<compile_context>
chip_gen: v7x
topology: tpu7x:2x2x1
jax: 0.10.0
libtpu: 0.0.40
codegen_flags: <defaults>
</compile_context>

<pallas_src>
import functools

import numpy as np
import jax
import jax.numpy as jnp
from jax.experimental import pallas as pl
from jax.experimental.pallas import tpu as pltpu


# ---------------------------------------------------------------------------
# Host-side static gather / scatter matrices (encode stride / padding / batch).
# ---------------------------------------------------------------------------
def _conv_gather_cat(B, H, W, k, stride, pad):
    """Encoder conv taps combined into ONE gather matrix.

    Returns S_cat (N_in, T*N_out), columns ordered tap-major so that
    (x @ S_cat)[:, t*N_out:(t+1)*N_out] is the tap-t gathered input (each
    column selects at most one input column -> exact in bf16), plus kept
    (kh, kw) tap ids and the output spatial dims."""
    OH = (H + 2 * pad - k) // stride + 1
    OW = (W + 2 * pad - k) // stride + 1
    N_in, N_out = B * H * W, B * OH * OW
    mats, taps = [], []
    for kh in range(k):
        for kw in range(k):
            S = np.zeros((N_in, N_out), np.float32)
            for b in range(B):
                for oh in range(OH):
                    ih = oh * stride - pad + kh
                    if not 0 <= ih < H:
                        continue
                    for ow in range(OW):
                        iw = ow * stride - pad + kw
                        if not 0 <= iw < W:
                            continue
                        S[(b * H + ih) * W + iw, (b * OH + oh) * OW + ow] = 1.0
            if S.any():                      # drop all-zero border taps
                mats.append(S)
                taps.append((kh, kw))
    return np.concatenate(mats, axis=1), taps, OH, OW


def _convT_scatter_stack(B, H, W, k, stride, pad, out_pad):
    """ConvTranspose taps: stacked scatter matrices (T, N_in, N_out) acting on
    the UNdilated input (sub-pixel style)."""
    OH = (H - 1) * stride - 2 * pad + k + out_pad
    OW = (W - 1) * stride - 2 * pad + k + out_pad
    N_in, N_out = B * H * W, B * OH * OW
    mats, taps = [], []
    for kh in range(k):
        for kw in range(k):
            S = np.zeros((N_in, N_out), np.float32)
            for b in range(B):
                for ih in range(H):
                    oh = ih * stride - pad + kh
                    if not 0 <= oh < OH:
                        continue
                    for iw in range(W):
                        ow = iw * stride - pad + kw
                        if not 0 <= ow < OW:
                            continue
                        S[(b * H + ih) * W + iw, (b * OH + oh) * OW + ow] = 1.0
            if S.any():
                mats.append(S)
                taps.append((kh, kw))
    return np.stack(mats, axis=0), taps, OH, OW


# ---------------------------------------------------------------------------
# Fused Pallas kernel: whole VAE forward, channels-major, VMEM resident.
# ---------------------------------------------------------------------------
def _vae_kernel(enc_meta, dec_meta, *refs):
    it = iter(refs)
    x_ref, eps_ref = next(it), next(it)
    enc = [(next(it), next(it), next(it)) for _ in enc_meta]
    wm_ref, bm_ref = next(it), next(it)
    wl_ref, bl_ref = next(it), next(it)
    wd_ref, bd_ref = next(it), next(it)
    dec = [(next(it), next(it), next(it)) for _ in dec_meta]
    out_ref, mean_ref, logvar_ref = next(it), next(it), next(it)

    # ---- Encoder: per layer = 1 combined gather GEMM + T tiny weight GEMMs --
    h = x_ref[...]                                        # (C_in, N_in) bf16
    for (s_ref, w_ref, b_ref), (T, n_out) in zip(enc, enc_meta):
        c_out = w_ref.shape[1]
        g = jnp.dot(h, s_ref[...], preferred_element_type=jnp.float32)
        acc = jnp.zeros((c_out, n_out), jnp.float32)
        for t in range(T):                                # static unroll, T<=9
            g_t = g[:, t * n_out:(t + 1) * n_out].astype(jnp.bfloat16)  # exact
            acc = acc + jnp.dot(w_ref[t], g_t, preferred_element_type=jnp.float32)
        h = jnp.maximum(acc + b_ref[...], 0.0).astype(jnp.bfloat16)

    # ---- Latent heads + reparametrization: z = mean + exp(logvar/2) * eps ---
    mean = jnp.dot(wm_ref[...], h, preferred_element_type=jnp.float32) + bm_ref[...]
    logvar = jnp.dot(wl_ref[...], h, preferred_element_type=jnp.float32) + bl_ref[...]
    mean_ref[...] = mean                                  # (latent, B)
    logvar_ref[...] = logvar
    z = mean + jnp.exp(logvar * 0.5) * eps_ref[...]       # f32 epilogue (v5e-safe)

    # ---- Decoder: fc, then per layer = 1 combined weight GEMM + T scatters --
    d = jnp.dot(wd_ref[...], z.astype(jnp.bfloat16),
                preferred_element_type=jnp.float32) + bd_ref[...]
    d = jnp.maximum(d, 0.0).astype(jnp.bfloat16)          # (feat, B) == 1x1 map
    n_dec = len(dec_meta)
    for i, ((w_ref, s_ref, b_ref), (T, c_out)) in enumerate(zip(dec, dec_meta)):
        n_out = s_ref.shape[2]
        # weight BEFORE scatter: dominant scatter GEMMs contract over C_out.
        y = jnp.dot(w_ref[...], d, preferred_element_type=jnp.float32)  # (T*C_out, N_in)
        acc = jnp.zeros((c_out, n_out), jnp.float32)
        for t in range(T):                                # static unroll
            y_t = y[t * c_out:(t + 1) * c_out, :].astype(jnp.bfloat16)
            acc = acc + jnp.dot(y_t, s_ref[t], preferred_element_type=jnp.float32)
        acc = acc + b_ref[...]
        if i == n_dec - 1:
            out_ref[...] = jax.nn.sigmoid(acc)            # lane-dense (C, B*H*W)
        else:
            d = jnp.maximum(acc, 0.0).astype(jnp.bfloat16)


# ---------------------------------------------------------------------------
# Weight / tap-matrix preparation (host side, once).
# ---------------------------------------------------------------------------
def prepare_vae(params, B, C, H, W, latent_dim):
    kargs, enc_meta, dec_meta = [], [], []
    flops = 0

    h, w = H, W
    for (cw, cb) in params["enc_conv"]:                   # cw: (OC, IC, 3, 3)
        cw, cb = np.asarray(cw), np.asarray(cb)
        oc, ic, k, _ = cw.shape
        S_cat, taps, oh, ow = _conv_gather_cat(B, h, w, k, stride=2, pad=1)
        T, n_out = len(taps), B * oh * ow
        wt = np.stack([cw[:, :, kh, kw] for (kh, kw) in taps], axis=0)  # (T,OC,IC)
        kargs += [jnp.asarray(S_cat, jnp.bfloat16),
                  jnp.asarray(wt, jnp.bfloat16),
                  jnp.asarray(cb.reshape(oc, 1), jnp.float32)]
        enc_meta.append((T, n_out))
        flops += 2 * ic * (B * h * w) * (T * n_out) + 2 * T * oc * ic * n_out
        h, w = oh, ow
    assert (h, w) == (1, 1), "encoder must reduce spatial dims to 1x1"

    for name in ("fc_mean", "fc_logvar", "fc_dec"):
        fw, fb = np.asarray(params[name][0]), np.asarray(params[name][1])
        kargs += [jnp.asarray(fw.T, jnp.bfloat16),          # channels-major W^T
                  jnp.asarray(fb.reshape(-1, 1), jnp.float32)]
        flops += 2 * fw.shape[0] * fw.shape[1] * B

    h, w = 1, 1
    for (dw, db) in params["dec_convT"]:                  # dw: (IC, OC, 3, 3)
        dw, db = np.asarray(dw), np.asarray(db)
        ic, oc, k, _ = dw.shape
        S_stack, taps, oh, ow = _convT_scatter_stack(B, h, w, k, stride=2,
                                                     pad=1, out_pad=1)
        T, n_in, n_out = len(taps), B * h * w, B * oh * ow
        # combined weight, rows ordered (tap, c_out): (T*OC, IC)
        wt = np.concatenate([dw[:, :, kh, kw].T for (kh, kw) in taps], axis=0)
        kargs += [jnp.asarray(wt, jnp.bfloat16),
                  jnp.asarray(S_stack, jnp.bfloat16),
                  jnp.asarray(db.reshape(oc, 1), jnp.float32)]
        dec_meta.append((T, oc))
        flops += 2 * T * oc * ic * n_in + 2 * T * oc * n_in * n_out
        h, w = oh, ow
    assert (h, w) == (H, W), "decoder must restore the input spatial dims"

    bytes_accessed = int(sum(int(a.size) * a.dtype.itemsize for a in kargs)
                         + B * C * H * W * 2              # bf16 input image
                         + latent_dim * B * 4             # eps
                         + B * C * H * W * 4              # output image
                         + 2 * latent_dim * B * 4)        # mean, logvar
    cost = pl.CostEstimate(flops=int(flops),
                           transcendentals=int(latent_dim * B + B * C * H * W),
                           bytes_accessed=bytes_accessed)
    return kargs, tuple(enc_meta), tuple(dec_meta), cost


# ---------------------------------------------------------------------------
# Forward wrapper: single pallas_call for the whole network.
# ---------------------------------------------------------------------------
def vae_forward(kargs, x, eps, *, enc_meta, dec_meta, cost):
    B, C, H, W = x.shape
    latent_dim = eps.shape[1]
    # Channels-major, lane-dense activations: (C, B*H*W); bf16 MXU operands.
    x2d = x.transpose(1, 0, 2, 3).reshape(C, B * H * W).astype(jnp.bfloat16)
    eps_cm = eps.T.astype(jnp.float32)                    # (latent, B)
    out2d, mean_cm, logvar_cm = pl.pallas_call(
        functools.partial(_vae_kernel, enc_meta, dec_meta),
        out_shape=(
            jax.ShapeDtypeStruct((C, B * H * W), jnp.float32),
            jax.ShapeDtypeStruct((latent_dim, B), jnp.float32),
            jax.ShapeDtypeStruct((latent_dim, B), jnp.float32),
        ),
        compiler_params=pltpu.CompilerParams(vmem_limit_bytes=32 * 1024 * 1024),
        cost_estimate=cost,
    )(x2d, eps_cm, *kargs)
    out = out2d.reshape(C, B, H, W).transpose(1, 0, 2, 3)  # back to NCHW
    return out, mean_cm.T, logvar_cm.T


# ---------------------------------------------------------------------------
# Deterministic parameter init (synthetic, no checkpoint).
# ---------------------------------------------------------------------------
def init_params(key, input_channels, latent_dim):
    chans = [input_channels, 8, 16, 32, 64]               # 4 encoder conv layers
    keys = jax.random.split(key, 32)
    ki = iter(range(32))
    params = {"enc_conv": [], "dec_convT": []}

    for i in range(4):
        ic, oc = chans[i], chans[i + 1]
        w = jax.random.normal(keys[next(ki)], (oc, ic, 3, 3), jnp.float32) * 0.1
        params["enc_conv"].append((w, jnp.zeros((oc,), jnp.float32)))

    feat = chans[-1]                                       # 1x1 spatial after 4 convs
    params["fc_mean"] = (
        jax.random.normal(keys[next(ki)], (feat, latent_dim), jnp.float32) * 0.1,
        jnp.zeros((latent_dim,), jnp.float32))
    params["fc_logvar"] = (
        jax.random.normal(keys[next(ki)], (feat, latent_dim), jnp.float32) * 0.1,
        jnp.zeros((latent_dim,), jnp.float32))
    params["fc_dec"] = (
        jax.random.normal(keys[next(ki)], (latent_dim, feat), jnp.float32) * 0.1,
        jnp.zeros((feat,), jnp.float32))

    dchans = [64, 32, 16, 8, input_channels]
    for i in range(4):
        ic, oc = dchans[i], dchans[i + 1]
        w = jax.random.normal(keys[next(ki)], (ic, oc, 3, 3), jnp.float32) * 0.1
        params["dec_convT"].append((w, jnp.zeros((oc,), jnp.float32)))
    return params


if __name__ == "__main__":
    key = jax.random.PRNGKey(0)
    k_param, k_x, k_eps = jax.random.split(key, 3)

    B, C, H, W = 2, 4, 16, 16
    latent_dim = 32

    params = init_params(k_param, input_channels=C, latent_dim=latent_dim)
    kargs, enc_meta, dec_meta, cost = prepare_vae(params, B, C, H, W, latent_dim)

    x = jax.random.normal(k_x, (B, C, H, W), jnp.float32)
    eps = jax.random.normal(k_eps, (B, latent_dim), jnp.float32)

    fwd = jax.jit(functools.partial(vae_forward, enc_meta=enc_meta,
                                    dec_meta=dec_meta, cost=cost))
    outputs, mean, logvar = fwd(kargs, x, eps)
    jax.block_until_ready(outputs)

    assert outputs.shape == (B, C, H, W), outputs.shape
    assert mean.shape == (B, latent_dim) and logvar.shape == (B, latent_dim)
    assert jnp.all(jnp.isfinite(outputs))
    assert jnp.all((outputs >= 0.0) & (outputs <= 1.0))    # sigmoid output range
    print("KERNEL_OK")
</pallas_src>

<mosaic_0001>
module attributes {stable_mosaic.version = 11 : i64} {
  func.func @_vae_kernel(%arg0: memref<4x512xbf16, #tpu.memory_space<vmem>>, %arg1: memref<32x2xf32, #tpu.memory_space<vmem>>, %arg2: memref<512x1152xbf16, #tpu.memory_space<vmem>>, %arg3: memref<9x8x4xbf16, #tpu.memory_space<vmem>>, %arg4: memref<8x1xf32, #tpu.memory_space<vmem>>, %arg5: memref<128x288xbf16, #tpu.memory_space<vmem>>, %arg6: memref<9x16x8xbf16, #tpu.memory_space<vmem>>, %arg7: memref<16x1xf32, #tpu.memory_space<vmem>>, %arg8: memref<32x72xbf16, #tpu.memory_space<vmem>>, %arg9: memref<9x32x16xbf16, #tpu.memory_space<vmem>>, %arg10: memref<32x1xf32, #tpu.memory_space<vmem>>, %arg11: memref<8x8xbf16, #tpu.memory_space<vmem>>, %arg12: memref<4x64x32xbf16, #tpu.memory_space<vmem>>, %arg13: memref<64x1xf32, #tpu.memory_space<vmem>>, %arg14: memref<32x64xbf16, #tpu.memory_space<vmem>>, %arg15: memref<32x1xf32, #tpu.memory_space<vmem>>, %arg16: memref<32x64xbf16, #tpu.memory_space<vmem>>, %arg17: memref<32x1xf32, #tpu.memory_space<vmem>>, %arg18: memref<64x32xbf16, #tpu.memory_space<vmem>>, %arg19: memref<64x1xf32, #tpu.memory_space<vmem>>, %arg20: memref<128x64xbf16, #tpu.memory_space<vmem>>, %arg21: memref<4x2x8xbf16, #tpu.memory_space<vmem>>, %arg22: memref<32x1xf32, #tpu.memory_space<vmem>>, %arg23: memref<144x32xbf16, #tpu.memory_space<vmem>>, %arg24: memref<9x8x32xbf16, #tpu.memory_space<vmem>>, %arg25: memref<16x1xf32, #tpu.memory_space<vmem>>, %arg26: memref<72x16xbf16, #tpu.memory_space<vmem>>, %arg27: memref<9x32x128xbf16, #tpu.memory_space<vmem>>, %arg28: memref<8x1xf32, #tpu.memory_space<vmem>>, %arg29: memref<36x8xbf16, #tpu.memory_space<vmem>>, %arg30: memref<9x128x512xbf16, #tpu.memory_space<vmem>>, %arg31: memref<4x1xf32, #tpu.memory_space<vmem>>, %arg32: memref<4x512xf32, #tpu.memory_space<vmem>>, %arg33: memref<32x2xf32, #tpu.memory_space<vmem>>, %arg34: memref<32x2xf32, #tpu.memory_space<vmem>>) attributes {dimension_semantics = [], scalar_prefetch = 0 : i64, scratch_operands = 0 : i64, tpu.core_type = #tpu.core_type<tc>} {
    %c0 = arith.constant 0 : index
    %c0_0 = arith.constant 0 : index
    %0 = vector.load %arg0[%c0, %c0_0] : memref<4x512xbf16, #tpu.memory_space<vmem>>, vector<4x512xbf16>
    %c0_1 = arith.constant 0 : index
    %c0_2 = arith.constant 0 : index
    %1 = vector.load %arg2[%c0_1, %c0_2] : memref<512x1152xbf16, #tpu.memory_space<vmem>>, vector<512x1152xbf16>
    %cst = arith.constant dense<0.000000e+00> : vector<4x1152xf32>
    %2 = tpu.matmul %0, %1, %cst {dimension_numbers = #tpu.dot_dimension_numbers<[1], [0], [0], [1], [0, 0, 1, 1], [], []>} : vector<4x512xbf16>, vector<512x1152xbf16>, vector<4x1152xf32> -> vector<4x1152xf32>
    %cst_3 = arith.constant 0.000000e+00 : f32
    %3 = vector.broadcast %cst_3 : f32 to vector<8x128xf32>
    %4 = vector.extract_strided_slice %2 {offsets = [0, 0], sizes = [4, 128], strides = [1, 1]} : vector<4x1152xf32> to vector<4x128xf32>
    %5 = arith.truncf %4 : vector<4x128xf32> to vector<4x128xbf16>
    %c0_4 = arith.constant 0 : index
    %c0_5 = arith.constant 0 : index
    %c0_6 = arith.constant 0 : index
    %6 = vector.load %arg3[%c0_4, %c0_5, %c0_6] : memref<9x8x4xbf16, #tpu.memory_space<vmem>>, vector<1x8x4xbf16>
    %7 = vector.shape_cast %6 : vector<1x8x4xbf16> to vector<8x4xbf16>
    %cst_7 = arith.constant dense<0.000000e+00> : vector<8x128xf32>
    %8 = tpu.matmul %7, %5, %cst_7 {dimension_numbers = #tpu.dot_dimension_numbers<[1], [0], [0], [1], [0, 0, 1, 1], [], []>} : vector<8x4xbf16>, vector<4x128xbf16>, vector<8x128xf32> -> vector<8x128xf32>
    %9 = arith.addf %3, %8 : vector<8x128xf32>
    %10 = vector.extract_strided_slice %2 {offsets = [0, 128], sizes = [4, 128], strides = [1, 1]} : vector<4x1152xf32> to vector<4x128xf32>
    %11 = arith.truncf %10 : vector<4x128xf32> to vector<4x128xbf16>
    %c1 = arith.constant 1 : index
    %c0_8 = arith.constant 0 : index
    %c0_9 = arith.constant 0 : index
    %12 = vector.load %arg3[%c1, %c0_8, %c0_9] : memref<9x8x4xbf16, #tpu.memory_space<vmem>>, vector<1x8x4xbf16>
    %13 = vector.shape_cast %12 : vector<1x8x4xbf16> to vector<8x4xbf16>
    %cst_10 = arith.constant dense<0.000000e+00> : vector<8x128xf32>
    %14 = tpu.matmul %13, %11, %cst_10 {dimension_numbers = #tpu.dot_dimension_numbers<[1], [0], [0], [1], [0, 0, 1, 1], [], []>} : vector<8x4xbf16>, vector<4x128xbf16>, vector<8x128xf32> -> vector<8x128xf32>
    %15 = arith.addf %9, %14 : vector<8x128xf32>
    %16 = vector.extract_strided_slice %2 {offsets = [0, 256], sizes = [4, 128], strides = [1, 1]} : vector<4x1152xf32> to vector<4x128xf32>
    %17 = arith.truncf %16 : vector<4x128xf32> to vector<4x128xbf16>
    %c2 = arith.constant 2 : index
    %c0_11 = arith.constant 0 : index
    %c0_12 = arith.constant 0 : index
    %18 = vector.load %arg3[%c2, %c0_11, %c0_12] : memref<9x8x4xbf16, #tpu.memory_space<vmem>>, vector<1x8x4xbf16>
    %19 = vector.shape_cast %18 : vector<1x8x4xbf16> to vector<8x4xbf16>
    %cst_13 = arith.constant dense<0.000000e+00> : vector<8x128xf32>
    %20 = tpu.matmul %19, %17, %cst_13 {dimension_numbers = #tpu.dot_dimension_numbers<[1], [0], [0], [1], [0, 0, 1, 1], [], []>} : vector<8x4xbf16>, vector<4x128xbf16>, vector<8x128xf32> -> vector<8x128xf32>
    %21 = arith.addf %15, %20 : vector<8x128xf32>
    %22 = vector.extract_strided_slice %2 {offsets = [0, 384], sizes = [4, 128], strides = [1, 1]} : vector<4x1152xf32> to vector<4x128xf32>
    %23 = arith.truncf %22 : vector<4x128xf32> to vector<4x128xbf16>
    %c3 = arith.constant 3 : index
    %c0_14 = arith.constant 0 : index
    %c0_15 = arith.constant 0 : index
    %24 = vector.load %arg3[%c3, %c0_14, %c0_15] : memref<9x8x4xbf16, #tpu.memory_space<vmem>>, vector<1x8x4xbf16>
    %25 = vector.shape_cast %24 : vector<1x8x4xbf16> to vector<8x4xbf16>
    %cst_16 = arith.constant dense<0.000000e+00> : vector<8x128xf32>
    %26 = tpu.matmul %25, %23, %cst_16 {dimension_numbers = #tpu.dot_dimension_numbers<[1], [0], [0], [1], [0, 0, 1, 1], [], []>} : vector<8x4xbf16>, vector<4x128xbf16>, vector<8x128xf32> -> vector<8x128xf32>
    %27 = arith.addf %21, %26 : vector<8x128xf32>
    %28 = vector.extract_strided_slice %2 {offsets = [0, 512], sizes = [4, 128], strides = [1, 1]} : vector<4x1152xf32> to vector<4x128xf32>
    %29 = arith.truncf %28 : vector<4x128xf32> to vector<4x128xbf16>
    %c4 = arith.constant 4 : index
    %c0_17 = arith.constant 0 : index
    %c0_18 = arith.constant 0 : index
    %30 = vector.load %arg3[%c4, %c0_17, %c0_18] : memref<9x8x4xbf16, #tpu.memory_space<vmem>>, vector<1x8x4xbf16>
    %31 = vector.shape_cast %30 : vector<1x8x4xbf16> to vector<8x4xbf16>
    %cst_19 = arith.constant dense<0.000000e+00> : vector<8x128xf32>
    %32 = tpu.matmul %31, %29, %cst_19 {dimension_numbers = #tpu.dot_dimension_numbers<[1], [0], [0], [1], [0, 0, 1, 1], [], []>} : vector<8x4xbf16>, vector<4x128xbf16>, vector<8x128xf32> -> vector<8x128xf32>
    %33 = arith.addf %27, %32 : vector<8x128xf32>
    %34 = vector.extract_strided_slice %2 {offsets = [0, 640], sizes = [4, 128], strides = [1, 1]} : vector<4x1152xf32> to vector<4x128xf32>
    %35 = arith.truncf %34 : vector<4x128xf32> to vector<4x128xbf16>
    %c5 = arith.constant 5 : index
    %c0_20 = arith.constant 0 : index
    %c0_21 = arith.constant 0 : index
    %36 = vector.load %arg3[%c5, %c0_20, %c0_21] : memref<9x8x4xbf16, #tpu.memory_space<vmem>>, vector<1x8x4xbf16>
    %37 = vector.shape_cast %36 : vector<1x8x4xbf16> to vector<8x4xbf16>
    %cst_22 = arith.constant dense<0.000000e+00> : vector<8x128xf32>
    %38 = tpu.matmul %37, %35, %cst_22 {dimension_numbers = #tpu.dot_dimension_numbers<[1], [0], [0], [1], [0, 0, 1, 1], [], []>} : vector<8x4xbf16>, vector<4x128xbf16>, vector<8x128xf32> -> vector<8x128xf32>
    %39 = arith.addf %33, %38 : vector<8x128xf32>
    %40 = vector.extract_strided_slice %2 {offsets = [0, 768], sizes = [4, 128], strides = [1, 1]} : vector<4x1152xf32> to vector<4x128xf32>
    %41 = arith.truncf %40 : vector<4x128xf32> to vector<4x128xbf16>
    %c6 = arith.constant 6 : index
    %c0_23 = arith.constant 0 : index
    %c0_24 = arith.constant 0 : index
    %42 = vector.load %arg3[%c6, %c0_23, %c0_24] : memref<9x8x4xbf16, #tpu.memory_space<vmem>>, vector<1x8x4xbf16>
    %43 = vector.shape_cast %42 : vector<1x8x4xbf16> to vector<8x4xbf16>
    %cst_25 = arith.constant dense<0.000000e+00> : vector<8x128xf32>
    %44 = tpu.matmul %43, %41, %cst_25 {dimension_numbers = #tpu.dot_dimension_numbers<[1], [0], [0], [1], [0, 0, 1, 1], [], []>} : vector<8x4xbf16>, vector<4x128xbf16>, vector<8x128xf32> -> vector<8x128xf32>
    %45 = arith.addf %39, %44 : vector<8x128xf32>
    %46 = vector.extract_strided_slice %2 {offsets = [0, 896], sizes = [4, 128], strides = [1, 1]} : vector<4x1152xf32> to vector<4x128xf32>
    %47 = arith.truncf %46 : vector<4x128xf32> to vector<4x128xbf16>
    %c7 = arith.constant 7 : index
    %c0_26 = arith.constant 0 : index
    %c0_27 = arith.constant 0 : index
    %48 = vector.load %arg3[%c7, %c0_26, %c0_27] : memref<9x8x4xbf16, #tpu.memory_space<vmem>>, vector<1x8x4xbf16>
    %49 = vector.shape_cast %48 : vector<1x8x4xbf16> to vector<8x4xbf16>
    %cst_28 = arith.constant dense<0.000000e+00> : vector<8x128xf32>
    %50 = tpu.matmul %49, %47, %cst_28 {dimension_numbers = #tpu.dot_dimension_numbers<[1], [0], [0], [1], [0, 0, 1, 1], [], []>} : vector<8x4xbf16>, vector<4x128xbf16>, vector<8x128xf32> -> vector<8x128xf32>
    %51 = arith.addf %45, %50 : vector<8x128xf32>
    %52 = vector.extract_strided_slice %2 {offsets = [0, 1024], sizes = [4, 128], strides = [1, 1]} : vector<4x1152xf32> to vector<4x128xf32>
    %53 = arith.truncf %52 : vector<4x128xf32> to vector<4x128xbf16>
    %c8 = arith.constant 8 : index
    %c0_29 = arith.constant 0 : index
    %c0_30 = arith.constant 0 : index
    %54 = vector.load %arg3[%c8, %c0_29, %c0_30] : memref<9x8x4xbf16, #tpu.memory_space<vmem>>, vector<1x8x4xbf16>
    %55 = vector.shape_cast %54 : vector<1x8x4xbf16> to vector<8x4xbf16>
    %cst_31 = arith.constant dense<0.000000e+00> : vector<8x128xf32>
    %56 = tpu.matmul %55, %53, %cst_31 {dimension_numbers = #tpu.dot_dimension_numbers<[1], [0], [0], [1], [0, 0, 1, 1], [], []>} : vector<8x4xbf16>, vector<4x128xbf16>, vector<8x128xf32> -> vector<8x128xf32>
    %57 = arith.addf %51, %56 : vector<8x128xf32>
    %c0_32 = arith.constant 0 : index
    %c0_33 = arith.constant 0 : index
    %58 = vector.load %arg4[%c0_32, %c0_33] : memref<8x1xf32, #tpu.memory_space<vmem>>, vector<8x1xf32>
    %59 = vector.broadcast %58 : vector<8x1xf32> to vector<8x128xf32>
    %60 = arith.addf %57, %59 : vector<8x128xf32>
    %cst_34 = arith.constant 0.000000e+00 : f32
    %61 = vector.broadcast %cst_34 : f32 to vector<8x128xf32>
    %62 = arith.maximumf %60, %61 : vector<8x128xf32>
    %63 = arith.truncf %62 : vector<8x128xf32> to vector<8x128xbf16>
    %c0_35 = arith.constant 0 : index
    %c0_36 = arith.constant 0 : index
    %64 = vector.load %arg5[%c0_35, %c0_36] : memref<128x288xbf16, #tpu.memory_space<vmem>>, vector<128x288xbf16>
    %cst_37 = arith.constant dense<0.000000e+00> : vector<8x288xf32>
    %65 = tpu.matmul %63, %64, %cst_37 {dimension_numbers = #tpu.dot_dimension_numbers<[1], [0], [0], [1], [0, 0, 1, 1], [], []>} : vector<8x128xbf16>, vector<128x288xbf16>, vector<8x288xf32> -> vector<8x288xf32>
    %cst_38 = arith.constant 0.000000e+00 : f32
    %66 = vector.broadcast %cst_38 : f32 to vector<16x32xf32>
    %67 = vector.extract_strided_slice %65 {offsets = [0, 0], sizes = [8, 32], strides = [1, 1]} : vector<8x288xf32> to vector<8x32xf32>
    %68 = arith.truncf %67 : vector<8x32xf32> to vector<8x32xbf16>
    %c0_39 = arith.constant 0 : index
    %c0_40 = arith.constant 0 : index
    %c0_41 = arith.constant 0 : index
    %69 = vector.load %arg6[%c0_39, %c0_40, %c0_41] : memref<9x16x8xbf16, #tpu.memory_space<vmem>>, vector<1x16x8xbf16>
    %70 = vector.shape_cast %69 : vector<1x16x8xbf16> to vector<16x8xbf16>
    %cst_42 = arith.constant dense<0.000000e+00> : vector<16x32xf32>
    %71 = tpu.matmul %70, %68, %cst_42 {dimension_numbers = #tpu.dot_dimension_numbers<[1], [0], [0], [1], [0, 0, 1, 1], [], []>} : vector<16x8xbf16>, vector<8x32xbf16>, vector<16x32xf32> -> vector<16x32xf32>
    %72 = arith.addf %66, %71 : vector<16x32xf32>
    %73 = vector.extract_strided_slice %65 {offsets = [0, 32], sizes = [8, 32], strides = [1, 1]} : vector<8x288xf32> to vector<8x32xf32>
    %74 = arith.truncf %73 : vector<8x32xf32> to vector<8x32xbf16>
    %c1_43 = arith.constant 1 : index
    %c0_44 = arith.constant 0 : index
    %c0_45 = arith.constant 0 : index
    %75 = vector.load %arg6[%c1_43, %c0_44, %c0_45] : memref<9x16x8xbf16, #tpu.memory_space<vmem>>, vector<1x16x8xbf16>
    %76 = vector.shape_cast %75 : vector<1x16x8xbf16> to vector<16x8xbf16>
    %cst_46 = arith.constant dense<0.000000e+00> : vector<16x32xf32>
    %77 = tpu.matmul %76, %74, %cst_46 {dimension_numbers = #tpu.dot_dimension_numbers<[1], [0], [0], [1], [0, 0, 1, 1], [], []>} : vector<16x8xbf16>, vector<8x32xbf16>, vector<16x32xf32> -> vector<16x32xf32>
    %78 = arith.addf %72, %77 : vector<16x32xf32>
    %79 = vector.extract_strided_slice %65 {offsets = [0, 64], sizes = [8, 32], strides = [1, 1]} : vector<8x288xf32> to vector<8x32xf32>
    %80 = arith.truncf %79 : vector<8x32xf32> to vector<8x32xbf16>
    %c2_47 = arith.constant 2 : index
    %c0_48 = arith.constant 0 : index
    %c0_49 = arith.constant 0 : index
    %81 = vector.load %arg6[%c2_47, %c0_48, %c0_49] : memref<9x16x8xbf16, #tpu.memory_space<vmem>>, vector<1x16x8xbf16>
    %82 = vector.shape_cast %81 : vector<1x16x8xbf16> to vector<16x8xbf16>
    %cst_50 = arith.constant dense<0.000000e+00> : vector<16x32xf32>
    %83 = tpu.matmul %82, %80, %cst_50 {dimension_numbers = #tpu.dot_dimension_numbers<[1], [0], [0], [1], [0, 0, 1, 1], [], []>} : vector<16x8xbf16>, vector<8x32xbf16>, vector<16x32xf32> -> vector<16x32xf32>
    %84 = arith.addf %78, %83 : vector<16x32xf32>
    %85 = vector.extract_strided_slice %65 {offsets = [0, 96], sizes = [8, 32], strides = [1, 1]} : vector<8x288xf32> to vector<8x32xf32>
    %86 = arith.truncf %85 : vector<8x32xf32> to vector<8x32xbf16>
    %c3_51 = arith.constant 3 : index
    %c0_52 = arith.constant 0 : index
    %c0_53 = arith.constant 0 : index
    %87 = vector.load %arg6[%c3_51, %c0_52, %c0_53] : memref<9x16x8xbf16, #tpu.memory_space<vmem>>, vector<1x16x8xbf16>
    %88 = vector.shape_cast %87 : vector<1x16x8xbf16> to vector<16x8xbf16>
    %cst_54 = arith.constant dense<0.000000e+00> : vector<16x32xf32>
    %89 = tpu.matmul %88, %86, %cst_54 {dimension_numbers = #tpu.dot_dimension_numbers<[1], [0], [0], [1], [0, 0, 1, 1], [], []>} : vector<16x8xbf16>, vector<8x32xbf16>, vector<16x32xf32> -> vector<16x32xf32>
    %90 = arith.addf %84, %89 : vector<16x32xf32>
    %91 = vector.extract_strided_slice %65 {offsets = [0, 128], sizes = [8, 32], strides = [1, 1]} : vector<8x288xf32> to vector<8x32xf32>
    %92 = arith.truncf %91 : vector<8x32xf32> to vector<8x32xbf16>
    %c4_55 = arith.constant 4 : index
    %c0_56 = arith.constant 0 : index
    %c0_57 = arith.constant 0 : index
    %93 = vector.load %arg6[%c4_55, %c0_56, %c0_57] : memref<9x16x8xbf16, #tpu.memory_space<vmem>>, vector<1x16x8xbf16>
    %94 = vector.shape_cast %93 : vector<1x16x8xbf16> to vector<16x8xbf16>
    %cst_58 = arith.constant dense<0.000000e+00> : vector<16x32xf32>
    %95 = tpu.matmul %94, %92, %cst_58 {dimension_numbers = #tpu.dot_dimension_numbers<[1], [0], [0], [1], [0, 0, 1, 1], [], []>} : vector<16x8xbf16>, vector<8x32xbf16>, vector<16x32xf32> -> vector<16x32xf32>
    %96 = arith.addf %90, %95 : vector<16x32xf32>
    %97 = vector.extract_strided_slice %65 {offsets = [0, 160], sizes = [8, 32], strides = [1, 1]} : vector<8x288xf32> to vector<8x32xf32>
    %98 = arith.truncf %97 : vector<8x32xf32> to vector<8x32xbf16>
    %c5_59 = arith.constant 5 : index
    %c0_60 = arith.constant 0 : index
    %c0_61 = arith.constant 0 : index
    %99 = vector.load %arg6[%c5_59, %c0_60, %c0_61] : memref<9x16x8xbf16, #tpu.memory_space<vmem>>, vector<1x16x8xbf16>
    %100 = vector.shape_cast %99 : vector<1x16x8xbf16> to vector<16x8xbf16>
    %cst_62 = arith.constant dense<0.000000e+00> : vector<16x32xf32>
    %101 = tpu.matmul %100, %98, %cst_62 {dimension_numbers = #tpu.dot_dimension_numbers<[1], [0], [0], [1], [0, 0, 1, 1], [], []>} : vector<16x8xbf16>, vector<8x32xbf16>, vector<16x32xf32> -> vector<16x32xf32>
    %102 = arith.addf %96, %101 : vector<16x32xf32>
    %103 = vector.extract_strided_slice %65 {offsets = [0, 192], sizes = [8, 32], strides = [1, 1]} : vector<8x288xf32> to vector<8x32xf32>
    %104 = arith.truncf %103 : vector<8x32xf32> to vector<8x32xbf16>
    %c6_63 = arith.constant 6 : index
    %c0_64 = arith.constant 0 : index
    %c0_65 = arith.constant 0 : index
    %105 = vector.load %arg6[%c6_63, %c0_64, %c0_65] : memref<9x16x8xbf16, #tpu.memory_space<vmem>>, vector<1x16x8xbf16>
    %106 = vector.shape_cast %105 : vector<1x16x8xbf16> to vector<16x8xbf16>
    %cst_66 = arith.constant dense<0.000000e+00> : vector<16x32xf32>
    %107 = tpu.matmul %106, %104, %cst_66 {dimension_numbers = #tpu.dot_dimension_numbers<[1], [0], [0], [1], [0, 0, 1, 1], [], []>} : vector<16x8xbf16>, vector<8x32xbf16>, vector<16x32xf32> -> vector<16x32xf32>
    %108 = arith.addf %102, %107 : vector<16x32xf32>
    %109 = vector.extract_strided_slice %65 {offsets = [0, 224], sizes = [8, 32], strides = [1, 1]} : vector<8x288xf32> to vector<8x32xf32>
    %110 = arith.truncf %109 : vector<8x32xf32> to vector<8x32xbf16>
    %c7_67 = arith.constant 7 : index
    %c0_68 = arith.constant 0 : index
    %c0_69 = arith.constant 0 : index
    %111 = vector.load %arg6[%c7_67, %c0_68, %c0_69] : memref<9x16x8xbf16, #tpu.memory_space<vmem>>, vector<1x16x8xbf16>
    %112 = vector.shape_cast %111 : vector<1x16x8xbf16> to vector<16x8xbf16>
    %cst_70 = arith.constant dense<0.000000e+00> : vector<16x32xf32>
    %113 = tpu.matmul %112, %110, %cst_70 {dimension_numbers = #tpu.dot_dimension_numbers<[1], [0], [0], [1], [0, 0, 1, 1], [], []>} : vector<16x8xbf16>, vector<8x32xbf16>, vector<16x32xf32> -> vector<16x32xf32>
    %114 = arith.addf %108, %113 : vector<16x32xf32>
    %115 = vector.extract_strided_slice %65 {offsets = [0, 256], sizes = [8, 32], strides = [1, 1]} : vector<8x288xf32> to vector<8x32xf32>
    %116 = arith.truncf %115 : vector<8x32xf32> to vector<8x32xbf16>
    %c8_71 = arith.constant 8 : index
    %c0_72 = arith.constant 0 : index
    %c0_73 = arith.constant 0 : index
    %117 = vector.load %arg6[%c8_71, %c0_72, %c0_73] : memref<9x16x8xbf16, #tpu.memory_space<vmem>>, vector<1x16x8xbf16>
    %118 = vector.shape_cast %117 : vector<1x16x8xbf16> to vector<16x8xbf16>
    %cst_74 = arith.constant dense<0.000000e+00> : vector<16x32xf32>
    %119 = tpu.matmul %118, %116, %cst_74 {dimension_numbers = #tpu.dot_dimension_numbers<[1], [0], [0], [1], [0, 0, 1, 1], [], []>} : vector<16x8xbf16>, vector<8x32xbf16>, vector<16x32xf32> -> vector<16x32xf32>
    %120 = arith.addf %114, %119 : vector<16x32xf32>
    %c0_75 = arith.constant 0 : index
    %c0_76 = arith.constant 0 : index
    %121 = vector.load %arg7[%c0_75, %c0_76] : memref<16x1xf32, #tpu.memory_space<vmem>>, vector<16x1xf32>
    %122 = vector.broadcast %121 : vector<16x1xf32> to vector<16x32xf32>
    %123 = arith.addf %120, %122 : vector<16x32xf32>
    %cst_77 = arith.constant 0.000000e+00 : f32
    %124 = vector.broadcast %cst_77 : f32 to vector<16x32xf32>
    %125 = arith.maximumf %123, %124 : vector<16x32xf32>
    %126 = arith.truncf %125 : vector<16x32xf32> to vector<16x32xbf16>
    %c0_78 = arith.constant 0 : index
    %c0_79 = arith.constant 0 : index
    %127 = vector.load %arg8[%c0_78, %c0_79] : memref<32x72xbf16, #tpu.memory_space<vmem>>, vector<32x72xbf16>
    %cst_80 = arith.constant dense<0.000000e+00> : vector<16x72xf32>
    %128 = tpu.matmul %126, %127, %cst_80 {dimension_numbers = #tpu.dot_dimension_numbers<[1], [0], [0], [1], [0, 0, 1, 1], [], []>} : vector<16x32xbf16>, vector<32x72xbf16>, vector<16x72xf32> -> vector<16x72xf32>
    %cst_81 = arith.constant 0.000000e+00 : f32
    %129 = vector.broadcast %cst_81 : f32 to vector<32x8xf32>
    %130 = vector.extract_strided_slice %128 {offsets = [0, 0], sizes = [16, 8], strides = [1, 1]} : vector<16x72xf32> to vector<16x8xf32>
    %131 = arith.truncf %130 : vector<16x8xf32> to vector<16x8xbf16>
    %c0_82 = arith.constant 0 : index
    %c0_83 = arith.constant 0 : index
    %c0_84 = arith.constant 0 : index
    %132 = vector.load %arg9[%c0_82, %c0_83, %c0_84] : memref<9x32x16xbf16, #tpu.memory_space<vmem>>, vector<1x32x16xbf16>
    %133 = vector.shape_cast %132 : vector<1x32x16xbf16> to vector<32x16xbf16>
    %cst_85 = arith.constant dense<0.000000e+00> : vector<32x8xf32>
    %134 = tpu.matmul %133, %131, %cst_85 {dimension_numbers = #tpu.dot_dimension_numbers<[1], [0], [0], [1], [0, 0, 1, 1], [], []>} : vector<32x16xbf16>, vector<16x8xbf16>, vector<32x8xf32> -> vector<32x8xf32>
    %135 = arith.addf %129, %134 : vector<32x8xf32>
    %136 = vector.extract_strided_slice %128 {offsets = [0, 8], sizes = [16, 8], strides = [1, 1]} : vector<16x72xf32> to vector<16x8xf32>
    %137 = arith.truncf %136 : vector<16x8xf32> to vector<16x8xbf16>
    %c1_86 = arith.constant 1 : index
    %c0_87 = arith.constant 0 : index
    %c0_88 = arith.constant 0 : index
    %138 = vector.load %arg9[%c1_86, %c0_87, %c0_88] : memref<9x32x16xbf16, #tpu.memory_space<vmem>>, vector<1x32x16xbf16>
    %139 = vector.shape_cast %138 : vector<1x32x16xbf16> to vector<32x16xbf16>
    %cst_89 = arith.constant dense<0.000000e+00> : vector<32x8xf32>
    %140 = tpu.matmul %139, %137, %cst_89 {dimension_numbers = #tpu.dot_dimension_numbers<[1], [0], [0], [1], [0, 0, 1, 1], [], []>} : vector<32x16xbf16>, vector<16x8xbf16>, vector<32x8xf32> -> vector<32x8xf32>
    %141 = arith.addf %135, %140 : vector<32x8xf32>
    %142 = vector.extract_strided_slice %128 {offsets = [0, 16], sizes = [16, 8], strides = [1, 1]} : vector<16x72xf32> to vector<16x8xf32>
    %143 = arith.truncf %142 : vector<16x8xf32> to vector<16x8xbf16>
    %c2_90 = arith.constant 2 : index
    %c0_91 = arith.constant 0 : index
    %c0_92 = arith.constant 0 : index
    %144 = vector.load %arg9[%c2_90, %c0_91, %c0_92] : memref<9x32x16xbf16, #tpu.memory_space<vmem>>, vector<1x32x16xbf16>
    %145 = vector.shape_cast %144 : vector<1x32x16xbf16> to vector<32x16xbf16>
    %cst_93 = arith.constant dense<0.000000e+00> : vector<32x8xf32>
    %146 = tpu.matmul %145, %143, %cst_93 {dimension_numbers = #tpu.dot_dimension_numbers<[1], [0], [0], [1], [0, 0, 1, 1], [], []>} : vector<32x16xbf16>, vector<16x8xbf16>, vector<32x8xf32> -> vector<32x8xf32>
    %147 = arith.addf %141, %146 : vector<32x8xf32>
    %148 = vector.extract_strided_slice %128 {offsets = [0, 24], sizes = [16, 8], strides = [1, 1]} : vector<16x72xf32> to vector<16x8xf32>
    %149 = arith.truncf %148 : vector<16x8xf32> to vector<16x8xbf16>
    %c3_94 = arith.constant 3 : index
    %c0_95 = arith.constant 0 : index
    %c0_96 = arith.constant 0 : index
    %150 = vector.load %arg9[%c3_94, %c0_95, %c0_96] : memref<9x32x16xbf16, #tpu.memory_space<vmem>>, vector<1x32x16xbf16>
    %151 = vector.shape_cast %150 : vector<1x32x16xbf16> to vector<32x16xbf16>
    %cst_97 = arith.constant dense<0.000000e+00> : vector<32x8xf32>
    %152 = tpu.matmul %151, %149, %cst_97 {dimension_numbers = #tpu.dot_dimension_numbers<[1], [0], [0], [1], [0, 0, 1, 1], [], []>} : vector<32x16xbf16>, vector<16x8xbf16>, vector<32x8xf32> -> vector<32x8xf32>
    %153 = arith.addf %147, %152 : vector<32x8xf32>
    %154 = vector.extract_strided_slice %128 {offsets = [0, 32], sizes = [16, 8], strides = [1, 1]} : vector<16x72xf32> to vector<16x8xf32>
    %155 = arith.truncf %154 : vector<16x8xf32> to vector<16x8xbf16>
    %c4_98 = arith.constant 4 : index
    %c0_99 = arith.constant 0 : index
    %c0_100 = arith.constant 0 : index
    %156 = vector.load %arg9[%c4_98, %c0_99, %c0_100] : memref<9x32x16xbf16, #tpu.memory_space<vmem>>, vector<1x32x16xbf16>
    %157 = vector.shape_cast %156 : vector<1x32x16xbf16> to vector<32x16xbf16>
    %cst_101 = arith.constant dense<0.000000e+00> : vector<32x8xf32>
    %158 = tpu.matmul %157, %155, %cst_101 {dimension_numbers = #tpu.dot_dimension_numbers<[1], [0], [0], [1], [0, 0, 1, 1], [], []>} : vector<32x16xbf16>, vector<16x8xbf16>, vector<32x8xf32> -> vector<32x8xf32>
    %159 = arith.addf %153, %158 : vector<32x8xf32>
    %160 = vector.extract_strided_slice %128 {offsets = [0, 40], sizes = [16, 8], strides = [1, 1]} : vector<16x72xf32> to vector<16x8xf32>
    %161 = arith.truncf %160 : vector<16x8xf32> to vector<16x8xbf16>
    %c5_102 = arith.constant 5 : index
    %c0_103 = arith.constant 0 : index
    %c0_104 = arith.constant 0 : index
    %162 = vector.load %arg9[%c5_102, %c0_103, %c0_104] : memref<9x32x16xbf16, #tpu.memory_space<vmem>>, vector<1x32x16xbf16>
    %163 = vector.shape_cast %162 : vector<1x32x16xbf16> to vector<32x16xbf16>
    %cst_105 = arith.constant dense<0.000000e+00> : vector<32x8xf32>
    %164 = tpu.matmul %163, %161, %cst_105 {dimension_numbers = #tpu.dot_dimension_numbers<[1], [0], [0], [1], [0, 0, 1, 1], [], []>} : vector<32x16xbf16>, vector<16x8xbf16>, vector<32x8xf32> -> vector<32x8xf32>
    %165 = arith.addf %159, %164 : vector<32x8xf32>
    %166 = vector.extract_strided_slice %128 {offsets = [0, 48], sizes = [16, 8], strides = [1, 1]} : vector<16x72xf32> to vector<16x8xf32>
    %167 = arith.truncf %166 : vector<16x8xf32> to vector<16x8xbf16>
    %c6_106 = arith.constant 6 : index
    %c0_107 = arith.constant 0 : index
    %c0_108 = arith.constant 0 : index
    %168 = vector.load %arg9[%c6_106, %c0_107, %c0_108] : memref<9x32x16xbf16, #tpu.memory_space<vmem>>, vector<1x32x16xbf16>
    %169 = vector.shape_cast %168 : vector<1x32x16xbf16> to vector<32x16xbf16>
    %cst_109 = arith.constant dense<0.000000e+00> : vector<32x8xf32>
    %170 = tpu.matmul %169, %167, %cst_109 {dimension_numbers = #tpu.dot_dimension_numbers<[1], [0], [0], [1], [0, 0, 1, 1], [], []>} : vector<32x16xbf16>, vector<16x8xbf16>, vector<32x8xf32> -> vector<32x8xf32>
    %171 = arith.addf %165, %170 : vector<32x8xf32>
    %172 = vector.extract_strided_slice %128 {offsets = [0, 56], sizes = [16, 8], strides = [1, 1]} : vector<16x72xf32> to vector<16x8xf32>
    %173 = arith.truncf %172 : vector<16x8xf32> to vector<16x8xbf16>
    %c7_110 = arith.constant 7 : index
    %c0_111 = arith.constant 0 : index
    %c0_112 = arith.constant 0 : index
    %174 = vector.load %arg9[%c7_110, %c0_111, %c0_112] : memref<9x32x16xbf16, #tpu.memory_space<vmem>>, vector<1x32x16xbf16>
    %175 = vector.shape_cast %174 : vector<1x32x16xbf16> to vector<32x16xbf16>
    %cst_113 = arith.constant dense<0.000000e+00> : vector<32x8xf32>
    %176 = tpu.matmul %175, %173, %cst_113 {dimension_numbers = #tpu.dot_dimension_numbers<[1], [0], [0], [1], [0, 0, 1, 1], [], []>} : vector<32x16xbf16>, vector<16x8xbf16>, vector<32x8xf32> -> vector<32x8xf32>
    %177 = arith.addf %171, %176 : vector<32x8xf32>
    %178 = vector.extract_strided_slice %128 {offsets = [0, 64], sizes = [16, 8], strides = [1, 1]} : vector<16x72xf32> to vector<16x8xf32>
    %179 = arith.truncf %178 : vector<16x8xf32> to vector<16x8xbf16>
    %c8_114 = arith.constant 8 : index
    %c0_115 = arith.constant 0 : index
    %c0_116 = arith.constant 0 : index
    %180 = vector.load %arg9[%c8_114, %c0_115, %c0_116] : memref<9x32x16xbf16, #tpu.memory_space<vmem>>, vector<1x32x16xbf16>
    %181 = vector.shape_cast %180 : vector<1x32x16xbf16> to vector<32x16xbf16>
    %cst_117 = arith.constant dense<0.000000e+00> : vector<32x8xf32>
    %182 = tpu.matmul %181, %179, %cst_117 {dimension_numbers = #tpu.dot_dimension_numbers<[1], [0], [0], [1], [0, 0, 1, 1], [], []>} : vector<32x16xbf16>, vector<16x8xbf16>, vector<32x8xf32> -> vector<32x8xf32>
    %183 = arith.addf %177, %182 : vector<32x8xf32>
    %c0_118 = arith.constant 0 : index
    %c0_119 = arith.constant 0 : index
    %184 = vector.load %arg10[%c0_118, %c0_119] : memref<32x1xf32, #tpu.memory_space<vmem>>, vector<32x1xf32>
    %185 = vector.broadcast %184 : vector<32x1xf32> to vector<32x8xf32>
    %186 = arith.addf %183, %185 : vector<32x8xf32>
    %cst_120 = arith.constant 0.000000e+00 : f32
    %187 = vector.broadcast %cst_120 : f32 to vector<32x8xf32>
    %188 = arith.maximumf %186, %187 : vector<32x8xf32>
    %189 = arith.truncf %188 : vector<32x8xf32> to vector<32x8xbf16>
    %c0_121 = arith.constant 0 : index
    %c0_122 = arith.constant 0 : index
    %190 = vector.load %arg11[%c0_121, %c0_122] : memref<8x8xbf16, #tpu.memory_space<vmem>>, vector<8x8xbf16>
    %cst_123 = arith.constant dense<0.000000e+00> : vector<32x8xf32>
    %191 = tpu.matmul %189, %190, %cst_123 {dimension_numbers = #tpu.dot_dimension_numbers<[1], [0], [0], [1], [0, 0, 1, 1], [], []>} : vector<32x8xbf16>, vector<8x8xbf16>, vector<32x8xf32> -> vector<32x8xf32>
    %cst_124 = arith.constant 0.000000e+00 : f32
    %192 = vector.broadcast %cst_124 : f32 to vector<64x2xf32>
    %193 = vector.extract_strided_slice %191 {offsets = [0, 0], sizes = [32, 2], strides = [1, 1]} : vector<32x8xf32> to vector<32x2xf32>
    %194 = arith.truncf %193 : vector<32x2xf32> to vector<32x2xbf16>
    %c0_125 = arith.constant 0 : index
    %c0_126 = arith.constant 0 : index
    %c0_127 = arith.constant 0 : index
    %195 = vector.load %arg12[%c0_125, %c0_126, %c0_127] : memref<4x64x32xbf16, #tpu.memory_space<vmem>>, vector<1x64x32xbf16>
    %196 = vector.shape_cast %195 : vector<1x64x32xbf16> to vector<64x32xbf16>
    %cst_128 = arith.constant dense<0.000000e+00> : vector<64x2xf32>
    %197 = tpu.matmul %196, %194, %cst_128 {dimension_numbers = #tpu.dot_dimension_numbers<[1], [0], [0], [1], [0, 0, 1, 1], [], []>} : vector<64x32xbf16>, vector<32x2xbf16>, vector<64x2xf32> -> vector<64x2xf32>
    %198 = arith.addf %192, %197 : vector<64x2xf32>
    %199 = vector.extract_strided_slice %191 {offsets = [0, 2], sizes = [32, 2], strides = [1, 1]} : vector<32x8xf32> to vector<32x2xf32>
    %200 = arith.truncf %199 : vector<32x2xf32> to vector<32x2xbf16>
    %c1_129 = arith.constant 1 : index
    %c0_130 = arith.constant 0 : index
    %c0_131 = arith.constant 0 : index
    %201 = vector.load %arg12[%c1_129, %c0_130, %c0_131] : memref<4x64x32xbf16, #tpu.memory_space<vmem>>, vector<1x64x32xbf16>
    %202 = vector.shape_cast %201 : vector<1x64x32xbf16> to vector<64x32xbf16>
    %cst_132 = arith.constant dense<0.000000e+00> : vector<64x2xf32>
    %203 = tpu.matmul %202, %200, %cst_132 {dimension_numbers = #tpu.dot_dimension_numbers<[1], [0], [0], [1], [0, 0, 1, 1], [], []>} : vector<64x32xbf16>, vector<32x2xbf16>, vector<64x2xf32> -> vector<64x2xf32>
    %204 = arith.addf %198, %203 : vector<64x2xf32>
    %205 = vector.extract_strided_slice %191 {offsets = [0, 4], sizes = [32, 2], strides = [1, 1]} : vector<32x8xf32> to vector<32x2xf32>
    %206 = arith.truncf %205 : vector<32x2xf32> to vector<32x2xbf16>
    %c2_133 = arith.constant 2 : index
    %c0_134 = arith.constant 0 : index
    %c0_135 = arith.constant 0 : index
    %207 = vector.load %arg12[%c2_133, %c0_134, %c0_135] : memref<4x64x32xbf16, #tpu.memory_space<vmem>>, vector<1x64x32xbf16>
    %208 = vector.shape_cast %207 : vector<1x64x32xbf16> to vector<64x32xbf16>
    %cst_136 = arith.constant dense<0.000000e+00> : vector<64x2xf32>
    %209 = tpu.matmul %208, %206, %cst_136 {dimension_numbers = #tpu.dot_dimension_numbers<[1], [0], [0], [1], [0, 0, 1, 1], [], []>} : vector<64x32xbf16>, vector<32x2xbf16>, vector<64x2xf32> -> vector<64x2xf32>
    %210 = arith.addf %204, %209 : vector<64x2xf32>
    %211 = vector.extract_strided_slice %191 {offsets = [0, 6], sizes = [32, 2], strides = [1, 1]} : vector<32x8xf32> to vector<32x2xf32>
    %212 = arith.truncf %211 : vector<32x2xf32> to vector<32x2xbf16>
    %c3_137 = arith.constant 3 : index
    %c0_138 = arith.constant 0 : index
    %c0_139 = arith.constant 0 : index
    %213 = vector.load %arg12[%c3_137, %c0_138, %c0_139] : memref<4x64x32xbf16, #tpu.memory_space<vmem>>, vector<1x64x32xbf16>
    %214 = vector.shape_cast %213 : vector<1x64x32xbf16> to vector<64x32xbf16>
    %cst_140 = arith.constant dense<0.000000e+00> : vector<64x2xf32>
    %215 = tpu.matmul %214, %212, %cst_140 {dimension_numbers = #tpu.dot_dimension_numbers<[1], [0], [0], [1], [0, 0, 1, 1], [], []>} : vector<64x32xbf16>, vector<32x2xbf16>, vector<64x2xf32> -> vector<64x2xf32>
    %216 = arith.addf %210, %215 : vector<64x2xf32>
    %c0_141 = arith.constant 0 : index
    %c0_142 = arith.constant 0 : index
    %217 = vector.load %arg13[%c0_141, %c0_142] : memref<64x1xf32, #tpu.memory_space<vmem>>, vector<64x1xf32>
    %218 = vector.broadcast %217 : vector<64x1xf32> to vector<64x2xf32>
    %219 = arith.addf %216, %218 : vector<64x2xf32>
    %cst_143 = arith.constant 0.000000e+00 : f32
    %220 = vector.broadcast %cst_143 : f32 to vector<64x2xf32>
    %221 = arith.maximumf %219, %220 : vector<64x2xf32>
    %222 = arith.truncf %221 : vector<64x2xf32> to vector<64x2xbf16>
    %c0_144 = arith.constant 0 : index
    %c0_145 = arith.constant 0 : index
    %223 = vector.load %arg14[%c0_144, %c0_145] : memref<32x64xbf16, #tpu.memory_space<vmem>>, vector<32x64xbf16>
    %cst_146 = arith.constant dense<0.000000e+00> : vector<32x2xf32>
    %224 = tpu.matmul %223, %222, %cst_146 {dimension_numbers = #tpu.dot_dimension_numbers<[1], [0], [0], [1], [0, 0, 1, 1], [], []>} : vector<32x64xbf16>, vector<64x2xbf16>, vector<32x2xf32> -> vector<32x2xf32>
    %c0_147 = arith.constant 0 : index
    %c0_148 = arith.constant 0 : index
    %225 = vector.load %arg15[%c0_147, %c0_148] : memref<32x1xf32, #tpu.memory_space<vmem>>, vector<32x1xf32>
    %226 = vector.broadcast %225 : vector<32x1xf32> to vector<32x2xf32>
    %227 = arith.addf %224, %226 : vector<32x2xf32>
    %c0_149 = arith.constant 0 : index
    %c0_150 = arith.constant 0 : index
    %228 = vector.load %arg16[%c0_149, %c0_150] : memref<32x64xbf16, #tpu.memory_space<vmem>>, vector<32x64xbf16>
    %cst_151 = arith.constant dense<0.000000e+00> : vector<32x2xf32>
    %229 = tpu.matmul %228, %222, %cst_151 {dimension_numbers = #tpu.dot_dimension_numbers<[1], [0], [0], [1], [0, 0, 1, 1], [], []>} : vector<32x64xbf16>, vector<64x2xbf16>, vector<32x2xf32> -> vector<32x2xf32>
    %c0_152 = arith.constant 0 : index
    %c0_153 = arith.constant 0 : index
    %230 = vector.load %arg17[%c0_152, %c0_153] : memref<32x1xf32, #tpu.memory_space<vmem>>, vector<32x1xf32>
    %231 = vector.broadcast %230 : vector<32x1xf32> to vector<32x2xf32>
    %232 = arith.addf %229, %231 : vector<32x2xf32>
    %c0_154 = arith.constant 0 : index
    %c0_155 = arith.constant 0 : index
    %233 = vector.load %arg33[%c0_154, %c0_155] : memref<32x2xf32, #tpu.memory_space<vmem>>, vector<32x2xf32>
    tpu.vector_store %arg33[%c0_154, %c0_155], %227 {strides = array<i32>} : memref<32x2xf32, #tpu.memory_space<vmem>>, vector<32x2xf32>,
    %c0_156 = arith.constant 0 : index
    %c0_157 = arith.constant 0 : index
    %234 = vector.load %arg34[%c0_156, %c0_157] : memref<32x2xf32, #tpu.memory_space<vmem>>, vector<32x2xf32>
    tpu.vector_store %arg34[%c0_156, %c0_157], %232 {strides = array<i32>} : memref<32x2xf32, #tpu.memory_space<vmem>>, vector<32x2xf32>,
    %cst_158 = arith.constant 5.000000e-01 : f32
    %235 = vector.broadcast %cst_158 : f32 to vector<32x2xf32>
    %236 = arith.mulf %232, %235 : vector<32x2xf32>
    %237 = math.exp %236 : vector<32x2xf32>
    %c0_159 = arith.constant 0 : index
    %c0_160 = arith.constant 0 : index
    %238 = vector.load %arg1[%c0_159, %c0_160] : memref<32x2xf32, #tpu.memory_space<vmem>>, vector<32x2xf32>
    %239 = arith.mulf %237, %238 : vector<32x2xf32>
    %240 = arith.addf %227, %239 : vector<32x2xf32>
    %c0_161 = arith.constant 0 : index
    %c0_162 = arith.constant 0 : index
    %241 = vector.load %arg18[%c0_161, %c0_162] : memref<64x32xbf16, #tpu.memory_space<vmem>>, vector<64x32xbf16>
    %242 = arith.truncf %240 : vector<32x2xf32> to vector<32x2xbf16>
    %cst_163 = arith.constant dense<0.000000e+00> : vector<64x2xf32>
    %243 = tpu.matmul %241, %242, %cst_163 {dimension_numbers = #tpu.dot_dimension_numbers<[1], [0], [0], [1], [0, 0, 1, 1], [], []>} : vector<64x32xbf16>, vector<32x2xbf16>, vector<64x2xf32> -> vector<64x2xf32>
    %c0_164 = arith.constant 0 : index
    %c0_165 = arith.constant 0 : index
    %244 = vector.load %arg19[%c0_164, %c0_165] : memref<64x1xf32, #tpu.memory_space<vmem>>, vector<64x1xf32>
    %245 = vector.broadcast %244 : vector<64x1xf32> to vector<64x2xf32>
    %246 = arith.addf %243, %245 : vector<64x2xf32>
    %cst_166 = arith.constant 0.000000e+00 : f32
    %247 = vector.broadcast %cst_166 : f32 to vector<64x2xf32>
    %248 = arith.maximumf %246, %247 : vector<64x2xf32>
    %249 = arith.truncf %248 : vector<64x2xf32> to vector<64x2xbf16>
    %c0_167 = arith.constant 0 : index
    %c0_168 = arith.constant 0 : index
    %250 = vector.load %arg20[%c0_167, %c0_168] : memref<128x64xbf16, #tpu.memory_space<vmem>>, vector<128x64xbf16>
    %cst_169 = arith.constant dense<0.000000e+00> : vector<128x2xf32>
    %251 = tpu.matmul %250, %249, %cst_169 {dimension_numbers = #tpu.dot_dimension_numbers<[1], [0], [0], [1], [0, 0, 1, 1], [], []>} : vector<128x64xbf16>, vector<64x2xbf16>, vector<128x2xf32> -> vector<128x2xf32>
    %cst_170 = arith.constant 0.000000e+00 : f32
    %252 = vector.broadcast %cst_170 : f32 to vector<32x8xf32>
    %253 = vector.extract_strided_slice %251 {offsets = [0, 0], sizes = [32, 2], strides = [1, 1]} : vector<128x2xf32> to vector<32x2xf32>
    %254 = arith.truncf %253 : vector<32x2xf32> to vector<32x2xbf16>
    %c0_171 = arith.constant 0 : index
    %c0_172 = arith.constant 0 : index
    %c0_173 = arith.constant 0 : index
    %255 = vector.load %arg21[%c0_171, %c0_172, %c0_173] : memref<4x2x8xbf16, #tpu.memory_space<vmem>>, vector<1x2x8xbf16>
    %256 = vector.shape_cast %255 : vector<1x2x8xbf16> to vector<2x8xbf16>
    %cst_174 = arith.constant dense<0.000000e+00> : vector<32x8xf32>
    %257 = tpu.matmul %254, %256, %cst_174 {dimension_numbers = #tpu.dot_dimension_numbers<[1], [0], [0], [1], [0, 0, 1, 1], [], []>} : vector<32x2xbf16>, vector<2x8xbf16>, vector<32x8xf32> -> vector<32x8xf32>
    %258 = arith.addf %252, %257 : vector<32x8xf32>
    %259 = vector.extract_strided_slice %251 {offsets = [32, 0], sizes = [32, 2], strides = [1, 1]} : vector<128x2xf32> to vector<32x2xf32>
    %260 = arith.truncf %259 : vector<32x2xf32> to vector<32x2xbf16>
    %c1_175 = arith.constant 1 : index
    %c0_176 = arith.constant 0 : index
    %c0_177 = arith.constant 0 : index
    %261 = vector.load %arg21[%c1_175, %c0_176, %c0_177] : memref<4x2x8xbf16, #tpu.memory_space<vmem>>, vector<1x2x8xbf16>
    %262 = vector.shape_cast %261 : vector<1x2x8xbf16> to vector<2x8xbf16>
    %cst_178 = arith.constant dense<0.000000e+00> : vector<32x8xf32>
    %263 = tpu.matmul %260, %262, %cst_178 {dimension_numbers = #tpu.dot_dimension_numbers<[1], [0], [0], [1], [0, 0, 1, 1], [], []>} : vector<32x2xbf16>, vector<2x8xbf16>, vector<32x8xf32> -> vector<32x8xf32>
    %264 = arith.addf %258, %263 : vector<32x8xf32>
    %265 = vector.extract_strided_slice %251 {offsets = [64, 0], sizes = [32, 2], strides = [1, 1]} : vector<128x2xf32> to vector<32x2xf32>
    %266 = arith.truncf %265 : vector<32x2xf32> to vector<32x2xbf16>
    %c2_179 = arith.constant 2 : index
    %c0_180 = arith.constant 0 : index
    %c0_181 = arith.constant 0 : index
    %267 = vector.load %arg21[%c2_179, %c0_180, %c0_181] : memref<4x2x8xbf16, #tpu.memory_space<vmem>>, vector<1x2x8xbf16>
    %268 = vector.shape_cast %267 : vector<1x2x8xbf16> to vector<2x8xbf16>
    %cst_182 = arith.constant dense<0.000000e+00> : vector<32x8xf32>
    %269 = tpu.matmul %266, %268, %cst_182 {dimension_numbers = #tpu.dot_dimension_numbers<[1], [0], [0], [1], [0, 0, 1, 1], [], []>} : vector<32x2xbf16>, vector<2x8xbf16>, vector<32x8xf32> -> vector<32x8xf32>
    %270 = arith.addf %264, %269 : vector<32x8xf32>
    %271 = vector.extract_strided_slice %251 {offsets = [96, 0], sizes = [32, 2], strides = [1, 1]} : vector<128x2xf32> to vector<32x2xf32>
    %272 = arith.truncf %271 : vector<32x2xf32> to vector<32x2xbf16>
    %c3_183 = arith.constant 3 : index
    %c0_184 = arith.constant 0 : index
    %c0_185 = arith.constant 0 : index
    %273 = vector.load %arg21[%c3_183, %c0_184, %c0_185] : memref<4x2x8xbf16, #tpu.memory_space<vmem>>, vector<1x2x8xbf16>
    %274 = vector.shape_cast %273 : vector<1x2x8xbf16> to vector<2x8xbf16>
    %cst_186 = arith.constant dense<0.000000e+00> : vector<32x8xf32>
    %275 = tpu.matmul %272, %274, %cst_186 {dimension_numbers = #tpu.dot_dimension_numbers<[1], [0], [0], [1], [0, 0, 1, 1], [], []>} : vector<32x2xbf16>, vector<2x8xbf16>, vector<32x8xf32> -> vector<32x8xf32>
    %276 = arith.addf %270, %275 : vector<32x8xf32>
    %c0_187 = arith.constant 0 : index
    %c0_188 = arith.constant 0 : index
    %277 = vector.load %arg22[%c0_187, %c0_188] : memref<32x1xf32, #tpu.memory_space<vmem>>, vector<32x1xf32>
    %278 = vector.broadcast %277 : vector<32x1xf32> to vector<32x8xf32>
    %279 = arith.addf %276, %278 : vector<32x8xf32>
    %cst_189 = arith.constant 0.000000e+00 : f32
    %280 = vector.broadcast %cst_189 : f32 to vector<32x8xf32>
    %281 = arith.maximumf %279, %280 : vector<32x8xf32>
    %282 = arith.truncf %281 : vector<32x8xf32> to vector<32x8xbf16>
    %c0_190 = arith.constant 0 : index
    %c0_191 = arith.constant 0 : index
    %283 = vector.load %arg23[%c0_190, %c0_191] : memref<144x32xbf16, #tpu.memory_space<vmem>>, vector<144x32xbf16>
    %cst_192 = arith.constant dense<0.000000e+00> : vector<144x8xf32>
    %284 = tpu.matmul %283, %282, %cst_192 {dimension_numbers = #tpu.dot_dimension_numbers<[1], [0], [0], [1], [0, 0, 1, 1], [], []>} : vector<144x32xbf16>, vector<32x8xbf16>, vector<144x8xf32> -> vector<144x8xf32>
    %cst_193 = arith.constant 0.000000e+00 : f32
    %285 = vector.broadcast %cst_193 : f32 to vector<16x32xf32>
    %286 = vector.extract_strided_slice %284 {offsets = [0, 0], sizes = [16, 8], strides = [1, 1]} : vector<144x8xf32> to vector<16x8xf32>
    %287 = arith.truncf %286 : vector<16x8xf32> to vector<16x8xbf16>
    %c0_194 = arith.constant 0 : index
    %c0_195 = arith.constant 0 : index
    %c0_196 = arith.constant 0 : index
    %288 = vector.load %arg24[%c0_194, %c0_195, %c0_196] : memref<9x8x32xbf16, #tpu.memory_space<vmem>>, vector<1x8x32xbf16>
    %289 = vector.shape_cast %288 : vector<1x8x32xbf16> to vector<8x32xbf16>
    %cst_197 = arith.constant dense<0.000000e+00> : vector<16x32xf32>
    %290 = tpu.matmul %287, %289, %cst_197 {dimension_numbers = #tpu.dot_dimension_numbers<[1], [0], [0], [1], [0, 0, 1, 1], [], []>} : vector<16x8xbf16>, vector<8x32xbf16>, vector<16x32xf32> -> vector<16x32xf32>
    %291 = arith.addf %285, %290 : vector<16x32xf32>
    %292 = vector.extract_strided_slice %284 {offsets = [16, 0], sizes = [16, 8], strides = [1, 1]} : vector<144x8xf32> to vector<16x8xf32>
    %293 = arith.truncf %292 : vector<16x8xf32> to vector<16x8xbf16>
    %c1_198 = arith.constant 1 : index
    %c0_199 = arith.constant 0 : index
    %c0_200 = arith.constant 0 : index
    %294 = vector.load %arg24[%c1_198, %c0_199, %c0_200] : memref<9x8x32xbf16, #tpu.memory_space<vmem>>, vector<1x8x32xbf16>
    %295 = vector.shape_cast %294 : vector<1x8x32xbf16> to vector<8x32xbf16>
    %cst_201 = arith.constant dense<0.000000e+00> : vector<16x32xf32>
    %296 = tpu.matmul %293, %295, %cst_201 {dimension_numbers = #tpu.dot_dimension_numbers<[1], [0], [0], [1], [0, 0, 1, 1], [], []>} : vector<16x8xbf16>, vector<8x32xbf16>, vector<16x32xf32> -> vector<16x32xf32>
    %297 = arith.addf %291, %296 : vector<16x32xf32>
    %298 = vector.extract_strided_slice %284 {offsets = [32, 0], sizes = [16, 8], strides = [1, 1]} : vector<144x8xf32> to vector<16x8xf32>
    %299 = arith.truncf %298 : vector<16x8xf32> to vector<16x8xbf16>
    %c2_202 = arith.constant 2 : index
    %c0_203 = arith.constant 0 : index
    %c0_204 = arith.constant 0 : index
    %300 = vector.load %arg24[%c2_202, %c0_203, %c0_204] : memref<9x8x32xbf16, #tpu.memory_space<vmem>>, vector<1x8x32xbf16>
    %301 = vector.shape_cast %300 : vector<1x8x32xbf16> to vector<8x32xbf16>
    %cst_205 = arith.constant dense<0.000000e+00> : vector<16x32xf32>
    %302 = tpu.matmul %299, %301, %cst_205 {dimension_numbers = #tpu.dot_dimension_numbers<[1], [0], [0], [1], [0, 0, 1, 1], [], []>} : vector<16x8xbf16>, vector<8x32xbf16>, vector<16x32xf32> -> vector<16x32xf32>
    %303 = arith.addf %297, %302 : vector<16x32xf32>
    %304 = vector.extract_strided_slice %284 {offsets = [48, 0], sizes = [16, 8], strides = [1, 1]} : vector<144x8xf32> to vector<16x8xf32>
    %305 = arith.truncf %304 : vector<16x8xf32> to vector<16x8xbf16>
    %c3_206 = arith.constant 3 : index
    %c0_207 = arith.constant 0 : index
    %c0_208 = arith.constant 0 : index
    %306 = vector.load %arg24[%c3_206, %c0_207, %c0_208] : memref<9x8x32xbf16, #tpu.memory_space<vmem>>, vector<1x8x32xbf16>
    %307 = vector.shape_cast %306 : vector<1x8x32xbf16> to vector<8x32xbf16>
    %cst_209 = arith.constant dense<0.000000e+00> : vector<16x32xf32>
    %308 = tpu.matmul %305, %307, %cst_209 {dimension_numbers = #tpu.dot_dimension_numbers<[1], [0], [0], [1], [0, 0, 1, 1], [], []>} : vector<16x8xbf16>, vector<8x32xbf16>, vector<16x32xf32> -> vector<16x32xf32>
    %309 = arith.addf %303, %308 : vector<16x32xf32>
    %310 = vector.extract_strided_slice %284 {offsets = [64, 0], sizes = [16, 8], strides = [1, 1]} : vector<144x8xf32> to vector<16x8xf32>
    %311 = arith.truncf %310 : vector<16x8xf32> to vector<16x8xbf16>
    %c4_210 = arith.constant 4 : index
    %c0_211 = arith.constant 0 : index
    %c0_212 = arith.constant 0 : index
    %312 = vector.load %arg24[%c4_210, %c0_211, %c0_212] : memref<9x8x32xbf16, #tpu.memory_space<vmem>>, vector<1x8x32xbf16>
    %313 = vector.shape_cast %312 : vector<1x8x32xbf16> to vector<8x32xbf16>
    %cst_213 = arith.constant dense<0.000000e+00> : vector<16x32xf32>
    %314 = tpu.matmul %311, %313, %cst_213 {dimension_numbers = #tpu.dot_dimension_numbers<[1], [0], [0], [1], [0, 0, 1, 1], [], []>} : vector<16x8xbf16>, vector<8x32xbf16>, vector<16x32xf32> -> vector<16x32xf32>
    %315 = arith.addf %309, %314 : vector<16x32xf32>
    %316 = vector.extract_strided_slice %284 {offsets = [80, 0], sizes = [16, 8], strides = [1, 1]} : vector<144x8xf32> to vector<16x8xf32>
    %317 = arith.truncf %316 : vector<16x8xf32> to vector<16x8xbf16>
    %c5_214 = arith.constant 5 : index
    %c0_215 = arith.constant 0 : index
    %c0_216 = arith.constant 0 : index
    %318 = vector.load %arg24[%c5_214, %c0_215, %c0_216] : memref<9x8x32xbf16, #tpu.memory_space<vmem>>, vector<1x8x32xbf16>
    %319 = vector.shape_cast %318 : vector<1x8x32xbf16> to vector<8x32xbf16>
    %cst_217 = arith.constant dense<0.000000e+00> : vector<16x32xf32>
    %320 = tpu.matmul %317, %319, %cst_217 {dimension_numbers = #tpu.dot_dimension_numbers<[1], [0], [0], [1], [0, 0, 1, 1], [], []>} : vector<16x8xbf16>, vector<8x32xbf16>, vector<16x32xf32> -> vector<16x32xf32>
    %321 = arith.addf %315, %320 : vector<16x32xf32>
    %322 = vector.extract_strided_slice %284 {offsets = [96, 0], sizes = [16, 8], strides = [1, 1]} : vector<144x8xf32> to vector<16x8xf32>
    %323 = arith.truncf %322 : vector<16x8xf32> to vector<16x8xbf16>
    %c6_218 = arith.constant 6 : index
    %c0_219 = arith.constant 0 : index
    %c0_220 = arith.constant 0 : index
    %324 = vector.load %arg24[%c6_218, %c0_219, %c0_220] : memref<9x8x32xbf16, #tpu.memory_space<vmem>>, vector<1x8x32xbf16>
    %325 = vector.shape_cast %324 : vector<1x8x32xbf16> to vector<8x32xbf16>
    %cst_221 = arith.constant dense<0.000000e+00> : vector<16x32xf32>
    %326 = tpu.matmul %323, %325, %cst_221 {dimension_numbers = #tpu.dot_dimension_numbers<[1], [0], [0], [1], [0, 0, 1, 1], [], []>} : vector<16x8xbf16>, vector<8x32xbf16>, vector<16x32xf32> -> vector<16x32xf32>
    %327 = arith.addf %321, %326 : vector<16x32xf32>
    %328 = vector.extract_strided_slice %284 {offsets = [112, 0], sizes = [16, 8], strides = [1, 1]} : vector<144x8xf32> to vector<16x8xf32>
    %329 = arith.truncf %328 : vector<16x8xf32> to vector<16x8xbf16>
    %c7_222 = arith.constant 7 : index
    %c0_223 = arith.constant 0 : index
    %c0_224 = arith.constant 0 : index
    %330 = vector.load %arg24[%c7_222, %c0_223, %c0_224] : memref<9x8x32xbf16, #tpu.memory_space<vmem>>, vector<1x8x32xbf16>
    %331 = vector.shape_cast %330 : vector<1x8x32xbf16> to vector<8x32xbf16>
    %cst_225 = arith.constant dense<0.000000e+00> : vector<16x32xf32>
    %332 = tpu.matmul %329, %331, %cst_225 {dimension_numbers = #tpu.dot_dimension_numbers<[1], [0], [0], [1], [0, 0, 1, 1], [], []>} : vector<16x8xbf16>, vector<8x32xbf16>, vector<16x32xf32> -> vector<16x32xf32>
    %333 = arith.addf %327, %332 : vector<16x32xf32>
    %334 = vector.extract_strided_slice %284 {offsets = [128, 0], sizes = [16, 8], strides = [1, 1]} : vector<144x8xf32> to vector<16x8xf32>
    %335 = arith.truncf %334 : vector<16x8xf32> to vector<16x8xbf16>
    %c8_226 = arith.constant 8 : index
    %c0_227 = arith.constant 0 : index
    %c0_228 = arith.constant 0 : index
    %336 = vector.load %arg24[%c8_226, %c0_227, %c0_228] : memref<9x8x32xbf16, #tpu.memory_space<vmem>>, vector<1x8x32xbf16>
    %337 = vector.shape_cast %336 : vector<1x8x32xbf16> to vector<8x32xbf16>
    %cst_229 = arith.constant dense<0.000000e+00> : vector<16x32xf32>
    %338 = tpu.matmul %335, %337, %cst_229 {dimension_numbers = #tpu.dot_dimension_numbers<[1], [0], [0], [1], [0, 0, 1, 1], [], []>} : vector<16x8xbf16>, vector<8x32xbf16>, vector<16x32xf32> -> vector<16x32xf32>
    %339 = arith.addf %333, %338 : vector<16x32xf32>
    %c0_230 = arith.constant 0 : index
    %c0_231 = arith.constant 0 : index
    %340 = vector.load %arg25[%c0_230, %c0_231] : memref<16x1xf32, #tpu.memory_space<vmem>>, vector<16x1xf32>
    %341 = vector.broadcast %340 : vector<16x1xf32> to vector<16x32xf32>
    %342 = arith.addf %339, %341 : vector<16x32xf32>
    %cst_232 = arith.constant 0.000000e+00 : f32
    %343 = vector.broadcast %cst_232 : f32 to vector<16x32xf32>
    %344 = arith.maximumf %342, %343 : vector<16x32xf32>
    %345 = arith.truncf %344 : vector<16x32xf32> to vector<16x32xbf16>
    %c0_233 = arith.constant 0 : index
    %c0_234 = arith.constant 0 : index
    %346 = vector.load %arg26[%c0_233, %c0_234] : memref<72x16xbf16, #tpu.memory_space<vmem>>, vector<72x16xbf16>
    %cst_235 = arith.constant dense<0.000000e+00> : vector<72x32xf32>
    %347 = tpu.matmul %346, %345, %cst_235 {dimension_numbers = #tpu.dot_dimension_numbers<[1], [0], [0], [1], [0, 0, 1, 1], [], []>} : vector<72x16xbf16>, vector<16x32xbf16>, vector<72x32xf32> -> vector<72x32xf32>
    %cst_236 = arith.constant 0.000000e+00 : f32
    %348 = vector.broadcast %cst_236 : f32 to vector<8x128xf32>
    %349 = vector.extract_strided_slice %347 {offsets = [0, 0], sizes = [8, 32], strides = [1, 1]} : vector<72x32xf32> to vector<8x32xf32>
    %350 = arith.truncf %349 : vector<8x32xf32> to vector<8x32xbf16>
    %c0_237 = arith.constant 0 : index
    %c0_238 = arith.constant 0 : index
    %c0_239 = arith.constant 0 : index
    %351 = vector.load %arg27[%c0_237, %c0_238, %c0_239] : memref<9x32x128xbf16, #tpu.memory_space<vmem>>, vector<1x32x128xbf16>
    %352 = vector.shape_cast %351 : vector<1x32x128xbf16> to vector<32x128xbf16>
    %cst_240 = arith.constant dense<0.000000e+00> : vector<8x128xf32>
    %353 = tpu.matmul %350, %352, %cst_240 {dimension_numbers = #tpu.dot_dimension_numbers<[1], [0], [0], [1], [0, 0, 1, 1], [], []>} : vector<8x32xbf16>, vector<32x128xbf16>, vector<8x128xf32> -> vector<8x128xf32>
    %354 = arith.addf %348, %353 : vector<8x128xf32>
    %355 = vector.extract_strided_slice %347 {offsets = [8, 0], sizes = [8, 32], strides = [1, 1]} : vector<72x32xf32> to vector<8x32xf32>
    %356 = arith.truncf %355 : vector<8x32xf32> to vector<8x32xbf16>
    %c1_241 = arith.constant 1 : index
    %c0_242 = arith.constant 0 : index
    %c0_243 = arith.constant 0 : index
    %357 = vector.load %arg27[%c1_241, %c0_242, %c0_243] : memref<9x32x128xbf16, #tpu.memory_space<vmem>>, vector<1x32x128xbf16>
    %358 = vector.shape_cast %357 : vector<1x32x128xbf16> to vector<32x128xbf16>
    %cst_244 = arith.constant dense<0.000000e+00> : vector<8x128xf32>
    %359 = tpu.matmul %356, %358, %cst_244 {dimension_numbers = #tpu.dot_dimension_numbers<[1], [0], [0], [1], [0, 0, 1, 1], [], []>} : vector<8x32xbf16>, vector<32x128xbf16>, vector<8x128xf32> -> vector<8x128xf32>
    %360 = arith.addf %354, %359 : vector<8x128xf32>
    %361 = vector.extract_strided_slice %347 {offsets = [16, 0], sizes = [8, 32], strides = [1, 1]} : vector<72x32xf32> to vector<8x32xf32>
    %362 = arith.truncf %361 : vector<8x32xf32> to vector<8x32xbf16>
    %c2_245 = arith.constant 2 : index
    %c0_246 = arith.constant 0 : index
    %c0_247 = arith.constant 0 : index
    %363 = vector.load %arg27[%c2_245, %c0_246, %c0_247] : memref<9x32x128xbf16, #tpu.memory_space<vmem>>, vector<1x32x128xbf16>
    %364 = vector.shape_cast %363 : vector<1x32x128xbf16> to vector<32x128xbf16>
    %cst_248 = arith.constant dense<0.000000e+00> : vector<8x128xf32>
    %365 = tpu.matmul %362, %364, %cst_248 {dimension_numbers = #tpu.dot_dimension_numbers<[1], [0], [0], [1], [0, 0, 1, 1], [], []>} : vector<8x32xbf16>, vector<32x128xbf16>, vector<8x128xf32> -> vector<8x128xf32>
    %366 = arith.addf %360, %365 : vector<8x128xf32>
    %367 = vector.extract_strided_slice %347 {offsets = [24, 0], sizes = [8, 32], strides = [1, 1]} : vector<72x32xf32> to vector<8x32xf32>
    %368 = arith.truncf %367 : vector<8x32xf32> to vector<8x32xbf16>
    %c3_249 = arith.constant 3 : index
    %c0_250 = arith.constant 0 : index
    %c0_251 = arith.constant 0 : index
    %369 = vector.load %arg27[%c3_249, %c0_250, %c0_251] : memref<9x32x128xbf16, #tpu.memory_space<vmem>>, vector<1x32x128xbf16>
    %370 = vector.shape_cast %369 : vector<1x32x128xbf16> to vector<32x128xbf16>
    %cst_252 = arith.constant dense<0.000000e+00> : vector<8x128xf32>
    %371 = tpu.matmul %368, %370, %cst_252 {dimension_numbers = #tpu.dot_dimension_numbers<[1], [0], [0], [1], [0, 0, 1, 1], [], []>} : vector<8x32xbf16>, vector<32x128xbf16>, vector<8x128xf32> -> vector<8x128xf32>
    %372 = arith.addf %366, %371 : vector<8x128xf32>
    %373 = vector.extract_strided_slice %347 {offsets = [32, 0], sizes = [8, 32], strides = [1, 1]} : vector<72x32xf32> to vector<8x32xf32>
    %374 = arith.truncf %373 : vector<8x32xf32> to vector<8x32xbf16>
    %c4_253 = arith.constant 4 : index
    %c0_254 = arith.constant 0 : index
    %c0_255 = arith.constant 0 : index
    %375 = vector.load %arg27[%c4_253, %c0_254, %c0_255] : memref<9x32x128xbf16, #tpu.memory_space<vmem>>, vector<1x32x128xbf16>
    %376 = vector.shape_cast %375 : vector<1x32x128xbf16> to vector<32x128xbf16>
    %cst_256 = arith.constant dense<0.000000e+00> : vector<8x128xf32>
    %377 = tpu.matmul %374, %376, %cst_256 {dimension_numbers = #tpu.dot_dimension_numbers<[1], [0], [0], [1], [0, 0, 1, 1], [], []>} : vector<8x32xbf16>, vector<32x128xbf16>, vector<8x128xf32> -> vector<8x128xf32>
    %378 = arith.addf %372, %377 : vector<8x128xf32>
    %379 = vector.extract_strided_slice %347 {offsets = [40, 0], sizes = [8, 32], strides = [1, 1]} : vector<72x32xf32> to vector<8x32xf32>
    %380 = arith.truncf %379 : vector<8x32xf32> to vector<8x32xbf16>
    %c5_257 = arith.constant 5 : index
    %c0_258 = arith.constant 0 : index
    %c0_259 = arith.constant 0 : index
    %381 = vector.load %arg27[%c5_257, %c0_258, %c0_259] : memref<9x32x128xbf16, #tpu.memory_space<vmem>>, vector<1x32x128xbf16>
    %382 = vector.shape_cast %381 : vector<1x32x128xbf16> to vector<32x128xbf16>
    %cst_260 = arith.constant dense<0.000000e+00> : vector<8x128xf32>
    %383 = tpu.matmul %380, %382, %cst_260 {dimension_numbers = #tpu.dot_dimension_numbers<[1], [0], [0], [1], [0, 0, 1, 1], [], []>} : vector<8x32xbf16>, vector<32x128xbf16>, vector<8x128xf32> -> vector<8x128xf32>
    %384 = arith.addf %378, %383 : vector<8x128xf32>
    %385 = vector.extract_strided_slice %347 {offsets = [48, 0], sizes = [8, 32], strides = [1, 1]} : vector<72x32xf32> to vector<8x32xf32>
    %386 = arith.truncf %385 : vector<8x32xf32> to vector<8x32xbf16>
    %c6_261 = arith.constant 6 : index
    %c0_262 = arith.constant 0 : index
    %c0_263 = arith.constant 0 : index
    %387 = vector.load %arg27[%c6_261, %c0_262, %c0_263] : memref<9x32x128xbf16, #tpu.memory_space<vmem>>, vector<1x32x128xbf16>
    %388 = vector.shape_cast %387 : vector<1x32x128xbf16> to vector<32x128xbf16>
    %cst_264 = arith.constant dense<0.000000e+00> : vector<8x128xf32>
    %389 = tpu.matmul %386, %388, %cst_264 {dimension_numbers = #tpu.dot_dimension_numbers<[1], [0], [0], [1], [0, 0, 1, 1], [], []>} : vector<8x32xbf16>, vector<32x128xbf16>, vector<8x128xf32> -> vector<8x128xf32>
    %390 = arith.addf %384, %389 : vector<8x128xf32>
    %391 = vector.extract_strided_slice %347 {offsets = [56, 0], sizes = [8, 32], strides = [1, 1]} : vector<72x32xf32> to vector<8x32xf32>
    %392 = arith.truncf %391 : vector<8x32xf32> to vector<8x32xbf16>
    %c7_265 = arith.constant 7 : index
    %c0_266 = arith.constant 0 : index
    %c0_267 = arith.constant 0 : index
    %393 = vector.load %arg27[%c7_265, %c0_266, %c0_267] : memref<9x32x128xbf16, #tpu.memory_space<vmem>>, vector<1x32x128xbf16>
    %394 = vector.shape_cast %393 : vector<1x32x128xbf16> to vector<32x128xbf16>
    %cst_268 = arith.constant dense<0.000000e+00> : vector<8x128xf32>
    %395 = tpu.matmul %392, %394, %cst_268 {dimension_numbers = #tpu.dot_dimension_numbers<[1], [0], [0], [1], [0, 0, 1, 1], [], []>} : vector<8x32xbf16>, vector<32x128xbf16>, vector<8x128xf32> -> vector<8x128xf32>
    %396 = arith.addf %390, %395 : vector<8x128xf32>
    %397 = vector.extract_strided_slice %347 {offsets = [64, 0], sizes = [8, 32], strides = [1, 1]} : vector<72x32xf32> to vector<8x32xf32>
    %398 = arith.truncf %397 : vector<8x32xf32> to vector<8x32xbf16>
    %c8_269 = arith.constant 8 : index
    %c0_270 = arith.constant 0 : index
    %c0_271 = arith.constant 0 : index
    %399 = vector.load %arg27[%c8_269, %c0_270, %c0_271] : memref<9x32x128xbf16, #tpu.memory_space<vmem>>, vector<1x32x128xbf16>
    %400 = vector.shape_cast %399 : vector<1x32x128xbf16> to vector<32x128xbf16>
    %cst_272 = arith.constant dense<0.000000e+00> : vector<8x128xf32>
    %401 = tpu.matmul %398, %400, %cst_272 {dimension_numbers = #tpu.dot_dimension_numbers<[1], [0], [0], [1], [0, 0, 1, 1], [], []>} : vector<8x32xbf16>, vector<32x128xbf16>, vector<8x128xf32> -> vector<8x128xf32>
    %402 = arith.addf %396, %401 : vector<8x128xf32>
    %c0_273 = arith.constant 0 : index
    %c0_274 = arith.constant 0 : index
    %403 = vector.load %arg28[%c0_273, %c0_274] : memref<8x1xf32, #tpu.memory_space<vmem>>, vector<8x1xf32>
    %404 = vector.broadcast %403 : vector<8x1xf32> to vector<8x128xf32>
    %405 = arith.addf %402, %404 : vector<8x128xf32>
    %cst_275 = arith.constant 0.000000e+00 : f32
    %406 = vector.broadcast %cst_275 : f32 to vector<8x128xf32>
    %407 = arith.maximumf %405, %406 : vector<8x128xf32>
    %408 = arith.truncf %407 : vector<8x128xf32> to vector<8x128xbf16>
    %c0_276 = arith.constant 0 : index
    %c0_277 = arith.constant 0 : index
    %409 = vector.load %arg29[%c0_276, %c0_277] : memref<36x8xbf16, #tpu.memory_space<vmem>>, vector<36x8xbf16>
    %cst_278 = arith.constant dense<0.000000e+00> : vector<36x128xf32>
    %410 = tpu.matmul %409, %408, %cst_278 {dimension_numbers = #tpu.dot_dimension_numbers<[1], [0], [0], [1], [0, 0, 1, 1], [], []>} : vector<36x8xbf16>, vector<8x128xbf16>, vector<36x128xf32> -> vector<36x128xf32>
    %cst_279 = arith.constant 0.000000e+00 : f32
    %411 = vector.broadcast %cst_279 : f32 to vector<4x512xf32>
    %412 = vector.extract_strided_slice %410 {offsets = [0, 0], sizes = [4, 128], strides = [1, 1]} : vector<36x128xf32> to vector<4x128xf32>
    %413 = arith.truncf %412 : vector<4x128xf32> to vector<4x128xbf16>
    %c0_280 = arith.constant 0 : index
    %c0_281 = arith.constant 0 : index
    %c0_282 = arith.constant 0 : index
    %414 = vector.load %arg30[%c0_280, %c0_281, %c0_282] : memref<9x128x512xbf16, #tpu.memory_space<vmem>>, vector<1x128x512xbf16>
    %415 = vector.shape_cast %414 : vector<1x128x512xbf16> to vector<128x512xbf16>
    %cst_283 = arith.constant dense<0.000000e+00> : vector<4x512xf32>
    %416 = tpu.matmul %413, %415, %cst_283 {dimension_numbers = #tpu.dot_dimension_numbers<[1], [0], [0], [1], [0, 0, 1, 1], [], []>} : vector<4x128xbf16>, vector<128x512xbf16>, vector<4x512xf32> -> vector<4x512xf32>
    %417 = arith.addf %411, %416 : vector<4x512xf32>
    %418 = vector.extract_strided_slice %410 {offsets = [4, 0], sizes = [4, 128], strides = [1, 1]} : vector<36x128xf32> to vector<4x128xf32>
    %419 = arith.truncf %418 : vector<4x128xf32> to vector<4x128xbf16>
    %c1_284 = arith.constant 1 : index
    %c0_285 = arith.constant 0 : index
    %c0_286 = arith.constant 0 : index
    %420 = vector.load %arg30[%c1_284, %c0_285, %c0_286] : memref<9x128x512xbf16, #tpu.memory_space<vmem>>, vector<1x128x512xbf16>
    %421 = vector.shape_cast %420 : vector<1x128x512xbf16> to vector<128x512xbf16>
    %cst_287 = arith.constant dense<0.000000e+00> : vector<4x512xf32>
    %422 = tpu.matmul %419, %421, %cst_287 {dimension_numbers = #tpu.dot_dimension_numbers<[1], [0], [0], [1], [0, 0, 1, 1], [], []>} : vector<4x128xbf16>, vector<128x512xbf16>, vector<4x512xf32> -> vector<4x512xf32>
    %423 = arith.addf %417, %422 : vector<4x512xf32>
    %424 = vector.extract_strided_slice %410 {offsets = [8, 0], sizes = [4, 128], strides = [1, 1]} : vector<36x128xf32> to vector<4x128xf32>
    %425 = arith.truncf %424 : vector<4x128xf32> to vector<4x128xbf16>
    %c2_288 = arith.constant 2 : index
    %c0_289 = arith.constant 0 : index
    %c0_290 = arith.constant 0 : index
    %426 = vector.load %arg30[%c2_288, %c0_289, %c0_290] : memref<9x128x512xbf16, #tpu.memory_space<vmem>>, vector<1x128x512xbf16>
    %427 = vector.shape_cast %426 : vector<1x128x512xbf16> to vector<128x512xbf16>
    %cst_291 = arith.constant dense<0.000000e+00> : vector<4x512xf32>
    %428 = tpu.matmul %425, %427, %cst_291 {dimension_numbers = #tpu.dot_dimension_numbers<[1], [0], [0], [1], [0, 0, 1, 1], [], []>} : vector<4x128xbf16>, vector<128x512xbf16>, vector<4x512xf32> -> vector<4x512xf32>
    %429 = arith.addf %423, %428 : vector<4x512xf32>
    %430 = vector.extract_strided_slice %410 {offsets = [12, 0], sizes = [4, 128], strides = [1, 1]} : vector<36x128xf32> to vector<4x128xf32>
    %431 = arith.truncf %430 : vector<4x128xf32> to vector<4x128xbf16>
    %c3_292 = arith.constant 3 : index
    %c0_293 = arith.constant 0 : index
    %c0_294 = arith.constant 0 : index
    %432 = vector.load %arg30[%c3_292, %c0_293, %c0_294] : memref<9x128x512xbf16, #tpu.memory_space<vmem>>, vector<1x128x512xbf16>
    %433 = vector.shape_cast %432 : vector<1x128x512xbf16> to vector<128x512xbf16>
    %cst_295 = arith.constant dense<0.000000e+00> : vector<4x512xf32>
    %434 = tpu.matmul %431, %433, %cst_295 {dimension_numbers = #tpu.dot_dimension_numbers<[1], [0], [0], [1], [0, 0, 1, 1], [], []>} : vector<4x128xbf16>, vector<128x512xbf16>, vector<4x512xf32> -> vector<4x512xf32>
    %435 = arith.addf %429, %434 : vector<4x512xf32>
    %436 = vector.extract_strided_slice %410 {offsets = [16, 0], sizes = [4, 128], strides = [1, 1]} : vector<36x128xf32> to vector<4x128xf32>
    %437 = arith.truncf %436 : vector<4x128xf32> to vector<4x128xbf16>
    %c4_296 = arith.constant 4 : index
    %c0_297 = arith.constant 0 : index
    %c0_298 = arith.constant 0 : index
    %438 = vector.load %arg30[%c4_296, %c0_297, %c0_298] : memref<9x128x512xbf16, #tpu.memory_space<vmem>>, vector<1x128x512xbf16>
    %439 = vector.shape_cast %438 : vector<1x128x512xbf16> to vector<128x512xbf16>
    %cst_299 = arith.constant dense<0.000000e+00> : vector<4x512xf32>
    %440 = tpu.matmul %437, %439, %cst_299 {dimension_numbers = #tpu.dot_dimension_numbers<[1], [0], [0], [1], [0, 0, 1, 1], [], []>} : vector<4x128xbf16>, vector<128x512xbf16>, vector<4x512xf32> -> vector<4x512xf32>
    %441 = arith.addf %435, %440 : vector<4x512xf32>
    %442 = vector.extract_strided_slice %410 {offsets = [20, 0], sizes = [4, 128], strides = [1, 1]} : vector<36x128xf32> to vector<4x128xf32>
    %443 = arith.truncf %442 : vector<4x128xf32> to vector<4x128xbf16>
    %c5_300 = arith.constant 5 : index
    %c0_301 = arith.constant 0 : index
    %c0_302 = arith.constant 0 : index
    %444 = vector.load %arg30[%c5_300, %c0_301, %c0_302] : memref<9x128x512xbf16, #tpu.memory_space<vmem>>, vector<1x128x512xbf16>
    %445 = vector.shape_cast %444 : vector<1x128x512xbf16> to vector<128x512xbf16>
    %cst_303 = arith.constant dense<0.000000e+00> : vector<4x512xf32>
    %446 = tpu.matmul %443, %445, %cst_303 {dimension_numbers = #tpu.dot_dimension_numbers<[1], [0], [0], [1], [0, 0, 1, 1], [], []>} : vector<4x128xbf16>, vector<128x512xbf16>, vector<4x512xf32> -> vector<4x512xf32>
    %447 = arith.addf %441, %446 : vector<4x512xf32>
    %448 = vector.extract_strided_slice %410 {offsets = [24, 0], sizes = [4, 128], strides = [1, 1]} : vector<36x128xf32> to vector<4x128xf32>
    %449 = arith.truncf %448 : vector<4x128xf32> to vector<4x128xbf16>
    %c6_304 = arith.constant 6 : index
    %c0_305 = arith.constant 0 : index
    %c0_306 = arith.constant 0 : index
    %450 = vector.load %arg30[%c6_304, %c0_305, %c0_306] : memref<9x128x512xbf16, #tpu.memory_space<vmem>>, vector<1x128x512xbf16>
    %451 = vector.shape_cast %450 : vector<1x128x512xbf16> to vector<128x512xbf16>
    %cst_307 = arith.constant dense<0.000000e+00> : vector<4x512xf32>
    %452 = tpu.matmul %449, %451, %cst_307 {dimension_numbers = #tpu.dot_dimension_numbers<[1], [0], [0], [1], [0, 0, 1, 1], [], []>} : vector<4x128xbf16>, vector<128x512xbf16>, vector<4x512xf32> -> vector<4x512xf32>
    %453 = arith.addf %447, %452 : vector<4x512xf32>
    %454 = vector.extract_strided_slice %410 {offsets = [28, 0], sizes = [4, 128], strides = [1, 1]} : vector<36x128xf32> to vector<4x128xf32>
    %455 = arith.truncf %454 : vector<4x128xf32> to vector<4x128xbf16>
    %c7_308 = arith.constant 7 : index
    %c0_309 = arith.constant 0 : index
    %c0_310 = arith.constant 0 : index
    %456 = vector.load %arg30[%c7_308, %c0_309, %c0_310] : memref<9x128x512xbf16, #tpu.memory_space<vmem>>, vector<1x128x512xbf16>
    %457 = vector.shape_cast %456 : vector<1x128x512xbf16> to vector<128x512xbf16>
    %cst_311 = arith.constant dense<0.000000e+00> : vector<4x512xf32>
    %458 = tpu.matmul %455, %457, %cst_311 {dimension_numbers = #tpu.dot_dimension_numbers<[1], [0], [0], [1], [0, 0, 1, 1], [], []>} : vector<4x128xbf16>, vector<128x512xbf16>, vector<4x512xf32> -> vector<4x512xf32>
    %459 = arith.addf %453, %458 : vector<4x512xf32>
    %460 = vector.extract_strided_slice %410 {offsets = [32, 0], sizes = [4, 128], strides = [1, 1]} : vector<36x128xf32> to vector<4x128xf32>
    %461 = arith.truncf %460 : vector<4x128xf32> to vector<4x128xbf16>
    %c8_312 = arith.constant 8 : index
    %c0_313 = arith.constant 0 : index
    %c0_314 = arith.constant 0 : index
    %462 = vector.load %arg30[%c8_312, %c0_313, %c0_314] : memref<9x128x512xbf16, #tpu.memory_space<vmem>>, vector<1x128x512xbf16>
    %463 = vector.shape_cast %462 : vector<1x128x512xbf16> to vector<128x512xbf16>
    %cst_315 = arith.constant dense<0.000000e+00> : vector<4x512xf32>
    %464 = tpu.matmul %461, %463, %cst_315 {dimension_numbers = #tpu.dot_dimension_numbers<[1], [0], [0], [1], [0, 0, 1, 1], [], []>} : vector<4x128xbf16>, vector<128x512xbf16>, vector<4x512xf32> -> vector<4x512xf32>
    %465 = arith.addf %459, %464 : vector<4x512xf32>
    %c0_316 = arith.constant 0 : index
    %c0_317 = arith.constant 0 : index
    %466 = vector.load %arg31[%c0_316, %c0_317] : memref<4x1xf32, #tpu.memory_space<vmem>>, vector<4x1xf32>
    %467 = vector.broadcast %466 : vector<4x1xf32> to vector<4x512xf32>
    %468 = arith.addf %465, %467 : vector<4x512xf32>
    %469 = arith.negf %468 : vector<4x512xf32>
    %470 = math.exp %469 : vector<4x512xf32>
    %cst_318 = arith.constant 1.000000e+00 : f32
    %471 = vector.broadcast %cst_318 : f32 to vector<4x512xf32>
    %472 = arith.addf %471, %470 : vector<4x512xf32>
    %473 = arith.divf %471, %472 : vector<4x512xf32>
    %c0_319 = arith.constant 0 : index
    %c0_320 = arith.constant 0 : index
    %474 = vector.load %arg32[%c0_319, %c0_320] : memref<4x512xf32, #tpu.memory_space<vmem>>, vector<4x512xf32>
    tpu.vector_store %arg32[%c0_319, %c0_320], %473 {strides = array<i32>} : memref<4x512xf32, #tpu.memory_space<vmem>>, vector<4x512xf32>,
    return
  }
}

</mosaic_0001>

<llo_original>
// kernel: vae_forward.1
$region0: #{vae_forward.1}
  #allocation0 [shape = 'u32[]', space=smem, size = 0x4, offset = 0x4, fixed_abs, tag = 'smem constant byte address 0x4 - core index']
  #allocation1 [shape = 'u32[144,128]{1,0:T(1,128)}', space=vmem, size = 0x12000, scoped, tag = 'internal scratch']
  %s0 = inlined_call_operand.smem [shape: u32[35], index: -1, kind: input, shape index: {}]
  %s1 = sld [smem:[%s0]]
  %s2 = scalar_lea.smem %s0, 1
  %s3 = sld [smem:[%s2]]
  %s4 = scalar_lea.smem %s0, 2
  %s5 = sld [smem:[%s4]]
  %s6 = scalar_lea.smem %s0, 3
  %s7 = sld [smem:[%s6]]
  %s8 = scalar_lea.smem %s0, 4
  %s9 = sld [smem:[%s8]]
  %s10 = scalar_lea.smem %s0, 5
  %s11 = sld [smem:[%s10]]
  %s12 = scalar_lea.smem %s0, 6
  %s13 = sld [smem:[%s12]]
  %s14 = scalar_lea.smem %s0, 7
  %s15 = sld [smem:[%s14]]
  %s16 = scalar_lea.smem %s0, 8
  %s17 = sld [smem:[%s16]]
  %s18 = scalar_lea.smem %s0, 9
  %s19 = sld [smem:[%s18]]
  %s20 = scalar_lea.smem %s0, 10
  %s21 = sld [smem:[%s20]]
  %s22 = scalar_lea.smem %s0, 11
  %s23 = sld [smem:[%s22]]
  %s24 = scalar_lea.smem %s0, 12
  %s25 = sld [smem:[%s24]]
  %s26 = scalar_lea.smem %s0, 13
  %s27 = sld [smem:[%s26]]
  %s28 = scalar_lea.smem %s0, 14
  %s29 = sld [smem:[%s28]]
  %s30 = scalar_lea.smem %s0, 15
  %s31 = sld [smem:[%s30]]
  %s32 = scalar_lea.smem %s0, 16
  %s33 = sld [smem:[%s32]]
  %s34 = scalar_lea.smem %s0, 17
  %s35 = sld [smem:[%s34]]
  %s36 = scalar_lea.smem %s0, 18
  %s37 = sld [smem:[%s36]]
  %s38 = scalar_lea.smem %s0, 19
  %s39 = sld [smem:[%s38]]
  %s40 = scalar_lea.smem %s0, 20
  %s41 = sld [smem:[%s40]]
  %s42 = scalar_lea.smem %s0, 21
  %s43 = sld [smem:[%s42]]
  %s44 = scalar_lea.smem %s0, 22
  %s45 = sld [smem:[%s44]]
  %s46 = scalar_lea.smem %s0, 23
  %s47 = sld [smem:[%s46]]
  %s48 = scalar_lea.smem %s0, 24
  %s49 = sld [smem:[%s48]]
  %s50 = scalar_lea.smem %s0, 25
  %s51 = sld [smem:[%s50]]
  %s52 = scalar_lea.smem %s0, 26
  %s53 = sld [smem:[%s52]]
  %s54 = scalar_lea.smem %s0, 27
  %s55 = sld [smem:[%s54]]
  %s56 = scalar_lea.smem %s0, 28
  %s57 = sld [smem:[%s56]]
  %s58 = scalar_lea.smem %s0, 29
  %s59 = sld [smem:[%s58]]
  %s60 = scalar_lea.smem %s0, 30
  %s61 = sld [smem:[%s60]]
  %s62 = scalar_lea.smem %s0, 31
  %s63 = sld [smem:[%s62]]
  %s64 = scalar_lea.smem %s0, 32
  %s65 = sld [smem:[%s64]]
  %s66 = scalar_lea.smem %s0, 33
  %s67 = sld [smem:[%s66]]
  %s68 = scalar_lea.smem %s0, 34
  %s69 = sld [smem:[%s68]]
  %70 = xla_tuple %s65, %s67, %s69
  %s71 = sld [smem:[#allocation0]]
  $region190: #{vae_forward.1} parent=0
    _
  %s73 = ssub.s32 1, %s71
  %s74 = scalar_select 0, %s73, %s71
  $region1: #{vae_forward.1} parent=0
    #allocation2 [shape = 'u8[1179648]{0}', space=vmem, size = 0x120000, scoped, tag = 'input window, operand 2, single buffered']
    #allocation3 [shape = 's32[1]{0}', space=sflag, size = 0x4, scoped, tag = 'scoped memory for vae_forward.1']
    #allocation4 [shape = 'u8[8192]{0}', space=vmem, size = 0x2000, scoped, tag = 'input window, operand 8, single buffered']
    #allocation5 [shape = 's32[1]{0}', space=sflag, size = 0x4, scoped, tag = 'scoped memory for vae_forward.1']
    #allocation6 [shape = 'u8[2048]{0}', space=vmem, size = 0x800, scoped, tag = 'input window, operand 11, single buffered']
    #allocation7 [shape = 'u8[8192]{0}', space=vmem, size = 0x2000, scoped, tag = 'input window, operand 14, single buffered']
    #allocation8 [shape = 's32[1]{0}', space=sflag, size = 0x4, scoped, tag = 'scoped memory for vae_forward.1']
    #allocation9 [shape = 'u8[8192]{0}', space=vmem, size = 0x2000, scoped, tag = 'input window, operand 16, single buffered']
    #allocation10 [shape = 'u8[2048]{0}', space=vmem, size = 0x800, scoped, tag = 'input window, operand 21, single buffered']
    #allocation11 [shape = 's32[1]{0}', space=sflag, size = 0x4, scoped, tag = 'scoped memory for vae_forward.1']
    #allocation12 [shape = 'u8[18432]{0}', space=vmem, size = 0x4800, scoped, tag = 'input window, operand 24, single buffered']
    #allocation13 [shape = 'u8[73728]{0}', space=vmem, size = 0x12000, scoped, tag = 'input window, operand 27, single buffered']
    #allocation14 [shape = 's32[1]{0}', space=sflag, size = 0x4, scoped, tag = 'scoped memory for vae_forward.1']
    #allocation15 [shape = 'u8[1179648]{0}', space=vmem, size = 0x120000, scoped, tag = 'input window, operand 30, single buffered']
    %75 = vsyncpa [#allocation3], 0
    %76 = vsyncpa [#allocation5], 0
    %77 = vsyncpa [#allocation8], 0
    %78 = vsyncpa [#allocation11], 0
    %79 = vsyncpa [#allocation14], 0
    // Predicated region
    $region2: #{vae_forward.1} parent=1 // pred_check
      _
    $region3: #{vae_forward.1} parent=1 // pred_check_branch
      %81 = sbr.rel (0) target = $region5
    $region4: #{vae_forward.1} parent=1 // pred_region
      _
    $region5: #{vae_forward.1} parent=1 // pred_fallthru
      _
    // Predicated region
    $region6: #{vae_forward.1} parent=1 // pred_check
      _
    $region7: #{vae_forward.1} parent=1 // pred_check_branch
      %83 = sbr.rel (0) target = $region9
    $region8: #{vae_forward.1} parent=1 // pred_region
      _
    $region9: #{vae_forward.1} parent=1 // pred_fallthru
      _
    // Predicated region
    $region10: #{vae_forward.1} parent=1 // pred_check
      _
    $region11: #{vae_forward.1} parent=1 // pred_check_branch
      %85 = sbr.rel (0) target = $region13
    $region12: #{vae_forward.1} parent=1 // pred_region
      %s87 = ssub.s32 36864, 36864
      %88 = vsyncadd [#allocation3], %s87
      %s89 = sshll.u32 [#allocation2], 4
      %s90 = int_to_ptr.vmem [resolvable:$true] %s89
      %95 = dma.hbm_to_vmem [thread:$0]  %s5, 36864, %s90, [#allocation3], 576, 576, 36
    $region13: #{vae_forward.1} parent=1 // pred_fallthru
      _
    // Predicated region
    $region14: #{vae_forward.1} parent=1 // pred_check
      _
    $region15: #{vae_forward.1} parent=1 // pred_check_branch
      %97 = sbr.rel (0) target = $region17
    $region16: #{vae_forward.1} parent=1 // pred_region
      _
    $region17: #{vae_forward.1} parent=1 // pred_fallthru
      _
    // Predicated region
    $region18: #{vae_forward.1} parent=1 // pred_check
      _
    $region19: #{vae_forward.1} parent=1 // pred_check_branch
      %99 = sbr.rel (0) target = $region21
    $region20: #{vae_forward.1} parent=1 // pred_region
      _
    $region21: #{vae_forward.1} parent=1 // pred_fallthru
      _
    // Predicated region
    $region22: #{vae_forward.1} parent=1 // pred_check
      _
    $region23: #{vae_forward.1} parent=1 // pred_check_branch
      %101 = sbr.rel (0) target = $region25
    $region24: #{vae_forward.1} parent=1 // pred_region
      _
    $region25: #{vae_forward.1} parent=1 // pred_fallthru
      _
    // Predicated region
    $region26: #{vae_forward.1} parent=1 // pred_check
      _
    $region27: #{vae_forward.1} parent=1 // pred_check_branch
      %103 = sbr.rel (0) target = $region29
    $region28: #{vae_forward.1} parent=1 // pred_region
      _
    $region29: #{vae_forward.1} parent=1 // pred_fallthru
      _
    // Predicated region
    $region30: #{vae_forward.1} parent=1 // pred_check
      _
    $region31: #{vae_forward.1} parent=1 // pred_check_branch
      %105 = sbr.rel (0) target = $region33
    $region32: #{vae_forward.1} parent=1 // pred_region
      _
    $region33: #{vae_forward.1} parent=1 // pred_fallthru
      _
    // Predicated region
    $region34: #{vae_forward.1} parent=1 // pred_check
      _
    $region35: #{vae_forward.1} parent=1 // pred_check_branch
      %107 = sbr.rel (0) target = $region37
    $region36: #{vae_forward.1} parent=1 // pred_region
      %s109 = ssub.s32 256, 256
      %110 = vsyncadd [#allocation5], %s109
      %s111 = sshll.u32 [#allocation4], 4
      %s112 = int_to_ptr.vmem [resolvable:$true] %s111
      %117 = dma.hbm_to_vmem [thread:$0]  %s17, 256, %s112, [#allocation5], 64, 64, 4
    $region37: #{vae_forward.1} parent=1 // pred_fallthru
      _
    // Predicated region
    $region38: #{vae_forward.1} parent=1 // pred_check
      _
    $region39: #{vae_forward.1} parent=1 // pred_check_branch
      %119 = sbr.rel (0) target = $region41
    $region40: #{vae_forward.1} parent=1 // pred_region
      _
    $region41: #{vae_forward.1} parent=1 // pred_fallthru
      _
    // Predicated region
    $region42: #{vae_forward.1} parent=1 // pred_check
      _
    $region43: #{vae_forward.1} parent=1 // pred_check_branch
      %121 = sbr.rel (0) target = $region45
    $region44: #{vae_forward.1} parent=1 // pred_region
      _
    $region45: #{vae_forward.1} parent=1 // pred_fallthru
      _
    // Predicated region
    $region46: #{vae_forward.1} parent=1 // pred_check
      _
    $region47: #{vae_forward.1} parent=1 // pred_check_branch
      %123 = sbr.rel (0) target = $region49
    $region48: #{vae_forward.1} parent=1 // pred_region
      %s125 = ssub.s32 64, 64
      %126 = vsyncadd [#allocation5], %s125
      %s128 = sshll.u32 [#allocation6], 4
      %s129 = int_to_ptr.vmem [resolvable:$true] %s128
      %131 = dma.hbm_to_vmem [thread:$0]  %s23, 64, %s129, [#allocation5]
    $region49: #{vae_forward.1} parent=1 // pred_fallthru
      _
    // Predicated region
    $region50: #{vae_forward.1} parent=1 // pred_check
      _
    $region51: #{vae_forward.1} parent=1 // pred_check_branch
      %133 = sbr.rel (0) target = $region53
    $region52: #{vae_forward.1} parent=1 // pred_region
      _
    $region53: #{vae_forward.1} parent=1 // pred_fallthru
      _
    // Predicated region
    $region54: #{vae_forward.1} parent=1 // pred_check
      _
    $region55: #{vae_forward.1} parent=1 // pred_check_branch
      %135 = sbr.rel (0) target = $region57
    $region56: #{vae_forward.1} parent=1 // pred_region
      _
    $region57: #{vae_forward.1} parent=1 // pred_fallthru
      _
    // Predicated region
    $region58: #{vae_forward.1} parent=1 // pred_check
      _
    $region59: #{vae_forward.1} parent=1 // pred_check_branch
      %137 = sbr.rel (0) target = $region61
    $region60: #{vae_forward.1} parent=1 // pred_region
      %s139 = ssub.s32 256, 256
      %140 = vsyncadd [#allocation8], %s139
      %s141 = sshll.u32 [#allocation7], 4
      %s142 = int_to_ptr.vmem [resolvable:$true] %s141
      %147 = dma.hbm_to_vmem [thread:$0]  %s29, 256, %s142, [#allocation8], 64, 64, 4
    $region61: #{vae_forward.1} parent=1 // pred_fallthru
      _
    // Predicated region
    $region62: #{vae_forward.1} parent=1 // pred_check
      _
    $region63: #{vae_forward.1} parent=1 // pred_check_branch
      %149 = sbr.rel (0) target = $region65
    $region64: #{vae_forward.1} parent=1 // pred_region
      _
    $region65: #{vae_forward.1} parent=1 // pred_fallthru
      _
    // Predicated region
    $region66: #{vae_forward.1} parent=1 // pred_check
      _
    $region67: #{vae_forward.1} parent=1 // pred_check_branch
      %151 = sbr.rel (0) target = $region69
    $region68: #{vae_forward.1} parent=1 // pred_region
      %s153 = ssub.s32 256, 256
      %154 = vsyncadd [#allocation8], %s153
      %s155 = sshll.u32 [#allocation9], 4
      %s156 = int_to_ptr.vmem [resolvable:$true] %s155
      %161 = dma.hbm_to_vmem [thread:$0]  %s33, 256, %s156, [#allocation8], 64, 64, 4
    $region69: #{vae_forward.1} parent=1 // pred_fallthru
      _
    // Predicated region
    $region70: #{vae_forward.1} parent=1 // pred_check
      _
    $region71: #{vae_forward.1} parent=1 // pred_check_branch
      %163 = sbr.rel (0) target = $region73
    $region72: #{vae_forward.1} parent=1 // pred_region
      _
    $region73: #{vae_forward.1} parent=1 // pred_fallthru
      _
    // Predicated region
    $region74: #{vae_forward.1} parent=1 // pred_check
      _
    $region75: #{vae_forward.1} parent=1 // pred_check_branch
      %165 = sbr.rel (0) target = $region77
    $region76: #{vae_forward.1} parent=1 // pred_region
      _
    $region77: #{vae_forward.1} parent=1 // pred_fallthru
      _
    // Predicated region
    $region78: #{vae_forward.1} parent=1 // pred_check
      _
    $region79: #{vae_forward.1} parent=1 // pred_check_branch
      %167 = sbr.rel (0) target = $region81
    $region80: #{vae_forward.1} parent=1 // pred_region
      _
    $region81: #{vae_forward.1} parent=1 // pred_fallthru
      _
    // Predicated region
    $region82: #{vae_forward.1} parent=1 // pred_check
      _
    $region83: #{vae_forward.1} parent=1 // pred_check_branch
      %169 = sbr.rel (0) target = $region85
    $region84: #{vae_forward.1} parent=1 // pred_region
      _
    $region85: #{vae_forward.1} parent=1 // pred_fallthru
      _
    // Predicated region
    $region86: #{vae_forward.1} parent=1 // pred_check
      _
    $region87: #{vae_forward.1} parent=1 // pred_check_branch
      %171 = sbr.rel (0) target = $region89
    $region88: #{vae_forward.1} parent=1 // pred_region
      %s173 = ssub.s32 64, 64
      %174 = vsyncadd [#allocation11], %s173
      %s175 = sshll.u32 [#allocation10], 4
      %s176 = int_to_ptr.vmem [resolvable:$true] %s175
      %181 = dma.hbm_to_vmem [thread:$0]  %s43, 64, %s176, [#allocation11], 16, 16, 1
    $region89: #{vae_forward.1} parent=1 // pred_fallthru
      _
    // Predicated region
    $region90: #{vae_forward.1} parent=1 // pred_check
      _
    $region91: #{vae_forward.1} parent=1 // pred_check_branch
      %183 = sbr.rel (0) target = $region93
    $region92: #{vae_forward.1} parent=1 // pred_region
      _
    $region93: #{vae_forward.1} parent=1 // pred_fallthru
      _
    // Predicated region
    $region94: #{vae_forward.1} parent=1 // pred_check
      _
    $region95: #{vae_forward.1} parent=1 // pred_check_branch
      %185 = sbr.rel (0) target = $region97
    $region96: #{vae_forward.1} parent=1 // pred_region
      _
    $region97: #{vae_forward.1} parent=1 // pred_fallthru
      _
    // Predicated region
    $region98: #{vae_forward.1} parent=1 // pred_check
      _
    $region99: #{vae_forward.1} parent=1 // pred_check_branch
      %187 = sbr.rel (0) target = $region101
    $region100: #{vae_forward.1} parent=1 // pred_region
      %s189 = ssub.s32 576, 576
      %190 = vsyncadd [#allocation11], %s189
      %s191 = sshll.u32 [#allocation12], 4
      %s192 = int_to_ptr.vmem [resolvable:$true] %s191
      %197 = dma.hbm_to_vmem [thread:$0]  %s49, 576, %s192, [#allocation11], 64, 64, 4
    $region101: #{vae_forward.1} parent=1 // pred_fallthru
      _
    // Predicated region
    $region102: #{vae_forward.1} parent=1 // pred_check
      _
    $region103: #{vae_forward.1} parent=1 // pred_check_branch
      %199 = sbr.rel (0) target = $region105
    $region104: #{vae_forward.1} parent=1 // pred_region
      _
    $region105: #{vae_forward.1} parent=1 // pred_fallthru
      _
    // Predicated region
    $region106: #{vae_forward.1} parent=1 // pred_check
      _
    $region107: #{vae_forward.1} parent=1 // pred_check_branch
      %201 = sbr.rel (0) target = $region109
    $region108: #{vae_forward.1} parent=1 // pred_region
      _
    $region109: #{vae_forward.1} parent=1 // pred_fallthru
      _
    // Predicated region
    $region110: #{vae_forward.1} parent=1 // pred_check
      _
    $region111: #{vae_forward.1} parent=1 // pred_check_branch
      %203 = sbr.rel (0) target = $region113
    $region112: #{vae_forward.1} parent=1 // pred_region
      %s205 = ssub.s32 2304, 2304
      %206 = vsyncadd [#allocation14], %s205
      %s207 = sshll.u32 [#allocation13], 4
      %s208 = int_to_ptr.vmem [resolvable:$true] %s207
      %213 = dma.hbm_to_vmem [thread:$0]  %s55, 2304, %s208, [#allocation14], 64, 64, 4
    $region113: #{vae_forward.1} parent=1 // pred_fallthru
      _
    // Predicated region
    $region114: #{vae_forward.1} parent=1 // pred_check
      _
    $region115: #{vae_forward.1} parent=1 // pred_check_branch
      %215 = sbr.rel (0) target = $region117
    $region116: #{vae_forward.1} parent=1 // pred_region
      _
    $region117: #{vae_forward.1} parent=1 // pred_fallthru
      _
    // Predicated region
    $region118: #{vae_forward.1} parent=1 // pred_check
      _
    $region119: #{vae_forward.1} parent=1 // pred_check_branch
      %217 = sbr.rel (0) target = $region121
    $region120: #{vae_forward.1} parent=1 // pred_region
      _
    $region121: #{vae_forward.1} parent=1 // pred_fallthru
      _
    // Predicated region
    $region122: #{vae_forward.1} parent=1 // pred_check
      _
    $region123: #{vae_forward.1} parent=1 // pred_check_branch
      %219 = sbr.rel (0) target = $region125
    $region124: #{vae_forward.1} parent=1 // pred_region
      %s221 = ssub.s32 36864, 36864
      %222 = vsyncadd [#allocation14], %s221
      %s223 = sshll.u32 [#allocation15], 4
      %s224 = int_to_ptr.vmem [resolvable:$true] %s223
      %229 = dma.hbm_to_vmem [thread:$0]  %s61, 36864, %s224, [#allocation14], 256, 256, 16
    $region125: #{vae_forward.1} parent=1 // pred_fallthru
      _
    // Predicated region
    $region126: #{vae_forward.1} parent=1 // pred_check
      _
    $region127: #{vae_forward.1} parent=1 // pred_check_branch
      %231 = sbr.rel (0) target = $region129
    $region128: #{vae_forward.1} parent=1 // pred_region
      _
    $region129: #{vae_forward.1} parent=1 // pred_fallthru
      _
    // Predicated region
    $region130: #{vae_forward.1} parent=1 // pred_check
      _
    $region131: #{vae_forward.1} parent=1 // pred_check_branch
      %233 = sbr.rel (0) target = $region133
    $region132: #{vae_forward.1} parent=1 // pred_region
      %234 = dma.done [#allocation3], 36864
    $region133: #{vae_forward.1} parent=1 // pred_fallthru
      _
    // Predicated region
    $region134: #{vae_forward.1} parent=1 // pred_check
      _
    $region135: #{vae_forward.1} parent=1 // pred_check_branch
      %236 = sbr.rel (0) target = $region137
    $region136: #{vae_forward.1} parent=1 // pred_region
      %237 = dma.done [#allocation5], 256
    $region137: #{vae_forward.1} parent=1 // pred_fallthru
      _
    // Predicated region
    $region138: #{vae_forward.1} parent=1 // pred_check
      _
    $region139: #{vae_forward.1} parent=1 // pred_check_branch
      %239 = sbr.rel (0) target = $region141
    $region140: #{vae_forward.1} parent=1 // pred_region
      %240 = dma.done [#allocation5], 64
    $region141: #{vae_forward.1} parent=1 // pred_fallthru
      _
    // Predicated region
    $region142: #{vae_forward.1} parent=1 // pred_check
      _
    $region143: #{vae_forward.1} parent=1 // pred_check_branch
      %242 = sbr.rel (0) target = $region145
    $region144: #{vae_forward.1} parent=1 // pred_region
      %243 = dma.done [#allocation8], 256
    $region145: #{vae_forward.1} parent=1 // pred_fallthru
      _
    // Predicated region
    $region146: #{vae_forward.1} parent=1 // pred_check
      _
    $region147: #{vae_forward.1} parent=1 // pred_check_branch
      %245 = sbr.rel (0) target = $region149
    $region148: #{vae_forward.1} parent=1 // pred_region
      %246 = dma.done [#allocation8], 256
    $region149: #{vae_forward.1} parent=1 // pred_fallthru
      _
    // Predicated region
    $region150: #{vae_forward.1} parent=1 // pred_check
      _
    $region151: #{vae_forward.1} parent=1 // pred_check_branch
      %248 = sbr.rel (0) target = $region153
    $region152: #{vae_forward.1} parent=1 // pred_region
      %249 = dma.done [#allocation11], 64
    $region153: #{vae_forward.1} parent=1 // pred_fallthru
      _
    // Predicated region
    $region154: #{vae_forward.1} parent=1 // pred_check
      _
    $region155: #{vae_forward.1} parent=1 // pred_check_branch
      %251 = sbr.rel (0) target = $region157
    $region156: #{vae_forward.1} parent=1 // pred_region
      %252 = dma.done [#allocation11], 576
    $region157: #{vae_forward.1} parent=1 // pred_fallthru
      _
    // Predicated region
    $region158: #{vae_forward.1} parent=1 // pred_check
      _
    $region159: #{vae_forward.1} parent=1 // pred_check_branch
      %254 = sbr.rel (0) target = $region161
    $region160: #{vae_forward.1} parent=1 // pred_region
      %255 = dma.done [#allocation14], 2304
    $region161: #{vae_forward.1} parent=1 // pred_fallthru
      _
    // Predicated region
    $region162: #{vae_forward.1} parent=1 // pred_check
      _
    $region163: #{vae_forward.1} parent=1 // pred_check_branch
      %257 = sbr.rel (0) target = $region165
    $region164: #{vae_forward.1} parent=1 // pred_region
      %258 = dma.done [#allocation14], 36864
    $region165: #{vae_forward.1} parent=1 // pred_fallthru
      _
    %v260 = vld [vmem:[%s1] sm:$0xff]
    %v261 = vld [vmem:[#allocation2] sm:$0xff]
    %v262 = vld [vmem:[#allocation2 + $0x8] sm:$0xff]
    %v263 = vld [vmem:[#allocation2 + $0x10] sm:$0xff]
    %v264 = vld [vmem:[#allocation2 + $0x18] sm:$0xff]
    %v265 = vld [vmem:[#allocation2 + $0x20] sm:$0xf]
    %v266 = vld [vmem:[#allocation2 + $0x24] sm:$0xff]
    %v267 = vld [vmem:[#allocation2 + $0x2c] sm:$0xff]
    %v268 = vld [vmem:[#allocation2 + $0x34] sm:$0xff]
    %v269 = vld [vmem:[#allocation2 + $0x3c] sm:$0xff]
    %v270 = vld [vmem:[#allocation2 + $0x44] sm:$0xf]
    %v271 = vld [vmem:[#allocation2 + $0x48] sm:$0xff]
    %v272 = vld [vmem:[#allocation2 + $0x50] sm:$0xff]
    %v273 = vld [vmem:[#allocation2 + $0x58] sm:$0xff]
    %v274 = vld [vmem:[#allocation2 + $0x60] sm:$0xff]
    %v275 = vld [vmem:[#allocation2 + $0x68] sm:$0xf]
    %v276 = vld [vmem:[#allocation2 + $0x6c] sm:$0xff]
    %v277 = vld [vmem:[#allocation2 + $0x74] sm:$0xff]
    %v278 = vld [vmem:[#allocation2 + $0x7c] sm:$0xff]
    %v279 = vld [vmem:[#allocation2 + $0x84] sm:$0xff]
    %v280 = vld [vmem:[#allocation2 + $0x8c] sm:$0xf]
    %v281 = vld [vmem:[#allocation2 + $0x90] sm:$0xff]
    %v282 = vld [vmem:[#allocation2 + $0x98] sm:$0xff]
    %v283 = vld [vmem:[#allocation2 + $0xa0] sm:$0xff]
    %v284 = vld [vmem:[#allocation2 + $0xa8] sm:$0xff]
    %v285 = vld [vmem:[#allocation2 + $0xb0] sm:$0xf]
    %v286 = vld [vmem:[#allocation2 + $0xb4] sm:$0xff]
    %v287 = vld [vmem:[#allocation2 + $0xbc] sm:$0xff]
    %v288 = vld [vmem:[#allocation2 + $0xc4] sm:$0xff]
    %v289 = vld [vmem:[#allocation2 + $0xcc] sm:$0xff]
    %v290 = vld [vmem:[#allocation2 + $0xd4] sm:$0xf]
    %v291 = vld [vmem:[#allocation2 + $0xd8] sm:$0xff]
    %v292 = vld [vmem:[#allocation2 + $0xe0] sm:$0xff]
    %v293 = vld [vmem:[#allocation2 + $0xe8] sm:$0xff]
    %v294 = vld [vmem:[#allocation2 + $0xf0] sm:$0xff]
    %v295 = vld [vmem:[#allocation2 + $0xf8] sm:$0xf]
    %v296 = vld [vmem:[#allocation2 + $0xfc] sm:$0xff]
    %v297 = vld [vmem:[#allocation2 + $0x104] sm:$0xff]
    %v298 = vld [vmem:[#allocation2 + $0x10c] sm:$0xff]
    %v299 = vld [vmem:[#allocation2 + $0x114] sm:$0xff]
    %v300 = vld [vmem:[#allocation2 + $0x11c] sm:$0xf]
    %v301 = vld [vmem:[#allocation2 + $0x120] sm:$0xff]
    %v302 = vld [vmem:[#allocation2 + $0x128] sm:$0xff]
    %v303 = vld [vmem:[#allocation2 + $0x130] sm:$0xff]
    %v304 = vld [vmem:[#allocation2 + $0x138] sm:$0xff]
    %v305 = vld [vmem:[#allocation2 + $0x140] sm:$0xf]
    %v306 = vld [vmem:[#allocation2 + $0x144] sm:$0xff]
    %v307 = vld [vmem:[#allocation2 + $0x14c] sm:$0xff]
    %v308 = vld [vmem:[#allocation2 + $0x154] sm:$0xff]
    %v309 = vld [vmem:[#allocation2 + $0x15c] sm:$0xff]
    %v310 = vld [vmem:[#allocation2 + $0x164] sm:$0xf]
    %v311 = vld [vmem:[#allocation2 + $0x168] sm:$0xff]
    %v312 = vld [vmem:[#allocation2 + $0x170] sm:$0xff]
    %v313 = vld [vmem:[#allocation2 + $0x178] sm:$0xff]
    %v314 = vld [vmem:[#allocation2 + $0x180] sm:$0xff]
    %v315 = vld [vmem:[#allocation2 + $0x188] sm:$0xf]
    %v316 = vld [vmem:[#allocation2 + $0x18c] sm:$0xff]
    %v317 = vld [vmem:[#allocation2 + $0x194] sm:$0xff]
    %v318 = vld [vmem:[#allocation2 + $0x19c] sm:$0xff]
    %v319 = vld [vmem:[#allocation2 + $0x1a4] sm:$0xff]
    %v320 = vld [vmem:[#allocation2 + $0x1ac] sm:$0xf]
    %v321 = vld [vmem:[#allocation2 + $0x1b0] sm:$0xff]
    %v322 = vld [vmem:[#allocation2 + $0x1b8] sm:$0xff]
    %v323 = vld [vmem:[#allocation2 + $0x1c0] sm:$0xff]
    %v324 = vld [vmem:[#allocation2 + $0x1c8] sm:$0xff]
    %v325 = vld [vmem:[#allocation2 + $0x1d0] sm:$0xf]
    %v326 = vld [vmem:[#allocation2 + $0x1d4] sm:$0xff]
    %v327 = vld [vmem:[#allocation2 + $0x1dc] sm:$0xff]
    %v328 = vld [vmem:[#allocation2 + $0x1e4] sm:$0xff]
    %v329 = vld [vmem:[#allocation2 + $0x1ec] sm:$0xff]
    %v330 = vld [vmem:[#allocation2 + $0x1f4] sm:$0xf]
    %v331 = vld [vmem:[#allocation2 + $0x1f8] sm:$0xff]
    %v332 = vld [vmem:[#allocation2 + $0x200] sm:$0xff]
    %v333 = vld [vmem:[#allocation2 + $0x208] sm:$0xff]
    %v334 = vld [vmem:[#allocation2 + $0x210] sm:$0xff]
    %v335 = vld [vmem:[#allocation2 + $0x218] sm:$0xf]
    %v336 = vld [vmem:[#allocation2 + $0x21c] sm:$0xff]
    %v337 = vld [vmem:[#allocation2 + $0x224] sm:$0xff]
    %v338 = vld [vmem:[#allocation2 + $0x22c] sm:$0xff]
    %v339 = vld [vmem:[#allocation2 + $0x234] sm:$0xff]
    %v340 = vld [vmem:[#allocation2 + $0x23c] sm:$0xf]
    %v341 = vld [vmem:[#allocation2 + $0x240] sm:$0xff]
    %v342 = vld [vmem:[#allocation2 + $0x248] sm:$0xff]
    %v343 = vld [vmem:[#allocation2 + $0x250] sm:$0xff]
    %v344 = vld [vmem:[#allocation2 + $0x258] sm:$0xff]
    %v345 = vld [vmem:[#allocation2 + $0x260] sm:$0xf]
    %v346 = vld [vmem:[#allocation2 + $0x264] sm:$0xff]
    %v347 = vld [vmem:[#allocation2 + $0x26c] sm:$0xff]
    %v348 = vld [vmem:[#allocation2 + $0x274] sm:$0xff]
    %v349 = vld [vmem:[#allocation2 + $0x27c] sm:$0xff]
    %v350 = vld [vmem:[#allocation2 + $0x284] sm:$0xf]
    %v351 = vld [vmem:[#allocation2 + $0x288] sm:$0xff]
    %v352 = vld [vmem:[#allocation2 + $0x290] sm:$0xff]
    %v353 = vld [vmem:[#allocation2 + $0x298] sm:$0xff]
    %v354 = vld [vmem:[#allocation2 + $0x2a0] sm:$0xff]
    %v355 = vld [vmem:[#allocation2 + $0x2a8] sm:$0xf]
    %v356 = vld [vmem:[#allocation2 + $0x2ac] sm:$0xff]
    %v357 = vld [vmem:[#allocation2 + $0x2b4] sm:$0xff]
    %v358 = vld [vmem:[#allocation2 + $0x2bc] sm:$0xff]
    %v359 = vld [vmem:[#allocation2 + $0x2c4] sm:$0xff]
    %v360 = vld [vmem:[#allocation2 + $0x2cc] sm:$0xf]
    %v361 = vld [vmem:[#allocation2 + $0x2d0] sm:$0xff]
    %v362 = vld [vmem:[#allocation2 + $0x2d8] sm:$0xff]
    %v363 = vld [vmem:[#allocation2 + $0x2e0] sm:$0xff]
    %v364 = vld [vmem:[#allocation2 + $0x2e8] sm:$0xff]
    %v365 = vld [vmem:[#allocation2 + $0x2f0] sm:$0xf]
    %v366 = vld [vmem:[#allocation2 + $0x2f4] sm:$0xff]
    %v367 = vld [vmem:[#allocation2 + $0x2fc] sm:$0xff]
    %v368 = vld [vmem:[#allocation2 + $0x304] sm:$0xff]
    %v369 = vld [vmem:[#allocation2 + $0x30c] sm:$0xff]
    %v370 = vld [vmem:[#allocation2 + $0x314] sm:$0xf]
    %v371 = vld [vmem:[#allocation2 + $0x318] sm:$0xff]
    %v372 = vld [vmem:[#allocation2 + $0x320] sm:$0xff]
    %v373 = vld [vmem:[#allocation2 + $0x328] sm:$0xff]
    %v374 = vld [vmem:[#allocation2 + $0x330] sm:$0xff]
    %v375 = vld [vmem:[#allocation2 + $0x338] sm:$0xf]
    %v376 = vld [vmem:[#allocation2 + $0x33c] sm:$0xff]
    %v377 = vld [vmem:[#allocation2 + $0x344] sm:$0xff]
    %v378 = vld [vmem:[#allocation2 + $0x34c] sm:$0xff]
    %v379 = vld [vmem:[#allocation2 + $0x354] sm:$0xff]
    %v380 = vld [vmem:[#allocation2 + $0x35c] sm:$0xf]
    %v381 = vld [vmem:[#allocation2 + $0x360] sm:$0xff]
    %v382 = vld [vmem:[#allocation2 + $0x368] sm:$0xff]
    %v383 = vld [vmem:[#allocation2 + $0x370] sm:$0xff]
    %v384 = vld [vmem:[#allocation2 + $0x378] sm:$0xff]
    %v385 = vld [vmem:[#allocation2 + $0x380] sm:$0xf]
    %v386 = vld [vmem:[#allocation2 + $0x384] sm:$0xff]
    %v387 = vld [vmem:[#allocation2 + $0x38c] sm:$0xff]
    %v388 = vld [vmem:[#allocation2 + $0x394] sm:$0xff]
    %v389 = vld [vmem:[#allocation2 + $0x39c] sm:$0xff]
    %v390 = vld [vmem:[#allocation2 + $0x3a4] sm:$0xf]
    %v391 = vld [vmem:[#allocation2 + $0x3a8] sm:$0xff]
    %v392 = vld [vmem:[#allocation2 + $0x3b0] sm:$0xff]
    %v393 = vld [vmem:[#allocation2 + $0x3b8] sm:$0xff]
    %v394 = vld [vmem:[#allocation2 + $0x3c0] sm:$0xff]
    %v395 = vld [vmem:[#allocation2 + $0x3c8] sm:$0xf]
    %v396 = vld [vmem:[#allocation2 + $0x3cc] sm:$0xff]
    %v397 = vld [vmem:[#allocation2 + $0x3d4] sm:$0xff]
    %v398 = vld [vmem:[#allocation2 + $0x3dc] sm:$0xff]
    %v399 = vld [vmem:[#allocation2 + $0x3e4] sm:$0xff]
    %v400 = vld [vmem:[#allocation2 + $0x3ec] sm:$0xf]
    %v401 = vld [vmem:[#allocation2 + $0x3f0] sm:$0xff]
    %v402 = vld [vmem:[#allocation2 + $0x3f8] sm:$0xff]
    %v403 = vld [vmem:[#allocation2 + $0x400] sm:$0xff]
    %v404 = vld [vmem:[#allocation2 + $0x408] sm:$0xff]
    %v405 = vld [vmem:[#allocation2 + $0x410] sm:$0xf]
    %v406 = vld [vmem:[#allocation2 + $0x414] sm:$0xff]
    %v407 = vld [vmem:[#allocation2 + $0x41c] sm:$0xff]
    %v408 = vld [vmem:[#allocation2 + $0x424] sm:$0xff]
    %v409 = vld [vmem:[#allocation2 + $0x42c] sm:$0xff]
    %v410 = vld [vmem:[#allocation2 + $0x434] sm:$0xf]
    %v411 = vld [vmem:[#allocation2 + $0x438] sm:$0xff]
    %v412 = vld [vmem:[#allocation2 + $0x440] sm:$0xff]
    %v413 = vld [vmem:[#allocation2 + $0x448] sm:$0xff]
    %v414 = vld [vmem:[#allocation2 + $0x450] sm:$0xff]
    %v415 = vld [vmem:[#allocation2 + $0x458] sm:$0xf]
    %v416 = vld [vmem:[#allocation2 + $0x45c] sm:$0xff]
    %v417 = vld [vmem:[#allocation2 + $0x464] sm:$0xff]
    %v418 = vld [vmem:[#allocation2 + $0x46c] sm:$0xff]
    %v419 = vld [vmem:[#allocation2 + $0x474] sm:$0xff]
    %v420 = vld [vmem:[#allocation2 + $0x47c] sm:$0xf]
    %v421 = vld [vmem:[#allocation2 + $0x480] sm:$0xff]
    %v422 = vld [vmem:[#allocation2 + $0x488] sm:$0xff]
    %v423 = vld [vmem:[#allocation2 + $0x490] sm:$0xff]
    %v424 = vld [vmem:[#allocation2 + $0x498] sm:$0xff]
    %v425 = vld [vmem:[#allocation2 + $0x4a0] sm:$0xf]
    %v426 = vld [vmem:[#allocation2 + $0x4a4] sm:$0xff]
    %v427 = vld [vmem:[#allocation2 + $0x4ac] sm:$0xff]
    %v428 = vld [vmem:[#allocation2 + $0x4b4] sm:$0xff]
    %v429 = vld [vmem:[#allocation2 + $0x4bc] sm:$0xff]
    %v430 = vld [vmem:[#allocation2 + $0x4c4] sm:$0xf]
    %v431 = vld [vmem:[#allocation2 + $0x4c8] sm:$0xff]
    %v432 = vld [vmem:[#allocation2 + $0x4d0] sm:$0xff]
    %v433 = vld [vmem:[#allocation2 + $0x4d8] sm:$0xff]
    %v434 = vld [vmem:[#allocation2 + $0x4e0] sm:$0xff]
    %v435 = vld [vmem:[#allocation2 + $0x4e8] sm:$0xf]
    %v436 = vld [vmem:[#allocation2 + $0x4ec] sm:$0xff]
    %v437 = vld [vmem:[#allocation2 + $0x4f4] sm:$0xff]
    %v438 = vld [vmem:[#allocation2 + $0x4fc] sm:$0xff]
    %v439 = vld [vmem:[#allocation2 + $0x504] sm:$0xff]
    %v440 = vld [vmem:[#allocation2 + $0x50c] sm:$0xf]
    %v441 = vld [vmem:[#allocation2 + $0x510] sm:$0xff]
    %v442 = vld [vmem:[#allocation2 + $0x518] sm:$0xff]
    %v443 = vld [vmem:[#allocation2 + $0x520] sm:$0xff]
    %v444 = vld [vmem:[#allocation2 + $0x528] sm:$0xff]
    %v445 = vld [vmem:[#allocation2 + $0x530] sm:$0xf]
    %v446 = vld [vmem:[#allocation2 + $0x534] sm:$0xff]
    %v447 = vld [vmem:[#allocation2 + $0x53c] sm:$0xff]
    %v448 = vld [vmem:[#allocation2 + $0x544] sm:$0xff]
    %v449 = vld [vmem:[#allocation2 + $0x54c] sm:$0xff]
    %v450 = vld [vmem:[#allocation2 + $0x554] sm:$0xf]
    %v451 = vld [vmem:[#allocation2 + $0x558] sm:$0xff]
    %v452 = vld [vmem:[#allocation2 + $0x560] sm:$0xff]
    %v453 = vld [vmem:[#allocation2 + $0x568] sm:$0xff]
    %v454 = vld [vmem:[#allocation2 + $0x570] sm:$0xff]
    %v455 = vld [vmem:[#allocation2 + $0x578] sm:$0xf]
    %v456 = vld [vmem:[#allocation2 + $0x57c] sm:$0xff]
    %v457 = vld [vmem:[#allocation2 + $0x584] sm:$0xff]
    %v458 = vld [vmem:[#allocation2 + $0x58c] sm:$0xff]
    %v459 = vld [vmem:[#allocation2 + $0x594] sm:$0xff]
    %v460 = vld [vmem:[#allocation2 + $0x59c] sm:$0xf]
    %v461 = vld [vmem:[#allocation2 + $0x5a0] sm:$0xff]
    %v462 = vld [vmem:[#allocation2 + $0x5a8] sm:$0xff]
    %v463 = vld [vmem:[#allocation2 + $0x5b0] sm:$0xff]
    %v464 = vld [vmem:[#allocation2 + $0x5b8] sm:$0xff]
    %v465 = vld [vmem:[#allocation2 + $0x5c0] sm:$0xf]
    %v466 = vld [vmem:[#allocation2 + $0x5c4] sm:$0xff]
    %v467 = vld [vmem:[#allocation2 + $0x5cc] sm:$0xff]
    %v468 = vld [vmem:[#allocation2 + $0x5d4] sm:$0xff]
    %v469 = vld [vmem:[#allocation2 + $0x5dc] sm:$0xff]
    %v470 = vld [vmem:[#allocation2 + $0x5e4] sm:$0xf]
    %v471 = vld [vmem:[#allocation2 + $0x5e8] sm:$0xff]
    %v472 = vld [vmem:[#allocation2 + $0x5f0] sm:$0xff]
    %v473 = vld [vmem:[#allocation2 + $0x5f8] sm:$0xff]
    %v474 = vld [vmem:[#allocation2 + $0x600] sm:$0xff]
    %v475 = vld [vmem:[#allocation2 + $0x608] sm:$0xf]
    %v476 = vld [vmem:[#allocation2 + $0x60c] sm:$0xff]
    %v477 = vld [vmem:[#allocation2 + $0x614] sm:$0xff]
    %v478 = vld [vmem:[#allocation2 + $0x61c] sm:$0xff]
    %v479 = vld [vmem:[#allocation2 + $0x624] sm:$0xff]
    %v480 = vld [vmem:[#allocation2 + $0x62c] sm:$0xf]
    %v481 = vld [vmem:[#allocation2 + $0x630] sm:$0xff]
    %v482 = vld [vmem:[#allocation2 + $0x638] sm:$0xff]
    %v483 = vld [vmem:[#allocation2 + $0x640] sm:$0xff]
    %v484 = vld [vmem:[#allocation2 + $0x648] sm:$0xff]
    %v485 = vld [vmem:[#allocation2 + $0x650] sm:$0xf]
    %v486 = vld [vmem:[#allocation2 + $0x654] sm:$0xff]
    %v487 = vld [vmem:[#allocation2 + $0x65c] sm:$0xff]
    %v488 = vld [vmem:[#allocation2 + $0x664] sm:$0xff]
    %v489 = vld [vmem:[#allocation2 + $0x66c] sm:$0xff]
    %v490 = vld [vmem:[#allocation2 + $0x674] sm:$0xf]
    %v491 = vld [vmem:[#allocation2 + $0x678] sm:$0xff]
    %v492 = vld [vmem:[#allocation2 + $0x680] sm:$0xff]
    %v493 = vld [vmem:[#allocation2 + $0x688] sm:$0xff]
    %v494 = vld [vmem:[#allocation2 + $0x690] sm:$0xff]
    %v495 = vld [vmem:[#allocation2 + $0x698] sm:$0xf]
    %v496 = vld [vmem:[#allocation2 + $0x69c] sm:$0xff]
    %v497 = vld [vmem:[#allocation2 + $0x6a4] sm:$0xff]
    %v498 = vld [vmem:[#allocation2 + $0x6ac] sm:$0xff]
    %v499 = vld [vmem:[#allocation2 + $0x6b4] sm:$0xff]
    %v500 = vld [vmem:[#allocation2 + $0x6bc] sm:$0xf]
    %v501 = vld [vmem:[#allocation2 + $0x6c0] sm:$0xff]
    %v502 = vld [vmem:[#allocation2 + $0x6c8] sm:$0xff]
    %v503 = vld [vmem:[#allocation2 + $0x6d0] sm:$0xff]
    %v504 = vld [vmem:[#allocation2 + $0x6d8] sm:$0xff]
    %v505 = vld [vmem:[#allocation2 + $0x6e0] sm:$0xf]
    %v506 = vld [vmem:[#allocation2 + $0x6e4] sm:$0xff]
    %v507 = vld [vmem:[#allocation2 + $0x6ec] sm:$0xff]
    %v508 = vld [vmem:[#allocation2 + $0x6f4] sm:$0xff]
    %v509 = vld [vmem:[#allocation2 + $0x6fc] sm:$0xff]
    %v510 = vld [vmem:[#allocation2 + $0x704] sm:$0xf]
    %v511 = vld [vmem:[#allocation2 + $0x708] sm:$0xff]
    %v512 = vld [vmem:[#allocation2 + $0x710] sm:$0xff]
    %v513 = vld [vmem:[#allocation2 + $0x718] sm:$0xff]
    %v514 = vld [vmem:[#allocation2 + $0x720] sm:$0xff]
    %v515 = vld [vmem:[#allocation2 + $0x728] sm:$0xf]
    %v516 = vld [vmem:[#allocation2 + $0x72c] sm:$0xff]
    %v517 = vld [vmem:[#allocation2 + $0x734] sm:$0xff]
    %v518 = vld [vmem:[#allocation2 + $0x73c] sm:$0xff]
    %v519 = vld [vmem:[#allocation2 + $0x744] sm:$0xff]
    %v520 = vld [vmem:[#allocation2 + $0x74c] sm:$0xf]
    %v521 = vld [vmem:[#allocation2 + $0x750] sm:$0xff]
    %v522 = vld [vmem:[#allocation2 + $0x758] sm:$0xff]
    %v523 = vld [vmem:[#allocation2 + $0x760] sm:$0xff]
    %v524 = vld [vmem:[#allocation2 + $0x768] sm:$0xff]
    %v525 = vld [vmem:[#allocation2 + $0x770] sm:$0xf]
    %v526 = vld [vmem:[#allocation2 + $0x774] sm:$0xff]
    %v527 = vld [vmem:[#allocation2 + $0x77c] sm:$0xff]
    %v528 = vld [vmem:[#allocation2 + $0x784] sm:$0xff]
    %v529 = vld [vmem:[#allocation2 + $0x78c] sm:$0xff]
    %v530 = vld [vmem:[#allocation2 + $0x794] sm:$0xf]
    %v531 = vld [vmem:[#allocation2 + $0x798] sm:$0xff]
    %v532 = vld [vmem:[#allocation2 + $0x7a0] sm:$0xff]
    %v533 = vld [vmem:[#allocation2 + $0x7a8] sm:$0xff]
    %v534 = vld [vmem:[#allocation2 + $0x7b0] sm:$0xff]
    %v535 = vld [vmem:[#allocation2 + $0x7b8] sm:$0xf]
    %v536 = vld [vmem:[#allocation2 + $0x7bc] sm:$0xff]
    %v537 = vld [vmem:[#allocation2 + $0x7c4] sm:$0xff]
    %v538 = vld [vmem:[#allocation2 + $0x7cc] sm:$0xff]
    %v539 = vld [vmem:[#allocation2 + $0x7d4] sm:$0xff]
    %v540 = vld [vmem:[#allocation2 + $0x7dc] sm:$0xf]
    %v541 = vld [vmem:[#allocation2 + $0x7e0] sm:$0xff]
    %v542 = vld [vmem:[#allocation2 + $0x7e8] sm:$0xff]
    %v543 = vld [vmem:[#allocation2 + $0x7f0] sm:$0xff]
    %v544 = vld [vmem:[#allocation2 + $0x7f8] sm:$0xff]
    %v545 = vld [vmem:[#allocation2 + $0x800] sm:$0xf]
    %v546 = vld [vmem:[#allocation2 + $0x804] sm:$0xff]
    %v547 = vld [vmem:[#allocation2 + $0x80c] sm:$0xff]
    %v548 = vld [vmem:[#allocation2 + $0x814] sm:$0xff]
    %v549 = vld [vmem:[#allocation2 + $0x81c] sm:$0xff]
    %v550 = vld [vmem:[#allocation2 + $0x824] sm:$0xf]
    %v551 = vld [vmem:[#allocation2 + $0x828] sm:$0xff]
    %v552 = vld [vmem:[#allocation2 + $0x830] sm:$0xff]
    %v553 = vld [vmem:[#allocation2 + $0x838] sm:$0xff]
    %v554 = vld [vmem:[#allocation2 + $0x840] sm:$0xff]
    %v555 = vld [vmem:[#allocation2 + $0x848] sm:$0xf]
    %v556 = vld [vmem:[#allocation2 + $0x84c] sm:$0xff]
    %v557 = vld [vmem:[#allocation2 + $0x854] sm:$0xff]
    %v558 = vld [vmem:[#allocation2 + $0x85c] sm:$0xff]
    %v559 = vld [vmem:[#allocation2 + $0x864] sm:$0xff]
    %v560 = vld [vmem:[#allocation2 + $0x86c] sm:$0xf]
    %v561 = vld [vmem:[#allocation2 + $0x870] sm:$0xff]
    %v562 = vld [vmem:[#allocation2 + $0x878] sm:$0xff]
    %v563 = vld [vmem:[#allocation2 + $0x880] sm:$0xff]
    %v564 = vld [vmem:[#allocation2 + $0x888] sm:$0xff]
    %v565 = vld [vmem:[#allocation2 + $0x890] sm:$0xf]
    %v566 = vld [vmem:[#allocation2 + $0x894] sm:$0xff]
    %v567 = vld [vmem:[#allocation2 + $0x89c] sm:$0xff]
    %v568 = vld [vmem:[#allocation2 + $0x8a4] sm:$0xff]
    %v569 = vld [vmem:[#allocation2 + $0x8ac] sm:$0xff]
    %v570 = vld [vmem:[#allocation2 + $0x8b4] sm:$0xf]
    %v571 = vld [vmem:[#allocation2 + $0x8b8] sm:$0xff]
    %v572 = vld [vmem:[#allocation2 + $0x8c0] sm:$0xff]
    %v573 = vld [vmem:[#allocation2 + $0x8c8] sm:$0xff]
    %v574 = vld [vmem:[#allocation2 + $0x8d0] sm:$0xff]
    %v575 = vld [vmem:[#allocation2 + $0x8d8] sm:$0xf]
    %v576 = vld [vmem:[#allocation2 + $0x8dc] sm:$0xff]
    %v577 = vld [vmem:[#allocation2 + $0x8e4] sm:$0xff]
    %v578 = vld [vmem:[#allocation2 + $0x8ec] sm:$0xff]
    %v579 = vld [vmem:[#allocation2 + $0x8f4] sm:$0xff]
    %v580 = vld [vmem:[#allocation2 + $0x8fc] sm:$0xf]
    %v582 = vcombine.high %v260, %v260
    %v584 = vunpack.c.l.s4 1983009808
    %v585 = vunpack.c.0.s8 %v584
    %v586 = vlaneseq
    %v587 = vshrl.u32 %v586, 7
    %v588 = vsub.s32 %v585, %v587
    %v589 = vrot.slane %v260, %v588
    %v591 = vunpack.c.l.s4 1983009808
    %v592 = vunpack.c.0.s8 %v591
    %v593 = vlaneseq
    %v594 = vshrl.u32 %v593, 7
    %v595 = vsub.s32 %v592, %v594
    %v596 = vrot.slane %v582, %v595
    %v597 = vcombine.high %v589, %v589
    %v598 = vcombine.high %v596, %v596
    %v923 = vunpack.c.l.b16 %v261
    %v924 = vunpack.c.h.b16 %v261
    %v925 = vunpack.c.l.b16 %v262
    %v926 = vunpack.c.h.b16 %v262
    %v927 = vunpack.c.l.b16 %v263
    %v928 = vunpack.c.h.b16 %v263
    %v929 = vunpack.c.l.b16 %v264
    %v930 = vunpack.c.h.b16 %v264
    %v931 = vunpack.c.l.b16 %v265
    %v932 = vunpack.c.l.b16 %v266
    %v933 = vunpack.c.h.b16 %v266
    %v934 = vunpack.c.l.b16 %v267
    %v935 = vunpack.c.h.b16 %v267
    %v936 = vunpack.c.l.b16 %v268
    %v937 = vunpack.c.h.b16 %v268
    %v938 = vunpack.c.l.b16 %v269
    %v939 = vunpack.c.h.b16 %v269
    %v940 = vunpack.c.l.b16 %v270
    %v941 = vunpack.c.l.b16 %v271
    %v942 = vunpack.c.h.b16 %v271
    %v943 = vunpack.c.l.b16 %v272
    %v944 = vunpack.c.h.b16 %v272
    %v945 = vunpack.c.l.b16 %v273
    %v946 = vunpack.c.h.b16 %v273
    %v947 = vunpack.c.l.b16 %v274
    %v948 = vunpack.c.h.b16 %v274
    %v949 = vunpack.c.l.b16 %v275
    %v950 = vunpack.c.l.b16 %v276
    %v951 = vunpack.c.h.b16 %v276
    %v952 = vunpack.c.l.b16 %v277
    %v953 = vunpack.c.h.b16 %v277
    %v954 = vunpack.c.l.b16 %v278
    %v955 = vunpack.c.h.b16 %v278
    %v956 = vunpack.c.l.b16 %v279
    %v957 = vunpack.c.h.b16 %v279
    %v958 = vunpack.c.l.b16 %v280
    %v959 = vunpack.c.l.b16 %v281
    %v960 = vunpack.c.h.b16 %v281
    %v961 = vunpack.c.l.b16 %v282
    %v962 = vunpack.c.h.b16 %v282
    %v963 = vunpack.c.l.b16 %v283
    %v964 = vunpack.c.h.b16 %v283
    %v965 = vunpack.c.l.b16 %v284
    %v966 = vunpack.c.h.b16 %v284
    %v967 = vunpack.c.l.b16 %v285
    %v968 = vunpack.c.l.b16 %v286
    %v969 = vunpack.c.h.b16 %v286
    %v970 = vunpack.c.l.b16 %v287
    %v971 = vunpack.c.h.b16 %v287
    %v972 = vunpack.c.l.b16 %v288
    %v973 = vunpack.c.h.b16 %v288
    %v974 = vunpack.c.l.b16 %v289
    %v975 = vunpack.c.h.b16 %v289
    %v976 = vunpack.c.l.b16 %v290
    %v977 = vunpack.c.l.b16 %v291
    %v978 = vunpack.c.h.b16 %v291
    %v979 = vunpack.c.l.b16 %v292
    %v980 = vunpack.c.h.b16 %v292
    %v981 = vunpack.c.l.b16 %v293
    %v982 = vunpack.c.h.b16 %v293
    %v983 = vunpack.c.l.b16 %v294
    %v984 = vunpack.c.h.b16 %v294
    %v985 = vunpack.c.l.b16 %v295
    %v986 = vunpack.c.l.b16 %v296
    %v987 = vunpack.c.h.b16 %v296
    %v988 = vunpack.c.l.b16 %v297
    %v989 = vunpack.c.h.b16 %v297
    %v990 = vunpack.c.l.b16 %v298
    %v991 = vunpack.c.h.b16 %v298
    %v992 = vunpack.c.l.b16 %v299
    %v993 = vunpack.c.h.b16 %v299
    %v994 = vunpack.c.l.b16 %v300
    %v995 = vunpack.c.l.b16 %v301
    %v996 = vunpack.c.h.b16 %v301
    %v997 = vunpack.c.l.b16 %v302
    %v998 = vunpack.c.h.b16 %v302
    %v999 = vunpack.c.l.b16 %v303
    %v1000 = vunpack.c.h.b16 %v303
    %v1001 = vunpack.c.l.b16 %v304
    %v1002 = vunpack.c.h.b16 %v304
    %v1003 = vunpack.c.l.b16 %v305
    %v1004 = vunpack.c.l.b16 %v306
    %v1005 = vunpack.c.h.b16 %v306
    %v1006 = vunpack.c.l.b16 %v307
    %v1007 = vunpack.c.h.b16 %v307
    %v1008 = vunpack.c.l.b16 %v308
    %v1009 = vunpack.c.h.b16 %v308
    %v1010 = vunpack.c.l.b16 %v309
    %v1011 = vunpack.c.h.b16 %v309
    %v1012 = vunpack.c.l.b16 %v310
    %v1013 = vunpack.c.l.b16 %v311
    %v1014 = vunpack.c.h.b16 %v311
    %v1015 = vunpack.c.l.b16 %v312
    %v1016 = vunpack.c.h.b16 %v312
    %v1017 = vunpack.c.l.b16 %v313
    %v1018 = vunpack.c.h.b16 %v313
    %v1019 = vunpack.c.l.b16 %v314
    %v1020 = vunpack.c.h.b16 %v314
    %v1021 = vunpack.c.l.b16 %v315
    %v1022 = vunpack.c.l.b16 %v316
    %v1023 = vunpack.c.h.b16 %v316
    %v1024 = vunpack.c.l.b16 %v317
    %v1025 = vunpack.c.h.b16 %v317
    %v1026 = vunpack.c.l.b16 %v318
    %v1027 = vunpack.c.h.b16 %v318
    %v1028 = vunpack.c.l.b16 %v319
    %v1029 = vunpack.c.h.b16 %v319
    %v1030 = vunpack.c.l.b16 %v320
    %v1031 = vunpack.c.l.b16 %v321
    %v1032 = vunpack.c.h.b16 %v321
    %v1033 = vunpack.c.l.b16 %v322
    %v1034 = vunpack.c.h.b16 %v322
    %v1035 = vunpack.c.l.b16 %v323
    %v1036 = vunpack.c.h.b16 %v323
    %v1037 = vunpack.c.l.b16 %v324
    %v1038 = vunpack.c.h.b16 %v324
    %v1039 = vunpack.c.l.b16 %v325
    %v1040 = vunpack.c.l.b16 %v326
    %v1041 = vunpack.c.h.b16 %v326
    %v1042 = vunpack.c.l.b16 %v327
    %v1043 = vunpack.c.h.b16 %v327
    %v1044 = vunpack.c.l.b16 %v328
    %v1045 = vunpack.c.h.b16 %v328
    %v1046 = vunpack.c.l.b16 %v329
    %v1047 = vunpack.c.h.b16 %v329
    %v1048 = vunpack.c.l.b16 %v330
    %v1049 = vunpack.c.l.b16 %v331
    %v1050 = vunpack.c.h.b16 %v331
    %v1051 = vunpack.c.l.b16 %v332
    %v1052 = vunpack.c.h.b16 %v332
    %v1053 = vunpack.c.l.b16 %v333
    %v1054 = vunpack.c.h.b16 %v333
    %v1055 = vunpack.c.l.b16 %v334
    %v1056 = vunpack.c.h.b16 %v334
    %v1057 = vunpack.c.l.b16 %v335
    %v1058 = vunpack.c.l.b16 %v336
    %v1059 = vunpack.c.h.b16 %v336
    %v1060 = vunpack.c.l.b16 %v337
    %v1061 = vunpack.c.h.b16 %v337
    %v1062 = vunpack.c.l.b16 %v338
    %v1063 = vunpack.c.h.b16 %v338
    %v1064 = vunpack.c.l.b16 %v339
    %v1065 = vunpack.c.h.b16 %v339
    %v1066 = vunpack.c.l.b16 %v340
    %v1067 = vunpack.c.l.b16 %v341
    %v1068 = vunpack.c.h.b16 %v341
    %v1069 = vunpack.c.l.b16 %v342
    %v1070 = vunpack.c.h.b16 %v342
    %v1071 = vunpack.c.l.b16 %v343
    %v1072 = vunpack.c.h.b16 %v343
    %v1073 = vunpack.c.l.b16 %v344
    %v1074 = vunpack.c.h.b16 %v344
    %v1075 = vunpack.c.l.b16 %v345
    %v1076 = vunpack.c.l.b16 %v346
    %v1077 = vunpack.c.h.b16 %v346
    %v1078 = vunpack.c.l.b16 %v347
    %v1079 = vunpack.c.h.b16 %v347
    %v1080 = vunpack.c.l.b16 %v348
    %v1081 = vunpack.c.h.b16 %v348
    %v1082 = vunpack.c.l.b16 %v349
    %v1083 = vunpack.c.h.b16 %v349
    %v1084 = vunpack.c.l.b16 %v350
    %v1085 = vunpack.c.l.b16 %v351
    %v1086 = vunpack.c.h.b16 %v351
    %v1087 = vunpack.c.l.b16 %v352
    %v1088 = vunpack.c.h.b16 %v352
    %v1089 = vunpack.c.l.b16 %v353
    %v1090 = vunpack.c.h.b16 %v353
    %v1091 = vunpack.c.l.b16 %v354
    %v1092 = vunpack.c.h.b16 %v354
    %v1093 = vunpack.c.l.b16 %v355
    %v1094 = vunpack.c.l.b16 %v356
    %v1095 = vunpack.c.h.b16 %v356
    %v1096 = vunpack.c.l.b16 %v357
    %v1097 = vunpack.c.h.b16 %v357
    %v1098 = vunpack.c.l.b16 %v358
    %v1099 = vunpack.c.h.b16 %v358
    %v1100 = vunpack.c.l.b16 %v359
    %v1101 = vunpack.c.h.b16 %v359
    %v1102 = vunpack.c.l.b16 %v360
    %v1103 = vunpack.c.l.b16 %v361
    %v1104 = vunpack.c.h.b16 %v361
    %v1105 = vunpack.c.l.b16 %v362
    %v1106 = vunpack.c.h.b16 %v362
    %v1107 = vunpack.c.l.b16 %v363
    %v1108 = vunpack.c.h.b16 %v363
    %v1109 = vunpack.c.l.b16 %v364
    %v1110 = vunpack.c.h.b16 %v364
    %v1111 = vunpack.c.l.b16 %v365
    %v1112 = vunpack.c.l.b16 %v366
    %v1113 = vunpack.c.h.b16 %v366
    %v1114 = vunpack.c.l.b16 %v367
    %v1115 = vunpack.c.h.b16 %v367
    %v1116 = vunpack.c.l.b16 %v368
    %v1117 = vunpack.c.h.b16 %v368
    %v1118 = vunpack.c.l.b16 %v369
    %v1119 = vunpack.c.h.b16 %v369
    %v1120 = vunpack.c.l.b16 %v370
    %v1121 = vunpack.c.l.b16 %v371
    %v1122 = vunpack.c.h.b16 %v371
    %v1123 = vunpack.c.l.b16 %v372
    %v1124 = vunpack.c.h.b16 %v372
    %v1125 = vunpack.c.l.b16 %v373
    %v1126 = vunpack.c.h.b16 %v373
    %v1127 = vunpack.c.l.b16 %v374
    %v1128 = vunpack.c.h.b16 %v374
    %v1129 = vunpack.c.l.b16 %v375
    %v1130 = vunpack.c.l.b16 %v376
    %v1131 = vunpack.c.h.b16 %v376
    %v1132 = vunpack.c.l.b16 %v377
    %v1133 = vunpack.c.h.b16 %v377
    %v1134 = vunpack.c.l.b16 %v378
    %v1135 = vunpack.c.h.b16 %v378
    %v1136 = vunpack.c.l.b16 %v379
    %v1137 = vunpack.c.h.b16 %v379
    %v1138 = vunpack.c.l.b16 %v380
    %v1139 = vunpack.c.l.b16 %v381
    %v1140 = vunpack.c.h.b16 %v381
    %v1141 = vunpack.c.l.b16 %v382
    %v1142 = vunpack.c.h.b16 %v382
    %v1143 = vunpack.c.l.b16 %v383
    %v1144 = vunpack.c.h.b16 %v383
    %v1145 = vunpack.c.l.b16 %v384
    %v1146 = vunpack.c.h.b16 %v384
    %v1147 = vunpack.c.l.b16 %v385
    %v1148 = vunpack.c.l.b16 %v386
    %v1149 = vunpack.c.h.b16 %v386
    %v1150 = vunpack.c.l.b16 %v387
    %v1151 = vunpack.c.h.b16 %v387
    %v1152 = vunpack.c.l.b16 %v388
    %v1153 = vunpack.c.h.b16 %v388
    %v1154 = vunpack.c.l.b16 %v389
    %v1155 = vunpack.c.h.b16 %v389
    %v1156 = vunpack.c.l.b16 %v390
    %v1157 = vunpack.c.l.b16 %v391
    %v1158 = vunpack.c.h.b16 %v391
    %v1159 = vunpack.c.l.b16 %v392
    %v1160 = vunpack.c.h.b16 %v392
    %v1161 = vunpack.c.l.b16 %v393
    %v1162 = vunpack.c.h.b16 %v393
    %v1163 = vunpack.c.l.b16 %v394
    %v1164 = vunpack.c.h.b16 %v394
    %v1165 = vunpack.c.l.b16 %v395
    %v1166 = vunpack.c.l.b16 %v396
    %v1167 = vunpack.c.h.b16 %v396
    %v1168 = vunpack.c.l.b16 %v397
    %v1169 = vunpack.c.h.b16 %v397
    %v1170 = vunpack.c.l.b16 %v398
    %v1171 = vunpack.c.h.b16 %v398
    %v1172 = vunpack.c.l.b16 %v399
    %v1173 = vunpack.c.h.b16 %v399
    %v1174 = vunpack.c.l.b16 %v400
    %v1175 = vunpack.c.l.b16 %v401
    %v1176 = vunpack.c.h.b16 %v401
    %v1177 = vunpack.c.l.b16 %v402
    %v1178 = vunpack.c.h.b16 %v402
    %v1179 = vunpack.c.l.b16 %v403
    %v1180 = vunpack.c.h.b16 %v403
    %v1181 = vunpack.c.l.b16 %v404
    %v1182 = vunpack.c.h.b16 %v404
    %v1183 = vunpack.c.l.b16 %v405
    %v1184 = vunpack.c.l.b16 %v406
    %v1185 = vunpack.c.h.b16 %v406
    %v1186 = vunpack.c.l.b16 %v407
    %v1187 = vunpack.c.h.b16 %v407
    %v1188 = vunpack.c.l.b16 %v408
    %v1189 = vunpack.c.h.b16 %v408
    %v1190 = vunpack.c.l.b16 %v409
    %v1191 = vunpack.c.h.b16 %v409
    %v1192 = vunpack.c.l.b16 %v410
    %v1193 = vunpack.c.l.b16 %v411
    %v1194 = vunpack.c.h.b16 %v411
    %v1195 = vunpack.c.l.b16 %v412
    %v1196 = vunpack.c.h.b16 %v412
    %v1197 = vunpack.c.l.b16 %v413
    %v1198 = vunpack.c.h.b16 %v413
    %v1199 = vunpack.c.l.b16 %v414
    %v1200 = vunpack.c.h.b16 %v414
    %v1201 = vunpack.c.l.b16 %v415
    %v1202 = vunpack.c.l.b16 %v416
    %v1203 = vunpack.c.h.b16 %v416
    %v1204 = vunpack.c.l.b16 %v417
    %v1205 = vunpack.c.h.b16 %v417
    %v1206 = vunpack.c.l.b16 %v418
    %v1207 = vunpack.c.h.b16 %v418
    %v1208 = vunpack.c.l.b16 %v419
    %v1209 = vunpack.c.h.b16 %v419
    %v1210 = vunpack.c.l.b16 %v420
    %v1211 = vunpack.c.l.b16 %v421
    %v1212 = vunpack.c.h.b16 %v421
    %v1213 = vunpack.c.l.b16 %v422
    %v1214 = vunpack.c.h.b16 %v422
    %v1215 = vunpack.c.l.b16 %v423
    %v1216 = vunpack.c.h.b16 %v423
    %v1217 = vunpack.c.l.b16 %v424
    %v1218 = vunpack.c.h.b16 %v424
    %v1219 = vunpack.c.l.b16 %v425
    %v1220 = vunpack.c.l.b16 %v426
    %v1221 = vunpack.c.h.b16 %v426
    %v1222 = vunpack.c.l.b16 %v427
    %v1223 = vunpack.c.h.b16 %v427
    %v1224 = vunpack.c.l.b16 %v428
    %v1225 = vunpack.c.h.b16 %v428
    %v1226 = vunpack.c.l.b16 %v429
    %v1227 = vunpack.c.h.b16 %v429
    %v1228 = vunpack.c.l.b16 %v430
    %v1229 = vunpack.c.l.b16 %v431
    %v1230 = vunpack.c.h.b16 %v431
    %v1231 = vunpack.c.l.b16 %v432
    %v1232 = vunpack.c.h.b16 %v432
    %v1233 = vunpack.c.l.b16 %v433
    %v1234 = vunpack.c.h.b16 %v433
    %v1235 = vunpack.c.l.b16 %v434
    %v1236 = vunpack.c.h.b16 %v434
    %v1237 = vunpack.c.l.b16 %v435
    %v1238 = vunpack.c.l.b16 %v436
    %v1239 = vunpack.c.h.b16 %v436
    %v1240 = vunpack.c.l.b16 %v437
    %v1241 = vunpack.c.h.b16 %v437
    %v1242 = vunpack.c.l.b16 %v438
    %v1243 = vunpack.c.h.b16 %v438
    %v1244 = vunpack.c.l.b16 %v439
    %v1245 = vunpack.c.h.b16 %v439
    %v1246 = vunpack.c.l.b16 %v440
    %v1247 = vunpack.c.l.b16 %v441
    %v1248 = vunpack.c.h.b16 %v441
    %v1249 = vunpack.c.l.b16 %v442
    %v1250 = vunpack.c.h.b16 %v442
    %v1251 = vunpack.c.l.b16 %v443
    %v1252 = vunpack.c.h.b16 %v443
    %v1253 = vunpack.c.l.b16 %v444
    %v1254 = vunpack.c.h.b16 %v444
    %v1255 = vunpack.c.l.b16 %v445
    %v1256 = vunpack.c.l.b16 %v446
    %v1257 = vunpack.c.h.b16 %v446
    %v1258 = vunpack.c.l.b16 %v447
    %v1259 = vunpack.c.h.b16 %v447
    %v1260 = vunpack.c.l.b16 %v448
    %v1261 = vunpack.c.h.b16 %v448
    %v1262 = vunpack.c.l.b16 %v449
    %v1263 = vunpack.c.h.b16 %v449
    %v1264 = vunpack.c.l.b16 %v450
    %v1265 = vunpack.c.l.b16 %v451
    %v1266 = vunpack.c.h.b16 %v451
    %v1267 = vunpack.c.l.b16 %v452
    %v1268 = vunpack.c.h.b16 %v452
    %v1269 = vunpack.c.l.b16 %v453
    %v1270 = vunpack.c.h.b16 %v453
    %v1271 = vunpack.c.l.b16 %v454
    %v1272 = vunpack.c.h.b16 %v454
    %v1273 = vunpack.c.l.b16 %v455
    %v1274 = vunpack.c.l.b16 %v456
    %v1275 = vunpack.c.h.b16 %v456
    %v1276 = vunpack.c.l.b16 %v457
    %v1277 = vunpack.c.h.b16 %v457
    %v1278 = vunpack.c.l.b16 %v458
    %v1279 = vunpack.c.h.b16 %v458
    %v1280 = vunpack.c.l.b16 %v459
    %v1281 = vunpack.c.h.b16 %v459
    %v1282 = vunpack.c.l.b16 %v460
    %v1283 = vunpack.c.l.b16 %v461
    %v1284 = vunpack.c.h.b16 %v461
    %v1285 = vunpack.c.l.b16 %v462
    %v1286 = vunpack.c.h.b16 %v462
    %v1287 = vunpack.c.l.b16 %v463
    %v1288 = vunpack.c.h.b16 %v463
    %v1289 = vunpack.c.l.b16 %v464
    %v1290 = vunpack.c.h.b16 %v464
    %v1291 = vunpack.c.l.b16 %v465
    %v1292 = vunpack.c.l.b16 %v466
    %v1293 = vunpack.c.h.b16 %v466
    %v1294 = vunpack.c.l.b16 %v467
    %v1295 = vunpack.c.h.b16 %v467
    %v1296 = vunpack.c.l.b16 %v468
    %v1297 = vunpack.c.h.b16 %v468
    %v1298 = vunpack.c.l.b16 %v469
    %v1299 = vunpack.c.h.b16 %v469
    %v1300 = vunpack.c.l.b16 %v470
    %v1301 = vunpack.c.l.b16 %v471
    %v1302 = vunpack.c.h.b16 %v471
    %v1303 = vunpack.c.l.b16 %v472
    %v1304 = vunpack.c.h.b16 %v472
    %v1305 = vunpack.c.l.b16 %v473
    %v1306 = vunpack.c.h.b16 %v473
    %v1307 = vunpack.c.l.b16 %v474
    %v1308 = vunpack.c.h.b16 %v474
    %v1309 = vunpack.c.l.b16 %v475
    %v1310 = vunpack.c.l.b16 %v476
    %v1311 = vunpack.c.h.b16 %v476
    %v1312 = vunpack.c.l.b16 %v477
    %v1313 = vunpack.c.h.b16 %v477
    %v1314 = vunpack.c.l.b16 %v478
    %v1315 = vunpack.c.h.b16 %v478
    %v1316 = vunpack.c.l.b16 %v479
    %v1317 = vunpack.c.h.b16 %v479
    %v1318 = vunpack.c.l.b16 %v480
    %v1319 = vunpack.c.l.b16 %v481
    %v1320 = vunpack.c.h.b16 %v481
    %v1321 = vunpack.c.l.b16 %v482
    %v1322 = vunpack.c.h.b16 %v482
    %v1323 = vunpack.c.l.b16 %v483
    %v1324 = vunpack.c.h.b16 %v483
    %v1325 = vunpack.c.l.b16 %v484
    %v1326 = vunpack.c.h.b16 %v484
    %v1327 = vunpack.c.l.b16 %v485
    %v1328 = vunpack.c.l.b16 %v486
    %v1329 = vunpack.c.h.b16 %v486
    %v1330 = vunpack.c.l.b16 %v487
    %v1331 = vunpack.c.h.b16 %v487
    %v1332 = vunpack.c.l.b16 %v488
    %v1333 = vunpack.c.h.b16 %v488
    %v1334 = vunpack.c.l.b16 %v489
    %v1335 = vunpack.c.h.b16 %v489
    %v1336 = vunpack.c.l.b16 %v490
    %v1337 = vunpack.c.l.b16 %v491
    %v1338 = vunpack.c.h.b16 %v491
    %v1339 = vunpack.c.l.b16 %v492
    %v1340 = vunpack.c.h.b16 %v492
    %v1341 = vunpack.c.l.b16 %v493
    %v1342 = vunpack.c.h.b16 %v493
    %v1343 = vunpack.c.l.b16 %v494
    %v1344 = vunpack.c.h.b16 %v494
    %v1345 = vunpack.c.l.b16 %v495
    %v1346 = vunpack.c.l.b16 %v496
    %v1347 = vunpack.c.h.b16 %v496
    %v1348 = vunpack.c.l.b16 %v497
    %v1349 = vunpack.c.h.b16 %v497
    %v1350 = vunpack.c.l.b16 %v498
    %v1351 = vunpack.c.h.b16 %v498
    %v1352 = vunpack.c.l.b16 %v499
    %v1353 = vunpack.c.h.b16 %v499
    %v1354 = vunpack.c.l.b16 %v500
    %v1355 = vunpack.c.l.b16 %v501
    %v1356 = vunpack.c.h.b16 %v501
    %v1357 = vunpack.c.l.b16 %v502
    %v1358 = vunpack.c.h.b16 %v502
    %v1359 = vunpack.c.l.b16 %v503
    %v1360 = vunpack.c.h.b16 %v503
    %v1361 = vunpack.c.l.b16 %v504
    %v1362 = vunpack.c.h.b16 %v504
    %v1363 = vunpack.c.l.b16 %v505
    %v1364 = vunpack.c.l.b16 %v506
    %v1365 = vunpack.c.h.b16 %v506
    %v1366 = vunpack.c.l.b16 %v507
    %v1367 = vunpack.c.h.b16 %v507
    %v1368 = vunpack.c.l.b16 %v508
    %v1369 = vunpack.c.h.b16 %v508
    %v1370 = vunpack.c.l.b16 %v509
    %v1371 = vunpack.c.h.b16 %v509
    %v1372 = vunpack.c.l.b16 %v510
    %v1373 = vunpack.c.l.b16 %v511
    %v1374 = vunpack.c.h.b16 %v511
    %v1375 = vunpack.c.l.b16 %v512
    %v1376 = vunpack.c.h.b16 %v512
    %v1377 = vunpack.c.l.b16 %v513
    %v1378 = vunpack.c.h.b16 %v513
    %v1379 = vunpack.c.l.b16 %v514
    %v1380 = vunpack.c.h.b16 %v514
    %v1381 = vunpack.c.l.b16 %v515
    %v1382 = vunpack.c.l.b16 %v516
    %v1383 = vunpack.c.h.b16 %v516
    %v1384 = vunpack.c.l.b16 %v517
    %v1385 = vunpack.c.h.b16 %v517
    %v1386 = vunpack.c.l.b16 %v518
    %v1387 = vunpack.c.h.b16 %v518
    %v1388 = vunpack.c.l.b16 %v519
    %v1389 = vunpack.c.h.b16 %v519
    %v1390 = vunpack.c.l.b16 %v520
    %v1391 = vunpack.c.l.b16 %v521
    %v1392 = vunpack.c.h.b16 %v521
    %v1393 = vunpack.c.l.b16 %v522
    %v1394 = vunpack.c.h.b16 %v522
    %v1395 = vunpack.c.l.b16 %v523
    %v1396 = vunpack.c.h.b16 %v523
    %v1397 = vunpack.c.l.b16 %v524
    %v1398 = vunpack.c.h.b16 %v524
    %v1399 = vunpack.c.l.b16 %v525
    %v1400 = vunpack.c.l.b16 %v526
    %v1401 = vunpack.c.h.b16 %v526
    %v1402 = vunpack.c.l.b16 %v527
    %v1403 = vunpack.c.h.b16 %v527
    %v1404 = vunpack.c.l.b16 %v528
    %v1405 = vunpack.c.h.b16 %v528
    %v1406 = vunpack.c.l.b16 %v529
    %v1407 = vunpack.c.h.b16 %v529
    %v1408 = vunpack.c.l.b16 %v530
    %v1409 = vunpack.c.l.b16 %v531
    %v1410 = vunpack.c.h.b16 %v531
    %v1411 = vunpack.c.l.b16 %v532
    %v1412 = vunpack.c.h.b16 %v532
    %v1413 = vunpack.c.l.b16 %v533
    %v1414 = vunpack.c.h.b16 %v533
    %v1415 = vunpack.c.l.b16 %v534
    %v1416 = vunpack.c.h.b16 %v534
    %v1417 = vunpack.c.l.b16 %v535
    %v1418 = vunpack.c.l.b16 %v536
    %v1419 = vunpack.c.h.b16 %v536
    %v1420 = vunpack.c.l.b16 %v537
    %v1421 = vunpack.c.h.b16 %v537
    %v1422 = vunpack.c.l.b16 %v538
    %v1423 = vunpack.c.h.b16 %v538
    %v1424 = vunpack.c.l.b16 %v539
    %v1425 = vunpack.c.h.b16 %v539
    %v1426 = vunpack.c.l.b16 %v540
    %v1427 = vunpack.c.l.b16 %v541
    %v1428 = vunpack.c.h.b16 %v541
    %v1429 = vunpack.c.l.b16 %v542
    %v1430 = vunpack.c.h.b16 %v542
    %v1431 = vunpack.c.l.b16 %v543
    %v1432 = vunpack.c.h.b16 %v543
    %v1433 = vunpack.c.l.b16 %v544
    %v1434 = vunpack.c.h.b16 %v544
    %v1435 = vunpack.c.l.b16 %v545
    %v1436 = vunpack.c.l.b16 %v546
    %v1437 = vunpack.c.h.b16 %v546
    %v1438 = vunpack.c.l.b16 %v547
    %v1439 = vunpack.c.h.b16 %v547
    %v1440 = vunpack.c.l.b16 %v548
    %v1441 = vunpack.c.h.b16 %v548
    %v1442 = vunpack.c.l.b16 %v549
    %v1443 = vunpack.c.h.b16 %v549
    %v1444 = vunpack.c.l.b16 %v550
    %v1445 = vunpack.c.l.b16 %v551
    %v1446 = vunpack.c.h.b16 %v551
    %v1447 = vunpack.c.l.b16 %v552
    %v1448 = vunpack.c.h.b16 %v552
    %v1449 = vunpack.c.l.b16 %v553
    %v1450 = vunpack.c.h.b16 %v553
    %v1451 = vunpack.c.l.b16 %v554
    %v1452 = vunpack.c.h.b16 %v554
    %v1453 = vunpack.c.l.b16 %v555
    %v1454 = vunpack.c.l.b16 %v556
    %v1455 = vunpack.c.h.b16 %v556
    %v1456 = vunpack.c.l.b16 %v557
    %v1457 = vunpack.c.h.b16 %v557
    %v1458 = vunpack.c.l.b16 %v558
    %v1459 = vunpack.c.h.b16 %v558
    %v1460 = vunpack.c.l.b16 %v559
    %v1461 = vunpack.c.h.b16 %v559
    %v1462 = vunpack.c.l.b16 %v560
    %v1463 = vunpack.c.l.b16 %v561
    %v1464 = vunpack.c.h.b16 %v561
    %v1465 = vunpack.c.l.b16 %v562
    %v1466 = vunpack.c.h.b16 %v562
    %v1467 = vunpack.c.l.b16 %v563
    %v1468 = vunpack.c.h.b16 %v563
    %v1469 = vunpack.c.l.b16 %v564
    %v1470 = vunpack.c.h.b16 %v564
    %v1471 = vunpack.c.l.b16 %v565
    %v1472 = vunpack.c.l.b16 %v566
    %v1473 = vunpack.c.h.b16 %v566
    %v1474 = vunpack.c.l.b16 %v567
    %v1475 = vunpack.c.h.b16 %v567
    %v1476 = vunpack.c.l.b16 %v568
    %v1477 = vunpack.c.h.b16 %v568
    %v1478 = vunpack.c.l.b16 %v569
    %v1479 = vunpack.c.h.b16 %v569
    %v1480 = vunpack.c.l.b16 %v570
    %v1481 = vunpack.c.l.b16 %v571
    %v1482 = vunpack.c.h.b16 %v571
    %v1483 = vunpack.c.l.b16 %v572
    %v1484 = vunpack.c.h.b16 %v572
    %v1485 = vunpack.c.l.b16 %v573
    %v1486 = vunpack.c.h.b16 %v573
    %v1487 = vunpack.c.l.b16 %v574
    %v1488 = vunpack.c.h.b16 %v574
    %v1489 = vunpack.c.l.b16 %v575
    %v1490 = vunpack.c.l.b16 %v576
    %v1491 = vunpack.c.h.b16 %v576
    %v1492 = vunpack.c.l.b16 %v577
    %v1493 = vunpack.c.h.b16 %v577
    %v1494 = vunpack.c.l.b16 %v578
    %v1495 = vunpack.c.h.b16 %v578
    %v1496 = vunpack.c.l.b16 %v579
    %v1497 = vunpack.c.h.b16 %v579
    %v1498 = vunpack.c.l.b16 %v580
    %v1499 = vpack.c.b16 %v932, %v923
    %v1500 = vpack.c.b16 %v933, %v924
    %v1501 = vpack.c.b16 %v934, %v925
    %v1502 = vpack.c.b16 %v935, %v926
    %v1503 = vpack.c.b16 %v936, %v927
    %v1504 = vpack.c.b16 %v937, %v928
    %v1505 = vpack.c.b16 %v938, %v929
    %v1506 = vpack.c.b16 %v939, %v930
    %v1507 = vpack.c.b16 %v940, %v931
    %v1508 = vpack.c.b16 %v950, %v941
    %v1509 = vpack.c.b16 %v951, %v942
    %v1510 = vpack.c.b16 %v952, %v943
    %v1511 = vpack.c.b16 %v953, %v944
    %v1512 = vpack.c.b16 %v954, %v945
    %v1513 = vpack.c.b16 %v955, %v946
    %v1514 = vpack.c.b16 %v956, %v947
    %v1515 = vpack.c.b16 %v957, %v948
    %v1516 = vpack.c.b16 %v958, %v949
    %v1517 = vpack.c.b16 %v968, %v959
    %v1518 = vpack.c.b16 %v969, %v960
    %v1519 = vpack.c.b16 %v970, %v961
    %v1520 = vpack.c.b16 %v971, %v962
    %v1521 = vpack.c.b16 %v972, %v963
    %v1522 = vpack.c.b16 %v973, %v964
    %v1523 = vpack.c.b16 %v974, %v965
    %v1524 = vpack.c.b16 %v975, %v966
    %v1525 = vpack.c.b16 %v976, %v967
    %v1526 = vpack.c.b16 %v986, %v977
    %v1527 = vpack.c.b16 %v987, %v978
    %v1528 = vpack.c.b16 %v988, %v979
    %v1529 = vpack.c.b16 %v989, %v980
    %v1530 = vpack.c.b16 %v990, %v981
    %v1531 = vpack.c.b16 %v991, %v982
    %v1532 = vpack.c.b16 %v992, %v983
    %v1533 = vpack.c.b16 %v993, %v984
    %v1534 = vpack.c.b16 %v994, %v985
    %v1535 = vpack.c.b16 %v1004, %v995
    %v1536 = vpack.c.b16 %v1005, %v996
    %v1537 = vpack.c.b16 %v1006, %v997
    %v1538 = vpack.c.b16 %v1007, %v998
    %v1539 = vpack.c.b16 %v1008, %v999
    %v1540 = vpack.c.b16 %v1009, %v1000
    %v1541 = vpack.c.b16 %v1010, %v1001
    %v1542 = vpack.c.b16 %v1011, %v1002
    %v1543 = vpack.c.b16 %v1012, %v1003
    %v1544 = vpack.c.b16 %v1022, %v1013
    %v1545 = vpack.c.b16 %v1023, %v1014
    %v1546 = vpack.c.b16 %v1024, %v1015
    %v1547 = vpack.c.b16 %v1025, %v1016
    %v1548 = vpack.c.b16 %v1026, %v1017
    %v1549 = vpack.c.b16 %v1027, %v1018
    %v1550 = vpack.c.b16 %v1028, %v1019
    %v1551 = vpack.c.b16 %v1029, %v1020
    %v1552 = vpack.c.b16 %v1030, %v1021
    %v1553 = vpack.c.b16 %v1040, %v1031
    %v1554 = vpack.c.b16 %v1041, %v1032
    %v1555 = vpack.c.b16 %v1042, %v1033
    %v1556 = vpack.c.b16 %v1043, %v1034
    %v1557 = vpack.c.b16 %v1044, %v1035
    %v1558 = vpack.c.b16 %v1045, %v1036
    %v1559 = vpack.c.b16 %v1046, %v1037
    %v1560 = vpack.c.b16 %v1047, %v1038
    %v1561 = vpack.c.b16 %v1048, %v1039
    %v1562 = vpack.c.b16 %v1058, %v1049
    %v1563 = vpack.c.b16 %v1059, %v1050
    %v1564 = vpack.c.b16 %v1060, %v1051
    %v1565 = vpack.c.b16 %v1061, %v1052
    %v1566 = vpack.c.b16 %v1062, %v1053
    %v1567 = vpack.c.b16 %v1063, %v1054
    %v1568 = vpack.c.b16 %v1064, %v1055
    %v1569 = vpack.c.b16 %v1065, %v1056
    %v1570 = vpack.c.b16 %v1066, %v1057
    %v1571 = vpack.c.b16 %v1076, %v1067
    %v1572 = vpack.c.b16 %v1077, %v1068
    %v1573 = vpack.c.b16 %v1078, %v1069
    %v1574 = vpack.c.b16 %v1079, %v1070
    %v1575 = vpack.c.b16 %v1080, %v1071
    %v1576 = vpack.c.b16 %v1081, %v1072
    %v1577 = vpack.c.b16 %v1082, %v1073
    %v1578 = vpack.c.b16 %v1083, %v1074
    %v1579 = vpack.c.b16 %v1084, %v1075
    %v1580 = vpack.c.b16 %v1094, %v1085
    %v1581 = vpack.c.b16 %v1095, %v1086
    %v1582 = vpack.c.b16 %v1096, %v1087
    %v1583 = vpack.c.b16 %v1097, %v1088
    %v1584 = vpack.c.b16 %v1098, %v1089
    %v1585 = vpack.c.b16 %v1099, %v1090
    %v1586 = vpack.c.b16 %v1100, %v1091
    %v1587 = vpack.c.b16 %v1101, %v1092
    %v1588 = vpack.c.b16 %v1102, %v1093
    %v1589 = vpack.c.b16 %v1112, %v1103
    %v1590 = vpack.c.b16 %v1113, %v1104
    %v1591 = vpack.c.b16 %v1114, %v1105
    %v1592 = vpack.c.b16 %v1115, %v1106
    %v1593 = vpack.c.b16 %v1116, %v1107
    %v1594 = vpack.c.b16 %v1117, %v1108
    %v1595 = vpack.c.b16 %v1118, %v1109
    %v1596 = vpack.c.b16 %v1119, %v1110
    %v1597 = vpack.c.b16 %v1120, %v1111
    %v1598 = vpack.c.b16 %v1130, %v1121
    %v1599 = vpack.c.b16 %v1131, %v1122
    %v1600 = vpack.c.b16 %v1132, %v1123
    %v1601 = vpack.c.b16 %v1133, %v1124
    %v1602 = vpack.c.b16 %v1134, %v1125
    %v1603 = vpack.c.b16 %v1135, %v1126
    %v1604 = vpack.c.b16 %v1136, %v1127
    %v1605 = vpack.c.b16 %v1137, %v1128
    %v1606 = vpack.c.b16 %v1138, %v1129
    %v1607 = vpack.c.b16 %v1148, %v1139
    %v1608 = vpack.c.b16 %v1149, %v1140
    %v1609 = vpack.c.b16 %v1150, %v1141
    %v1610 = vpack.c.b16 %v1151, %v1142
    %v1611 = vpack.c.b16 %v1152, %v1143
    %v1612 = vpack.c.b16 %v1153, %v1144
    %v1613 = vpack.c.b16 %v1154, %v1145
    %v1614 = vpack.c.b16 %v1155, %v1146
    %v1615 = vpack.c.b16 %v1156, %v1147
    %v1616 = vpack.c.b16 %v1166, %v1157
    %v1617 = vpack.c.b16 %v1167, %v1158
    %v1618 = vpack.c.b16 %v1168, %v1159
    %v1619 = vpack.c.b16 %v1169, %v1160
    %v1620 = vpack.c.b16 %v1170, %v1161
    %v1621 = vpack.c.b16 %v1171, %v1162
    %v1622 = vpack.c.b16 %v1172, %v1163
    %v1623 = vpack.c.b16 %v1173, %v1164
    %v1624 = vpack.c.b16 %v1174, %v1165
    %v1625 = vpack.c.b16 %v1184, %v1175
    %v1626 = vpack.c.b16 %v1185, %v1176
    %v1627 = vpack.c.b16 %v1186, %v1177
    %v1628 = vpack.c.b16 %v1187, %v1178
    %v1629 = vpack.c.b16 %v1188, %v1179
    %v1630 = vpack.c.b16 %v1189, %v1180
    %v1631 = vpack.c.b16 %v1190, %v1181
    %v1632 = vpack.c.b16 %v1191, %v1182
    %v1633 = vpack.c.b16 %v1192, %v1183
    %v1634 = vpack.c.b16 %v1202, %v1193
    %v1635 = vpack.c.b16 %v1203, %v1194
    %v1636 = vpack.c.b16 %v1204, %v1195
    %v1637 = vpack.c.b16 %v1205, %v1196
    %v1638 = vpack.c.b16 %v1206, %v1197
    %v1639 = vpack.c.b16 %v1207, %v1198
    %v1640 = vpack.c.b16 %v1208, %v1199
    %v1641 = vpack.c.b16 %v1209, %v1200
    %v1642 = vpack.c.b16 %v1210, %v1201
    %v1643 = vpack.c.b16 %v1220, %v1211
    %v1644 = vpack.c.b16 %v1221, %v1212
    %v1645 = vpack.c.b16 %v1222, %v1213
    %v1646 = vpack.c.b16 %v1223, %v1214
    %v1647 = vpack.c.b16 %v1224, %v1215
    %v1648 = vpack.c.b16 %v1225, %v1216
    %v1649 = vpack.c.b16 %v1226, %v1217
    %v1650 = vpack.c.b16 %v1227, %v1218
    %v1651 = vpack.c.b16 %v1228, %v1219
    %v1652 = vpack.c.b16 %v1238, %v1229
    %v1653 = vpack.c.b16 %v1239, %v1230
    %v1654 = vpack.c.b16 %v1240, %v1231
    %v1655 = vpack.c.b16 %v1241, %v1232
    %v1656 = vpack.c.b16 %v1242, %v1233
    %v1657 = vpack.c.b16 %v1243, %v1234
    %v1658 = vpack.c.b16 %v1244, %v1235
    %v1659 = vpack.c.b16 %v1245, %v1236
    %v1660 = vpack.c.b16 %v1246, %v1237
    %v1661 = vpack.c.b16 %v1256, %v1247
    %v1662 = vpack.c.b16 %v1257, %v1248
    %v1663 = vpack.c.b16 %v1258, %v1249
    %v1664 = vpack.c.b16 %v1259, %v1250
    %v1665 = vpack.c.b16 %v1260, %v1251
    %v1666 = vpack.c.b16 %v1261, %v1252
    %v1667 = vpack.c.b16 %v1262, %v1253
    %v1668 = vpack.c.b16 %v1263, %v1254
    %v1669 = vpack.c.b16 %v1264, %v1255
    %v1670 = vpack.c.b16 %v1274, %v1265
    %v1671 = vpack.c.b16 %v1275, %v1266
    %v1672 = vpack.c.b16 %v1276, %v1267
    %v1673 = vpack.c.b16 %v1277, %v1268
    %v1674 = vpack.c.b16 %v1278, %v1269
    %v1675 = vpack.c.b16 %v1279, %v1270
    %v1676 = vpack.c.b16 %v1280, %v1271
    %v1677 = vpack.c.b16 %v1281, %v1272
    %v1678 = vpack.c.b16 %v1282, %v1273
    %v1679 = vpack.c.b16 %v1292, %v1283
    %v1680 = vpack.c.b16 %v1293, %v1284
    %v1681 = vpack.c.b16 %v1294, %v1285
    %v1682 = vpack.c.b16 %v1295, %v1286
    %v1683 = vpack.c.b16 %v1296, %v1287
    %v1684 = vpack.c.b16 %v1297, %v1288
    %v1685 = vpack.c.b16 %v1298, %v1289
    %v1686 = vpack.c.b16 %v1299, %v1290
    %v1687 = vpack.c.b16 %v1300, %v1291
    %v1688 = vpack.c.b16 %v1310, %v1301
    %v1689 = vpack.c.b16 %v1311, %v1302
    %v1690 = vpack.c.b16 %v1312, %v1303
    %v1691 = vpack.c.b16 %v1313, %v1304
    %v1692 = vpack.c.b16 %v1314, %v1305
    %v1693 = vpack.c.b16 %v1315, %v1306
    %v1694 = vpack.c.b16 %v1316, %v1307
    %v1695 = vpack.c.b16 %v1317, %v1308
    %v1696 = vpack.c.b16 %v1318, %v1309
    %v1697 = vpack.c.b16 %v1328, %v1319
    %v1698 = vpack.c.b16 %v1329, %v1320
    %v1699 = vpack.c.b16 %v1330, %v1321
    %v1700 = vpack.c.b16 %v1331, %v1322
    %v1701 = vpack.c.b16 %v1332, %v1323
    %v1702 = vpack.c.b16 %v1333, %v1324
    %v1703 = vpack.c.b16 %v1334, %v1325
    %v1704 = vpack.c.b16 %v1335, %v1326
    %v1705 = vpack.c.b16 %v1336, %v1327
    %v1706 = vpack.c.b16 %v1346, %v1337
    %v1707 = vpack.c.b16 %v1347, %v1338
    %v1708 = vpack.c.b16 %v1348, %v1339
    %v1709 = vpack.c.b16 %v1349, %v1340
    %v1710 = vpack.c.b16 %v1350, %v1341
    %v1711 = vpack.c.b16 %v1351, %v1342
    %v1712 = vpack.c.b16 %v1352, %v1343
    %v1713 = vpack.c.b16 %v1353, %v1344
    %v1714 = vpack.c.b16 %v1354, %v1345
    %v1715 = vpack.c.b16 %v1364, %v1355
    %v1716 = vpack.c.b16 %v1365, %v1356
    %v1717 = vpack.c.b16 %v1366, %v1357
    %v1718 = vpack.c.b16 %v1367, %v1358
    %v1719 = vpack.c.b16 %v1368, %v1359
    %v1720 = vpack.c.b16 %v1369, %v1360
    %v1721 = vpack.c.b16 %v1370, %v1361
    %v1722 = vpack.c.b16 %v1371, %v1362
    %v1723 = vpack.c.b16 %v1372, %v1363
    %v1724 = vpack.c.b16 %v1382, %v1373
    %v1725 = vpack.c.b16 %v1383, %v1374
    %v1726 = vpack.c.b16 %v1384, %v1375
    %v1727 = vpack.c.b16 %v1385, %v1376
    %v1728 = vpack.c.b16 %v1386, %v1377
    %v1729 = vpack.c.b16 %v1387, %v1378
    %v1730 = vpack.c.b16 %v1388, %v1379
    %v1731 = vpack.c.b16 %v1389, %v1380
    %v1732 = vpack.c.b16 %v1390, %v1381
    %v1733 = vpack.c.b16 %v1400, %v1391
    %v1734 = vpack.c.b16 %v1401, %v1392
    %v1735 = vpack.c.b16 %v1402, %v1393
    %v1736 = vpack.c.b16 %v1403, %v1394
    %v1737 = vpack.c.b16 %v1404, %v1395
    %v1738 = vpack.c.b16 %v1405, %v1396
    %v1739 = vpack.c.b16 %v1406, %v1397
    %v1740 = vpack.c.b16 %v1407, %v1398
    %v1741 = vpack.c.b16 %v1408, %v1399
    %v1742 = vpack.c.b16 %v1418, %v1409
    %v1743 = vpack.c.b16 %v1419, %v1410
    %v1744 = vpack.c.b16 %v1420, %v1411
    %v1745 = vpack.c.b16 %v1421, %v1412
    %v1746 = vpack.c.b16 %v1422, %v1413
    %v1747 = vpack.c.b16 %v1423, %v1414
    %v1748 = vpack.c.b16 %v1424, %v1415
    %v1749 = vpack.c.b16 %v1425, %v1416
    %v1750 = vpack.c.b16 %v1426, %v1417
    %v1751 = vpack.c.b16 %v1436, %v1427
    %v1752 = vpack.c.b16 %v1437, %v1428
    %v1753 = vpack.c.b16 %v1438, %v1429
    %v1754 = vpack.c.b16 %v1439, %v1430
    %v1755 = vpack.c.b16 %v1440, %v1431
    %v1756 = vpack.c.b16 %v1441, %v1432
    %v1757 = vpack.c.b16 %v1442, %v1433
    %v1758 = vpack.c.b16 %v1443, %v1434
    %v1759 = vpack.c.b16 %v1444, %v1435
    %v1760 = vpack.c.b16 %v1454, %v1445
    %v1761 = vpack.c.b16 %v1455, %v1446
    %v1762 = vpack.c.b16 %v1456, %v1447
    %v1763 = vpack.c.b16 %v1457, %v1448
    %v1764 = vpack.c.b16 %v1458, %v1449
    %v1765 = vpack.c.b16 %v1459, %v1450
    %v1766 = vpack.c.b16 %v1460, %v1451
    %v1767 = vpack.c.b16 %v1461, %v1452
    %v1768 = vpack.c.b16 %v1462, %v1453
    %v1769 = vpack.c.b16 %v1472, %v1463
    %v1770 = vpack.c.b16 %v1473, %v1464
    %v1771 = vpack.c.b16 %v1474, %v1465
    %v1772 = vpack.c.b16 %v1475, %v1466
    %v1773 = vpack.c.b16 %v1476, %v1467
    %v1774 = vpack.c.b16 %v1477, %v1468
    %v1775 = vpack.c.b16 %v1478, %v1469
    %v1776 = vpack.c.b16 %v1479, %v1470
    %v1777 = vpack.c.b16 %v1480, %v1471
    %v1778 = vpack.c.b16 %v1490, %v1481
    %v1779 = vpack.c.b16 %v1491, %v1482
    %v1780 = vpack.c.b16 %v1492, %v1483
    %v1781 = vpack.c.b16 %v1493, %v1484
    %v1782 = vpack.c.b16 %v1494, %v1485
    %v1783 = vpack.c.b16 %v1495, %v1486
    %v1784 = vpack.c.b16 %v1496, %v1487
    %v1785 = vpack.c.b16 %v1497, %v1488
    %v1786 = vpack.c.b16 %v1498, %v1489
    %2075 = vmatprep.subr.bf16.mxu0 %v1500
    %2076 = vmatpush1.bf16.msra.mxu0 %v1499
    %2077 = vmatprep.subr.bf16.mxu0 %v1509
    %2078 = vmatpush1.bf16.msra.mxu0 %v1508
    %2079 = vmatprep.subr.bf16.mxu0 %v1518
    %2080 = vmatpush1.bf16.msra.mxu0 %v1517
    %2081 = vmatprep.subr.bf16.mxu0 %v1527
    %2082 = vmatpush1.bf16.msra.mxu0 %v1526
    %2083 = vmatprep.subr.bf16.mxu0 %v1536
    %2084 = vmatpush1.bf16.msra.mxu0 %v1535
    %2085 = vmatprep.subr.bf16.mxu0 %v1545
    %2086 = vmatpush1.bf16.msra.mxu0 %v1544
    %2087 = vmatprep.subr.bf16.mxu0 %v1554
    %2088 = vmatpush1.bf16.msra.mxu0 %v1553
    %2089 = vmatprep.subr.bf16.mxu0 %v1563
    %2090 = vmatpush1.bf16.msra.mxu0 %v1562
    %2091 = vmatprep.subr.bf16.mxu0 %v1572
    %2092 = vmatpush1.bf16.msra.mxu0 %v1571
    %2093 = vmatprep.subr.bf16.mxu0 %v1581
    %2094 = vmatpush1.bf16.msra.mxu0 %v1580
    %2095 = vmatprep.subr.bf16.mxu0 %v1590
    %2096 = vmatpush1.bf16.msra.mxu0 %v1589
    %2097 = vmatprep.subr.bf16.mxu0 %v1599
    %2098 = vmatpush1.bf16.msra.mxu0 %v1598
    %2099 = vmatprep.subr.bf16.mxu0 %v1608
    %2100 = vmatpush1.bf16.msra.mxu0 %v1607
    %2101 = vmatprep.subr.bf16.mxu0 %v1617
    %2102 = vmatpush1.bf16.msra.mxu0 %v1616
    %2103 = vmatprep.subr.bf16.mxu0 %v1626
    %2104 = vmatpush1.bf16.msra.mxu0 %v1625
    %2105 = vmatprep.subr.bf16.mxu0 %v1635
    %2106 = vmatpush1.bf16.msra.mxu0 %v1634
    %2107 = vmatprep.mubr.bf16.mxu0 %v597
    %2108 = vmatmul.mubr.bf16.gmra.mrb[0].mxu0 %v589
    %v2109 = vpop.f32.mrb[0].mxu0
    %v2110 = vadd.f32 0.0, %v2109
    %v2111 = vpop.f32.mrb[0].mxu0
    %v2112 = vadd.f32 0.0, %v2111
    %v2113 = vpop.f32.mrb[0].mxu0
    %v2114 = vpop.f32.mrb[0].mxu0
    %2115 = vdwg.mxu0
    %2116 = vmatprep.subr.bf16.mxu0 %v1644
    %2117 = vmatpush1.bf16.msra.mxu0 %v1643
    %2118 = vmatprep.subr.bf16.mxu0 %v1653
    %2119 = vmatpush1.bf16.msra.mxu0 %v1652
    %2120 = vmatprep.subr.bf16.mxu0 %v1662
    %2121 = vmatpush1.bf16.msra.mxu0 %v1661
    %2122 = vmatprep.subr.bf16.mxu0 %v1671
    %2123 = vmatpush1.bf16.msra.mxu0 %v1670
    %2124 = vmatprep.subr.bf16.mxu0 %v1680
    %2125 = vmatpush1.bf16.msra.mxu0 %v1679
    %2126 = vmatprep.subr.bf16.mxu0 %v1689
    %2127 = vmatpush1.bf16.msra.mxu0 %v1688
    %2128 = vmatprep.subr.bf16.mxu0 %v1698
    %2129 = vmatpush1.bf16.msra.mxu0 %v1697
    %2130 = vmatprep.subr.bf16.mxu0 %v1707
    %2131 = vmatpush1.bf16.msra.mxu0 %v1706
    %2132 = vmatprep.subr.bf16.mxu0 %v1716
    %2133 = vmatpush1.bf16.msra.mxu0 %v1715
    %2134 = vmatprep.subr.bf16.mxu0 %v1725
    %2135 = vmatpush1.bf16.msra.mxu0 %v1724
    %2136 = vmatprep.subr.bf16.mxu0 %v1734
    %2137 = vmatpush1.bf16.msra.mxu0 %v1733
    %2138 = vmatprep.subr.bf16.mxu0 %v1743
    %2139 = vmatpush1.bf16.msra.mxu0 %v1742
    %2140 = vmatprep.subr.bf16.mxu0 %v1752
    %2141 = vmatpush1.bf16.msra.mxu0 %v1751
    %2142 = vmatprep.subr.bf16.mxu0 %v1761
    %2143 = vmatpush1.bf16.msra.mxu0 %v1760
    %2144 = vmatprep.subr.bf16.mxu0 %v1770
    %2145 = vmatpush1.bf16.msra.mxu0 %v1769
    %2146 = vmatprep.subr.bf16.mxu0 %v1779
    %2147 = vmatpush1.bf16.msra.mxu0 %v1778
    %2148 = vmatprep.mubr.bf16.mxu0 %v598
    %2149 = vmatmul.mubr.bf16.gmra.mrb[0].mxu0 %v596
    %v2150 = vpop.f32.mrb[0].mxu0
    %v2151 = vadd.f32 %v2110, %v2150
    %v2152 = vpop.f32.mrb[0].mxu0
    %v2153 = vadd.f32 %v2112, %v2152
    %v2154 = vpop.f32.mrb[0].mxu0
    %v2155 = vpop.f32.mrb[0].mxu0
    %2156 = vdwg.mxu0
    %2157 = vmatprep.subr.bf16.mxu0 %v1502
    %2158 = vmatpush1.bf16.msra.mxu0 %v1501
    %2159 = vmatprep.subr.bf16.mxu0 %v1511
    %2160 = vmatpush1.bf16.msra.mxu0 %v1510
    %2161 = vmatprep.subr.bf16.mxu0 %v1520
    %2162 = vmatpush1.bf16.msra.mxu0 %v1519
    %2163 = vmatprep.subr.bf16.mxu0 %v1529
    %2164 = vmatpush1.bf16.msra.mxu0 %v1528
    %2165 = vmatprep.subr.bf16.mxu0 %v1538
    %2166 = vmatpush1.bf16.msra.mxu0 %v1537
    %2167 = vmatprep.subr.bf16.mxu0 %v1547
    %2168 = vmatpush1.bf16.msra.mxu0 %v1546
    %2169 = vmatprep.subr.bf16.mxu0 %v1556
    %2170 = vmatpush1.bf16.msra.mxu0 %v1555
    %2171 = vmatprep.subr.bf16.mxu0 %v1565
    %2172 = vmatpush1.bf16.msra.mxu0 %v1564
    %2173 = vmatprep.subr.bf16.mxu0 %v1574
    %2174 = vmatpush1.bf16.msra.mxu0 %v1573
    %2175 = vmatprep.subr.bf16.mxu0 %v1583
    %2176 = vmatpush1.bf16.msra.mxu0 %v1582
    %2177 = vmatprep.subr.bf16.mxu0 %v1592
    %2178 = vmatpush1.bf16.msra.mxu0 %v1591
    %2179 = vmatprep.subr.bf16.mxu0 %v1601
    %2180 = vmatpush1.bf16.msra.mxu0 %v1600
    %2181 = vmatprep.subr.bf16.mxu0 %v1610
    %2182 = vmatpush1.bf16.msra.mxu0 %v1609
    %2183 = vmatprep.subr.bf16.mxu0 %v1619
    %2184 = vmatpush1.bf16.msra.mxu0 %v1618
    %2185 = vmatprep.subr.bf16.mxu0 %v1628
    %2186 = vmatpush1.bf16.msra.mxu0 %v1627
    %2187 = vmatprep.subr.bf16.mxu0 %v1637
    %2188 = vmatpush1.bf16.msra.mxu0 %v1636
    %2189 = vmatprep.mubr.bf16.mxu0 %v597
    %2190 = vmatmul.mubr.bf16.gmra.mrb[0].mxu0 %v589
    %v2191 = vpop.f32.mrb[0].mxu0
    %v2192 = vadd.f32 0.0, %v2191
    %v2193 = vpop.f32.mrb[0].mxu0
    %v2194 = vadd.f32 0.0, %v2193
    %v2195 = vpop.f32.mrb[0].mxu0
    %v2196 = vpop.f32.mrb[0].mxu0
    %2197 = vdwg.mxu0
    %2198 = vmatprep.subr.bf16.mxu0 %v1646
    %2199 = vmatpush1.bf16.msra.mxu0 %v1645
    %2200 = vmatprep.subr.bf16.mxu0 %v1655
    %2201 = vmatpush1.bf16.msra.mxu0 %v1654
    %2202 = vmatprep.subr.bf16.mxu0 %v1664
    %2203 = vmatpush1.bf16.msra.mxu0 %v1663
    %2204 = vmatprep.subr.bf16.mxu0 %v1673
    %2205 = vmatpush1.bf16.msra.mxu0 %v1672
    %2206 = vmatprep.subr.bf16.mxu0 %v1682
    %2207 = vmatpush1.bf16.msra.mxu0 %v1681
    %2208 = vmatprep.subr.bf16.mxu0 %v1691
    %2209 = vmatpush1.bf16.msra.mxu0 %v1690
    %2210 = vmatprep.subr.bf16.mxu0 %v1700
    %2211 = vmatpush1.bf16.msra.mxu0 %v1699
    %2212 = vmatprep.subr.bf16.mxu0 %v1709
    %2213 = vmatpush1.bf16.msra.mxu0 %v1708
    %2214 = vmatprep.subr.bf16.mxu0 %v1718
    %2215 = vmatpush1.bf16.msra.mxu0 %v1717
    %2216 = vmatprep.subr.bf16.mxu0 %v1727
    %2217 = vmatpush1.bf16.msra.mxu0 %v1726
    %2218 = vmatprep.subr.bf16.mxu0 %v1736
    %2219 = vmatpush1.bf16.msra.mxu0 %v1735
    %2220 = vmatprep.subr.bf16.mxu0 %v1745
    %2221 = vmatpush1.bf16.msra.mxu0 %v1744
    %2222 = vmatprep.subr.bf16.mxu0 %v1754
    %2223 = vmatpush1.bf16.msra.mxu0 %v1753
    %2224 = vmatprep.subr.bf16.mxu0 %v1763
    %2225 = vmatpush1.bf16.msra.mxu0 %v1762
    %2226 = vmatprep.subr.bf16.mxu0 %v1772
    %2227 = vmatpush1.bf16.msra.mxu0 %v1771
    %2228 = vmatprep.subr.bf16.mxu0 %v1781
    %2229 = vmatpush1.bf16.msra.mxu0 %v1780
    %2230 = vmatprep.mubr.bf16.mxu0 %v598
    %2231 = vmatmul.mubr.bf16.gmra.mrb[0].mxu0 %v596
    %v2232 = vpop.f32.mrb[0].mxu0
    %v2233 = vadd.f32 %v2192, %v2232
    %v2234 = vpop.f32.mrb[0].mxu0
    %v2235 = vadd.f32 %v2194, %v2234
    %v2236 = vpop.f32.mrb[0].mxu0
    %v2237 = vpop.f32.mrb[0].mxu0
    %2238 = vdwg.mxu0
    %2239 = vmatprep.subr.bf16.mxu0 %v1504
    %2240 = vmatpush1.bf16.msra.mxu0 %v1503
    %2241 = vmatprep.subr.bf16.mxu0 %v1513
    %2242 = vmatpush1.bf16.msra.mxu0 %v1512
    %2243 = vmatprep.subr.bf16.mxu0 %v1522
    %2244 = vmatpush1.bf16.msra.mxu0 %v1521
    %2245 = vmatprep.subr.bf16.mxu0 %v1531
    %2246 = vmatpush1.bf16.msra.mxu0 %v1530
    %2247 = vmatprep.subr.bf16.mxu0 %v1540
    %2248 = vmatpush1.bf16.msra.mxu0 %v1539
    %2249 = vmatprep.subr.bf16.mxu0 %v1549
    %2250 = vmatpush1.bf16.msra.mxu0 %v1548
    %2251 = vmatprep.subr.bf16.mxu0 %v1558
    %2252 = vmatpush1.bf16.msra.mxu0 %v1557
    %2253 = vmatprep.subr.bf16.mxu0 %v1567
    %2254 = vmatpush1.bf16.msra.mxu0 %v1566
    %2255 = vmatprep.subr.bf16.mxu0 %v1576
    %2256 = vmatpush1.bf16.msra.mxu0 %v1575
    %2257 = vmatprep.subr.bf16.mxu0 %v1585
    %2258 = vmatpush1.bf16.msra.mxu0 %v1584
    %2259 = vmatprep.subr.bf16.mxu0 %v1594
    %2260 = vmatpush1.bf16.msra.mxu0 %v1593
    %2261 = vmatprep.subr.bf16.mxu0 %v1603
    %2262 = vmatpush1.bf16.msra.mxu0 %v1602
    %2263 = vmatprep.subr.bf16.mxu0 %v1612
    %2264 = vmatpush1.bf16.msra.mxu0 %v1611
    %2265 = vmatprep.subr.bf16.mxu0 %v1621
    %2266 = vmatpush1.bf16.msra.mxu0 %v1620
    %2267 = vmatprep.subr.bf16.mxu0 %v1630
    %2268 = vmatpush1.bf16.msra.mxu0 %v1629
    %2269 = vmatprep.subr.bf16.mxu0 %v1639
    %2270 = vmatpush1.bf16.msra.mxu0 %v1638
    %2271 = vmatprep.mubr.bf16.mxu0 %v597
    %2272 = vmatmul.mubr.bf16.gmra.mrb[0].mxu0 %v589
    %v2273 = vpop.f32.mrb[0].mxu0
    %v2274 = vadd.f32 0.0, %v2273
    %v2275 = vpop.f32.mrb[0].mxu0
    %v2276 = vadd.f32 0.0, %v2275
    %v2277 = vpop.f32.mrb[0].mxu0
    %v2278 = vpop.f32.mrb[0].mxu0
    %2279 = vdwg.mxu0
    %2280 = vmatprep.subr.bf16.mxu0 %v1648
    %2281 = vmatpush1.bf16.msra.mxu0 %v1647
    %2282 = vmatprep.subr.bf16.mxu0 %v1657
    %2283 = vmatpush1.bf16.msra.mxu0 %v1656
    %2284 = vmatprep.subr.bf16.mxu0 %v1666
    %2285 = vmatpush1.bf16.msra.mxu0 %v1665
    %2286 = vmatprep.subr.bf16.mxu0 %v1675
    %2287 = vmatpush1.bf16.msra.mxu0 %v1674
    %2288 = vmatprep.subr.bf16.mxu0 %v1684
    %2289 = vmatpush1.bf16.msra.mxu0 %v1683
    %2290 = vmatprep.subr.bf16.mxu0 %v1693
    %2291 = vmatpush1.bf16.msra.mxu0 %v1692
    %2292 = vmatprep.subr.bf16.mxu0 %v1702
    %2293 = vmatpush1.bf16.msra.mxu0 %v1701
    %2294 = vmatprep.subr.bf16.mxu0 %v1711
    %2295 = vmatpush1.bf16.msra.mxu0 %v1710
    %2296 = vmatprep.subr.bf16.mxu0 %v1720
    %2297 = vmatpush1.bf16.msra.mxu0 %v1719
    %2298 = vmatprep.subr.bf16.mxu0 %v1729
    %2299 = vmatpush1.bf16.msra.mxu0 %v1728
    %2300 = vmatprep.subr.bf16.mxu0 %v1738
    %2301 = vmatpush1.bf16.msra.mxu0 %v1737
    %2302 = vmatprep.subr.bf16.mxu0 %v1747
    %2303 = vmatpush1.bf16.msra.mxu0 %v1746
    %2304 = vmatprep.subr.bf16.mxu0 %v1756
    %2305 = vmatpush1.bf16.msra.mxu0 %v1755
    %2306 = vmatprep.subr.bf16.mxu0 %v1765
    %2307 = vmatpush1.bf16.msra.mxu0 %v1764
    %2308 = vmatprep.subr.bf16.mxu0 %v1774
    %2309 = vmatpush1.bf16.msra.mxu0 %v1773
    %2310 = vmatprep.subr.bf16.mxu0 %v1783
    %2311 = vmatpush1.bf16.msra.mxu0 %v1782
    %2312 = vmatprep.mubr.bf16.mxu0 %v598
    %2313 = vmatmul.mubr.bf16.gmra.mrb[0].mxu0 %v596
    %v2314 = vpop.f32.mrb[0].mxu0
    %v2315 = vadd.f32 %v2274, %v2314
    %v2316 = vpop.f32.mrb[0].mxu0
    %v2317 = vadd.f32 %v2276, %v2316
    %v2318 = vpop.f32.mrb[0].mxu0
    %v2319 = vpop.f32.mrb[0].mxu0
    %2320 = vdwg.mxu0
    %2321 = vmatprep.subr.bf16.mxu0 %v1506
    %2322 = vmatpush1.bf16.msra.mxu0 %v1505
    %2323 = vmatprep.subr.bf16.mxu0 %v1515
    %2324 = vmatpush1.bf16.msra.mxu0 %v1514
    %2325 = vmatprep.subr.bf16.mxu0 %v1524
    %2326 = vmatpush1.bf16.msra.mxu0 %v1523
    %2327 = vmatprep.subr.bf16.mxu0 %v1533
    %2328 = vmatpush1.bf16.msra.mxu0 %v1532
    %2329 = vmatprep.subr.bf16.mxu0 %v1542
    %2330 = vmatpush1.bf16.msra.mxu0 %v1541
    %2331 = vmatprep.subr.bf16.mxu0 %v1551
    %2332 = vmatpush1.bf16.msra.mxu0 %v1550
    %2333 = vmatprep.subr.bf16.mxu0 %v1560
    %2334 = vmatpush1.bf16.msra.mxu0 %v1559
    %2335 = vmatprep.subr.bf16.mxu0 %v1569
    %2336 = vmatpush1.bf16.msra.mxu0 %v1568
    %2337 = vmatprep.subr.bf16.mxu0 %v1578
    %2338 = vmatpush1.bf16.msra.mxu0 %v1577
    %2339 = vmatprep.subr.bf16.mxu0 %v1587
    %2340 = vmatpush1.bf16.msra.mxu0 %v1586
    %2341 = vmatprep.subr.bf16.mxu0 %v1596
    %2342 = vmatpush1.bf16.msra.mxu0 %v1595
    %2343 = vmatprep.subr.bf16.mxu0 %v1605
    %2344 = vmatpush1.bf16.msra.mxu0 %v1604
    %2345 = vmatprep.subr.bf16.mxu0 %v1614
    %2346 = vmatpush1.bf16.msra.mxu0 %v1613
    %2347 = vmatprep.subr.bf16.mxu0 %v1623
    %2348 = vmatpush1.bf16.msra.mxu0 %v1622
    %2349 = vmatprep.subr.bf16.mxu0 %v1632
    %2350 = vmatpush1.bf16.msra.mxu0 %v1631
    %2351 = vmatprep.subr.bf16.mxu0 %v1641
    %2352 = vmatpush1.bf16.msra.mxu0 %v1640
    %2353 = vmatprep.mubr.bf16.mxu0 %v597
    %2354 = vmatmul.mubr.bf16.gmra.mrb[0].mxu0 %v589
    %v2355 = vpop.f32.mrb[0].mxu0
    %v2356 = vadd.f32 0.0, %v2355
    %v2357 = vpop.f32.mrb[0].mxu0
    %v2358 = vadd.f32 0.0, %v2357
    %v2359 = vpop.f32.mrb[0].mxu0
    %v2360 = vpop.f32.mrb[0].mxu0
    %2361 = vdwg.mxu0
    %2362 = vmatprep.subr.bf16.mxu0 %v1650
    %2363 = vmatpush1.bf16.msra.mxu0 %v1649
    %2364 = vmatprep.subr.bf16.mxu0 %v1659
    %2365 = vmatpush1.bf16.msra.mxu0 %v1658
    %2366 = vmatprep.subr.bf16.mxu0 %v1668
    %2367 = vmatpush1.bf16.msra.mxu0 %v1667
    %2368 = vmatprep.subr.bf16.mxu0 %v1677
    %2369 = vmatpush1.bf16.msra.mxu0 %v1676
    %2370 = vmatprep.subr.bf16.mxu0 %v1686
    %2371 = vmatpush1.bf16.msra.mxu0 %v1685
    %2372 = vmatprep.subr.bf16.mxu0 %v1695
    %2373 = vmatpush1.bf16.msra.mxu0 %v1694
    %2374 = vmatprep.subr.bf16.mxu0 %v1704
    %2375 = vmatpush1.bf16.msra.mxu0 %v1703
    %2376 = vmatprep.subr.bf16.mxu0 %v1713
    %2377 = vmatpush1.bf16.msra.mxu0 %v1712
    %2378 = vmatprep.subr.bf16.mxu0 %v1722
    %2379 = vmatpush1.bf16.msra.mxu0 %v1721
    %2380 = vmatprep.subr.bf16.mxu0 %v1731
    %2381 = vmatpush1.bf16.msra.mxu0 %v1730
    %2382 = vmatprep.subr.bf16.mxu0 %v1740
    %2383 = vmatpush1.bf16.msra.mxu0 %v1739
    %2384 = vmatprep.subr.bf16.mxu0 %v1749
    %2385 = vmatpush1.bf16.msra.mxu0 %v1748
    %2386 = vmatprep.subr.bf16.mxu0 %v1758
    %2387 = vmatpush1.bf16.msra.mxu0 %v1757
    %2388 = vmatprep.subr.bf16.mxu0 %v1767
    %2389 = vmatpush1.bf16.msra.mxu0 %v1766
    %2390 = vmatprep.subr.bf16.mxu0 %v1776
    %2391 = vmatpush1.bf16.msra.mxu0 %v1775
    %2392 = vmatprep.subr.bf16.mxu0 %v1785
    %2393 = vmatpush1.bf16.msra.mxu0 %v1784
    %2394 = vmatprep.mubr.bf16.mxu0 %v598
    %2395 = vmatmul.mubr.bf16.gmra.mrb[0].mxu0 %v596
    %v2396 = vpop.f32.mrb[0].mxu0
    %v2397 = vadd.f32 %v2356, %v2396
    %v2398 = vpop.f32.mrb[0].mxu0
    %v2399 = vadd.f32 %v2358, %v2398
    %v2400 = vpop.f32.mrb[0].mxu0
    %v2401 = vpop.f32.mrb[0].mxu0
    %2402 = vdwg.mxu0
    %2403 = vmatprep.subr.bf16.mxu0 0
    %2404 = vmatpush1.bf16.msra.mxu0 %v1507
    %2405 = vmatprep.subr.bf16.mxu0 0
    %2406 = vmatpush1.bf16.msra.mxu0 %v1516
    %2407 = vmatprep.subr.bf16.mxu0 0
    %2408 = vmatpush1.bf16.msra.mxu0 %v1525
    %2409 = vmatprep.subr.bf16.mxu0 0
    %2410 = vmatpush1.bf16.msra.mxu0 %v1534
    %2411 = vmatprep.subr.bf16.mxu0 0
    %2412 = vmatpush1.bf16.msra.mxu0 %v1543
    %2413 = vmatprep.subr.bf16.mxu0 0
    %2414 = vmatpush1.bf16.msra.mxu0 %v1552
    %2415 = vmatprep.subr.bf16.mxu0 0
    %2416 = vmatpush1.bf16.msra.mxu0 %v1561
    %2417 = vmatprep.subr.bf16.mxu0 0
    %2418 = vmatpush1.bf16.msra.mxu0 %v1570
    %2419 = vmatprep.subr.bf16.mxu0 0
    %2420 = vmatpush1.bf16.msra.mxu0 %v1579
    %2421 = vmatprep.subr.bf16.mxu0 0
    %2422 = vmatpush1.bf16.msra.mxu0 %v1588
    %2423 = vmatprep.subr.bf16.mxu0 0
    %2424 = vmatpush1.bf16.msra.mxu0 %v1597
    %2425 = vmatprep.subr.bf16.mxu0 0
    %2426 = vmatpush1.bf16.msra.mxu0 %v1606
    %2427 = vmatprep.subr.bf16.mxu0 0
    %2428 = vmatpush1.bf16.msra.mxu0 %v1615
    %2429 = vmatprep.subr.bf16.mxu0 0
    %2430 = vmatpush1.bf16.msra.mxu0 %v1624
    %2431 = vmatprep.subr.bf16.mxu0 0
    %2432 = vmatpush1.bf16.msra.mxu0 %v1633
    %2433 = vmatprep.subr.bf16.mxu0 0
    %2434 = vmatpush1.bf16.msra.mxu0 %v1642
    %2435 = vmatprep.mubr.bf16.mxu0 %v597
    %2436 = vmatmul.mubr.bf16.gmra.mrb[0].mxu0 %v589
    %v2437 = vpop.f32.mrb[0].mxu0
    %v2438 = vadd.f32 0.0, %v2437
    %v2439 = vpop.f32.mrb[0].mxu0
    %v2440 = vpop.f32.mrb[0].mxu0
    %v2441 = vpop.f32.mrb[0].mxu0
    %2442 = vdwg.mxu0
    %2443 = vmatprep.subr.bf16.mxu0 0
    %2444 = vmatpush1.bf16.msra.mxu0 %v1651
    %2445 = vmatprep.subr.bf16.mxu0 0
    %2446 = vmatpush1.bf16.msra.mxu0 %v1660
    %2447 = vmatprep.subr.bf16.mxu0 0
    %2448 = vmatpush1.bf16.msra.mxu0 %v1669
    %2449 = vmatprep.subr.bf16.mxu0 0
    %2450 = vmatpush1.bf16.msra.mxu0 %v1678
    %2451 = vmatprep.subr.bf16.mxu0 0
    %2452 = vmatpush1.bf16.msra.mxu0 %v1687
    %2453 = vmatprep.subr.bf16.mxu0 0
    %2454 = vmatpush1.bf16.msra.mxu0 %v1696
    %2455 = vmatprep.subr.bf16.mxu0 0
    %2456 = vmatpush1.bf16.msra.mxu0 %v1705
    %2457 = vmatprep.subr.bf16.mxu0 0
    %2458 = vmatpush1.bf16.msra.mxu0 %v1714
    %2459 = vmatprep.subr.bf16.mxu0 0
    %2460 = vmatpush1.bf16.msra.mxu0 %v1723
    %2461 = vmatprep.subr.bf16.mxu0 0
    %2462 = vmatpush1.bf16.msra.mxu0 %v1732
    %2463 = vmatprep.subr.bf16.mxu0 0
    %2464 = vmatpush1.bf16.msra.mxu0 %v1741
    %2465 = vmatprep.subr.bf16.mxu0 0
    %2466 = vmatpush1.bf16.msra.mxu0 %v1750
    %2467 = vmatprep.subr.bf16.mxu0 0
    %2468 = vmatpush1.bf16.msra.mxu0 %v1759
    %2469 = vmatprep.subr.bf16.mxu0 0
    %2470 = vmatpush1.bf16.msra.mxu0 %v1768
    %2471 = vmatprep.subr.bf16.mxu0 0
    %2472 = vmatpush1.bf16.msra.mxu0 %v1777
    %2473 = vmatprep.subr.bf16.mxu0 0
    %2474 = vmatpush1.bf16.msra.mxu0 %v1786
    %2475 = vmatprep.mubr.bf16.mxu0 %v598
    %2476 = vmatmul.mubr.bf16.gmra.mrb[0].mxu0 %v596
    %v2477 = vpop.f32.mrb[0].mxu0
    %v2478 = vadd.f32 %v2438, %v2477
    %v2479 = vpop.f32.mrb[0].mxu0
    %v2480 = vpop.f32.mrb[0].mxu0
    %v2481 = vpop.f32.mrb[0].mxu0
    %2482 = vdwg.mxu0
    %v2483 = vpack.c.bf16 %v2151, %v2151
    %v2484 = vld [vmem:[%s7] sm:$0xf]
    %v2485 = vpack.c.bf16 %v2153, %v2153
    %s2486 = scalar_lea.vmem %s7, 4
    %v2487 = vld [vmem:[%s2486] sm:$0xf]
    %vm2488 = vcmask 31744
    %v2490 = vsel %vm2488, %v2487, 0
    %vm2492 = vcmask 1041408
    %v2494 = vsel %vm2492, %v2485, 0
    %2496 = vmatprep.subr.bf16.mxu0 0
    %2497 = vmatpush1.bf16.msra.mxu0 %v2494
    %2498 = vmatprep.subr.bf16.mxu0 0
    %2499 = vmatpush1.bf16.msra.mxu0 0
    %2500 = vmatprep.subr.bf16.mxu0 0
    %2501 = vmatpush1.bf16.msra.mxu0 0
    %2502 = vmatprep.subr.bf16.mxu0 0
    %2503 = vmatpush1.bf16.msra.mxu0 0
    %2504 = vmatprep.subr.bf16.mxu0 0
    %2505 = vmatpush1.bf16.msra.mxu0 0
    %2506 = vmatprep.subr.bf16.mxu0 0
    %2507 = vmatpush1.bf16.msra.mxu0 0
    %2508 = vmatprep.subr.bf16.mxu0 0
    %2509 = vmatpush1.bf16.msra.mxu0 0
    %2510 = vmatprep.subr.bf16.mxu0 0
    %2511 = vmatpush1.bf16.msra.mxu0 0
    %2512 = vmatprep.subr.bf16.mxu0 0
    %2513 = vmatpush1.bf16.msra.mxu0 0
    %2514 = vmatprep.subr.bf16.mxu0 0
    %2515 = vmatpush1.bf16.msra.mxu0 0
    %2516 = vmatprep.subr.bf16.mxu0 0
    %2517 = vmatpush1.bf16.msra.mxu0 0
    %2518 = vmatprep.subr.bf16.mxu0 0
    %2519 = vmatpush1.bf16.msra.mxu0 0
    %2520 = vmatprep.subr.bf16.mxu0 0
    %2521 = vmatpush1.bf16.msra.mxu0 0
    %2522 = vmatprep.subr.bf16.mxu0 0
    %2523 = vmatpush1.bf16.msra.mxu0 0
    %2524 = vmatprep.subr.bf16.mxu0 0
    %2525 = vmatpush1.bf16.msra.mxu0 0
    %2526 = vmatprep.subr.bf16.mxu0 0
    %2527 = vmatpush1.bf16.msra.mxu0 0
    %2528 = vmatprep.mubr.bf16.mxu0 0
    %2529 = vmatmul.mubr.bf16.gmra.mrb[0].mxu0 %v2490
    %v2530 = vpop.f32.mrb[0].mxu0
    %v2531 = vadd.f32 0.0, %v2530
    %v2532 = vpop.f32.mrb[0].mxu0
    %v2533 = vpop.f32.mrb[0].mxu0
    %v2534 = vpop.f32.mrb[0].mxu0
    %2535 = vdwg.mxu0
    %v2537 = vsel %vm2488, %v2484, 0
    %v2540 = vsel %vm2492, %v2483, 0
    %2542 = vmatprep.subr.bf16.mxu0 0
    %2543 = vmatpush1.bf16.msra.mxu0 %v2540
    %2544 = vmatprep.subr.bf16.mxu0 0
    %2545 = vmatpush1.bf16.msra.mxu0 0
    %2546 = vmatprep.subr.bf16.mxu0 0
    %2547 = vmatpush1.bf16.msra.mxu0 0
    %2548 = vmatprep.subr.bf16.mxu0 0
    %2549 = vmatpush1.bf16.msra.mxu0 0
    %2550 = vmatprep.subr.bf16.mxu0 0
    %2551 = vmatpush1.bf16.msra.mxu0 0
    %2552 = vmatprep.subr.bf16.mxu0 0
    %2553 = vmatpush1.bf16.msra.mxu0 0
    %2554 = vmatprep.subr.bf16.mxu0 0
    %2555 = vmatpush1.bf16.msra.mxu0 0
    %2556 = vmatprep.subr.bf16.mxu0 0
    %2557 = vmatpush1.bf16.msra.mxu0 0
    %2558 = vmatprep.subr.bf16.mxu0 0
    %2559 = vmatpush1.bf16.msra.mxu0 0
    %2560 = vmatprep.subr.bf16.mxu0 0
    %2561 = vmatpush1.bf16.msra.mxu0 0
    %2562 = vmatprep.subr.bf16.mxu0 0
    %2563 = vmatpush1.bf16.msra.mxu0 0
    %2564 = vmatprep.subr.bf16.mxu0 0
    %2565 = vmatpush1.bf16.msra.mxu0 0
    %2566 = vmatprep.subr.bf16.mxu0 0
    %2567 = vmatpush1.bf16.msra.mxu0 0
    %2568 = vmatprep.subr.bf16.mxu0 0
    %2569 = vmatpush1.bf16.msra.mxu0 0
    %2570 = vmatprep.subr.bf16.mxu0 0
    %2571 = vmatpush1.bf16.msra.mxu0 0
    %2572 = vmatprep.subr.bf16.mxu0 0
    %2573 = vmatpush1.bf16.msra.mxu0 0
    %2574 = vmatprep.mubr.bf16.mxu0 0
    %2575 = vmatmul.mubr.bf16.gmra.mrb[0].mxu0 %v2537
    %v2576 = vpop.f32.mrb[0].mxu0
    %v2577 = vadd.f32 %v2531, %v2576
    %v2578 = vpop.f32.mrb[0].mxu0
    %v2579 = vpop.f32.mrb[0].mxu0
    %v2580 = vpop.f32.mrb[0].mxu0
    %2581 = vdwg.mxu0
    %v2582 = vpack.c.bf16 %v2233, %v2233
    %s2583 = scalar_lea.vmem %s7, 8
    %v2584 = vld [vmem:[%s2583] sm:$0xf]
    %v2586 = vsel %vm2488, %v2584, 0
    %v2589 = vsel %vm2492, %v2582, 0
    %2591 = vmatprep.subr.bf16.mxu0 0
    %2592 = vmatpush1.bf16.msra.mxu0 %v2589
    %2593 = vmatprep.subr.bf16.mxu0 0
    %2594 = vmatpush1.bf16.msra.mxu0 0
    %2595 = vmatprep.subr.bf16.mxu0 0
    %2596 = vmatpush1.bf16.msra.mxu0 0
    %2597 = vmatprep.subr.bf16.mxu0 0
    %2598 = vmatpush1.bf16.msra.mxu0 0
    %2599 = vmatprep.subr.bf16.mxu0 0
    %2600 = vmatpush1.bf16.msra.mxu0 0
    %2601 = vmatprep.subr.bf16.mxu0 0
    %2602 = vmatpush1.bf16.msra.mxu0 0
    %2603 = vmatprep.subr.bf16.mxu0 0
    %2604 = vmatpush1.bf16.msra.mxu0 0
    %2605 = vmatprep.subr.bf16.mxu0 0
    %2606 = vmatpush1.bf16.msra.mxu0 0
    %2607 = vmatprep.subr.bf16.mxu0 0
    %2608 = vmatpush1.bf16.msra.mxu0 0
    %2609 = vmatprep.subr.bf16.mxu0 0
    %2610 = vmatpush1.bf16.msra.mxu0 0
    %2611 = vmatprep.subr.bf16.mxu0 0
    %2612 = vmatpush1.bf16.msra.mxu0 0
    %2613 = vmatprep.subr.bf16.mxu0 0
    %2614 = vmatpush1.bf16.msra.mxu0 0
    %2615 = vmatprep.subr.bf16.mxu0 0
    %2616 = vmatpush1.bf16.msra.mxu0 0
    %2617 = vmatprep.subr.bf16.mxu0 0
    %2618 = vmatpush1.bf16.msra.mxu0 0
    %2619 = vmatprep.subr.bf16.mxu0 0
    %2620 = vmatpush1.bf16.msra.mxu0 0
    %2621 = vmatprep.subr.bf16.mxu0 0
    %2622 = vmatpush1.bf16.msra.mxu0 0
    %2623 = vmatprep.mubr.bf16.mxu0 0
    %2624 = vmatmul.mubr.bf16.gmra.mrb[0].mxu0 %v2586
    %v2625 = vpop.f32.mrb[0].mxu0
    %v2626 = vadd.f32 0.0, %v2625
    %v2627 = vpop.f32.mrb[0].mxu0
    %v2628 = vpop.f32.mrb[0].mxu0
    %v2629 = vpop.f32.mrb[0].mxu0
    %2630 = vdwg.mxu0
    %v2631 = vadd.f32 %v2577, %v2626
    %v2632 = vpack.c.bf16 %v2235, %v2235
    %s2633 = scalar_lea.vmem %s7, 12
    %v2634 = vld [vmem:[%s2633] sm:$0xf]
    %v2636 = vsel %vm2488, %v2634, 0
    %v2639 = vsel %vm2492, %v2632, 0
    %2641 = vmatprep.subr.bf16.mxu0 0
    %2642 = vmatpush1.bf16.msra.mxu0 %v2639
    %2643 = vmatprep.subr.bf16.mxu0 0
    %2644 = vmatpush1.bf16.msra.mxu0 0
    %2645 = vmatprep.subr.bf16.mxu0 0
    %2646 = vmatpush1.bf16.msra.mxu0 0
    %2647 = vmatprep.subr.bf16.mxu0 0
    %2648 = vmatpush1.bf16.msra.mxu0 0
    %2649 = vmatprep.subr.bf16.mxu0 0
    %2650 = vmatpush1.bf16.msra.mxu0 0
    %2651 = vmatprep.subr.bf16.mxu0 0
    %2652 = vmatpush1.bf16.msra.mxu0 0
    %2653 = vmatprep.subr.bf16.mxu0 0
    %2654 = vmatpush1.bf16.msra.mxu0 0
    %2655 = vmatprep.subr.bf16.mxu0 0
    %2656 = vmatpush1.bf16.msra.mxu0 0
    %2657 = vmatprep.subr.bf16.mxu0 0
    %2658 = vmatpush1.bf16.msra.mxu0 0
    %2659 = vmatprep.subr.bf16.mxu0 0
    %2660 = vmatpush1.bf16.msra.mxu0 0
    %2661 = vmatprep.subr.bf16.mxu0 0
    %2662 = vmatpush1.bf16.msra.mxu0 0
    %2663 = vmatprep.subr.bf16.mxu0 0
    %2664 = vmatpush1.bf16.msra.mxu0 0
    %2665 = vmatprep.subr.bf16.mxu0 0
    %2666 = vmatpush1.bf16.msra.mxu0 0
    %2667 = vmatprep.subr.bf16.mxu0 0
    %2668 = vmatpush1.bf16.msra.mxu0 0
    %2669 = vmatprep.subr.bf16.mxu0 0
    %2670 = vmatpush1.bf16.msra.mxu0 0
    %2671 = vmatprep.subr.bf16.mxu0 0
    %2672 = vmatpush1.bf16.msra.mxu0 0
    %2673 = vmatprep.mubr.bf16.mxu0 0
    %2674 = vmatmul.mubr.bf16.gmra.mrb[0].mxu0 %v2636
    %v2675 = vpop.f32.mrb[0].mxu0
    %v2676 = vadd.f32 0.0, %v2675
    %v2677 = vpop.f32.mrb[0].mxu0
    %v2678 = vpop.f32.mrb[0].mxu0
    %v2679 = vpop.f32.mrb[0].mxu0
    %2680 = vdwg.mxu0
    %v2681 = vadd.f32 %v2631, %v2676
    %v2682 = vpack.c.bf16 %v2315, %v2315
    %s2683 = scalar_lea.vmem %s7, 16
    %v2684 = vld [vmem:[%s2683] sm:$0xf]
    %v2686 = vsel %vm2488, %v2684, 0
    %v2689 = vsel %vm2492, %v2682, 0
    %2691 = vmatprep.subr.bf16.mxu0 0
    %2692 = vmatpush1.bf16.msra.mxu0 %v2689
    %2693 = vmatprep.subr.bf16.mxu0 0
    %2694 = vmatpush1.bf16.msra.mxu0 0
    %2695 = vmatprep.subr.bf16.mxu0 0
    %2696 = vmatpush1.bf16.msra.mxu0 0
    %2697 = vmatprep.subr.bf16.mxu0 0
    %2698 = vmatpush1.bf16.msra.mxu0 0
    %2699 = vmatprep.subr.bf16.mxu0 0
    %2700 = vmatpush1.bf16.msra.mxu0 0
    %2701 = vmatprep.subr.bf16.mxu0 0
    %2702 = vmatpush1.bf16.msra.mxu0 0
    %2703 = vmatprep.subr.bf16.mxu0 0
    %2704 = vmatpush1.bf16.msra.mxu0 0
    %2705 = vmatprep.subr.bf16.mxu0 0
    %2706 = vmatpush1.bf16.msra.mxu0 0
    %2707 = vmatprep.subr.bf16.mxu0 0
    %2708 = vmatpush1.bf16.msra.mxu0 0
    %2709 = vmatprep.subr.bf16.mxu0 0
    %2710 = vmatpush1.bf16.msra.mxu0 0
    %2711 = vmatprep.subr.bf16.mxu0 0
    %2712 = vmatpush1.bf16.msra.mxu0 0
    %2713 = vmatprep.subr.bf16.mxu0 0
    %2714 = vmatpush1.bf16.msra.mxu0 0
    %2715 = vmatprep.subr.bf16.mxu0 0
    %2716 = vmatpush1.bf16.msra.mxu0 0
    %2717 = vmatprep.subr.bf16.mxu0 0
    %2718 = vmatpush1.bf16.msra.mxu0 0
    %2719 = vmatprep.subr.bf16.mxu0 0
    %2720 = vmatpush1.bf16.msra.mxu0 0
    %2721 = vmatprep.subr.bf16.mxu0 0
    %2722 = vmatpush1.bf16.msra.mxu0 0
    %2723 = vmatprep.mubr.bf16.mxu0 0
    %2724 = vmatmul.mubr.bf16.gmra.mrb[0].mxu0 %v2686
    %v2725 = vpop.f32.mrb[0].mxu0
    %v2726 = vadd.f32 0.0, %v2725
    %v2727 = vpop.f32.mrb[0].mxu0
    %v2728 = vpop.f32.mrb[0].mxu0
    %v2729 = vpop.f32.mrb[0].mxu0
    %2730 = vdwg.mxu0
    %v2731 = vadd.f32 %v2681, %v2726
    %v2732 = vpack.c.bf16 %v2317, %v2317
    %s2733 = scalar_lea.vmem %s7, 20
    %v2734 = vld [vmem:[%s2733] sm:$0xf]
    %v2736 = vsel %vm2488, %v2734, 0
    %v2739 = vsel %vm2492, %v2732, 0
    %2741 = vmatprep.subr.bf16.mxu0 0
    %2742 = vmatpush1.bf16.msra.mxu0 %v2739
    %2743 = vmatprep.subr.bf16.mxu0 0
    %2744 = vmatpush1.bf16.msra.mxu0 0
    %2745 = vmatprep.subr.bf16.mxu0 0
    %2746 = vmatpush1.bf16.msra.mxu0 0
    %2747 = vmatprep.subr.bf16.mxu0 0
    %2748 = vmatpush1.bf16.msra.mxu0 0
    %2749 = vmatprep.subr.bf16.mxu0 0
    %2750 = vmatpush1.bf16.msra.mxu0 0
    %2751 = vmatprep.subr.bf16.mxu0 0
    %2752 = vmatpush1.bf16.msra.mxu0 0
    %2753 = vmatprep.subr.bf16.mxu0 0
    %2754 = vmatpush1.bf16.msra.mxu0 0
    %2755 = vmatprep.subr.bf16.mxu0 0
    %2756 = vmatpush1.bf16.msra.mxu0 0
    %2757 = vmatprep.subr.bf16.mxu0 0
    %2758 = vmatpush1.bf16.msra.mxu0 0
    %2759 = vmatprep.subr.bf16.mxu0 0
    %2760 = vmatpush1.bf16.msra.mxu0 0
    %2761 = vmatprep.subr.bf16.mxu0 0
    %2762 = vmatpush1.bf16.msra.mxu0 0
    %2763 = vmatprep.subr.bf16.mxu0 0
    %2764 = vmatpush1.bf16.msra.mxu0 0
    %2765 = vmatprep.subr.bf16.mxu0 0
    %2766 = vmatpush1.bf16.msra.mxu0 0
    %2767 = vmatprep.subr.bf16.mxu0 0
    %2768 = vmatpush1.bf16.msra.mxu0 0
    %2769 = vmatprep.subr.bf16.mxu0 0
    %2770 = vmatpush1.bf16.msra.mxu0 0
    %2771 = vmatprep.subr.bf16.mxu0 0
    %2772 = vmatpush1.bf16.msra.mxu0 0
    %2773 = vmatprep.mubr.bf16.mxu0 0
    %2774 = vmatmul.mubr.bf16.gmra.mrb[0].mxu0 %v2736
    %v2775 = vpop.f32.mrb[0].mxu0
    %v2776 = vadd.f32 0.0, %v2775
    %v2777 = vpop.f32.mrb[0].mxu0
    %v2778 = vpop.f32.mrb[0].mxu0
    %v2779 = vpop.f32.mrb[0].mxu0
    %2780 = vdwg.mxu0
    %v2781 = vadd.f32 %v2731, %v2776
    %v2782 = vpack.c.bf16 %v2397, %v2397
    %s2783 = scalar_lea.vmem %s7, 24
    %v2784 = vld [vmem:[%s2783] sm:$0xf]
    %v2786 = vsel %vm2488, %v2784, 0
    %v2789 = vsel %vm2492, %v2782, 0
    %2791 = vmatprep.subr.bf16.mxu0 0
    %2792 = vmatpush1.bf16.msra.mxu0 %v2789
    %2793 = vmatprep.subr.bf16.mxu0 0
    %2794 = vmatpush1.bf16.msra.mxu0 0
    %2795 = vmatprep.subr.bf16.mxu0 0
    %2796 = vmatpush1.bf16.msra.mxu0 0
    %2797 = vmatprep.subr.bf16.mxu0 0
    %2798 = vmatpush1.bf16.msra.mxu0 0
    %2799 = vmatprep.subr.bf16.mxu0 0
    %2800 = vmatpush1.bf16.msra.mxu0 0
    %2801 = vmatprep.subr.bf16.mxu0 0
    %2802 = vmatpush1.bf16.msra.mxu0 0
    %2803 = vmatprep.subr.bf16.mxu0 0
    %2804 = vmatpush1.bf16.msra.mxu0 0
    %2805 = vmatprep.subr.bf16.mxu0 0
    %2806 = vmatpush1.bf16.msra.mxu0 0
    %2807 = vmatprep.subr.bf16.mxu0 0
    %2808 = vmatpush1.bf16.msra.mxu0 0
    %2809 = vmatprep.subr.bf16.mxu0 0
    %2810 = vmatpush1.bf16.msra.mxu0 0
    %2811 = vmatprep.subr.bf16.mxu0 0
    %2812 = vmatpush1.bf16.msra.mxu0 0
    %2813 = vmatprep.subr.bf16.mxu0 0
    %2814 = vmatpush1.bf16.msra.mxu0 0
    %2815 = vmatprep.subr.bf16.mxu0 0
    %2816 = vmatpush1.bf16.msra.mxu0 0
    %2817 = vmatprep.subr.bf16.mxu0 0
    %2818 = vmatpush1.bf16.msra.mxu0 0
    %2819 = vmatprep.subr.bf16.mxu0 0
    %2820 = vmatpush1.bf16.msra.mxu0 0
    %2821 = vmatprep.subr.bf16.mxu0 0
    %2822 = vmatpush1.bf16.msra.mxu0 0
    %2823 = vmatprep.mubr.bf16.mxu0 0
    %2824 = vmatmul.mubr.bf16.gmra.mrb[0].mxu0 %v2786
    %v2825 = vpop.f32.mrb[0].mxu0
    %v2826 = vadd.f32 0.0, %v2825
    %v2827 = vpop.f32.mrb[0].mxu0
    %v2828 = vpop.f32.mrb[0].mxu0
    %v2829 = vpop.f32.mrb[0].mxu0
    %2830 = vdwg.mxu0
    %v2831 = vadd.f32 %v2781, %v2826
    %v2832 = vpack.c.bf16 %v2399, %v2399
    %s2833 = scalar_lea.vmem %s7, 28
    %v2834 = vld [vmem:[%s2833] sm:$0xf]
    %v2836 = vsel %vm2488, %v2834, 0
    %v2839 = vsel %vm2492, %v2832, 0
    %2841 = vmatprep.subr.bf16.mxu0 0
    %2842 = vmatpush1.bf16.msra.mxu0 %v2839
    %2843 = vmatprep.subr.bf16.mxu0 0
    %2844 = vmatpush1.bf16.msra.mxu0 0
    %2845 = vmatprep.subr.bf16.mxu0 0
    %2846 = vmatpush1.bf16.msra.mxu0 0
    %2847 = vmatprep.subr.bf16.mxu0 0
    %2848 = vmatpush1.bf16.msra.mxu0 0
    %2849 = vmatprep.subr.bf16.mxu0 0
    %2850 = vmatpush1.bf16.msra.mxu0 0
    %2851 = vmatprep.subr.bf16.mxu0 0
    %2852 = vmatpush1.bf16.msra.mxu0 0
    %2853 = vmatprep.subr.bf16.mxu0 0
    %2854 = vmatpush1.bf16.msra.mxu0 0
    %2855 = vmatprep.subr.bf16.mxu0 0
    %2856 = vmatpush1.bf16.msra.mxu0 0
    %2857 = vmatprep.subr.bf16.mxu0 0
    %2858 = vmatpush1.bf16.msra.mxu0 0
    %2859 = vmatprep.subr.bf16.mxu0 0
    %2860 = vmatpush1.bf16.msra.mxu0 0
    %2861 = vmatprep.subr.bf16.mxu0 0
    %2862 = vmatpush1.bf16.msra.mxu0 0
    %2863 = vmatprep.subr.bf16.mxu0 0
    %2864 = vmatpush1.bf16.msra.mxu0 0
    %2865 = vmatprep.subr.bf16.mxu0 0
    %2866 = vmatpush1.bf16.msra.mxu0 0
    %2867 = vmatprep.subr.bf16.mxu0 0
    %2868 = vmatpush1.bf16.msra.mxu0 0
    %2869 = vmatprep.subr.bf16.mxu0 0
    %2870 = vmatpush1.bf16.msra.mxu0 0
    %2871 = vmatprep.subr.bf16.mxu0 0
    %2872 = vmatpush1.bf16.msra.mxu0 0
    %2873 = vmatprep.mubr.bf16.mxu0 0
    %2874 = vmatmul.mubr.bf16.gmra.mrb[0].mxu0 %v2836
    %v2875 = vpop.f32.mrb[0].mxu0
    %v2876 = vadd.f32 0.0, %v2875
    %v2877 = vpop.f32.mrb[0].mxu0
    %v2878 = vpop.f32.mrb[0].mxu0
    %v2879 = vpop.f32.mrb[0].mxu0
    %2880 = vdwg.mxu0
    %v2881 = vadd.f32 %v2831, %v2876
    %v2882 = vpack.c.bf16 %v2478, %v2478
    %s2883 = scalar_lea.vmem %s7, 32
    %v2884 = vld [vmem:[%s2883] sm:$0xf]
    %v2886 = vsel %vm2488, %v2884, 0
    %v2889 = vsel %vm2492, %v2882, 0
    %2891 = vmatprep.subr.bf16.mxu0 0
    %2892 = vmatpush1.bf16.msra.mxu0 %v2889
    %2893 = vmatprep.subr.bf16.mxu0 0
    %2894 = vmatpush1.bf16.msra.mxu0 0
    %2895 = vmatprep.subr.bf16.mxu0 0
    %2896 = vmatpush1.bf16.msra.mxu0 0
    %2897 = vmatprep.subr.bf16.mxu0 0
    %2898 = vmatpush1.bf16.msra.mxu0 0
    %2899 = vmatprep.subr.bf16.mxu0 0
    %2900 = vmatpush1.bf16.msra.mxu0 0
    %2901 = vmatprep.subr.bf16.mxu0 0
    %2902 = vmatpush1.bf16.msra.mxu0 0
    %2903 = vmatprep.subr.bf16.mxu0 0
    %2904 = vmatpush1.bf16.msra.mxu0 0
    %2905 = vmatprep.subr.bf16.mxu0 0
    %2906 = vmatpush1.bf16.msra.mxu0 0
    %2907 = vmatprep.subr.bf16.mxu0 0
    %2908 = vmatpush1.bf16.msra.mxu0 0
    %2909 = vmatprep.subr.bf16.mxu0 0
    %2910 = vmatpush1.bf16.msra.mxu0 0
    %2911 = vmatprep.subr.bf16.mxu0 0
    %2912 = vmatpush1.bf16.msra.mxu0 0
    %2913 = vmatprep.subr.bf16.mxu0 0
    %2914 = vmatpush1.bf16.msra.mxu0 0
    %2915 = vmatprep.subr.bf16.mxu0 0
    %2916 = vmatpush1.bf16.msra.mxu0 0
    %2917 = vmatprep.subr.bf16.mxu0 0
    %2918 = vmatpush1.bf16.msra.mxu0 0
    %2919 = vmatprep.subr.bf16.mxu0 0
    %2920 = vmatpush1.bf16.msra.mxu0 0
    %2921 = vmatprep.subr.bf16.mxu0 0
    %2922 = vmatpush1.bf16.msra.mxu0 0
    %2923 = vmatprep.mubr.bf16.mxu0 0
    %2924 = vmatmul.mubr.bf16.gmra.mrb[0].mxu0 %v2886
    %v2925 = vpop.f32.mrb[0].mxu0
    %v2926 = vadd.f32 0.0, %v2925
    %v2927 = vpop.f32.mrb[0].mxu0
    %v2928 = vpop.f32.mrb[0].mxu0
    %v2929 = vpop.f32.mrb[0].mxu0
    %2930 = vdwg.mxu0
    %v2931 = vadd.f32 %v2881, %v2926
    %v2932 = vld [vmem:[%s9] sm:$0xff]
    %2934 = vset.pattern.permute.xlu0 0
    %2935 = vperm.xlu0 %2934, %v2932
    %v2936 = vpop.permute.xlu0 %2935
    %v2938 = vadd.f32 %v2931, %v2936
    %v2939 = vmax.f32 %v2938, 0.0
    %v2940 = vpack.c.bf16 %v2939, %v2939
    %v2941 = vld [vmem:[%s11] sm:$0xff]
    %v2942 = vld [vmem:[%s11 + $0x8] sm:$0xf]
    %v2943 = vld [vmem:[%s11 + $0xc] sm:$0xff]
    %v2944 = vld [vmem:[%s11 + $0x14] sm:$0xf]
    %v2945 = vld [vmem:[%s11 + $0x18] sm:$0xff]
    %v2946 = vld [vmem:[%s11 + $0x20] sm:$0xf]
    %v2947 = vld [vmem:[%s11 + $0x24] sm:$0xff]
    %v2948 = vld [vmem:[%s11 + $0x2c] sm:$0xf]
    %v2949 = vld [vmem:[%s11 + $0x30] sm:$0xff]
    %v2950 = vld [vmem:[%s11 + $0x38] sm:$0xf]
    %v2951 = vld [vmem:[%s11 + $0x3c] sm:$0xff]
    %v2952 = vld [vmem:[%s11 + $0x44] sm:$0xf]
    %v2953 = vld [vmem:[%s11 + $0x48] sm:$0xff]
    %v2954 = vld [vmem:[%s11 + $0x50] sm:$0xf]
    %v2955 = vld [vmem:[%s11 + $0x54] sm:$0xff]
    %v2956 = vld [vmem:[%s11 + $0x5c] sm:$0xf]
    %v2957 = vld [vmem:[%s11 + $0x60] sm:$0xff]
    %v2958 = vld [vmem:[%s11 + $0x68] sm:$0xf]
    %v2959 = vld [vmem:[%s11 + $0x6c] sm:$0xff]
    %v2960 = vld [vmem:[%s11 + $0x74] sm:$0xf]
    %v2961 = vld [vmem:[%s11 + $0x78] sm:$0xff]
    %v2962 = vld [vmem:[%s11 + $0x80] sm:$0xf]
    %v2963 = vld [vmem:[%s11 + $0x84] sm:$0xff]
    %v2964 = vld [vmem:[%s11 + $0x8c] sm:$0xf]
    %v2965 = vld [vmem:[%s11 + $0x90] sm:$0xff]
    %v2966 = vld [vmem:[%s11 + $0x98] sm:$0xf]
    %v2967 = vld [vmem:[%s11 + $0x9c] sm:$0xff]
    %v2968 = vld [vmem:[%s11 + $0xa4] sm:$0xf]
    %v2969 = vld [vmem:[%s11 + $0xa8] sm:$0xff]
    %v2970 = vld [vmem:[%s11 + $0xb0] sm:$0xf]
    %v2971 = vld [vmem:[%s11 + $0xb4] sm:$0xff]
    %v2972 = vld [vmem:[%s11 + $0xbc] sm:$0xf]
    %v3005 = vunpack.c.l.b16 %v2941
    %v3006 = vunpack.c.h.b16 %v2941
    %v3007 = vunpack.c.l.b16 %v2942
    %v3008 = vunpack.c.l.b16 %v2943
    %v3009 = vunpack.c.h.b16 %v2943
    %v3010 = vunpack.c.l.b16 %v2944
    %v3011 = vunpack.c.l.b16 %v2945
    %v3012 = vunpack.c.h.b16 %v2945
    %v3013 = vunpack.c.l.b16 %v2946
    %v3014 = vunpack.c.l.b16 %v2947
    %v3015 = vunpack.c.h.b16 %v2947
    %v3016 = vunpack.c.l.b16 %v2948
    %v3017 = vunpack.c.l.b16 %v2949
    %v3018 = vunpack.c.h.b16 %v2949
    %v3019 = vunpack.c.l.b16 %v2950
    %v3020 = vunpack.c.l.b16 %v2951
    %v3021 = vunpack.c.h.b16 %v2951
    %v3022 = vunpack.c.l.b16 %v2952
    %v3023 = vunpack.c.l.b16 %v2953
    %v3024 = vunpack.c.h.b16 %v2953
    %v3025 = vunpack.c.l.b16 %v2954
    %v3026 = vunpack.c.l.b16 %v2955
    %v3027 = vunpack.c.h.b16 %v2955
    %v3028 = vunpack.c.l.b16 %v2956
    %v3029 = vunpack.c.l.b16 %v2957
    %v3030 = vunpack.c.h.b16 %v2957
    %v3031 = vunpack.c.l.b16 %v2958
    %v3032 = vunpack.c.l.b16 %v2959
    %v3033 = vunpack.c.h.b16 %v2959
    %v3034 = vunpack.c.l.b16 %v2960
    %v3035 = vunpack.c.l.b16 %v2961
    %v3036 = vunpack.c.h.b16 %v2961
    %v3037 = vunpack.c.l.b16 %v2962
    %v3038 = vunpack.c.l.b16 %v2963
    %v3039 = vunpack.c.h.b16 %v2963
    %v3040 = vunpack.c.l.b16 %v2964
    %v3041 = vunpack.c.l.b16 %v2965
    %v3042 = vunpack.c.h.b16 %v2965
    %v3043 = vunpack.c.l.b16 %v2966
    %v3044 = vunpack.c.l.b16 %v2967
    %v3045 = vunpack.c.h.b16 %v2967
    %v3046 = vunpack.c.l.b16 %v2968
    %v3047 = vunpack.c.l.b16 %v2969
    %v3048 = vunpack.c.h.b16 %v2969
    %v3049 = vunpack.c.l.b16 %v2970
    %v3050 = vunpack.c.l.b16 %v2971
    %v3051 = vunpack.c.h.b16 %v2971
    %v3052 = vunpack.c.l.b16 %v2972
    %v3053 = vpack.c.b16 %v3008, %v3005
    %v3054 = vpack.c.b16 %v3009, %v3006
    %v3055 = vpack.c.b16 %v3010, %v3007
    %v3056 = vpack.c.b16 %v3014, %v3011
    %v3057 = vpack.c.b16 %v3015, %v3012
    %v3058 = vpack.c.b16 %v3016, %v3013
    %v3059 = vpack.c.b16 %v3020, %v3017
    %v3060 = vpack.c.b16 %v3021, %v3018
    %v3061 = vpack.c.b16 %v3022, %v3019
    %v3062 = vpack.c.b16 %v3026, %v3023
    %v3063 = vpack.c.b16 %v3027, %v3024
    %v3064 = vpack.c.b16 %v3028, %v3025
    %v3065 = vpack.c.b16 %v3032, %v3029
    %v3066 = vpack.c.b16 %v3033, %v3030
    %v3067 = vpack.c.b16 %v3034, %v3031
    %v3068 = vpack.c.b16 %v3038, %v3035
    %v3069 = vpack.c.b16 %v3039, %v3036
    %v3070 = vpack.c.b16 %v3040, %v3037
    %v3071 = vpack.c.b16 %v3044, %v3041
    %v3072 = vpack.c.b16 %v3045, %v3042
    %v3073 = vpack.c.b16 %v3046, %v3043
    %v3074 = vpack.c.b16 %v3050, %v3047
    %v3075 = vpack.c.b16 %v3051, %v3048
    %v3076 = vpack.c.b16 %v3052, %v3049
    %3101 = vmatprep.subr.bf16.mxu0 %v3054
    %3102 = vmatpush1.bf16.msra.mxu0 %v3053
    %3103 = vmatprep.subr.bf16.mxu0 %v3057
    %3104 = vmatpush1.bf16.msra.mxu0 %v3056
    %3105 = vmatprep.subr.bf16.mxu0 %v3060
    %3106 = vmatpush1.bf16.msra.mxu0 %v3059
    %3107 = vmatprep.subr.bf16.mxu0 %v3063
    %3108 = vmatpush1.bf16.msra.mxu0 %v3062
    %3109 = vmatprep.subr.bf16.mxu0 %v3066
    %3110 = vmatpush1.bf16.msra.mxu0 %v3065
    %3111 = vmatprep.subr.bf16.mxu0 %v3069
    %3112 = vmatpush1.bf16.msra.mxu0 %v3068
    %3113 = vmatprep.subr.bf16.mxu0 %v3072
    %3114 = vmatpush1.bf16.msra.mxu0 %v3071
    %3115 = vmatprep.subr.bf16.mxu0 %v3075
    %3116 = vmatpush1.bf16.msra.mxu0 %v3074
    %3117 = vmatprep.subr.bf16.mxu0 0
    %3118 = vmatpush1.bf16.msra.mxu0 0
    %3119 = vmatprep.subr.bf16.mxu0 0
    %3120 = vmatpush1.bf16.msra.mxu0 0
    %3121 = vmatprep.subr.bf16.mxu0 0
    %3122 = vmatpush1.bf16.msra.mxu0 0
    %3123 = vmatprep.subr.bf16.mxu0 0
    %3124 = vmatpush1.bf16.msra.mxu0 0
    %3125 = vmatprep.subr.bf16.mxu0 0
    %3126 = vmatpush1.bf16.msra.mxu0 0
    %3127 = vmatprep.subr.bf16.mxu0 0
    %3128 = vmatpush1.bf16.msra.mxu0 0
    %3129 = vmatprep.subr.bf16.mxu0 0
    %3130 = vmatpush1.bf16.msra.mxu0 0
    %3131 = vmatprep.subr.bf16.mxu0 0
    %3132 = vmatpush1.bf16.msra.mxu0 0
    %3133 = vmatprep.mubr.bf16.mxu0 0
    %3134 = vmatmul.mubr.bf16.gmra.mrb[0].mxu0 %v2940
    %v3135 = vpop.f32.mrb[0].mxu0
    %v3136 = vadd.f32 0.0, %v3135
    %v3137 = vpop.f32.mrb[0].mxu0
    %v3138 = vadd.f32 0.0, %v3137
    %v3139 = vpop.f32.mrb[0].mxu0
    %v3140 = vpop.f32.mrb[0].mxu0
    %3141 = vdwg.mxu0
    %3142 = vmatprep.subr.bf16.mxu0 0
    %3143 = vmatpush1.bf16.msra.mxu0 %v3055
    %3144 = vmatprep.subr.bf16.mxu0 0
    %3145 = vmatpush1.bf16.msra.mxu0 %v3058
    %3146 = vmatprep.subr.bf16.mxu0 0
    %3147 = vmatpush1.bf16.msra.mxu0 %v3061
    %3148 = vmatprep.subr.bf16.mxu0 0
    %3149 = vmatpush1.bf16.msra.mxu0 %v3064
    %3150 = vmatprep.subr.bf16.mxu0 0
    %3151 = vmatpush1.bf16.msra.mxu0 %v3067
    %3152 = vmatprep.subr.bf16.mxu0 0
    %3153 = vmatpush1.bf16.msra.mxu0 %v3070
    %3154 = vmatprep.subr.bf16.mxu0 0
    %3155 = vmatpush1.bf16.msra.mxu0 %v3073
    %3156 = vmatprep.subr.bf16.mxu0 0
    %3157 = vmatpush1.bf16.msra.mxu0 %v3076
    %3158 = vmatprep.subr.bf16.mxu0 0
    %3159 = vmatpush1.bf16.msra.mxu0 0
    %3160 = vmatprep.subr.bf16.mxu0 0
    %3161 = vmatpush1.bf16.msra.mxu0 0
    %3162 = vmatprep.subr.bf16.mxu0 0
    %3163 = vmatpush1.bf16.msra.mxu0 0
    %3164 = vmatprep.subr.bf16.mxu0 0
    %3165 = vmatpush1.bf16.msra.mxu0 0
    %3166 = vmatprep.subr.bf16.mxu0 0
    %3167 = vmatpush1.bf16.msra.mxu0 0
    %3168 = vmatprep.subr.bf16.mxu0 0
    %3169 = vmatpush1.bf16.msra.mxu0 0
    %3170 = vmatprep.subr.bf16.mxu0 0
    %3171 = vmatpush1.bf16.msra.mxu0 0
    %3172 = vmatprep.subr.bf16.mxu0 0
    %3173 = vmatpush1.bf16.msra.mxu0 0
    %3174 = vmatprep.mubr.bf16.mxu0 0
    %3175 = vmatmul.mubr.bf16.gmra.mrb[0].mxu0 %v2940
    %v3176 = vpop.f32.mrb[0].mxu0
    %v3177 = vadd.f32 0.0, %v3176
    %v3178 = vpop.f32.mrb[0].mxu0
    %v3179 = vpop.f32.mrb[0].mxu0
    %v3180 = vpop.f32.mrb[0].mxu0
    %3181 = vdwg.mxu0
    %v3182 = vpack.c.bf16 %v3136, %v3136
    %v3183 = vld [vmem:[%s13] sm:$0xf]
    %v3184 = vld [vmem:[%s13 + $0x4] sm:$0xf]
    %s3185 = scalar_lea.vmem %s13, 8
    %v3186 = vld [vmem:[%s3185] sm:$0xf]
    %v3187 = vld [vmem:[%s3185 + $0x4] sm:$0xf]
    %v3190 = vunpack.c.l.b16 %v3186
    %v3191 = vunpack.c.l.b16 %v3187
    %v3192 = vpack.c.b16 %v3191, %v3190
    %3194 = vrot.lane.b32.xlu0 %v3182, 96
    %v3195 = vpop.permute.xlu0 %3194
    %vm3196 = vcmask 64512
    %v3198 = vsel %vm3196, %v3192, 0
    %vm3200 = vcmask 1043456
    %v3202 = vsel %vm3200, %v3195, 0
    %3204 = vmatprep.subr.bf16.mxu0 0
    %3205 = vmatpush1.bf16.msra.mxu0 %v3202
    %3206 = vmatprep.subr.bf16.mxu0 0
    %3207 = vmatpush1.bf16.msra.mxu0 0
    %3208 = vmatprep.subr.bf16.mxu0 0
    %3209 = vmatpush1.bf16.msra.mxu0 0
    %3210 = vmatprep.subr.bf16.mxu0 0
    %3211 = vmatpush1.bf16.msra.mxu0 0
    %3212 = vmatprep.subr.bf16.mxu0 0
    %3213 = vmatpush1.bf16.msra.mxu0 0
    %3214 = vmatprep.subr.bf16.mxu0 0
    %3215 = vmatpush1.bf16.msra.mxu0 0
    %3216 = vmatprep.subr.bf16.mxu0 0
    %3217 = vmatpush1.bf16.msra.mxu0 0
    %3218 = vmatprep.subr.bf16.mxu0 0
    %3219 = vmatpush1.bf16.msra.mxu0 0
    %3220 = vmatprep.subr.bf16.mxu0 0
    %3221 = vmatpush1.bf16.msra.mxu0 0
    %3222 = vmatprep.subr.bf16.mxu0 0
    %3223 = vmatpush1.bf16.msra.mxu0 0
    %3224 = vmatprep.subr.bf16.mxu0 0
    %3225 = vmatpush1.bf16.msra.mxu0 0
    %3226 = vmatprep.subr.bf16.mxu0 0
    %3227 = vmatpush1.bf16.msra.mxu0 0
    %3228 = vmatprep.subr.bf16.mxu0 0
    %3229 = vmatpush1.bf16.msra.mxu0 0
    %3230 = vmatprep.subr.bf16.mxu0 0
    %3231 = vmatpush1.bf16.msra.mxu0 0
    %3232 = vmatprep.subr.bf16.mxu0 0
    %3233 = vmatpush1.bf16.msra.mxu0 0
    %3234 = vmatprep.subr.bf16.mxu0 0
    %3235 = vmatpush1.bf16.msra.mxu0 0
    %3236 = vmatprep.mubr.bf16.mxu0 0
    %3237 = vmatmul.mubr.bf16.gmra.mrb[0].mxu0 %v3198
    %v3238 = vpop.f32.mrb[0].mxu0
    %v3239 = vadd.f32 0.0, %v3238
    %v3240 = vpop.f32.mrb[0].mxu0
    %v3241 = vpop.f32.mrb[0].mxu0
    %v3242 = vadd.f32 0.0, %v3241
    %v3243 = vpop.f32.mrb[0].mxu0
    %3244 = vdwg.mxu0
    %v3247 = vunpack.c.l.b16 %v3183
    %v3248 = vunpack.c.l.b16 %v3184
    %v3249 = vpack.c.b16 %v3248, %v3247
    %v3251 = vsel %vm3196, %v3249, 0
    %v3254 = vsel %vm3200, %v3182, 0
    %3256 = vmatprep.subr.bf16.mxu0 0
    %3257 = vmatpush1.bf16.msra.mxu0 %v3254
    %3258 = vmatprep.subr.bf16.mxu0 0
    %3259 = vmatpush1.bf16.msra.mxu0 0
    %3260 = vmatprep.subr.bf16.mxu0 0
    %3261 = vmatpush1.bf16.msra.mxu0 0
    %3262 = vmatprep.subr.bf16.mxu0 0
    %3263 = vmatpush1.bf16.msra.mxu0 0
    %3264 = vmatprep.subr.bf16.mxu0 0
    %3265 = vmatpush1.bf16.msra.mxu0 0
    %3266 = vmatprep.subr.bf16.mxu0 0
    %3267 = vmatpush1.bf16.msra.mxu0 0
    %3268 = vmatprep.subr.bf16.mxu0 0
    %3269 = vmatpush1.bf16.msra.mxu0 0
    %3270 = vmatprep.subr.bf16.mxu0 0
    %3271 = vmatpush1.bf16.msra.mxu0 0
    %3272 = vmatprep.subr.bf16.mxu0 0
    %3273 = vmatpush1.bf16.msra.mxu0 0
    %3274 = vmatprep.subr.bf16.mxu0 0
    %3275 = vmatpush1.bf16.msra.mxu0 0
    %3276 = vmatprep.subr.bf16.mxu0 0
    %3277 = vmatpush1.bf16.msra.mxu0 0
    %3278 = vmatprep.subr.bf16.mxu0 0
    %3279 = vmatpush1.bf16.msra.mxu0 0
    %3280 = vmatprep.subr.bf16.mxu0 0
    %3281 = vmatpush1.bf16.msra.mxu0 0
    %3282 = vmatprep.subr.bf16.mxu0 0
    %3283 = vmatpush1.bf16.msra.mxu0 0
    %3284 = vmatprep.subr.bf16.mxu0 0
    %3285 = vmatpush1.bf16.msra.mxu0 0
    %3286 = vmatprep.subr.bf16.mxu0 0
    %3287 = vmatpush1.bf16.msra.mxu0 0
    %3288 = vmatprep.mubr.bf16.mxu0 0
    %3289 = vmatmul.mubr.bf16.gmra.mrb[0].mxu0 %v3251
    %v3290 = vpop.f32.mrb[0].mxu0
    %v3291 = vadd.f32 %v3239, %v3290
    %v3292 = vpop.f32.mrb[0].mxu0
    %v3293 = vpop.f32.mrb[0].mxu0
    %v3294 = vadd.f32 %v3242, %v3293
    %v3295 = vpop.f32.mrb[0].mxu0
    %3296 = vdwg.mxu0
    %s3297 = scalar_lea.vmem %s13, 16
    %v3298 = vld [vmem:[%s3297] sm:$0xf]
    %v3299 = vld [vmem:[%s3297 + $0x4] sm:$0xf]
    %v3302 = vunpack.c.l.b16 %v3298
    %v3303 = vunpack.c.l.b16 %v3299
    %v3304 = vpack.c.b16 %v3303, %v3302
    %3305 = vrot.lane.b32.xlu0 %v3182, 64
    %v3306 = vpop.permute.xlu0 %3305
    %v3308 = vsel %vm3196, %v3304, 0
    %v3311 = vsel %vm3200, %v3306, 0
    %3313 = vmatprep.subr.bf16.mxu0 0
    %3314 = vmatpush1.bf16.msra.mxu0 %v3311
    %3315 = vmatprep.subr.bf16.mxu0 0
    %3316 = vmatpush1.bf16.msra.mxu0 0
    %3317 = vmatprep.subr.bf16.mxu0 0
    %3318 = vmatpush1.bf16.msra.mxu0 0
    %3319 = vmatprep.subr.bf16.mxu0 0
    %3320 = vmatpush1.bf16.msra.mxu0 0
    %3321 = vmatprep.subr.bf16.mxu0 0
    %3322 = vmatpush1.bf16.msra.mxu0 0
    %3323 = vmatprep.subr.bf16.mxu0 0
    %3324 = vmatpush1.bf16.msra.mxu0 0
    %3325 = vmatprep.subr.bf16.mxu0 0
    %3326 = vmatpush1.bf16.msra.mxu0 0
    %3327 = vmatprep.subr.bf16.mxu0 0
    %3328 = vmatpush1.bf16.msra.mxu0 0
    %3329 = vmatprep.subr.bf16.mxu0 0
    %3330 = vmatpush1.bf16.msra.mxu0 0
    %3331 = vmatprep.subr.bf16.mxu0 0
    %3332 = vmatpush1.bf16.msra.mxu0 0
    %3333 = vmatprep.subr.bf16.mxu0 0
    %3334 = vmatpush1.bf16.msra.mxu0 0
    %3335 = vmatprep.subr.bf16.mxu0 0
    %3336 = vmatpush1.bf16.msra.mxu0 0
    %3337 = vmatprep.subr.bf16.mxu0 0
    %3338 = vmatpush1.bf16.msra.mxu0 0
    %3339 = vmatprep.subr.bf16.mxu0 0
    %3340 = vmatpush1.bf16.msra.mxu0 0
    %3341 = vmatprep.subr.bf16.mxu0 0
    %3342 = vmatpush1.bf16.msra.mxu0 0
    %3343 = vmatprep.subr.bf16.mxu0 0
    %3344 = vmatpush1.bf16.msra.mxu0 0
    %3345 = vmatprep.mubr.bf16.mxu0 0
    %3346 = vmatmul.mubr.bf16.gmra.mrb[0].mxu0 %v3308
    %v3347 = vpop.f32.mrb[0].mxu0
    %v3348 = vadd.f32 0.0, %v3347
    %v3349 = vpop.f32.mrb[0].mxu0
    %v3350 = vpop.f32.mrb[0].mxu0
    %v3351 = vadd.f32 0.0, %v3350
    %v3352 = vpop.f32.mrb[0].mxu0
    %3353 = vdwg.mxu0
    %v3354 = vadd.f32 %v3291, %v3348
    %v3355 = vadd.f32 %v3294, %v3351
    %s3356 = scalar_lea.vmem %s13, 24
    %v3357 = vld [vmem:[%s3356] sm:$0xf]
    %v3358 = vld [vmem:[%s3356 + $0x4] sm:$0xf]
    %v3361 = vunpack.c.l.b16 %v3357
    %v3362 = vunpack.c.l.b16 %v3358
    %v3363 = vpack.c.b16 %v3362, %v3361
    %3364 = vrot.lane.b32.xlu0 %v3182, 32
    %v3365 = vpop.permute.xlu0 %3364
    %v3367 = vsel %vm3196, %v3363, 0
    %v3370 = vsel %vm3200, %v3365, 0
    %3372 = vmatprep.subr.bf16.mxu0 0
    %3373 = vmatpush1.bf16.msra.mxu0 %v3370
    %3374 = vmatprep.subr.bf16.mxu0 0
    %3375 = vmatpush1.bf16.msra.mxu0 0
    %3376 = vmatprep.subr.bf16.mxu0 0
    %3377 = vmatpush1.bf16.msra.mxu0 0
    %3378 = vmatprep.subr.bf16.mxu0 0
    %3379 = vmatpush1.bf16.msra.mxu0 0
    %3380 = vmatprep.subr.bf16.mxu0 0
    %3381 = vmatpush1.bf16.msra.mxu0 0
    %3382 = vmatprep.subr.bf16.mxu0 0
    %3383 = vmatpush1.bf16.msra.mxu0 0
    %3384 = vmatprep.subr.bf16.mxu0 0
    %3385 = vmatpush1.bf16.msra.mxu0 0
    %3386 = vmatprep.subr.bf16.mxu0 0
    %3387 = vmatpush1.bf16.msra.mxu0 0
    %3388 = vmatprep.subr.bf16.mxu0 0
    %3389 = vmatpush1.bf16.msra.mxu0 0
    %3390 = vmatprep.subr.bf16.mxu0 0
    %3391 = vmatpush1.bf16.msra.mxu0 0
    %3392 = vmatprep.subr.bf16.mxu0 0
    %3393 = vmatpush1.bf16.msra.mxu0 0
    %3394 = vmatprep.subr.bf16.mxu0 0
    %3395 = vmatpush1.bf16.msra.mxu0 0
    %3396 = vmatprep.subr.bf16.mxu0 0
    %3397 = vmatpush1.bf16.msra.mxu0 0
    %3398 = vmatprep.subr.bf16.mxu0 0
    %3399 = vmatpush1.bf16.msra.mxu0 0
    %3400 = vmatprep.subr.bf16.mxu0 0
    %3401 = vmatpush1.bf16.msra.mxu0 0
    %3402 = vmatprep.subr.bf16.mxu0 0
    %3403 = vmatpush1.bf16.msra.mxu0 0
    %3404 = vmatprep.mubr.bf16.mxu0 0
    %3405 = vmatmul.mubr.bf16.gmra.mrb[0].mxu0 %v3367
    %v3406 = vpop.f32.mrb[0].mxu0
    %v3407 = vadd.f32 0.0, %v3406
    %v3408 = vpop.f32.mrb[0].mxu0
    %v3409 = vpop.f32.mrb[0].mxu0
    %v3410 = vadd.f32 0.0, %v3409
    %v3411 = vpop.f32.mrb[0].mxu0
    %3412 = vdwg.mxu0
    %v3413 = vadd.f32 %v3354, %v3407
    %v3414 = vadd.f32 %v3355, %v3410
    %v3415 = vpack.c.bf16 %v3138, %v3138
    %s3416 = scalar_lea.vmem %s13, 32
    %v3417 = vld [vmem:[%s3416] sm:$0xf]
    %v3418 = vld [vmem:[%s3416 + $0x4] sm:$0xf]
    %v3421 = vunpack.c.l.b16 %v3417
    %v3422 = vunpack.c.l.b16 %v3418
    %v3423 = vpack.c.b16 %v3422, %v3421
    %v3425 = vsel %vm3196, %v3423, 0
    %v3428 = vsel %vm3200, %v3415, 0
    %3430 = vmatprep.subr.bf16.mxu0 0
    %3431 = vmatpush1.bf16.msra.mxu0 %v3428
    %3432 = vmatprep.subr.bf16.mxu0 0
    %3433 = vmatpush1.bf16.msra.mxu0 0
    %3434 = vmatprep.subr.bf16.mxu0 0
    %3435 = vmatpush1.bf16.msra.mxu0 0
    %3436 = vmatprep.subr.bf16.mxu0 0
    %3437 = vmatpush1.bf16.msra.mxu0 0
    %3438 = vmatprep.subr.bf16.mxu0 0
    %3439 = vmatpush1.bf16.msra.mxu0 0
    %3440 = vmatprep.subr.bf16.mxu0 0
    %3441 = vmatpush1.bf16.msra.mxu0 0
    %3442 = vmatprep.subr.bf16.mxu0 0
    %3443 = vmatpush1.bf16.msra.mxu0 0
    %3444 = vmatprep.subr.bf16.mxu0 0
    %3445 = vmatpush1.bf16.msra.mxu0 0
    %3446 = vmatprep.subr.bf16.mxu0 0
    %3447 = vmatpush1.bf16.msra.mxu0 0
    %3448 = vmatprep.subr.bf16.mxu0 0
    %3449 = vmatpush1.bf16.msra.mxu0 0
    %3450 = vmatprep.subr.bf16.mxu0 0
    %3451 = vmatpush1.bf16.msra.mxu0 0
    %3452 = vmatprep.subr.bf16.mxu0 0
    %3453 = vmatpush1.bf16.msra.mxu0 0
    %3454 = vmatprep.subr.bf16.mxu0 0
    %3455 = vmatpush1.bf16.msra.mxu0 0
    %3456 = vmatprep.subr.bf16.mxu0 0
    %3457 = vmatpush1.bf16.msra.mxu0 0
    %3458 = vmatprep.subr.bf16.mxu0 0
    %3459 = vmatpush1.bf16.msra.mxu0 0
    %3460 = vmatprep.subr.bf16.mxu0 0
    %3461 = vmatpush1.bf16.msra.mxu0 0
    %3462 = vmatprep.mubr.bf16.mxu0 0
    %3463 = vmatmul.mubr.bf16.gmra.mrb[0].mxu0 %v3425
    %v3464 = vpop.f32.mrb[0].mxu0
    %v3465 = vadd.f32 0.0, %v3464
    %v3466 = vpop.f32.mrb[0].mxu0
    %v3467 = vpop.f32.mrb[0].mxu0
    %v3468 = vadd.f32 0.0, %v3467
    %v3469 = vpop.f32.mrb[0].mxu0
    %3470 = vdwg.mxu0
    %v3471 = vadd.f32 %v3413, %v3465
    %v3472 = vadd.f32 %v3414, %v3468
    %s3473 = scalar_lea.vmem %s13, 40
    %v3474 = vld [vmem:[%s3473] sm:$0xf]
    %v3475 = vld [vmem:[%s3473 + $0x4] sm:$0xf]
    %v3478 = vunpack.c.l.b16 %v3474
    %v3479 = vunpack.c.l.b16 %v3475
    %v3480 = vpack.c.b16 %v3479, %v3478
    %3482 = vrot.lane.b32.xlu0 %v3415, 96
    %v3483 = vpop.permute.xlu0 %3482
    %v3485 = vsel %vm3196, %v3480, 0
    %v3488 = vsel %vm3200, %v3483, 0
    %3490 = vmatprep.subr.bf16.mxu0 0
    %3491 = vmatpush1.bf16.msra.mxu0 %v3488
    %3492 = vmatprep.subr.bf16.mxu0 0
    %3493 = vmatpush1.bf16.msra.mxu0 0
    %3494 = vmatprep.subr.bf16.mxu0 0
    %3495 = vmatpush1.bf16.msra.mxu0 0
    %3496 = vmatprep.subr.bf16.mxu0 0
    %3497 = vmatpush1.bf16.msra.mxu0 0
    %3498 = vmatprep.subr.bf16.mxu0 0
    %3499 = vmatpush1.bf16.msra.mxu0 0
    %3500 = vmatprep.subr.bf16.mxu0 0
    %3501 = vmatpush1.bf16.msra.mxu0 0
    %3502 = vmatprep.subr.bf16.mxu0 0
    %3503 = vmatpush1.bf16.msra.mxu0 0
    %3504 = vmatprep.subr.bf16.mxu0 0
    %3505 = vmatpush1.bf16.msra.mxu0 0
    %3506 = vmatprep.subr.bf16.mxu0 0
    %3507 = vmatpush1.bf16.msra.mxu0 0
    %3508 = vmatprep.subr.bf16.mxu0 0
    %3509 = vmatpush1.bf16.msra.mxu0 0
    %3510 = vmatprep.subr.bf16.mxu0 0
    %3511 = vmatpush1.bf16.msra.mxu0 0
    %3512 = vmatprep.subr.bf16.mxu0 0
    %3513 = vmatpush1.bf16.msra.mxu0 0
    %3514 = vmatprep.subr.bf16.mxu0 0
    %3515 = vmatpush1.bf16.msra.mxu0 0
    %3516 = vmatprep.subr.bf16.mxu0 0
    %3517 = vmatpush1.bf16.msra.mxu0 0
    %3518 = vmatprep.subr.bf16.mxu0 0
    %3519 = vmatpush1.bf16.msra.mxu0 0
    %3520 = vmatprep.subr.bf16.mxu0 0
    %3521 = vmatpush1.bf16.msra.mxu0 0
    %3522 = vmatprep.mubr.bf16.mxu0 0
    %3523 = vmatmul.mubr.bf16.gmra.mrb[0].mxu0 %v3485
    %v3524 = vpop.f32.mrb[0].mxu0
    %v3525 = vadd.f32 0.0, %v3524
    %v3526 = vpop.f32.mrb[0].mxu0
    %v3527 = vpop.f32.mrb[0].mxu0
    %v3528 = vadd.f32 0.0, %v3527
    %v3529 = vpop.f32.mrb[0].mxu0
    %3530 = vdwg.mxu0
    %v3531 = vadd.f32 %v3471, %v3525
    %v3532 = vadd.f32 %v3472, %v3528
    %s3533 = scalar_lea.vmem %s13, 48
    %v3534 = vld [vmem:[%s3533] sm:$0xf]
    %v3535 = vld [vmem:[%s3533 + $0x4] sm:$0xf]
    %v3538 = vunpack.c.l.b16 %v3534
    %v3539 = vunpack.c.l.b16 %v3535
    %v3540 = vpack.c.b16 %v3539, %v3538
    %3541 = vrot.lane.b32.xlu0 %v3415, 64
    %v3542 = vpop.permute.xlu0 %3541
    %v3544 = vsel %vm3196, %v3540, 0
    %v3547 = vsel %vm3200, %v3542, 0
    %3549 = vmatprep.subr.bf16.mxu0 0
    %3550 = vmatpush1.bf16.msra.mxu0 %v3547
    %3551 = vmatprep.subr.bf16.mxu0 0
    %3552 = vmatpush1.bf16.msra.mxu0 0
    %3553 = vmatprep.subr.bf16.mxu0 0
    %3554 = vmatpush1.bf16.msra.mxu0 0
    %3555 = vmatprep.subr.bf16.mxu0 0
    %3556 = vmatpush1.bf16.msra.mxu0 0
    %3557 = vmatprep.subr.bf16.mxu0 0
    %3558 = vmatpush1.bf16.msra.mxu0 0
    %3559 = vmatprep.subr.bf16.mxu0 0
    %3560 = vmatpush1.bf16.msra.mxu0 0
    %3561 = vmatprep.subr.bf16.mxu0 0
    %3562 = vmatpush1.bf16.msra.mxu0 0
    %3563 = vmatprep.subr.bf16.mxu0 0
    %3564 = vmatpush1.bf16.msra.mxu0 0
    %3565 = vmatprep.subr.bf16.mxu0 0
    %3566 = vmatpush1.bf16.msra.mxu0 0
    %3567 = vmatprep.subr.bf16.mxu0 0
    %3568 = vmatpush1.bf16.msra.mxu0 0
    %3569 = vmatprep.subr.bf16.mxu0 0
    %3570 = vmatpush1.bf16.msra.mxu0 0
    %3571 = vmatprep.subr.bf16.mxu0 0
    %3572 = vmatpush1.bf16.msra.mxu0 0
    %3573 = vmatprep.subr.bf16.mxu0 0
    %3574 = vmatpush1.bf16.msra.mxu0 0
    %3575 = vmatprep.subr.bf16.mxu0 0
    %3576 = vmatpush1.bf16.msra.mxu0 0
    %3577 = vmatprep.subr.bf16.mxu0 0
    %3578 = vmatpush1.bf16.msra.mxu0 0
    %3579 = vmatprep.subr.bf16.mxu0 0
    %3580 = vmatpush1.bf16.msra.mxu0 0
    %3581 = vmatprep.mubr.bf16.mxu0 0
    %3582 = vmatmul.mubr.bf16.gmra.mrb[0].mxu0 %v3544
    %v3583 = vpop.f32.mrb[0].mxu0
    %v3584 = vadd.f32 0.0, %v3583
    %v3585 = vpop.f32.mrb[0].mxu0
    %v3586 = vpop.f32.mrb[0].mxu0
    %v3587 = vadd.f32 0.0, %v3586
    %v3588 = vpop.f32.mrb[0].mxu0
    %3589 = vdwg.mxu0
    %v3590 = vadd.f32 %v3531, %v3584
    %v3591 = vadd.f32 %v3532, %v3587
    %s3592 = scalar_lea.vmem %s13, 56
    %v3593 = vld [vmem:[%s3592] sm:$0xf]
    %v3594 = vld [vmem:[%s3592 + $0x4] sm:$0xf]
    %v3597 = vunpack.c.l.b16 %v3593
    %v3598 = vunpack.c.l.b16 %v3594
    %v3599 = vpack.c.b16 %v3598, %v3597
    %3600 = vrot.lane.b32.xlu0 %v3415, 32
    %v3601 = vpop.permute.xlu0 %3600
    %v3603 = vsel %vm3196, %v3599, 0
    %v3606 = vsel %vm3200, %v3601, 0
    %3608 = vmatprep.subr.bf16.mxu0 0
    %3609 = vmatpush1.bf16.msra.mxu0 %v3606
    %3610 = vmatprep.subr.bf16.mxu0 0
    %3611 = vmatpush1.bf16.msra.mxu0 0
    %3612 = vmatprep.subr.bf16.mxu0 0
    %3613 = vmatpush1.bf16.msra.mxu0 0
    %3614 = vmatprep.subr.bf16.mxu0 0
    %3615 = vmatpush1.bf16.msra.mxu0 0
    %3616 = vmatprep.subr.bf16.mxu0 0
    %3617 = vmatpush1.bf16.msra.mxu0 0
    %3618 = vmatprep.subr.bf16.mxu0 0
    %3619 = vmatpush1.bf16.msra.mxu0 0
    %3620 = vmatprep.subr.bf16.mxu0 0
    %3621 = vmatpush1.bf16.msra.mxu0 0
    %3622 = vmatprep.subr.bf16.mxu0 0
    %3623 = vmatpush1.bf16.msra.mxu0 0
    %3624 = vmatprep.subr.bf16.mxu0 0
    %3625 = vmatpush1.bf16.msra.mxu0 0
    %3626 = vmatprep.subr.bf16.mxu0 0
    %3627 = vmatpush1.bf16.msra.mxu0 0
    %3628 = vmatprep.subr.bf16.mxu0 0
    %3629 = vmatpush1.bf16.msra.mxu0 0
    %3630 = vmatprep.subr.bf16.mxu0 0
    %3631 = vmatpush1.bf16.msra.mxu0 0
    %3632 = vmatprep.subr.bf16.mxu0 0
    %3633 = vmatpush1.bf16.msra.mxu0 0
    %3634 = vmatprep.subr.bf16.mxu0 0
    %3635 = vmatpush1.bf16.msra.mxu0 0
    %3636 = vmatprep.subr.bf16.mxu0 0
    %3637 = vmatpush1.bf16.msra.mxu0 0
    %3638 = vmatprep.subr.bf16.mxu0 0
    %3639 = vmatpush1.bf16.msra.mxu0 0
    %3640 = vmatprep.mubr.bf16.mxu0 0
    %3641 = vmatmul.mubr.bf16.gmra.mrb[0].mxu0 %v3603
    %v3642 = vpop.f32.mrb[0].mxu0
    %v3643 = vadd.f32 0.0, %v3642
    %v3644 = vpop.f32.mrb[0].mxu0
    %v3645 = vpop.f32.mrb[0].mxu0
    %v3646 = vadd.f32 0.0, %v3645
    %v3647 = vpop.f32.mrb[0].mxu0
    %3648 = vdwg.mxu0
    %v3649 = vadd.f32 %v3590, %v3643
    %v3650 = vadd.f32 %v3591, %v3646
    %v3651 = vpack.c.bf16 %v3177, %v3177
    %s3652 = scalar_lea.vmem %s13, 64
    %v3653 = vld [vmem:[%s3652] sm:$0xf]
    %v3654 = vld [vmem:[%s3652 + $0x4] sm:$0xf]
    %v3657 = vunpack.c.l.b16 %v3653
    %v3658 = vunpack.c.l.b16 %v3654
    %v3659 = vpack.c.b16 %v3658, %v3657
    %v3661 = vsel %vm3196, %v3659, 0
    %v3664 = vsel %vm3200, %v3651, 0
    %3666 = vmatprep.subr.bf16.mxu0 0
    %3667 = vmatpush1.bf16.msra.mxu0 %v3664
    %3668 = vmatprep.subr.bf16.mxu0 0
    %3669 = vmatpush1.bf16.msra.mxu0 0
    %3670 = vmatprep.subr.bf16.mxu0 0
    %3671 = vmatpush1.bf16.msra.mxu0 0
    %3672 = vmatprep.subr.bf16.mxu0 0
    %3673 = vmatpush1.bf16.msra.mxu0 0
    %3674 = vmatprep.subr.bf16.mxu0 0
    %3675 = vmatpush1.bf16.msra.mxu0 0
    %3676 = vmatprep.subr.bf16.mxu0 0
    %3677 = vmatpush1.bf16.msra.mxu0 0
    %3678 = vmatprep.subr.bf16.mxu0 0
    %3679 = vmatpush1.bf16.msra.mxu0 0
    %3680 = vmatprep.subr.bf16.mxu0 0
    %3681 = vmatpush1.bf16.msra.mxu0 0
    %3682 = vmatprep.subr.bf16.mxu0 0
    %3683 = vmatpush1.bf16.msra.mxu0 0
    %3684 = vmatprep.subr.bf16.mxu0 0
    %3685 = vmatpush1.bf16.msra.mxu0 0
    %3686 = vmatprep.subr.bf16.mxu0 0
    %3687 = vmatpush1.bf16.msra.mxu0 0
    %3688 = vmatprep.subr.bf16.mxu0 0
    %3689 = vmatpush1.bf16.msra.mxu0 0
    %3690 = vmatprep.subr.bf16.mxu0 0
    %3691 = vmatpush1.bf16.msra.mxu0 0
    %3692 = vmatprep.subr.bf16.mxu0 0
    %3693 = vmatpush1.bf16.msra.mxu0 0
    %3694 = vmatprep.subr.bf16.mxu0 0
    %3695 = vmatpush1.bf16.msra.mxu0 0
    %3696 = vmatprep.subr.bf16.mxu0 0
    %3697 = vmatpush1.bf16.msra.mxu0 0
    %3698 = vmatprep.mubr.bf16.mxu0 0
    %3699 = vmatmul.mubr.bf16.gmra.mrb[0].mxu0 %v3661
    %v3700 = vpop.f32.mrb[0].mxu0
    %v3701 = vadd.f32 0.0, %v3700
    %v3702 = vpop.f32.mrb[0].mxu0
    %v3703 = vpop.f32.mrb[0].mxu0
    %v3704 = vadd.f32 0.0, %v3703
    %v3705 = vpop.f32.mrb[0].mxu0
    %3706 = vdwg.mxu0
    %v3707 = vadd.f32 %v3649, %v3701
    %v3708 = vadd.f32 %v3650, %v3704
    %v3709 = vld [vmem:[%s15] sm:$0xff]
    %v3710 = vld [vmem:[%s15 + $0x8] sm:$0xff]
    %3712 = vset.pattern.permute.xlu0 0
    %3713 = vperm.xlu0 %3712, %v3709
    %v3714 = vpop.permute.xlu0 %3713
    %3717 = vset.pattern.permute.xlu0 0
    %3718 = vperm.xlu0 %3717, %v3710
    %v3719 = vpop.permute.xlu0 %3718
    %v3721 = vadd.f32 %v3707, %v3714
    %v3722 = vadd.f32 %v3708, %v3719
    %v3723 = vmax.f32 %v3721, 0.0
    %v3724 = vmax.f32 %v3722, 0.0
    %v3725 = vpack.c.bf16 %v3724, %v3723
    %v3726 = vld [vmem:[#allocation4] sm:$0xf]
    %v3727 = vld [vmem:[#allocation4 + $0x4] sm:$0xf]
    %v3728 = vld [vmem:[#allocation4 + $0x8] sm:$0xf]
    %v3729 = vld [vmem:[#allocation4 + $0xc] sm:$0xf]
    %v3734 = vunpack.c.l.b16 %v3726
    %v3735 = vunpack.c.l.b16 %v3727
    %v3736 = vunpack.c.l.b16 %v3728
    %v3737 = vunpack.c.l.b16 %v3729
    %v3738 = vpack.c.b16 %v3735, %v3734
    %v3739 = vpack.c.b16 %v3737, %v3736
    %vm3742 = vcmask 261120
    %v3744 = vsel %vm3742, %v3725, 0
    %3746 = vmatprep.subr.bf16.mxu0 0
    %3747 = vmatpush1.bf16.msra.mxu0 %v3738
    %3748 = vmatprep.subr.bf16.mxu0 0
    %3749 = vmatpush1.bf16.msra.mxu0 %v3739
    %3750 = vmatprep.subr.bf16.mxu0 0
    %3751 = vmatpush1.bf16.msra.mxu0 0
    %3752 = vmatprep.subr.bf16.mxu0 0
    %3753 = vmatpush1.bf16.msra.mxu0 0
    %3754 = vmatprep.subr.bf16.mxu0 0
    %3755 = vmatpush1.bf16.msra.mxu0 0
    %3756 = vmatprep.subr.bf16.mxu0 0
    %3757 = vmatpush1.bf16.msra.mxu0 0
    %3758 = vmatprep.subr.bf16.mxu0 0
    %3759 = vmatpush1.bf16.msra.mxu0 0
    %3760 = vmatprep.subr.bf16.mxu0 0
    %3761 = vmatpush1.bf16.msra.mxu0 0
    %3762 = vmatprep.subr.bf16.mxu0 0
    %3763 = vmatpush1.bf16.msra.mxu0 0
    %3764 = vmatprep.subr.bf16.mxu0 0
    %3765 = vmatpush1.bf16.msra.mxu0 0
    %3766 = vmatprep.subr.bf16.mxu0 0
    %3767 = vmatpush1.bf16.msra.mxu0 0
    %3768 = vmatprep.subr.bf16.mxu0 0
    %3769 = vmatpush1.bf16.msra.mxu0 0
    %3770 = vmatprep.subr.bf16.mxu0 0
    %3771 = vmatpush1.bf16.msra.mxu0 0
    %3772 = vmatprep.subr.bf16.mxu0 0
    %3773 = vmatpush1.bf16.msra.mxu0 0
    %3774 = vmatprep.subr.bf16.mxu0 0
    %3775 = vmatpush1.bf16.msra.mxu0 0
    %3776 = vmatprep.subr.bf16.mxu0 0
    %3777 = vmatpush1.bf16.msra.mxu0 0
    %3778 = vmatprep.mubr.bf16.mxu0 0
    %3779 = vmatmul.mubr.bf16.gmra.mrb[0].mxu0 %v3744
    %v3780 = vpop.f32.mrb[0].mxu0
    %v3781 = vadd.f32 0.0, %v3780
    %v3782 = vpop.f32.mrb[0].mxu0
    %v3783 = vpop.f32.mrb[0].mxu0
    %v3784 = vadd.f32 0.0, %v3783
    %v3785 = vpop.f32.mrb[0].mxu0
    %3786 = vdwg.mxu0
    %v3787 = vpack.c.bf16 %v3784, %v3781
    %v3788 = vld [vmem:[%s19] sm:$0xf]
    %v3789 = vld [vmem:[%s19 + $0x4] sm:$0xf]
    %v3790 = vld [vmem:[%s19 + $0x8] sm:$0xf]
    %v3791 = vld [vmem:[%s19 + $0xc] sm:$0xf]
    %s3792 = scalar_lea.vmem %s19, 16
    %v3793 = vld [vmem:[%s3792] sm:$0xf]
    %v3794 = vld [vmem:[%s3792 + $0x4] sm:$0xf]
    %v3795 = vld [vmem:[%s3792 + $0x8] sm:$0xf]
    %v3796 = vld [vmem:[%s3792 + $0xc] sm:$0xf]
    %v3801 = vunpack.c.l.b16 %v3793
    %v3802 = vunpack.c.l.b16 %v3794
    %v3803 = vunpack.c.l.b16 %v3795
    %v3804 = vunpack.c.l.b16 %v3796
    %v3805 = vpack.c.b16 %v3802, %v3801
    %v3806 = vpack.c.b16 %v3804, %v3803
    %3808 = vrot.lane.b32.xlu0 %v3787, 120
    %v3809 = vpop.permute.xlu0 %3808
    %vm3811 = vcmask 130048
    %v3813 = vsel %vm3811, %v3805, 0
    %v3816 = vsel %vm3811, %v3806, 0
    %3818 = vmatprep.subr.bf16.mxu0 0
    %3819 = vmatpush1.bf16.msra.mxu0 %v3809
    %3820 = vmatprep.subr.bf16.mxu0 0
    %3821 = vmatpush1.bf16.msra.mxu0 0
    %3822 = vmatprep.subr.bf16.mxu0 0
    %3823 = vmatpush1.bf16.msra.mxu0 0
    %3824 = vmatprep.subr.bf16.mxu0 0
    %3825 = vmatpush1.bf16.msra.mxu0 0
    %3826 = vmatprep.subr.bf16.mxu0 0
    %3827 = vmatpush1.bf16.msra.mxu0 0
    %3828 = vmatprep.subr.bf16.mxu0 0
    %3829 = vmatpush1.bf16.msra.mxu0 0
    %3830 = vmatprep.subr.bf16.mxu0 0
    %3831 = vmatpush1.bf16.msra.mxu0 0
    %3832 = vmatprep.subr.bf16.mxu0 0
    %3833 = vmatpush1.bf16.msra.mxu0 0
    %3834 = vmatprep.subr.bf16.mxu0 0
    %3835 = vmatpush1.bf16.msra.mxu0 0
    %3836 = vmatprep.subr.bf16.mxu0 0
    %3837 = vmatpush1.bf16.msra.mxu0 0
    %3838 = vmatprep.subr.bf16.mxu0 0
    %3839 = vmatpush1.bf16.msra.mxu0 0
    %3840 = vmatprep.subr.bf16.mxu0 0
    %3841 = vmatpush1.bf16.msra.mxu0 0
    %3842 = vmatprep.subr.bf16.mxu0 0
    %3843 = vmatpush1.bf16.msra.mxu0 0
    %3844 = vmatprep.subr.bf16.mxu0 0
    %3845 = vmatpush1.bf16.msra.mxu0 0
    %3846 = vmatprep.subr.bf16.mxu0 0
    %3847 = vmatpush1.bf16.msra.mxu0 0
    %3848 = vmatprep.subr.bf16.mxu0 0
    %3849 = vmatpush1.bf16.msra.mxu0 0
    %3850 = vmatprep.mubr.bf16.mxu0 0
    %3851 = vmatmul.mubr.bf16.gmra.mrb[0].mxu0 %v3813
    %v3852 = vpop.f32.mrb[0].mxu0
    %v3853 = vadd.f32 0.0, %v3852
    %v3854 = vpop.f32.mrb[0].mxu0
    %v3855 = vpop.f32.mrb[0].mxu0
    %v3856 = vadd.f32 0.0, %v3855
    %v3857 = vpop.f32.mrb[0].mxu0
    %3858 = vmatprep.mubr.bf16.mxu0 0
    %3859 = vmatmul.mubr.bf16.gmra.mrb[0].mxu0 %v3816
    %v3860 = vpop.f32.mrb[0].mxu0
    %v3861 = vadd.f32 0.0, %v3860
    %v3862 = vpop.f32.mrb[0].mxu0
    %v3863 = vpop.f32.mrb[0].mxu0
    %v3864 = vadd.f32 0.0, %v3863
    %v3865 = vpop.f32.mrb[0].mxu0
    %3866 = vdwg.mxu0
    %v3871 = vunpack.c.l.b16 %v3788
    %v3872 = vunpack.c.l.b16 %v3789
    %v3873 = vunpack.c.l.b16 %v3790
    %v3874 = vunpack.c.l.b16 %v3791
    %v3875 = vpack.c.b16 %v3872, %v3871
    %v3876 = vpack.c.b16 %v3874, %v3873
    %v3878 = vsel %vm3811, %v3875, 0
    %v3881 = vsel %vm3811, %v3876, 0
    %3883 = vmatprep.subr.bf16.mxu0 0
    %3884 = vmatpush1.bf16.msra.mxu0 %v3787
    %3885 = vmatprep.subr.bf16.mxu0 0
    %3886 = vmatpush1.bf16.msra.mxu0 0
    %3887 = vmatprep.subr.bf16.mxu0 0
    %3888 = vmatpush1.bf16.msra.mxu0 0
    %3889 = vmatprep.subr.bf16.mxu0 0
    %3890 = vmatpush1.bf16.msra.mxu0 0
    %3891 = vmatprep.subr.bf16.mxu0 0
    %3892 = vmatpush1.bf16.msra.mxu0 0
    %3893 = vmatprep.subr.bf16.mxu0 0
    %3894 = vmatpush1.bf16.msra.mxu0 0
    %3895 = vmatprep.subr.bf16.mxu0 0
    %3896 = vmatpush1.bf16.msra.mxu0 0
    %3897 = vmatprep.subr.bf16.mxu0 0
    %3898 = vmatpush1.bf16.msra.mxu0 0
    %3899 = vmatprep.subr.bf16.mxu0 0
    %3900 = vmatpush1.bf16.msra.mxu0 0
    %3901 = vmatprep.subr.bf16.mxu0 0
    %3902 = vmatpush1.bf16.msra.mxu0 0
    %3903 = vmatprep.subr.bf16.mxu0 0
    %3904 = vmatpush1.bf16.msra.mxu0 0
    %3905 = vmatprep.subr.bf16.mxu0 0
    %3906 = vmatpush1.bf16.msra.mxu0 0
    %3907 = vmatprep.subr.bf16.mxu0 0
    %3908 = vmatpush1.bf16.msra.mxu0 0
    %3909 = vmatprep.subr.bf16.mxu0 0
    %3910 = vmatpush1.bf16.msra.mxu0 0
    %3911 = vmatprep.subr.bf16.mxu0 0
    %3912 = vmatpush1.bf16.msra.mxu0 0
    %3913 = vmatprep.subr.bf16.mxu0 0
    %3914 = vmatpush1.bf16.msra.mxu0 0
    %3915 = vmatprep.mubr.bf16.mxu0 0
    %3916 = vmatmul.mubr.bf16.gmra.mrb[0].mxu0 %v3878
    %v3917 = vpop.f32.mrb[0].mxu0
    %v3918 = vadd.f32 %v3853, %v3917
    %v3919 = vpop.f32.mrb[0].mxu0
    %v3920 = vpop.f32.mrb[0].mxu0
    %v3921 = vadd.f32 %v3856, %v3920
    %v3922 = vpop.f32.mrb[0].mxu0
    %3923 = vmatprep.mubr.bf16.mxu0 0
    %3924 = vmatmul.mubr.bf16.gmra.mrb[0].mxu0 %v3881
    %v3925 = vpop.f32.mrb[0].mxu0
    %v3926 = vadd.f32 %v3861, %v3925
    %v3927 = vpop.f32.mrb[0].mxu0
    %v3928 = vpop.f32.mrb[0].mxu0
    %v3929 = vadd.f32 %v3864, %v3928
    %v3930 = vpop.f32.mrb[0].mxu0
    %3931 = vdwg.mxu0
    %s3932 = scalar_lea.vmem %s19, 32
    %v3933 = vld [vmem:[%s3932] sm:$0xf]
    %v3934 = vld [vmem:[%s3932 + $0x4] sm:$0xf]
    %v3935 = vld [vmem:[%s3932 + $0x8] sm:$0xf]
    %v3936 = vld [vmem:[%s3932 + $0xc] sm:$0xf]
    %v3941 = vunpack.c.l.b16 %v3933
    %v3942 = vunpack.c.l.b16 %v3934
    %v3943 = vunpack.c.l.b16 %v3935
    %v3944 = vunpack.c.l.b16 %v3936
    %v3945 = vpack.c.b16 %v3942, %v3941
    %v3946 = vpack.c.b16 %v3944, %v3943
    %3947 = vrot.lane.b32.xlu0 %v3787, 112
    %v3948 = vpop.permute.xlu0 %3947
    %v3951 = vsel %vm3811, %v3945, 0
    %v3954 = vsel %vm3811, %v3946, 0
    %3956 = vmatprep.subr.bf16.mxu0 0
    %3957 = vmatpush1.bf16.msra.mxu0 %v3948
    %3958 = vmatprep.subr.bf16.mxu0 0
    %3959 = vmatpush1.bf16.msra.mxu0 0
    %3960 = vmatprep.subr.bf16.mxu0 0
    %3961 = vmatpush1.bf16.msra.mxu0 0
    %3962 = vmatprep.subr.bf16.mxu0 0
    %3963 = vmatpush1.bf16.msra.mxu0 0
    %3964 = vmatprep.subr.bf16.mxu0 0
    %3965 = vmatpush1.bf16.msra.mxu0 0
    %3966 = vmatprep.subr.bf16.mxu0 0
    %3967 = vmatpush1.bf16.msra.mxu0 0
    %3968 = vmatprep.subr.bf16.mxu0 0
    %3969 = vmatpush1.bf16.msra.mxu0 0
    %3970 = vmatprep.subr.bf16.mxu0 0
    %3971 = vmatpush1.bf16.msra.mxu0 0
    %3972 = vmatprep.subr.bf16.mxu0 0
    %3973 = vmatpush1.bf16.msra.mxu0 0
    %3974 = vmatprep.subr.bf16.mxu0 0
    %3975 = vmatpush1.bf16.msra.mxu0 0
    %3976 = vmatprep.subr.bf16.mxu0 0
    %3977 = vmatpush1.bf16.msra.mxu0 0
    %3978 = vmatprep.subr.bf16.mxu0 0
    %3979 = vmatpush1.bf16.msra.mxu0 0
    %3980 = vmatprep.subr.bf16.mxu0 0
    %3981 = vmatpush1.bf16.msra.mxu0 0
    %3982 = vmatprep.subr.bf16.mxu0 0
    %3983 = vmatpush1.bf16.msra.mxu0 0
    %3984 = vmatprep.subr.bf16.mxu0 0
    %3985 = vmatpush1.bf16.msra.mxu0 0
    %3986 = vmatprep.subr.bf16.mxu0 0
    %3987 = vmatpush1.bf16.msra.mxu0 0
    %3988 = vmatprep.mubr.bf16.mxu0 0
    %3989 = vmatmul.mubr.bf16.gmra.mrb[0].mxu0 %v3951
    %v3990 = vpop.f32.mrb[0].mxu0
    %v3991 = vadd.f32 0.0, %v3990
    %v3992 = vpop.f32.mrb[0].mxu0
    %v3993 = vpop.f32.mrb[0].mxu0
    %v3994 = vadd.f32 0.0, %v3993
    %v3995 = vpop.f32.mrb[0].mxu0
    %3996 = vmatprep.mubr.bf16.mxu0 0
    %3997 = vmatmul.mubr.bf16.gmra.mrb[0].mxu0 %v3954
    %v3998 = vpop.f32.mrb[0].mxu0
    %v3999 = vadd.f32 0.0, %v3998
    %v4000 = vpop.f32.mrb[0].mxu0
    %v4001 = vpop.f32.mrb[0].mxu0
    %v4002 = vadd.f32 0.0, %v4001
    %v4003 = vpop.f32.mrb[0].mxu0
    %4004 = vdwg.mxu0
    %v4005 = vadd.f32 %v3918, %v3991
    %v4006 = vadd.f32 %v3921, %v3994
    %v4007 = vadd.f32 %v3926, %v3999
    %v4008 = vadd.f32 %v3929, %v4002
    %s4009 = scalar_lea.vmem %s19, 48
    %v4010 = vld [vmem:[%s4009] sm:$0xf]
    %v4011 = vld [vmem:[%s4009 + $0x4] sm:$0xf]
    %v4012 = vld [vmem:[%s4009 + $0x8] sm:$0xf]
    %v4013 = vld [vmem:[%s4009 + $0xc] sm:$0xf]
    %v4018 = vunpack.c.l.b16 %v4010
    %v4019 = vunpack.c.l.b16 %v4011
    %v4020 = vunpack.c.l.b16 %v4012
    %v4021 = vunpack.c.l.b16 %v4013
    %v4022 = vpack.c.b16 %v4019, %v4018
    %v4023 = vpack.c.b16 %v4021, %v4020
    %4024 = vrot.lane.b32.xlu0 %v3787, 104
    %v4025 = vpop.permute.xlu0 %4024
    %v4028 = vsel %vm3811, %v4022, 0
    %v4031 = vsel %vm3811, %v4023, 0
    %4033 = vmatprep.subr.bf16.mxu0 0
    %4034 = vmatpush1.bf16.msra.mxu0 %v4025
    %4035 = vmatprep.subr.bf16.mxu0 0
    %4036 = vmatpush1.bf16.msra.mxu0 0
    %4037 = vmatprep.subr.bf16.mxu0 0
    %4038 = vmatpush1.bf16.msra.mxu0 0
    %4039 = vmatprep.subr.bf16.mxu0 0
    %4040 = vmatpush1.bf16.msra.mxu0 0
    %4041 = vmatprep.subr.bf16.mxu0 0
    %4042 = vmatpush1.bf16.msra.mxu0 0
    %4043 = vmatprep.subr.bf16.mxu0 0
    %4044 = vmatpush1.bf16.msra.mxu0 0
    %4045 = vmatprep.subr.bf16.mxu0 0
    %4046 = vmatpush1.bf16.msra.mxu0 0
    %4047 = vmatprep.subr.bf16.mxu0 0
    %4048 = vmatpush1.bf16.msra.mxu0 0
    %4049 = vmatprep.subr.bf16.mxu0 0
    %4050 = vmatpush1.bf16.msra.mxu0 0
    %4051 = vmatprep.subr.bf16.mxu0 0
    %4052 = vmatpush1.bf16.msra.mxu0 0
    %4053 = vmatprep.subr.bf16.mxu0 0
    %4054 = vmatpush1.bf16.msra.mxu0 0
    %4055 = vmatprep.subr.bf16.mxu0 0
    %4056 = vmatpush1.bf16.msra.mxu0 0
    %4057 = vmatprep.subr.bf16.mxu0 0
    %4058 = vmatpush1.bf16.msra.mxu0 0
    %4059 = vmatprep.subr.bf16.mxu0 0
    %4060 = vmatpush1.bf16.msra.mxu0 0
    %4061 = vmatprep.subr.bf16.mxu0 0
    %4062 = vmatpush1.bf16.msra.mxu0 0
    %4063 = vmatprep.subr.bf16.mxu0 0
    %4064 = vmatpush1.bf16.msra.mxu0 0
    %4065 = vmatprep.mubr.bf16.mxu0 0
    %4066 = vmatmul.mubr.bf16.gmra.mrb[0].mxu0 %v4028
    %v4067 = vpop.f32.mrb[0].mxu0
    %v4068 = vadd.f32 0.0, %v4067
    %v4069 = vpop.f32.mrb[0].mxu0
    %v4070 = vpop.f32.mrb[0].mxu0
    %v4071 = vadd.f32 0.0, %v4070
    %v4072 = vpop.f32.mrb[0].mxu0
    %4073 = vmatprep.mubr.bf16.mxu0 0
    %4074 = vmatmul.mubr.bf16.gmra.mrb[0].mxu0 %v4031
    %v4075 = vpop.f32.mrb[0].mxu0
    %v4076 = vadd.f32 0.0, %v4075
    %v4077 = vpop.f32.mrb[0].mxu0
    %v4078 = vpop.f32.mrb[0].mxu0
    %v4079 = vadd.f32 0.0, %v4078
    %v4080 = vpop.f32.mrb[0].mxu0
    %4081 = vdwg.mxu0
    %v4082 = vadd.f32 %v4005, %v4068
    %v4083 = vadd.f32 %v4006, %v4071
    %v4084 = vadd.f32 %v4007, %v4076
    %v4085 = vadd.f32 %v4008, %v4079
    %s4086 = scalar_lea.vmem %s19, 64
    %v4087 = vld [vmem:[%s4086] sm:$0xf]
    %v4088 = vld [vmem:[%s4086 + $0x4] sm:$0xf]
    %v4089 = vld [vmem:[%s4086 + $0x8] sm:$0xf]
    %v4090 = vld [vmem:[%s4086 + $0xc] sm:$0xf]
    %v4095 = vunpack.c.l.b16 %v4087
    %v4096 = vunpack.c.l.b16 %v4088
    %v4097 = vunpack.c.l.b16 %v4089
    %v4098 = vunpack.c.l.b16 %v4090
    %v4099 = vpack.c.b16 %v4096, %v4095
    %v4100 = vpack.c.b16 %v4098, %v4097
    %4101 = vrot.lane.b32.xlu0 %v3787, 96
    %v4102 = vpop.permute.xlu0 %4101
    %v4105 = vsel %vm3811, %v4099, 0
    %v4108 = vsel %vm3811, %v4100, 0
    %4110 = vmatprep.subr.bf16.mxu0 0
    %4111 = vmatpush1.bf16.msra.mxu0 %v4102
    %4112 = vmatprep.subr.bf16.mxu0 0
    %4113 = vmatpush1.bf16.msra.mxu0 0
    %4114 = vmatprep.subr.bf16.mxu0 0
    %4115 = vmatpush1.bf16.msra.mxu0 0
    %4116 = vmatprep.subr.bf16.mxu0 0
    %4117 = vmatpush1.bf16.msra.mxu0 0
    %4118 = vmatprep.subr.bf16.mxu0 0
    %4119 = vmatpush1.bf16.msra.mxu0 0
    %4120 = vmatprep.subr.bf16.mxu0 0
    %4121 = vmatpush1.bf16.msra.mxu0 0
    %4122 = vmatprep.subr.bf16.mxu0 0
    %4123 = vmatpush1.bf16.msra.mxu0 0
    %4124 = vmatprep.subr.bf16.mxu0 0
    %4125 = vmatpush1.bf16.msra.mxu0 0
    %4126 = vmatprep.subr.bf16.mxu0 0
    %4127 = vmatpush1.bf16.msra.mxu0 0
    %4128 = vmatprep.subr.bf16.mxu0 0
    %4129 = vmatpush1.bf16.msra.mxu0 0
    %4130 = vmatprep.subr.bf16.mxu0 0
    %4131 = vmatpush1.bf16.msra.mxu0 0
    %4132 = vmatprep.subr.bf16.mxu0 0
    %4133 = vmatpush1.bf16.msra.mxu0 0
    %4134 = vmatprep.subr.bf16.mxu0 0
    %4135 = vmatpush1.bf16.msra.mxu0 0
    %4136 = vmatprep.subr.bf16.mxu0 0
    %4137 = vmatpush1.bf16.msra.mxu0 0
    %4138 = vmatprep.subr.bf16.mxu0 0
    %4139 = vmatpush1.bf16.msra.mxu0 0
    %4140 = vmatprep.subr.bf16.mxu0 0
    %4141 = vmatpush1.bf16.msra.mxu0 0
    %4142 = vmatprep.mubr.bf16.mxu0 0
    %4143 = vmatmul.mubr.bf16.gmra.mrb[0].mxu0 %v4105
    %v4144 = vpop.f32.mrb[0].mxu0
    %v4145 = vadd.f32 0.0, %v4144
    %v4146 = vpop.f32.mrb[0].mxu0
    %v4147 = vpop.f32.mrb[0].mxu0
    %v4148 = vadd.f32 0.0, %v4147
    %v4149 = vpop.f32.mrb[0].mxu0
    %4150 = vmatprep.mubr.bf16.mxu0 0
    %4151 = vmatmul.mubr.bf16.gmra.mrb[0].mxu0 %v4108
    %v4152 = vpop.f32.mrb[0].mxu0
    %v4153 = vadd.f32 0.0, %v4152
    %v4154 = vpop.f32.mrb[0].mxu0
    %v4155 = vpop.f32.mrb[0].mxu0
    %v4156 = vadd.f32 0.0, %v4155
    %v4157 = vpop.f32.mrb[0].mxu0
    %4158 = vdwg.mxu0
    %v4159 = vadd.f32 %v4082, %v4145
    %v4160 = vadd.f32 %v4083, %v4148
    %v4161 = vadd.f32 %v4084, %v4153
    %v4162 = vadd.f32 %v4085, %v4156
    %s4163 = scalar_lea.vmem %s19, 80
    %v4164 = vld [vmem:[%s4163] sm:$0xf]
    %v4165 = vld [vmem:[%s4163 + $0x4] sm:$0xf]
    %v4166 = vld [vmem:[%s4163 + $0x8] sm:$0xf]
    %v4167 = vld [vmem:[%s4163 + $0xc] sm:$0xf]
    %v4172 = vunpack.c.l.b16 %v4164
    %v4173 = vunpack.c.l.b16 %v4165
    %v4174 = vunpack.c.l.b16 %v4166
    %v4175 = vunpack.c.l.b16 %v4167
    %v4176 = vpack.c.b16 %v4173, %v4172
    %v4177 = vpack.c.b16 %v4175, %v4174
    %4178 = vrot.lane.b32.xlu0 %v3787, 88
    %v4179 = vpop.permute.xlu0 %4178
    %v4182 = vsel %vm3811, %v4176, 0
    %v4185 = vsel %vm3811, %v4177, 0
    %4187 = vmatprep.subr.bf16.mxu0 0
    %4188 = vmatpush1.bf16.msra.mxu0 %v4179
    %4189 = vmatprep.subr.bf16.mxu0 0
    %4190 = vmatpush1.bf16.msra.mxu0 0
    %4191 = vmatprep.subr.bf16.mxu0 0
    %4192 = vmatpush1.bf16.msra.mxu0 0
    %4193 = vmatprep.subr.bf16.mxu0 0
    %4194 = vmatpush1.bf16.msra.mxu0 0
    %4195 = vmatprep.subr.bf16.mxu0 0
    %4196 = vmatpush1.bf16.msra.mxu0 0
    %4197 = vmatprep.subr.bf16.mxu0 0
    %4198 = vmatpush1.bf16.msra.mxu0 0
    %4199 = vmatprep.subr.bf16.mxu0 0
    %4200 = vmatpush1.bf16.msra.mxu0 0
    %4201 = vmatprep.subr.bf16.mxu0 0
    %4202 = vmatpush1.bf16.msra.mxu0 0
    %4203 = vmatprep.subr.bf16.mxu0 0
    %4204 = vmatpush1.bf16.msra.mxu0 0
    %4205 = vmatprep.subr.bf16.mxu0 0
    %4206 = vmatpush1.bf16.msra.mxu0 0
    %4207 = vmatprep.subr.bf16.mxu0 0
    %4208 = vmatpush1.bf16.msra.mxu0 0
    %4209 = vmatprep.subr.bf16.mxu0 0
    %4210 = vmatpush1.bf16.msra.mxu0 0
    %4211 = vmatprep.subr.bf16.mxu0 0
    %4212 = vmatpush1.bf16.msra.mxu0 0
    %4213 = vmatprep.subr.bf16.mxu0 0
    %4214 = vmatpush1.bf16.msra.mxu0 0
    %4215 = vmatprep.subr.bf16.mxu0 0
    %4216 = vmatpush1.bf16.msra.mxu0 0
    %4217 = vmatprep.subr.bf16.mxu0 0
    %4218 = vmatpush1.bf16.msra.mxu0 0
    %4219 = vmatprep.mubr.bf16.mxu0 0
    %4220 = vmatmul.mubr.bf16.gmra.mrb[0].mxu0 %v4182
    %v4221 = vpop.f32.mrb[0].mxu0
    %v4222 = vadd.f32 0.0, %v4221
    %v4223 = vpop.f32.mrb[0].mxu0
    %v4224 = vpop.f32.mrb[0].mxu0
    %v4225 = vadd.f32 0.0, %v4224
    %v4226 = vpop.f32.mrb[0].mxu0
    %4227 = vmatprep.mubr.bf16.mxu0 0
    %4228 = vmatmul.mubr.bf16.gmra.mrb[0].mxu0 %v4185
    %v4229 = vpop.f32.mrb[0].mxu0
    %v4230 = vadd.f32 0.0, %v4229
    %v4231 = vpop.f32.mrb[0].mxu0
    %v4232 = vpop.f32.mrb[0].mxu0
    %v4233 = vadd.f32 0.0, %v4232
    %v4234 = vpop.f32.mrb[0].mxu0
    %4235 = vdwg.mxu0
    %v4236 = vadd.f32 %v4159, %v4222
    %v4237 = vadd.f32 %v4160, %v4225
    %v4238 = vadd.f32 %v4161, %v4230
    %v4239 = vadd.f32 %v4162, %v4233
    %s4240 = scalar_lea.vmem %s19, 96
    %v4241 = vld [vmem:[%s4240] sm:$0xf]
    %v4242 = vld [vmem:[%s4240 + $0x4] sm:$0xf]
    %v4243 = vld [vmem:[%s4240 + $0x8] sm:$0xf]
    %v4244 = vld [vmem:[%s4240 + $0xc] sm:$0xf]
    %v4249 = vunpack.c.l.b16 %v4241
    %v4250 = vunpack.c.l.b16 %v4242
    %v4251 = vunpack.c.l.b16 %v4243
    %v4252 = vunpack.c.l.b16 %v4244
    %v4253 = vpack.c.b16 %v4250, %v4249
    %v4254 = vpack.c.b16 %v4252, %v4251
    %4255 = vrot.lane.b32.xlu0 %v3787, 80
    %v4256 = vpop.permute.xlu0 %4255
    %v4259 = vsel %vm3811, %v4253, 0
    %v4262 = vsel %vm3811, %v4254, 0
    %4264 = vmatprep.subr.bf16.mxu0 0
    %4265 = vmatpush1.bf16.msra.mxu0 %v4256
    %4266 = vmatprep.subr.bf16.mxu0 0
    %4267 = vmatpush1.bf16.msra.mxu0 0
    %4268 = vmatprep.subr.bf16.mxu0 0
    %4269 = vmatpush1.bf16.msra.mxu0 0
    %4270 = vmatprep.subr.bf16.mxu0 0
    %4271 = vmatpush1.bf16.msra.mxu0 0
    %4272 = vmatprep.subr.bf16.mxu0 0
    %4273 = vmatpush1.bf16.msra.mxu0 0
    %4274 = vmatprep.subr.bf16.mxu0 0
    %4275 = vmatpush1.bf16.msra.mxu0 0
    %4276 = vmatprep.subr.bf16.mxu0 0
    %4277 = vmatpush1.bf16.msra.mxu0 0
    %4278 = vmatprep.subr.bf16.mxu0 0
    %4279 = vmatpush1.bf16.msra.mxu0 0
    %4280 = vmatprep.subr.bf16.mxu0 0
    %4281 = vmatpush1.bf16.msra.mxu0 0
    %4282 = vmatprep.subr.bf16.mxu0 0
    %4283 = vmatpush1.bf16.msra.mxu0 0
    %4284 = vmatprep.subr.bf16.mxu0 0
    %4285 = vmatpush1.bf16.msra.mxu0 0
    %4286 = vmatprep.subr.bf16.mxu0 0
    %4287 = vmatpush1.bf16.msra.mxu0 0
    %4288 = vmatprep.subr.bf16.mxu0 0
    %4289 = vmatpush1.bf16.msra.mxu0 0
    %4290 = vmatprep.subr.bf16.mxu0 0
    %4291 = vmatpush1.bf16.msra.mxu0 0
    %4292 = vmatprep.subr.bf16.mxu0 0
    %4293 = vmatpush1.bf16.msra.mxu0 0
    %4294 = vmatprep.subr.bf16.mxu0 0
    %4295 = vmatpush1.bf16.msra.mxu0 0
    %4296 = vmatprep.mubr.bf16.mxu0 0
    %4297 = vmatmul.mubr.bf16.gmra.mrb[0].mxu0 %v4259
    %v4298 = vpop.f32.mrb[0].mxu0
    %v4299 = vadd.f32 0.0, %v4298
    %v4300 = vpop.f32.mrb[0].mxu0
    %v4301 = vpop.f32.mrb[0].mxu0
    %v4302 = vadd.f32 0.0, %v4301
    %v4303 = vpop.f32.mrb[0].mxu0
    %4304 = vmatprep.mubr.bf16.mxu0 0
    %4305 = vmatmul.mubr.bf16.gmra.mrb[0].mxu0 %v4262
    %v4306 = vpop.f32.mrb[0].mxu0
    %v4307 = vadd.f32 0.0, %v4306
    %v4308 = vpop.f32.mrb[0].mxu0
    %v4309 = vpop.f32.mrb[0].mxu0
    %v4310 = vadd.f32 0.0, %v4309
    %v4311 = vpop.f32.mrb[0].mxu0
    %4312 = vdwg.mxu0
    %v4313 = vadd.f32 %v4236, %v4299
    %v4314 = vadd.f32 %v4237, %v4302
    %v4315 = vadd.f32 %v4238, %v4307
    %v4316 = vadd.f32 %v4239, %v4310
    %s4317 = scalar_lea.vmem %s19, 112
    %v4318 = vld [vmem:[%s4317] sm:$0xf]
    %v4319 = vld [vmem:[%s4317 + $0x4] sm:$0xf]
    %v4320 = vld [vmem:[%s4317 + $0x8] sm:$0xf]
    %v4321 = vld [vmem:[%s4317 + $0xc] sm:$0xf]
    %v4326 = vunpack.c.l.b16 %v4318
    %v4327 = vunpack.c.l.b16 %v4319
    %v4328 = vunpack.c.l.b16 %v4320
    %v4329 = vunpack.c.l.b16 %v4321
    %v4330 = vpack.c.b16 %v4327, %v4326
    %v4331 = vpack.c.b16 %v4329, %v4328
    %4332 = vrot.lane.b32.xlu0 %v3787, 72
    %v4333 = vpop.permute.xlu0 %4332
    %v4336 = vsel %vm3811, %v4330, 0
    %v4339 = vsel %vm3811, %v4331, 0
    %4341 = vmatprep.subr.bf16.mxu0 0
    %4342 = vmatpush1.bf16.msra.mxu0 %v4333
    %4343 = vmatprep.subr.bf16.mxu0 0
    %4344 = vmatpush1.bf16.msra.mxu0 0
    %4345 = vmatprep.subr.bf16.mxu0 0
    %4346 = vmatpush1.bf16.msra.mxu0 0
    %4347 = vmatprep.subr.bf16.mxu0 0
    %4348 = vmatpush1.bf16.msra.mxu0 0
    %4349 = vmatprep.subr.bf16.mxu0 0
    %4350 = vmatpush1.bf16.msra.mxu0 0
    %4351 = vmatprep.subr.bf16.mxu0 0
    %4352 = vmatpush1.bf16.msra.mxu0 0
    %4353 = vmatprep.subr.bf16.mxu0 0
    %4354 = vmatpush1.bf16.msra.mxu0 0
    %4355 = vmatprep.subr.bf16.mxu0 0
    %4356 = vmatpush1.bf16.msra.mxu0 0
    %4357 = vmatprep.subr.bf16.mxu0 0
    %4358 = vmatpush1.bf16.msra.mxu0 0
    %4359 = vmatprep.subr.bf16.mxu0 0
    %4360 = vmatpush1.bf16.msra.mxu0 0
    %4361 = vmatprep.subr.bf16.mxu0 0
    %4362 = vmatpush1.bf16.msra.mxu0 0
    %4363 = vmatprep.subr.bf16.mxu0 0
    %4364 = vmatpush1.bf16.msra.mxu0 0
    %4365 = vmatprep.subr.bf16.mxu0 0
    %4366 = vmatpush1.bf16.msra.mxu0 0
    %4367 = vmatprep.subr.bf16.mxu0 0
    %4368 = vmatpush1.bf16.msra.mxu0 0
    %4369 = vmatprep.subr.bf16.mxu0 0
    %4370 = vmatpush1.bf16.msra.mxu0 0
    %4371 = vmatprep.subr.bf16.mxu0 0
    %4372 = vmatpush1.bf16.msra.mxu0 0
    %4373 = vmatprep.mubr.bf16.mxu0 0
    %4374 = vmatmul.mubr.bf16.gmra.mrb[0].mxu0 %v4336
    %v4375 = vpop.f32.mrb[0].mxu0
    %v4376 = vadd.f32 0.0, %v4375
    %v4377 = vpop.f32.mrb[0].mxu0
    %v4378 = vpop.f32.mrb[0].mxu0
    %v4379 = vadd.f32 0.0, %v4378
    %v4380 = vpop.f32.mrb[0].mxu0
    %4381 = vmatprep.mubr.bf16.mxu0 0
    %4382 = vmatmul.mubr.bf16.gmra.mrb[0].mxu0 %v4339
    %v4383 = vpop.f32.mrb[0].mxu0
    %v4384 = vadd.f32 0.0, %v4383
    %v4385 = vpop.f32.mrb[0].mxu0
    %v4386 = vpop.f32.mrb[0].mxu0
    %v4387 = vadd.f32 0.0, %v4386
    %v4388 = vpop.f32.mrb[0].mxu0
    %4389 = vdwg.mxu0
    %v4390 = vadd.f32 %v4313, %v4376
    %v4391 = vadd.f32 %v4314, %v4379
    %v4392 = vadd.f32 %v4315, %v4384
    %v4393 = vadd.f32 %v4316, %v4387
    %s4394 = scalar_lea.vmem %s19, 128
    %v4395 = vld [vmem:[%s4394] sm:$0xf]
    %v4396 = vld [vmem:[%s4394 + $0x4] sm:$0xf]
    %v4397 = vld [vmem:[%s4394 + $0x8] sm:$0xf]
    %v4398 = vld [vmem:[%s4394 + $0xc] sm:$0xf]
    %v4403 = vunpack.c.l.b16 %v4395
    %v4404 = vunpack.c.l.b16 %v4396
    %v4405 = vunpack.c.l.b16 %v4397
    %v4406 = vunpack.c.l.b16 %v4398
    %v4407 = vpack.c.b16 %v4404, %v4403
    %v4408 = vpack.c.b16 %v4406, %v4405
    %4409 = vrot.lane.b32.xlu0 %v3787, 64
    %v4410 = vpop.permute.xlu0 %4409
    %v4413 = vsel %vm3811, %v4407, 0
    %v4416 = vsel %vm3811, %v4408, 0
    %4418 = vmatprep.subr.bf16.mxu0 0
    %4419 = vmatpush1.bf16.msra.mxu0 %v4410
    %4420 = vmatprep.subr.bf16.mxu0 0
    %4421 = vmatpush1.bf16.msra.mxu0 0
    %4422 = vmatprep.subr.bf16.mxu0 0
    %4423 = vmatpush1.bf16.msra.mxu0 0
    %4424 = vmatprep.subr.bf16.mxu0 0
    %4425 = vmatpush1.bf16.msra.mxu0 0
    %4426 = vmatprep.subr.bf16.mxu0 0
    %4427 = vmatpush1.bf16.msra.mxu0 0
    %4428 = vmatprep.subr.bf16.mxu0 0
    %4429 = vmatpush1.bf16.msra.mxu0 0
    %4430 = vmatprep.subr.bf16.mxu0 0
    %4431 = vmatpush1.bf16.msra.mxu0 0
    %4432 = vmatprep.subr.bf16.mxu0 0
    %4433 = vmatpush1.bf16.msra.mxu0 0
    %4434 = vmatprep.subr.bf16.mxu0 0
    %4435 = vmatpush1.bf16.msra.mxu0 0
    %4436 = vmatprep.subr.bf16.mxu0 0
    %4437 = vmatpush1.bf16.msra.mxu0 0
    %4438 = vmatprep.subr.bf16.mxu0 0
    %4439 = vmatpush1.bf16.msra.mxu0 0
    %4440 = vmatprep.subr.bf16.mxu0 0
    %4441 = vmatpush1.bf16.msra.mxu0 0
    %4442 = vmatprep.subr.bf16.mxu0 0
    %4443 = vmatpush1.bf16.msra.mxu0 0
    %4444 = vmatprep.subr.bf16.mxu0 0
    %4445 = vmatpush1.bf16.msra.mxu0 0
    %4446 = vmatprep.subr.bf16.mxu0 0
    %4447 = vmatpush1.bf16.msra.mxu0 0
    %4448 = vmatprep.subr.bf16.mxu0 0
    %4449 = vmatpush1.bf16.msra.mxu0 0
    %4450 = vmatprep.mubr.bf16.mxu0 0
    %4451 = vmatmul.mubr.bf16.gmra.mrb[0].mxu0 %v4413
    %v4452 = vpop.f32.mrb[0].mxu0
    %v4453 = vadd.f32 0.0, %v4452
    %v4454 = vpop.f32.mrb[0].mxu0
    %v4455 = vpop.f32.mrb[0].mxu0
    %v4456 = vadd.f32 0.0, %v4455
    %v4457 = vpop.f32.mrb[0].mxu0
    %4458 = vmatprep.mubr.bf16.mxu0 0
    %4459 = vmatmul.mubr.bf16.gmra.mrb[0].mxu0 %v4416
    %v4460 = vpop.f32.mrb[0].mxu0
    %v4461 = vadd.f32 0.0, %v4460
    %v4462 = vpop.f32.mrb[0].mxu0
    %v4463 = vpop.f32.mrb[0].mxu0
    %v4464 = vadd.f32 0.0, %v4463
    %v4465 = vpop.f32.mrb[0].mxu0
    %4466 = vdwg.mxu0
    %v4467 = vadd.f32 %v4390, %v4453
    %v4468 = vadd.f32 %v4391, %v4456
    %v4469 = vadd.f32 %v4392, %v4461
    %v4470 = vadd.f32 %v4393, %v4464
    %v4471 = vld [vmem:[%s21] sm:$0xff]
    %v4472 = vld [vmem:[%s21 + $0x8] sm:$0xff]
    %v4473 = vld [vmem:[%s21 + $0x10] sm:$0xff]
    %v4474 = vld [vmem:[%s21 + $0x18] sm:$0xff]
    %4476 = vset.pattern.permute.xlu0 0
    %4477 = vperm.xlu0 %4476, %v4471
    %v4478 = vpop.permute.xlu0 %4477
    %4481 = vset.pattern.permute.xlu0 0
    %4482 = vperm.xlu0 %4481, %v4472
    %v4483 = vpop.permute.xlu0 %4482
    %4486 = vset.pattern.permute.xlu0 0
    %4487 = vperm.xlu0 %4486, %v4473
    %v4488 = vpop.permute.xlu0 %4487
    %4491 = vset.pattern.permute.xlu0 0
    %4492 = vperm.xlu0 %4491, %v4474
    %v4493 = vpop.permute.xlu0 %4492
    %v4495 = vadd.f32 %v4467, %v4478
    %v4496 = vadd.f32 %v4468, %v4483
    %v4497 = vadd.f32 %v4469, %v4488
    %v4498 = vadd.f32 %v4470, %v4493
    %v4499 = vmax.f32 %v4495, 0.0
    %v4500 = vmax.f32 %v4496, 0.0
    %v4501 = vmax.f32 %v4497, 0.0
    %v4502 = vmax.f32 %v4498, 0.0
    %v4503 = vpack.c.bf16 %v4500, %v4499
    %v4504 = vpack.c.bf16 %v4502, %v4501
    %v4505 = vld [vmem:[#allocation6] sm:$0xf]
    %v4507 = vsel %vm3196, %v4503, 0
    %v4510 = vsel %vm3196, %v4504, 0
    %v4513 = vsel %vm3200, %v4505, 0
    %4515 = vmatprep.subr.bf16.mxu0 0
    %4516 = vmatpush1.bf16.msra.mxu0 %v4513
    %4517 = vmatprep.subr.bf16.mxu0 0
    %4518 = vmatpush1.bf16.msra.mxu0 0
    %4519 = vmatprep.subr.bf16.mxu0 0
    %4520 = vmatpush1.bf16.msra.mxu0 0
    %4521 = vmatprep.subr.bf16.mxu0 0
    %4522 = vmatpush1.bf16.msra.mxu0 0
    %4523 = vmatprep.subr.bf16.mxu0 0
    %4524 = vmatpush1.bf16.msra.mxu0 0
    %4525 = vmatprep.subr.bf16.mxu0 0
    %4526 = vmatpush1.bf16.msra.mxu0 0
    %4527 = vmatprep.subr.bf16.mxu0 0
    %4528 = vmatpush1.bf16.msra.mxu0 0
    %4529 = vmatprep.subr.bf16.mxu0 0
    %4530 = vmatpush1.bf16.msra.mxu0 0
    %4531 = vmatprep.subr.bf16.mxu0 0
    %4532 = vmatpush1.bf16.msra.mxu0 0
    %4533 = vmatprep.subr.bf16.mxu0 0
    %4534 = vmatpush1.bf16.msra.mxu0 0
    %4535 = vmatprep.subr.bf16.mxu0 0
    %4536 = vmatpush1.bf16.msra.mxu0 0
    %4537 = vmatprep.subr.bf16.mxu0 0
    %4538 = vmatpush1.bf16.msra.mxu0 0
    %4539 = vmatprep.subr.bf16.mxu0 0
    %4540 = vmatpush1.bf16.msra.mxu0 0
    %4541 = vmatprep.subr.bf16.mxu0 0
    %4542 = vmatpush1.bf16.msra.mxu0 0
    %4543 = vmatprep.subr.bf16.mxu0 0
    %4544 = vmatpush1.bf16.msra.mxu0 0
    %4545 = vmatprep.subr.bf16.mxu0 0
    %4546 = vmatpush1.bf16.msra.mxu0 0
    %4547 = vmatprep.mubr.bf16.mxu0 0
    %4548 = vmatmul.mubr.bf16.gmra.mrb[0].mxu0 %v4507
    %v4549 = vpop.f32.mrb[0].mxu0
    %v4550 = vadd.f32 0.0, %v4549
    %v4551 = vpop.f32.mrb[0].mxu0
    %v4552 = vpop.f32.mrb[0].mxu0
    %v4553 = vadd.f32 0.0, %v4552
    %v4554 = vpop.f32.mrb[0].mxu0
    %4555 = vmatprep.mubr.bf16.mxu0 0
    %4556 = vmatmul.mubr.bf16.gmra.mrb[0].mxu0 %v4510
    %v4557 = vpop.f32.mrb[0].mxu0
    %v4558 = vadd.f32 0.0, %v4557
    %v4559 = vpop.f32.mrb[0].mxu0
    %v4560 = vpop.f32.mrb[0].mxu0
    %v4561 = vadd.f32 0.0, %v4560
    %v4562 = vpop.f32.mrb[0].mxu0
    %4563 = vdwg.mxu0
    %v4564 = vpack.c.bf16 %v4553, %v4550
    %v4565 = vpack.c.bf16 %v4561, %v4558
    %v4566 = vld [vmem:[%s25] sm:$0xf]
    %v4567 = vld [vmem:[%s25 + $0x4] sm:$0xf]
    %v4568 = vld [vmem:[%s25 + $0x8] sm:$0xf]
    %v4569 = vld [vmem:[%s25 + $0xc] sm:$0xf]
    %v4570 = vld [vmem:[%s25 + $0x10] sm:$0xf]
    %v4571 = vld [vmem:[%s25 + $0x14] sm:$0xf]
    %v4572 = vld [vmem:[%s25 + $0x18] sm:$0xf]
    %v4573 = vld [vmem:[%s25 + $0x1c] sm:$0xf]
    %s4574 = scalar_lea.vmem %s25, 32
    %v4575 = vld [vmem:[%s4574] sm:$0xf]
    %v4576 = vld [vmem:[%s4574 + $0x4] sm:$0xf]
    %v4577 = vld [vmem:[%s4574 + $0x8] sm:$0xf]
    %v4578 = vld [vmem:[%s4574 + $0xc] sm:$0xf]
    %v4579 = vld [vmem:[%s4574 + $0x10] sm:$0xf]
    %v4580 = vld [vmem:[%s4574 + $0x14] sm:$0xf]
    %v4581 = vld [vmem:[%s4574 + $0x18] sm:$0xf]
    %v4582 = vld [vmem:[%s4574 + $0x1c] sm:$0xf]
    %v4591 = vunpack.c.l.b16 %v4575
    %v4592 = vunpack.c.l.b16 %v4576
    %v4593 = vunpack.c.l.b16 %v4577
    %v4594 = vunpack.c.l.b16 %v4578
    %v4595 = vunpack.c.l.b16 %v4579
    %v4596 = vunpack.c.l.b16 %v4580
    %v4597 = vunpack.c.l.b16 %v4581
    %v4598 = vunpack.c.l.b16 %v4582
    %v4599 = vpack.c.b16 %v4592, %v4591
    %v4600 = vpack.c.b16 %v4594, %v4593
    %v4601 = vpack.c.b16 %v4596, %v4595
    %v4602 = vpack.c.b16 %v4598, %v4597
    %4605 = vrot.lane.b32.xlu0 %v4564, 126
    %v4606 = vpop.permute.xlu0 %4605
    %4607 = vrot.lane.b32.xlu0 %v4565, 126
    %v4608 = vpop.permute.xlu0 %4607
    %v4612 = vsel %vm3742, %v4599, 0
    %v4615 = vsel %vm3742, %v4600, 0
    %v4618 = vsel %vm3742, %v4601, 0
    %v4621 = vsel %vm3742, %v4602, 0
    %4623 = vmatprep.subr.bf16.mxu0 0
    %4624 = vmatpush1.bf16.msra.mxu0 %v4606
    %4625 = vmatprep.subr.bf16.mxu0 0
    %4626 = vmatpush1.bf16.msra.mxu0 %v4608
    %4627 = vmatprep.subr.bf16.mxu0 0
    %4628 = vmatpush1.bf16.msra.mxu0 0
    %4629 = vmatprep.subr.bf16.mxu0 0
    %4630 = vmatpush1.bf16.msra.mxu0 0
    %4631 = vmatprep.subr.bf16.mxu0 0
    %4632 = vmatpush1.bf16.msra.mxu0 0
    %4633 = vmatprep.subr.bf16.mxu0 0
    %4634 = vmatpush1.bf16.msra.mxu0 0
    %4635 = vmatprep.subr.bf16.mxu0 0
    %4636 = vmatpush1.bf16.msra.mxu0 0
    %4637 = vmatprep.subr.bf16.mxu0 0
    %4638 = vmatpush1.bf16.msra.mxu0 0
    %4639 = vmatprep.subr.bf16.mxu0 0
    %4640 = vmatpush1.bf16.msra.mxu0 0
    %4641 = vmatprep.subr.bf16.mxu0 0
    %4642 = vmatpush1.bf16.msra.mxu0 0
    %4643 = vmatprep.subr.bf16.mxu0 0
    %4644 = vmatpush1.bf16.msra.mxu0 0
    %4645 = vmatprep.subr.bf16.mxu0 0
    %4646 = vmatpush1.bf16.msra.mxu0 0
    %4647 = vmatprep.subr.bf16.mxu0 0
    %4648 = vmatpush1.bf16.msra.mxu0 0
    %4649 = vmatprep.subr.bf16.mxu0 0
    %4650 = vmatpush1.bf16.msra.mxu0 0
    %4651 = vmatprep.subr.bf16.mxu0 0
    %4652 = vmatpush1.bf16.msra.mxu0 0
    %4653 = vmatprep.subr.bf16.mxu0 0
    %4654 = vmatpush1.bf16.msra.mxu0 0
    %4655 = vmatprep.mubr.bf16.mxu0 0
    %4656 = vmatmul.mubr.bf16.gmra.mrb[0].mxu0 %v4612
    %v4657 = vpop.f32.mrb[0].mxu0
    %v4658 = vadd.f32 0.0, %v4657
    %v4659 = vpop.f32.mrb[0].mxu0
    %v4660 = vpop.f32.mrb[0].mxu0
    %v4661 = vadd.f32 0.0, %v4660
    %v4662 = vpop.f32.mrb[0].mxu0
    %4663 = vmatprep.mubr.bf16.mxu0 0
    %4664 = vmatmul.mubr.bf16.gmra.mrb[0].mxu0 %v4615
    %v4665 = vpop.f32.mrb[0].mxu0
    %v4666 = vadd.f32 0.0, %v4665
    %v4667 = vpop.f32.mrb[0].mxu0
    %v4668 = vpop.f32.mrb[0].mxu0
    %v4669 = vadd.f32 0.0, %v4668
    %v4670 = vpop.f32.mrb[0].mxu0
    %4671 = vmatprep.mubr.bf16.mxu0 0
    %4672 = vmatmul.mubr.bf16.gmra.mrb[0].mxu0 %v4618
    %v4673 = vpop.f32.mrb[0].mxu0
    %v4674 = vadd.f32 0.0, %v4673
    %v4675 = vpop.f32.mrb[0].mxu0
    %v4676 = vpop.f32.mrb[0].mxu0
    %v4677 = vadd.f32 0.0, %v4676
    %v4678 = vpop.f32.mrb[0].mxu0
    %4679 = vmatprep.mubr.bf16.mxu0 0
    %4680 = vmatmul.mubr.bf16.gmra.mrb[0].mxu0 %v4621
    %v4681 = vpop.f32.mrb[0].mxu0
    %v4682 = vadd.f32 0.0, %v4681
    %v4683 = vpop.f32.mrb[0].mxu0
    %v4684 = vpop.f32.mrb[0].mxu0
    %v4685 = vadd.f32 0.0, %v4684
    %v4686 = vpop.f32.mrb[0].mxu0
    %4687 = vdwg.mxu0
    %v4696 = vunpack.c.l.b16 %v4566
    %v4697 = vunpack.c.l.b16 %v4567
    %v4698 = vunpack.c.l.b16 %v4568
    %v4699 = vunpack.c.l.b16 %v4569
    %v4700 = vunpack.c.l.b16 %v4570
    %v4701 = vunpack.c.l.b16 %v4571
    %v4702 = vunpack.c.l.b16 %v4572
    %v4703 = vunpack.c.l.b16 %v4573
    %v4704 = vpack.c.b16 %v4697, %v4696
    %v4705 = vpack.c.b16 %v4699, %v4698
    %v4706 = vpack.c.b16 %v4701, %v4700
    %v4707 = vpack.c.b16 %v4703, %v4702
    %v4709 = vsel %vm3742, %v4704, 0
    %v4712 = vsel %vm3742, %v4705, 0
    %v4715 = vsel %vm3742, %v4706, 0
    %v4718 = vsel %vm3742, %v4707, 0
    %4720 = vmatprep.subr.bf16.mxu0 0
    %4721 = vmatpush1.bf16.msra.mxu0 %v4564
    %4722 = vmatprep.subr.bf16.mxu0 0
    %4723 = vmatpush1.bf16.msra.mxu0 %v4565
    %4724 = vmatprep.subr.bf16.mxu0 0
    %4725 = vmatpush1.bf16.msra.mxu0 0
    %4726 = vmatprep.subr.bf16.mxu0 0
    %4727 = vmatpush1.bf16.msra.mxu0 0
    %4728 = vmatprep.subr.bf16.mxu0 0
    %4729 = vmatpush1.bf16.msra.mxu0 0
    %4730 = vmatprep.subr.bf16.mxu0 0
    %4731 = vmatpush1.bf16.msra.mxu0 0
    %4732 = vmatprep.subr.bf16.mxu0 0
    %4733 = vmatpush1.bf16.msra.mxu0 0
    %4734 = vmatprep.subr.bf16.mxu0 0
    %4735 = vmatpush1.bf16.msra.mxu0 0
    %4736 = vmatprep.subr.bf16.mxu0 0
    %4737 = vmatpush1.bf16.msra.mxu0 0
    %4738 = vmatprep.subr.bf16.mxu0 0
    %4739 = vmatpush1.bf16.msra.mxu0 0
    %4740 = vmatprep.subr.bf16.mxu0 0
    %4741 = vmatpush1.bf16.msra.mxu0 0
    %4742 = vmatprep.subr.bf16.mxu0 0
    %4743 = vmatpush1.bf16.msra.mxu0 0
    %4744 = vmatprep.subr.bf16.mxu0 0
    %4745 = vmatpush1.bf16.msra.mxu0 0
    %4746 = vmatprep.subr.bf16.mxu0 0
    %4747 = vmatpush1.bf16.msra.mxu0 0
    %4748 = vmatprep.subr.bf16.mxu0 0
    %4749 = vmatpush1.bf16.msra.mxu0 0
    %4750 = vmatprep.subr.bf16.mxu0 0
    %4751 = vmatpush1.bf16.msra.mxu0 0
    %4752 = vmatprep.mubr.bf16.mxu0 0
    %4753 = vmatmul.mubr.bf16.gmra.mrb[0].mxu0 %v4709
    %v4754 = vpop.f32.mrb[0].mxu0
    %v4755 = vadd.f32 %v4658, %v4754
    %v4756 = vpop.f32.mrb[0].mxu0
    %v4757 = vpop.f32.mrb[0].mxu0
    %v4758 = vadd.f32 %v4661, %v4757
    %v4759 = vpop.f32.mrb[0].mxu0
    %4760 = vmatprep.mubr.bf16.mxu0 0
    %4761 = vmatmul.mubr.bf16.gmra.mrb[0].mxu0 %v4712
    %v4762 = vpop.f32.mrb[0].mxu0
    %v4763 = vadd.f32 %v4666, %v4762
    %v4764 = vpop.f32.mrb[0].mxu0
    %v4765 = vpop.f32.mrb[0].mxu0
    %v4766 = vadd.f32 %v4669, %v4765
    %v4767 = vpop.f32.mrb[0].mxu0
    %4768 = vmatprep.mubr.bf16.mxu0 0
    %4769 = vmatmul.mubr.bf16.gmra.mrb[0].mxu0 %v4715
    %v4770 = vpop.f32.mrb[0].mxu0
    %v4771 = vadd.f32 %v4674, %v4770
    %v4772 = vpop.f32.mrb[0].mxu0
    %v4773 = vpop.f32.mrb[0].mxu0
    %v4774 = vadd.f32 %v4677, %v4773
    %v4775 = vpop.f32.mrb[0].mxu0
    %4776 = vmatprep.mubr.bf16.mxu0 0
    %4777 = vmatmul.mubr.bf16.gmra.mrb[0].mxu0 %v4718
    %v4778 = vpop.f32.mrb[0].mxu0
    %v4779 = vadd.f32 %v4682, %v4778
    %v4780 = vpop.f32.mrb[0].mxu0
    %v4781 = vpop.f32.mrb[0].mxu0
    %v4782 = vadd.f32 %v4685, %v4781
    %v4783 = vpop.f32.mrb[0].mxu0
    %4784 = vdwg.mxu0
    %s4785 = scalar_lea.vmem %s25, 64
    %v4786 = vld [vmem:[%s4785] sm:$0xf]
    %v4787 = vld [vmem:[%s4785 + $0x4] sm:$0xf]
    %v4788 = vld [vmem:[%s4785 + $0x8] sm:$0xf]
    %v4789 = vld [vmem:[%s4785 + $0xc] sm:$0xf]
    %v4790 = vld [vmem:[%s4785 + $0x10] sm:$0xf]
    %v4791 = vld [vmem:[%s4785 + $0x14] sm:$0xf]
    %v4792 = vld [vmem:[%s4785 + $0x18] sm:$0xf]
    %v4793 = vld [vmem:[%s4785 + $0x1c] sm:$0xf]
    %v4802 = vunpack.c.l.b16 %v4786
    %v4803 = vunpack.c.l.b16 %v4787
    %v4804 = vunpack.c.l.b16 %v4788
    %v4805 = vunpack.c.l.b16 %v4789
    %v4806 = vunpack.c.l.b16 %v4790
    %v4807 = vunpack.c.l.b16 %v4791
    %v4808 = vunpack.c.l.b16 %v4792
    %v4809 = vunpack.c.l.b16 %v4793
    %v4810 = vpack.c.b16 %v4803, %v4802
    %v4811 = vpack.c.b16 %v4805, %v4804
    %v4812 = vpack.c.b16 %v4807, %v4806
    %v4813 = vpack.c.b16 %v4809, %v4808
    %4814 = vrot.lane.b32.xlu0 %v4564, 124
    %v4815 = vpop.permute.xlu0 %4814
    %4816 = vrot.lane.b32.xlu0 %v4565, 124
    %v4817 = vpop.permute.xlu0 %4816
    %v4821 = vsel %vm3742, %v4810, 0
    %v4824 = vsel %vm3742, %v4811, 0
    %v4827 = vsel %vm3742, %v4812, 0
    %v4830 = vsel %vm3742, %v4813, 0
    %4832 = vmatprep.subr.bf16.mxu0 0
    %4833 = vmatpush1.bf16.msra.mxu0 %v4815
    %4834 = vmatprep.subr.bf16.mxu0 0
    %4835 = vmatpush1.bf16.msra.mxu0 %v4817
    %4836 = vmatprep.subr.bf16.mxu0 0
    %4837 = vmatpush1.bf16.msra.mxu0 0
    %4838 = vmatprep.subr.bf16.mxu0 0
    %4839 = vmatpush1.bf16.msra.mxu0 0
    %4840 = vmatprep.subr.bf16.mxu0 0
    %4841 = vmatpush1.bf16.msra.mxu0 0
    %4842 = vmatprep.subr.bf16.mxu0 0
    %4843 = vmatpush1.bf16.msra.mxu0 0
    %4844 = vmatprep.subr.bf16.mxu0 0
    %4845 = vmatpush1.bf16.msra.mxu0 0
    %4846 = vmatprep.subr.bf16.mxu0 0
    %4847 = vmatpush1.bf16.msra.mxu0 0
    %4848 = vmatprep.subr.bf16.mxu0 0
    %4849 = vmatpush1.bf16.msra.mxu0 0
    %4850 = vmatprep.subr.bf16.mxu0 0
    %4851 = vmatpush1.bf16.msra.mxu0 0
    %4852 = vmatprep.subr.bf16.mxu0 0
    %4853 = vmatpush1.bf16.msra.mxu0 0
    %4854 = vmatprep.subr.bf16.mxu0 0
    %4855 = vmatpush1.bf16.msra.mxu0 0
    %4856 = vmatprep.subr.bf16.mxu0 0
    %4857 = vmatpush1.bf16.msra.mxu0 0
    %4858 = vmatprep.subr.bf16.mxu0 0
    %4859 = vmatpush1.bf16.msra.mxu0 0
    %4860 = vmatprep.subr.bf16.mxu0 0
    %4861 = vmatpush1.bf16.msra.mxu0 0
    %4862 = vmatprep.subr.bf16.mxu0 0
    %4863 = vmatpush1.bf16.msra.mxu0 0
    %4864 = vmatprep.mubr.bf16.mxu0 0
    %4865 = vmatmul.mubr.bf16.gmra.mrb[0].mxu0 %v4821
    %v4866 = vpop.f32.mrb[0].mxu0
    %v4867 = vadd.f32 0.0, %v4866
    %v4868 = vpop.f32.mrb[0].mxu0
    %v4869 = vpop.f32.mrb[0].mxu0
    %v4870 = vadd.f32 0.0, %v4869
    %v4871 = vpop.f32.mrb[0].mxu0
    %4872 = vmatprep.mubr.bf16.mxu0 0
    %4873 = vmatmul.mubr.bf16.gmra.mrb[0].mxu0 %v4824
    %v4874 = vpop.f32.mrb[0].mxu0
    %v4875 = vadd.f32 0.0, %v4874
    %v4876 = vpop.f32.mrb[0].mxu0
    %v4877 = vpop.f32.mrb[0].mxu0
    %v4878 = vadd.f32 0.0, %v4877
    %v4879 = vpop.f32.mrb[0].mxu0
    %4880 = vmatprep.mubr.bf16.mxu0 0
    %4881 = vmatmul.mubr.bf16.gmra.mrb[0].mxu0 %v4827
    %v4882 = vpop.f32.mrb[0].mxu0
    %v4883 = vadd.f32 0.0, %v4882
    %v4884 = vpop.f32.mrb[0].mxu0
    %v4885 = vpop.f32.mrb[0].mxu0
    %v4886 = vadd.f32 0.0, %v4885
    %v4887 = vpop.f32.mrb[0].mxu0
    %4888 = vmatprep.mubr.bf16.mxu0 0
    %4889 = vmatmul.mubr.bf16.gmra.mrb[0].mxu0 %v4830
    %v4890 = vpop.f32.mrb[0].mxu0
    %v4891 = vadd.f32 0.0, %v4890
    %v4892 = vpop.f32.mrb[0].mxu0
    %v4893 = vpop.f32.mrb[0].mxu0
    %v4894 = vadd.f32 0.0, %v4893
    %v4895 = vpop.f32.mrb[0].mxu0
    %4896 = vdwg.mxu0
    %v4897 = vadd.f32 %v4755, %v4867
    %v4898 = vadd.f32 %v4758, %v4870
    %v4899 = vadd.f32 %v4763, %v4875
    %v4900 = vadd.f32 %v4766, %v4878
    %v4901 = vadd.f32 %v4771, %v4883
    %v4902 = vadd.f32 %v4774, %v4886
    %v4903 = vadd.f32 %v4779, %v4891
    %v4904 = vadd.f32 %v4782, %v4894
    %s4905 = scalar_lea.vmem %s25, 96
    %v4906 = vld [vmem:[%s4905] sm:$0xf]
    %v4907 = vld [vmem:[%s4905 + $0x4] sm:$0xf]
    %v4908 = vld [vmem:[%s4905 + $0x8] sm:$0xf]
    %v4909 = vld [vmem:[%s4905 + $0xc] sm:$0xf]
    %v4910 = vld [vmem:[%s4905 + $0x10] sm:$0xf]
    %v4911 = vld [vmem:[%s4905 + $0x14] sm:$0xf]
    %v4912 = vld [vmem:[%s4905 + $0x18] sm:$0xf]
    %v4913 = vld [vmem:[%s4905 + $0x1c] sm:$0xf]
    %v4922 = vunpack.c.l.b16 %v4906
    %v4923 = vunpack.c.l.b16 %v4907
    %v4924 = vunpack.c.l.b16 %v4908
    %v4925 = vunpack.c.l.b16 %v4909
    %v4926 = vunpack.c.l.b16 %v4910
    %v4927 = vunpack.c.l.b16 %v4911
    %v4928 = vunpack.c.l.b16 %v4912
    %v4929 = vunpack.c.l.b16 %v4913
    %v4930 = vpack.c.b16 %v4923, %v4922
    %v4931 = vpack.c.b16 %v4925, %v4924
    %v4932 = vpack.c.b16 %v4927, %v4926
    %v4933 = vpack.c.b16 %v4929, %v4928
    %4934 = vrot.lane.b32.xlu0 %v4564, 122
    %v4935 = vpop.permute.xlu0 %4934
    %4936 = vrot.lane.b32.xlu0 %v4565, 122
    %v4937 = vpop.permute.xlu0 %4936
    %v4941 = vsel %vm3742, %v4930, 0
    %v4944 = vsel %vm3742, %v4931, 0
    %v4947 = vsel %vm3742, %v4932, 0
    %v4950 = vsel %vm3742, %v4933, 0
    %4952 = vmatprep.subr.bf16.mxu0 0
    %4953 = vmatpush1.bf16.msra.mxu0 %v4935
    %4954 = vmatprep.subr.bf16.mxu0 0
    %4955 = vmatpush1.bf16.msra.mxu0 %v4937
    %4956 = vmatprep.subr.bf16.mxu0 0
    %4957 = vmatpush1.bf16.msra.mxu0 0
    %4958 = vmatprep.subr.bf16.mxu0 0
    %4959 = vmatpush1.bf16.msra.mxu0 0
    %4960 = vmatprep.subr.bf16.mxu0 0
    %4961 = vmatpush1.bf16.msra.mxu0 0
    %4962 = vmatprep.subr.bf16.mxu0 0
    %4963 = vmatpush1.bf16.msra.mxu0 0
    %4964 = vmatprep.subr.bf16.mxu0 0
    %4965 = vmatpush1.bf16.msra.mxu0 0
    %4966 = vmatprep.subr.bf16.mxu0 0
    %4967 = vmatpush1.bf16.msra.mxu0 0
    %4968 = vmatprep.subr.bf16.mxu0 0
    %4969 = vmatpush1.bf16.msra.mxu0 0
    %4970 = vmatprep.subr.bf16.mxu0 0
    %4971 = vmatpush1.bf16.msra.mxu0 0
    %4972 = vmatprep.subr.bf16.mxu0 0
    %4973 = vmatpush1.bf16.msra.mxu0 0
    %4974 = vmatprep.subr.bf16.mxu0 0
    %4975 = vmatpush1.bf16.msra.mxu0 0
    %4976 = vmatprep.subr.bf16.mxu0 0
    %4977 = vmatpush1.bf16.msra.mxu0 0
    %4978 = vmatprep.subr.bf16.mxu0 0
    %4979 = vmatpush1.bf16.msra.mxu0 0
    %4980 = vmatprep.subr.bf16.mxu0 0
    %4981 = vmatpush1.bf16.msra.mxu0 0
    %4982 = vmatprep.subr.bf16.mxu0 0
    %4983 = vmatpush1.bf16.msra.mxu0 0
    %4984 = vmatprep.mubr.bf16.mxu0 0
    %4985 = vmatmul.mubr.bf16.gmra.mrb[0].mxu0 %v4941
    %v4986 = vpop.f32.mrb[0].mxu0
    %v4987 = vadd.f32 0.0, %v4986
    %v4988 = vpop.f32.mrb[0].mxu0
    %v4989 = vpop.f32.mrb[0].mxu0
    %v4990 = vadd.f32 0.0, %v4989
    %v4991 = vpop.f32.mrb[0].mxu0
    %4992 = vmatprep.mubr.bf16.mxu0 0
    %4993 = vmatmul.mubr.bf16.gmra.mrb[0].mxu0 %v4944
    %v4994 = vpop.f32.mrb[0].mxu0
    %v4995 = vadd.f32 0.0, %v4994
    %v4996 = vpop.f32.mrb[0].mxu0
    %v4997 = vpop.f32.mrb[0].mxu0
    %v4998 = vadd.f32 0.0, %v4997
    %v4999 = vpop.f32.mrb[0].mxu0
    %5000 = vmatprep.mubr.bf16.mxu0 0
    %5001 = vmatmul.mubr.bf16.gmra.mrb[0].mxu0 %v4947
    %v5002 = vpop.f32.mrb[0].mxu0
    %v5003 = vadd.f32 0.0, %v5002
    %v5004 = vpop.f32.mrb[0].mxu0
    %v5005 = vpop.f32.mrb[0].mxu0
    %v5006 = vadd.f32 0.0, %v5005
    %v5007 = vpop.f32.mrb[0].mxu0
    %5008 = vmatprep.mubr.bf16.mxu0 0
    %5009 = vmatmul.mubr.bf16.gmra.mrb[0].mxu0 %v4950
    %v5010 = vpop.f32.mrb[0].mxu0
    %v5011 = vadd.f32 0.0, %v5010
    %v5012 = vpop.f32.mrb[0].mxu0
    %v5013 = vpop.f32.mrb[0].mxu0
    %v5014 = vadd.f32 0.0, %v5013
    %v5015 = vpop.f32.mrb[0].mxu0
    %5016 = vdwg.mxu0
    %v5017 = vadd.f32 %v4897, %v4987
    %v5018 = vadd.f32 %v4898, %v4990
    %v5019 = vadd.f32 %v4899, %v4995
    %v5020 = vadd.f32 %v4900, %v4998
    %v5021 = vadd.f32 %v4901, %v5003
    %v5022 = vadd.f32 %v4902, %v5006
    %v5023 = vadd.f32 %v4903, %v5011
    %v5024 = vadd.f32 %v4904, %v5014
    %v5025 = vld [vmem:[%s27] sm:$0xff]
    %v5026 = vld [vmem:[%s27 + $0x8] sm:$0xff]
    %v5027 = vld [vmem:[%s27 + $0x10] sm:$0xff]
    %v5028 = vld [vmem:[%s27 + $0x18] sm:$0xff]
    %v5029 = vld [vmem:[%s27 + $0x20] sm:$0xff]
    %v5030 = vld [vmem:[%s27 + $0x28] sm:$0xff]
    %v5031 = vld [vmem:[%s27 + $0x30] sm:$0xff]
    %v5032 = vld [vmem:[%s27 + $0x38] sm:$0xff]
    %5034 = vset.pattern.permute.xlu0 0
    %5035 = vperm.xlu0 %5034, %v5025
    %v5036 = vpop.permute.xlu0 %5035
    %5039 = vset.pattern.permute.xlu0 0
    %5040 = vperm.xlu0 %5039, %v5026
    %v5041 = vpop.permute.xlu0 %5040
    %5044 = vset.pattern.permute.xlu0 0
    %5045 = vperm.xlu0 %5044, %v5027
    %v5046 = vpop.permute.xlu0 %5045
    %5049 = vset.pattern.permute.xlu0 0
    %5050 = vperm.xlu0 %5049, %v5028
    %v5051 = vpop.permute.xlu0 %5050
    %5054 = vset.pattern.permute.xlu0 0
    %5055 = vperm.xlu0 %5054, %v5029
    %v5056 = vpop.permute.xlu0 %5055
    %5059 = vset.pattern.permute.xlu0 0
    %5060 = vperm.xlu0 %5059, %v5030
    %v5061 = vpop.permute.xlu0 %5060
    %5064 = vset.pattern.permute.xlu0 0
    %5065 = vperm.xlu0 %5064, %v5031
    %v5066 = vpop.permute.xlu0 %5065
    %5069 = vset.pattern.permute.xlu0 0
    %5070 = vperm.xlu0 %5069, %v5032
    %v5071 = vpop.permute.xlu0 %5070
    %v5073 = vadd.f32 %v5017, %v5036
    %v5074 = vadd.f32 %v5018, %v5041
    %v5075 = vadd.f32 %v5019, %v5046
    %v5076 = vadd.f32 %v5020, %v5051
    %v5077 = vadd.f32 %v5021, %v5056
    %v5078 = vadd.f32 %v5022, %v5061
    %v5079 = vadd.f32 %v5023, %v5066
    %v5080 = vadd.f32 %v5024, %v5071
    %v5081 = vmax.f32 %v5073, 0.0
    %v5082 = vmax.f32 %v5074, 0.0
    %v5083 = vmax.f32 %v5075, 0.0
    %v5084 = vmax.f32 %v5076, 0.0
    %v5085 = vmax.f32 %v5077, 0.0
    %v5086 = vmax.f32 %v5078, 0.0
    %v5087 = vmax.f32 %v5079, 0.0
    %v5088 = vmax.f32 %v5080, 0.0
    %v5089 = vpack.c.bf16 %v5082, %v5081
    %v5090 = vpack.c.bf16 %v5084, %v5083
    %v5091 = vpack.c.bf16 %v5086, %v5085
    %v5092 = vpack.c.bf16 %v5088, %v5087
    %v5093 = vld [vmem:[#allocation7] sm:$0xf]
    %v5094 = vld [vmem:[#allocation7 + $0x4] sm:$0xf]
    %v5095 = vld [vmem:[#allocation7 + $0x8] sm:$0xf]
    %v5096 = vld [vmem:[#allocation7 + $0xc] sm:$0xf]
    %v5097 = vld [vmem:[%s31] sm:$0xff]
    %v5098 = vld [vmem:[%s31 + $0x8] sm:$0xff]
    %v5099 = vld [vmem:[%s31 + $0x10] sm:$0xff]
    %v5100 = vld [vmem:[%s31 + $0x18] sm:$0xff]
    %5102 = vset.pattern.permute.xlu0 0
    %5103 = vperm.xlu0 %5102, %v5097
    %v5104 = vpop.permute.xlu0 %5103
    %5107 = vset.pattern.permute.xlu0 0
    %5108 = vperm.xlu0 %5107, %v5098
    %v5109 = vpop.permute.xlu0 %5108
    %5112 = vset.pattern.permute.xlu0 0
    %5113 = vperm.xlu0 %5112, %v5099
    %v5114 = vpop.permute.xlu0 %5113
    %5117 = vset.pattern.permute.xlu0 0
    %5118 = vperm.xlu0 %5117, %v5100
    %v5119 = vpop.permute.xlu0 %5118
    %v5125 = vunpack.c.l.b16 %v5093
    %v5126 = vunpack.c.l.b16 %v5094
    %v5127 = vunpack.c.l.b16 %v5095
    %v5128 = vunpack.c.l.b16 %v5096
    %v5129 = vpack.c.b16 %v5126, %v5125
    %v5130 = vpack.c.b16 %v5128, %v5127
    %vm5131 = vcmask 523264
    %v5133 = vsel %vm5131, %v5129, 0
    %v5136 = vsel %vm5131, %v5130, 0
    %5138 = vmatprep.subr.bf16.mxu0 0
    %5139 = vmatpush1.bf16.msra.mxu0 %v5089
    %5140 = vmatprep.subr.bf16.mxu0 0
    %5141 = vmatpush1.bf16.msra.mxu0 %v5090
    %5142 = vmatprep.subr.bf16.mxu0 0
    %5143 = vmatpush1.bf16.msra.mxu0 %v5091
    %5144 = vmatprep.subr.bf16.mxu0 0
    %5145 = vmatpush1.bf16.msra.mxu0 %v5092
    %5146 = vmatprep.subr.bf16.mxu0 0
    %5147 = vmatpush1.bf16.msra.mxu0 0
    %5148 = vmatprep.subr.bf16.mxu0 0
    %5149 = vmatpush1.bf16.msra.mxu0 0
    %5150 = vmatprep.subr.bf16.mxu0 0
    %5151 = vmatpush1.bf16.msra.mxu0 0
    %5152 = vmatprep.subr.bf16.mxu0 0
    %5153 = vmatpush1.bf16.msra.mxu0 0
    %5154 = vmatprep.subr.bf16.mxu0 0
    %5155 = vmatpush1.bf16.msra.mxu0 0
    %5156 = vmatprep.subr.bf16.mxu0 0
    %5157 = vmatpush1.bf16.msra.mxu0 0
    %5158 = vmatprep.subr.bf16.mxu0 0
    %5159 = vmatpush1.bf16.msra.mxu0 0
    %5160 = vmatprep.subr.bf16.mxu0 0
    %5161 = vmatpush1.bf16.msra.mxu0 0
    %5162 = vmatprep.subr.bf16.mxu0 0
    %5163 = vmatpush1.bf16.msra.mxu0 0
    %5164 = vmatprep.subr.bf16.mxu0 0
    %5165 = vmatpush1.bf16.msra.mxu0 0
    %5166 = vmatprep.subr.bf16.mxu0 0
    %5167 = vmatpush1.bf16.msra.mxu0 0
    %5168 = vmatprep.subr.bf16.mxu0 0
    %5169 = vmatpush1.bf16.msra.mxu0 0
    %5170 = vmatprep.mubr.bf16.mxu0 0
    %5171 = vmatmul.mubr.bf16.gmra.mrb[0].mxu0 %v5133
    %v5172 = vpop.f32.mrb[0].mxu0
    %v5173 = vadd.f32 %v5104, %v5172
    %v5174 = vpop.f32.mrb[0].mxu0
    %v5175 = vpop.f32.mrb[0].mxu0
    %v5176 = vadd.f32 %v5109, %v5175
    %v5177 = vpop.f32.mrb[0].mxu0
    %5178 = vmatprep.mubr.bf16.mxu0 0
    %5179 = vmatmul.mubr.bf16.gmra.mrb[0].mxu0 %v5136
    %v5180 = vpop.f32.mrb[0].mxu0
    %v5181 = vadd.f32 %v5114, %v5180
    %v5182 = vpop.f32.mrb[0].mxu0
    %v5183 = vpop.f32.mrb[0].mxu0
    %v5184 = vadd.f32 %v5119, %v5183
    %v5185 = vpop.f32.mrb[0].mxu0
    %5186 = vdwg.mxu0
    %v5187 = vld [vmem:[#allocation9] sm:$0xf]
    %v5188 = vld [vmem:[#allocation9 + $0x4] sm:$0xf]
    %v5189 = vld [vmem:[#allocation9 + $0x8] sm:$0xf]
    %v5190 = vld [vmem:[#allocation9 + $0xc] sm:$0xf]
    %v5191 = vld [vmem:[%s35] sm:$0xff]
    %v5192 = vld [vmem:[%s35 + $0x8] sm:$0xff]
    %v5193 = vld [vmem:[%s35 + $0x10] sm:$0xff]
    %v5194 = vld [vmem:[%s35 + $0x18] sm:$0xff]
    %5196 = vset.pattern.permute.xlu0 0
    %5197 = vperm.xlu0 %5196, %v5191
    %v5198 = vpop.permute.xlu0 %5197
    %5201 = vset.pattern.permute.xlu0 0
    %5202 = vperm.xlu0 %5201, %v5192
    %v5203 = vpop.permute.xlu0 %5202
    %5206 = vset.pattern.permute.xlu0 0
    %5207 = vperm.xlu0 %5206, %v5193
    %v5208 = vpop.permute.xlu0 %5207
    %5211 = vset.pattern.permute.xlu0 0
    %5212 = vperm.xlu0 %5211, %v5194
    %v5213 = vpop.permute.xlu0 %5212
    %v5219 = vunpack.c.l.b16 %v5187
    %v5220 = vunpack.c.l.b16 %v5188
    %v5221 = vunpack.c.l.b16 %v5189
    %v5222 = vunpack.c.l.b16 %v5190
    %v5223 = vpack.c.b16 %v5220, %v5219
    %v5224 = vpack.c.b16 %v5222, %v5221
    %v5226 = vsel %vm5131, %v5223, 0
    %v5229 = vsel %vm5131, %v5224, 0
    %5231 = vmatprep.subr.bf16.mxu0 0
    %5232 = vmatpush1.bf16.msra.mxu0 %v5089
    %5233 = vmatprep.subr.bf16.mxu0 0
    %5234 = vmatpush1.bf16.msra.mxu0 %v5090
    %5235 = vmatprep.subr.bf16.mxu0 0
    %5236 = vmatpush1.bf16.msra.mxu0 %v5091
    %5237 = vmatprep.subr.bf16.mxu0 0
    %5238 = vmatpush1.bf16.msra.mxu0 %v5092
    %5239 = vmatprep.subr.bf16.mxu0 0
    %5240 = vmatpush1.bf16.msra.mxu0 0
    %5241 = vmatprep.subr.bf16.mxu0 0
    %5242 = vmatpush1.bf16.msra.mxu0 0
    %5243 = vmatprep.subr.bf16.mxu0 0
    %5244 = vmatpush1.bf16.msra.mxu0 0
    %5245 = vmatprep.subr.bf16.mxu0 0
    %5246 = vmatpush1.bf16.msra.mxu0 0
    %5247 = vmatprep.subr.bf16.mxu0 0
    %5248 = vmatpush1.bf16.msra.mxu0 0
    %5249 = vmatprep.subr.bf16.mxu0 0
    %5250 = vmatpush1.bf16.msra.mxu0 0
    %5251 = vmatprep.subr.bf16.mxu0 0
    %5252 = vmatpush1.bf16.msra.mxu0 0
    %5253 = vmatprep.subr.bf16.mxu0 0
    %5254 = vmatpush1.bf16.msra.mxu0 0
    %5255 = vmatprep.subr.bf16.mxu0 0
    %5256 = vmatpush1.bf16.msra.mxu0 0
    %5257 = vmatprep.subr.bf16.mxu0 0
    %5258 = vmatpush1.bf16.msra.mxu0 0
    %5259 = vmatprep.subr.bf16.mxu0 0
    %5260 = vmatpush1.bf16.msra.mxu0 0
    %5261 = vmatprep.subr.bf16.mxu0 0
    %5262 = vmatpush1.bf16.msra.mxu0 0
    %5263 = vmatprep.mubr.bf16.mxu0 0
    %5264 = vmatmul.mubr.bf16.gmra.mrb[0].mxu0 %v5226
    %v5265 = vpop.f32.mrb[0].mxu0
    %v5266 = vadd.f32 %v5198, %v5265
    %v5267 = vpop.f32.mrb[0].mxu0
    %v5268 = vpop.f32.mrb[0].mxu0
    %v5269 = vadd.f32 %v5203, %v5268
    %v5270 = vpop.f32.mrb[0].mxu0
    %5271 = vmatprep.mubr.bf16.mxu0 0
    %5272 = vmatmul.mubr.bf16.gmra.mrb[0].mxu0 %v5229
    %v5273 = vpop.f32.mrb[0].mxu0
    %v5274 = vadd.f32 %v5208, %v5273
    %v5275 = vpop.f32.mrb[0].mxu0
    %v5276 = vpop.f32.mrb[0].mxu0
    %v5277 = vadd.f32 %v5213, %v5276
    %v5278 = vpop.f32.mrb[0].mxu0
    %5279 = vdwg.mxu0
    %vm5280 = vcmask 15360
    %5281 = vst.msk [vmem:[%s67] sm:$0xff] %vm5280, %v5173
    %5282 = vst.msk [vmem:[%s67 + $0x8] sm:$0xff] %vm5280, %v5176
    %5283 = vst.msk [vmem:[%s67 + $0x10] sm:$0xff] %vm5280, %v5181
    %5284 = vst.msk [vmem:[%s67 + $0x18] sm:$0xff] %vm5280, %v5184
    %5285 = vst.msk [vmem:[%s69] sm:$0xff] %vm5280, %v5266
    %5286 = vst.msk [vmem:[%s69 + $0x8] sm:$0xff] %vm5280, %v5269
    %5287 = vst.msk [vmem:[%s69 + $0x10] sm:$0xff] %vm5280, %v5274
    %5288 = vst.msk [vmem:[%s69 + $0x18] sm:$0xff] %vm5280, %v5277
    %v5289 = vmul.f32 %v5266, 0.5
    %v5290 = vmul.f32 %v5269, 0.5
    %v5291 = vmul.f32 %v5274, 0.5
    %v5292 = vmul.f32 %v5277, 0.5
    %v5293 = vmul.f32 %v5289, 1.442695
    %v5294 = vpow.pop %v5293
    %v5295 = vmul.f32 %v5290, 1.442695
    %v5296 = vpow.pop %v5295
    %v5297 = vmul.f32 %v5291, 1.442695
    %v5298 = vpow.pop %v5297
    %v5299 = vmul.f32 %v5292, 1.442695
    %v5300 = vpow.pop %v5299
    %v5301 = vld [vmem:[%s3] sm:$0xff]
    %v5302 = vld [vmem:[%s3 + $0x8] sm:$0xff]
    %v5303 = vld [vmem:[%s3 + $0x10] sm:$0xff]
    %v5304 = vld [vmem:[%s3 + $0x18] sm:$0xff]
    %v5305 = vmul.f32 %v5294, %v5301
    %v5306 = vmul.f32 %v5296, %v5302
    %v5307 = vmul.f32 %v5298, %v5303
    %v5308 = vmul.f32 %v5300, %v5304
    %v5309 = vadd.f32 %v5173, %v5305
    %v5310 = vadd.f32 %v5176, %v5306
    %v5311 = vadd.f32 %v5181, %v5307
    %v5312 = vadd.f32 %v5184, %v5308
    %v5313 = vld [vmem:[%s37] sm:$0xf]
    %v5314 = vld [vmem:[%s37 + $0x4] sm:$0xf]
    %v5315 = vld [vmem:[%s37 + $0x8] sm:$0xf]
    %v5316 = vld [vmem:[%s37 + $0xc] sm:$0xf]
    %v5317 = vld [vmem:[%s37 + $0x10] sm:$0xf]
    %v5318 = vld [vmem:[%s37 + $0x14] sm:$0xf]
    %v5319 = vld [vmem:[%s37 + $0x18] sm:$0xf]
    %v5320 = vld [vmem:[%s37 + $0x1c] sm:$0xf]
    %v5321 = vpack.c.bf16 %v5310, %v5309
    %v5322 = vpack.c.bf16 %v5312, %v5311
    %v5323 = vld [vmem:[%s39] sm:$0xff]
    %v5324 = vld [vmem:[%s39 + $0x8] sm:$0xff]
    %v5325 = vld [vmem:[%s39 + $0x10] sm:$0xff]
    %v5326 = vld [vmem:[%s39 + $0x18] sm:$0xff]
    %v5327 = vld [vmem:[%s39 + $0x20] sm:$0xff]
    %v5328 = vld [vmem:[%s39 + $0x28] sm:$0xff]
    %v5329 = vld [vmem:[%s39 + $0x30] sm:$0xff]
    %v5330 = vld [vmem:[%s39 + $0x38] sm:$0xff]
    %5332 = vset.pattern.permute.xlu0 0
    %5333 = vperm.xlu0 %5332, %v5323
    %v5334 = vpop.permute.xlu0 %5333
    %5337 = vset.pattern.permute.xlu0 0
    %5338 = vperm.xlu0 %5337, %v5324
    %v5339 = vpop.permute.xlu0 %5338
    %5342 = vset.pattern.permute.xlu0 0
    %5343 = vperm.xlu0 %5342, %v5325
    %v5344 = vpop.permute.xlu0 %5343
    %5347 = vset.pattern.permute.xlu0 0
    %5348 = vperm.xlu0 %5347, %v5326
    %v5349 = vpop.permute.xlu0 %5348
    %5352 = vset.pattern.permute.xlu0 0
    %5353 = vperm.xlu0 %5352, %v5327
    %v5354 = vpop.permute.xlu0 %5353
    %5357 = vset.pattern.permute.xlu0 0
    %5358 = vperm.xlu0 %5357, %v5328
    %v5359 = vpop.permute.xlu0 %5358
    %5362 = vset.pattern.permute.xlu0 0
    %5363 = vperm.xlu0 %5362, %v5329
    %v5364 = vpop.permute.xlu0 %5363
    %5367 = vset.pattern.permute.xlu0 0
    %5368 = vperm.xlu0 %5367, %v5330
    %v5369 = vpop.permute.xlu0 %5368
    %v5379 = vunpack.c.l.b16 %v5313
    %v5380 = vunpack.c.l.b16 %v5314
    %v5381 = vunpack.c.l.b16 %v5315
    %v5382 = vunpack.c.l.b16 %v5316
    %v5383 = vunpack.c.l.b16 %v5317
    %v5384 = vunpack.c.l.b16 %v5318
    %v5385 = vunpack.c.l.b16 %v5319
    %v5386 = vunpack.c.l.b16 %v5320
    %v5387 = vpack.c.b16 %v5380, %v5379
    %v5388 = vpack.c.b16 %v5382, %v5381
    %v5389 = vpack.c.b16 %v5384, %v5383
    %v5390 = vpack.c.b16 %v5386, %v5385
    %v5392 = vsel %vm3742, %v5387, 0
    %v5395 = vsel %vm3742, %v5388, 0
    %v5398 = vsel %vm3742, %v5389, 0
    %v5401 = vsel %vm3742, %v5390, 0
    %5403 = vmatprep.subr.bf16.mxu0 0
    %5404 = vmatpush1.bf16.msra.mxu0 %v5321
    %5405 = vmatprep.subr.bf16.mxu0 0
    %5406 = vmatpush1.bf16.msra.mxu0 %v5322
    %5407 = vmatprep.subr.bf16.mxu0 0
    %5408 = vmatpush1.bf16.msra.mxu0 0
    %5409 = vmatprep.subr.bf16.mxu0 0
    %5410 = vmatpush1.bf16.msra.mxu0 0
    %5411 = vmatprep.subr.bf16.mxu0 0
    %5412 = vmatpush1.bf16.msra.mxu0 0
    %5413 = vmatprep.subr.bf16.mxu0 0
    %5414 = vmatpush1.bf16.msra.mxu0 0
    %5415 = vmatprep.subr.bf16.mxu0 0
    %5416 = vmatpush1.bf16.msra.mxu0 0
    %5417 = vmatprep.subr.bf16.mxu0 0
    %5418 = vmatpush1.bf16.msra.mxu0 0
    %5419 = vmatprep.subr.bf16.mxu0 0
    %5420 = vmatpush1.bf16.msra.mxu0 0
    %5421 = vmatprep.subr.bf16.mxu0 0
    %5422 = vmatpush1.bf16.msra.mxu0 0
    %5423 = vmatprep.subr.bf16.mxu0 0
    %5424 = vmatpush1.bf16.msra.mxu0 0
    %5425 = vmatprep.subr.bf16.mxu0 0
    %5426 = vmatpush1.bf16.msra.mxu0 0
    %5427 = vmatprep.subr.bf16.mxu0 0
    %5428 = vmatpush1.bf16.msra.mxu0 0
    %5429 = vmatprep.subr.bf16.mxu0 0
    %5430 = vmatpush1.bf16.msra.mxu0 0
    %5431 = vmatprep.subr.bf16.mxu0 0
    %5432 = vmatpush1.bf16.msra.mxu0 0
    %5433 = vmatprep.subr.bf16.mxu0 0
    %5434 = vmatpush1.bf16.msra.mxu0 0
    %5435 = vmatprep.mubr.bf16.mxu0 0
    %5436 = vmatmul.mubr.bf16.gmra.mrb[0].mxu0 %v5392
    %v5437 = vpop.f32.mrb[0].mxu0
    %v5438 = vadd.f32 %v5334, %v5437
    %v5439 = vpop.f32.mrb[0].mxu0
    %v5440 = vpop.f32.mrb[0].mxu0
    %v5441 = vadd.f32 %v5339, %v5440
    %v5442 = vpop.f32.mrb[0].mxu0
    %5443 = vmatprep.mubr.bf16.mxu0 0
    %5444 = vmatmul.mubr.bf16.gmra.mrb[0].mxu0 %v5395
    %v5445 = vpop.f32.mrb[0].mxu0
    %v5446 = vadd.f32 %v5344, %v5445
    %v5447 = vpop.f32.mrb[0].mxu0
    %v5448 = vpop.f32.mrb[0].mxu0
    %v5449 = vadd.f32 %v5349, %v5448
    %v5450 = vpop.f32.mrb[0].mxu0
    %5451 = vmatprep.mubr.bf16.mxu0 0
    %5452 = vmatmul.mubr.bf16.gmra.mrb[0].mxu0 %v5398
    %v5453 = vpop.f32.mrb[0].mxu0
    %v5454 = vadd.f32 %v5354, %v5453
    %v5455 = vpop.f32.mrb[0].mxu0
    %v5456 = vpop.f32.mrb[0].mxu0
    %v5457 = vadd.f32 %v5359, %v5456
    %v5458 = vpop.f32.mrb[0].mxu0
    %5459 = vmatprep.mubr.bf16.mxu0 0
    %5460 = vmatmul.mubr.bf16.gmra.mrb[0].mxu0 %v5401
    %v5461 = vpop.f32.mrb[0].mxu0
    %v5462 = vadd.f32 %v5364, %v5461
    %v5463 = vpop.f32.mrb[0].mxu0
    %v5464 = vpop.f32.mrb[0].mxu0
    %v5465 = vadd.f32 %v5369, %v5464
    %v5466 = vpop.f32.mrb[0].mxu0
    %5467 = vdwg.mxu0
    %v5468 = vmax.f32 %v5438, 0.0
    %v5469 = vmax.f32 %v5441, 0.0
    %v5470 = vmax.f32 %v5446, 0.0
    %v5471 = vmax.f32 %v5449, 0.0
    %v5472 = vmax.f32 %v5454, 0.0
    %v5473 = vmax.f32 %v5457, 0.0
    %v5474 = vmax.f32 %v5462, 0.0
    %v5475 = vmax.f32 %v5465, 0.0
    %v5476 = vpack.c.bf16 %v5469, %v5468
    %v5477 = vpack.c.bf16 %v5471, %v5470
    %v5478 = vpack.c.bf16 %v5473, %v5472
    %v5479 = vpack.c.bf16 %v5475, %v5474
    %v5480 = vld [vmem:[%s41] sm:$0xf]
    %v5481 = vld [vmem:[%s41 + $0x4] sm:$0xf]
    %v5482 = vld [vmem:[%s41 + $0x8] sm:$0xf]
    %v5483 = vld [vmem:[%s41 + $0xc] sm:$0xf]
    %v5484 = vld [vmem:[%s41 + $0x10] sm:$0xf]
    %v5485 = vld [vmem:[%s41 + $0x14] sm:$0xf]
    %v5486 = vld [vmem:[%s41 + $0x18] sm:$0xf]
    %v5487 = vld [vmem:[%s41 + $0x1c] sm:$0xf]
    %v5488 = vld [vmem:[%s41 + $0x20] sm:$0xf]
    %v5489 = vld [vmem:[%s41 + $0x24] sm:$0xf]
    %v5490 = vld [vmem:[%s41 + $0x28] sm:$0xf]
    %v5491 = vld [vmem:[%s41 + $0x2c] sm:$0xf]
    %v5492 = vld [vmem:[%s41 + $0x30] sm:$0xf]
    %v5493 = vld [vmem:[%s41 + $0x34] sm:$0xf]
    %v5494 = vld [vmem:[%s41 + $0x38] sm:$0xf]
    %v5495 = vld [vmem:[%s41 + $0x3c] sm:$0xf]
    %v5512 = vunpack.c.l.b16 %v5480
    %v5513 = vunpack.c.l.b16 %v5481
    %v5514 = vunpack.c.l.b16 %v5482
    %v5515 = vunpack.c.l.b16 %v5483
    %v5516 = vunpack.c.l.b16 %v5484
    %v5517 = vunpack.c.l.b16 %v5485
    %v5518 = vunpack.c.l.b16 %v5486
    %v5519 = vunpack.c.l.b16 %v5487
    %v5520 = vunpack.c.l.b16 %v5488
    %v5521 = vunpack.c.l.b16 %v5489
    %v5522 = vunpack.c.l.b16 %v5490
    %v5523 = vunpack.c.l.b16 %v5491
    %v5524 = vunpack.c.l.b16 %v5492
    %v5525 = vunpack.c.l.b16 %v5493
    %v5526 = vunpack.c.l.b16 %v5494
    %v5527 = vunpack.c.l.b16 %v5495
    %v5528 = vpack.c.b16 %v5513, %v5512
    %v5529 = vpack.c.b16 %v5515, %v5514
    %v5530 = vpack.c.b16 %v5517, %v5516
    %v5531 = vpack.c.b16 %v5519, %v5518
    %v5532 = vpack.c.b16 %v5521, %v5520
    %v5533 = vpack.c.b16 %v5523, %v5522
    %v5534 = vpack.c.b16 %v5525, %v5524
    %v5535 = vpack.c.b16 %v5527, %v5526
    %v5537 = vsel %vm5131, %v5528, 0
    %v5540 = vsel %vm5131, %v5529, 0
    %v5543 = vsel %vm5131, %v5530, 0
    %v5546 = vsel %vm5131, %v5531, 0
    %v5549 = vsel %vm5131, %v5532, 0
    %v5552 = vsel %vm5131, %v5533, 0
    %v5555 = vsel %vm5131, %v5534, 0
    %v5558 = vsel %vm5131, %v5535, 0
    %5560 = vmatprep.subr.bf16.mxu0 0
    %5561 = vmatpush1.bf16.msra.mxu0 %v5476
    %5562 = vmatprep.subr.bf16.mxu0 0
    %5563 = vmatpush1.bf16.msra.mxu0 %v5477
    %5564 = vmatprep.subr.bf16.mxu0 0
    %5565 = vmatpush1.bf16.msra.mxu0 %v5478
    %5566 = vmatprep.subr.bf16.mxu0 0
    %5567 = vmatpush1.bf16.msra.mxu0 %v5479
    %5568 = vmatprep.subr.bf16.mxu0 0
    %5569 = vmatpush1.bf16.msra.mxu0 0
    %5570 = vmatprep.subr.bf16.mxu0 0
    %5571 = vmatpush1.bf16.msra.mxu0 0
    %5572 = vmatprep.subr.bf16.mxu0 0
    %5573 = vmatpush1.bf16.msra.mxu0 0
    %5574 = vmatprep.subr.bf16.mxu0 0
    %5575 = vmatpush1.bf16.msra.mxu0 0
    %5576 = vmatprep.subr.bf16.mxu0 0
    %5577 = vmatpush1.bf16.msra.mxu0 0
    %5578 = vmatprep.subr.bf16.mxu0 0
    %5579 = vmatpush1.bf16.msra.mxu0 0
    %5580 = vmatprep.subr.bf16.mxu0 0
    %5581 = vmatpush1.bf16.msra.mxu0 0
    %5582 = vmatprep.subr.bf16.mxu0 0
    %5583 = vmatpush1.bf16.msra.mxu0 0
    %5584 = vmatprep.subr.bf16.mxu0 0
    %5585 = vmatpush1.bf16.msra.mxu0 0
    %5586 = vmatprep.subr.bf16.mxu0 0
    %5587 = vmatpush1.bf16.msra.mxu0 0
    %5588 = vmatprep.subr.bf16.mxu0 0
    %5589 = vmatpush1.bf16.msra.mxu0 0
    %5590 = vmatprep.subr.bf16.mxu0 0
    %5591 = vmatpush1.bf16.msra.mxu0 0
    %5592 = vmatprep.mubr.bf16.mxu0 0
    %5593 = vmatmul.mubr.bf16.gmra.mrb[0].mxu0 %v5537
    %v5594 = vpop.f32.mrb[0].mxu0
    %v5595 = vadd.f32 0.0, %v5594
    %v5596 = vpop.f32.mrb[0].mxu0
    %v5597 = vpop.f32.mrb[0].mxu0
    %v5598 = vadd.f32 0.0, %v5597
    %v5599 = vpop.f32.mrb[0].mxu0
    %5600 = vmatprep.mubr.bf16.mxu0 0
    %5601 = vmatmul.mubr.bf16.gmra.mrb[0].mxu0 %v5540
    %v5602 = vpop.f32.mrb[0].mxu0
    %v5603 = vadd.f32 0.0, %v5602
    %v5604 = vpop.f32.mrb[0].mxu0
    %v5605 = vpop.f32.mrb[0].mxu0
    %v5606 = vadd.f32 0.0, %v5605
    %v5607 = vpop.f32.mrb[0].mxu0
    %5608 = vmatprep.mubr.bf16.mxu0 0
    %5609 = vmatmul.mubr.bf16.gmra.mrb[0].mxu0 %v5543
    %v5610 = vpop.f32.mrb[0].mxu0
    %v5611 = vadd.f32 0.0, %v5610
    %v5612 = vpop.f32.mrb[0].mxu0
    %v5613 = vpop.f32.mrb[0].mxu0
    %v5614 = vadd.f32 0.0, %v5613
    %v5615 = vpop.f32.mrb[0].mxu0
    %5616 = vmatprep.mubr.bf16.mxu0 0
    %5617 = vmatmul.mubr.bf16.gmra.mrb[0].mxu0 %v5546
    %v5618 = vpop.f32.mrb[0].mxu0
    %v5619 = vadd.f32 0.0, %v5618
    %v5620 = vpop.f32.mrb[0].mxu0
    %v5621 = vpop.f32.mrb[0].mxu0
    %v5622 = vadd.f32 0.0, %v5621
    %v5623 = vpop.f32.mrb[0].mxu0
    %5624 = vmatprep.mubr.bf16.mxu0 0
    %5625 = vmatmul.mubr.bf16.gmra.mrb[0].mxu0 %v5549
    %v5626 = vpop.f32.mrb[0].mxu0
    %v5627 = vadd.f32 0.0, %v5626
    %v5628 = vpop.f32.mrb[0].mxu0
    %v5629 = vpop.f32.mrb[0].mxu0
    %v5630 = vadd.f32 0.0, %v5629
    %v5631 = vpop.f32.mrb[0].mxu0
    %5632 = vmatprep.mubr.bf16.mxu0 0
    %5633 = vmatmul.mubr.bf16.gmra.mrb[0].mxu0 %v5552
    %v5634 = vpop.f32.mrb[0].mxu0
    %v5635 = vadd.f32 0.0, %v5634
    %v5636 = vpop.f32.mrb[0].mxu0
    %v5637 = vpop.f32.mrb[0].mxu0
    %v5638 = vadd.f32 0.0, %v5637
    %v5639 = vpop.f32.mrb[0].mxu0
    %5640 = vmatprep.mubr.bf16.mxu0 0
    %5641 = vmatmul.mubr.bf16.gmra.mrb[0].mxu0 %v5555
    %v5642 = vpop.f32.mrb[0].mxu0
    %v5643 = vadd.f32 0.0, %v5642
    %v5644 = vpop.f32.mrb[0].mxu0
    %v5645 = vpop.f32.mrb[0].mxu0
    %v5646 = vadd.f32 0.0, %v5645
    %v5647 = vpop.f32.mrb[0].mxu0
    %5648 = vmatprep.mubr.bf16.mxu0 0
    %5649 = vmatmul.mubr.bf16.gmra.mrb[0].mxu0 %v5558
    %v5650 = vpop.f32.mrb[0].mxu0
    %v5651 = vadd.f32 0.0, %v5650
    %v5652 = vpop.f32.mrb[0].mxu0
    %v5653 = vpop.f32.mrb[0].mxu0
    %v5654 = vadd.f32 0.0, %v5653
    %v5655 = vpop.f32.mrb[0].mxu0
    %5656 = vdwg.mxu0
    %v5657 = vpack.c.bf16 %v5598, %v5595
    %v5658 = vpack.c.bf16 %v5606, %v5603
    %v5659 = vld [vmem:[#allocation10] sm:$0x1]
    %v5660 = vpack.c.bf16 %v5614, %v5611
    %v5661 = vpack.c.bf16 %v5622, %v5619
    %s5662 = scalar_lea.vmem [#allocation10], 1
    %v5663 = vld [vmem:[%s5662] sm:$0x1]
    %v5665 = vsel %vm5280, %v5660, 0
    %v5668 = vsel %vm5280, %v5661, 0
    %vm5670 = vcmask 1040384
    %v5672 = vsel %vm5670, %v5663, 0
    %5674 = vmatprep.subr.bf16.mxu0 0
    %5675 = vmatpush1.bf16.msra.mxu0 %v5672
    %5676 = vmatprep.subr.bf16.mxu0 0
    %5677 = vmatpush1.bf16.msra.mxu0 0
    %5678 = vmatprep.subr.bf16.mxu0 0
    %5679 = vmatpush1.bf16.msra.mxu0 0
    %5680 = vmatprep.subr.bf16.mxu0 0
    %5681 = vmatpush1.bf16.msra.mxu0 0
    %5682 = vmatprep.subr.bf16.mxu0 0
    %5683 = vmatpush1.bf16.msra.mxu0 0
    %5684 = vmatprep.subr.bf16.mxu0 0
    %5685 = vmatpush1.bf16.msra.mxu0 0
    %5686 = vmatprep.subr.bf16.mxu0 0
    %5687 = vmatpush1.bf16.msra.mxu0 0
    %5688 = vmatprep.subr.bf16.mxu0 0
    %5689 = vmatpush1.bf16.msra.mxu0 0
    %5690 = vmatprep.subr.bf16.mxu0 0
    %5691 = vmatpush1.bf16.msra.mxu0 0
    %5692 = vmatprep.subr.bf16.mxu0 0
    %5693 = vmatpush1.bf16.msra.mxu0 0
    %5694 = vmatprep.subr.bf16.mxu0 0
    %5695 = vmatpush1.bf16.msra.mxu0 0
    %5696 = vmatprep.subr.bf16.mxu0 0
    %5697 = vmatpush1.bf16.msra.mxu0 0
    %5698 = vmatprep.subr.bf16.mxu0 0
    %5699 = vmatpush1.bf16.msra.mxu0 0
    %5700 = vmatprep.subr.bf16.mxu0 0
    %5701 = vmatpush1.bf16.msra.mxu0 0
    %5702 = vmatprep.subr.bf16.mxu0 0
    %5703 = vmatpush1.bf16.msra.mxu0 0
    %5704 = vmatprep.subr.bf16.mxu0 0
    %5705 = vmatpush1.bf16.msra.mxu0 0
    %5706 = vmatprep.mubr.bf16.mxu0 0
    %5707 = vmatmul.mubr.bf16.gmra.mrb[0].mxu0 %v5665
    %v5708 = vpop.f32.mrb[0].mxu0
    %v5709 = vadd.f32 0.0, %v5708
    %v5710 = vpop.f32.mrb[0].mxu0
    %v5711 = vpop.f32.mrb[0].mxu0
    %v5712 = vadd.f32 0.0, %v5711
    %v5713 = vpop.f32.mrb[0].mxu0
    %5714 = vmatprep.mubr.bf16.mxu0 0
    %5715 = vmatmul.mubr.bf16.gmra.mrb[0].mxu0 %v5668
    %v5716 = vpop.f32.mrb[0].mxu0
    %v5717 = vadd.f32 0.0, %v5716
    %v5718 = vpop.f32.mrb[0].mxu0
    %v5719 = vpop.f32.mrb[0].mxu0
    %v5720 = vadd.f32 0.0, %v5719
    %v5721 = vpop.f32.mrb[0].mxu0
    %5722 = vdwg.mxu0
    %v5724 = vsel %vm5280, %v5657, 0
    %v5727 = vsel %vm5280, %v5658, 0
    %v5730 = vsel %vm5670, %v5659, 0
    %5732 = vmatprep.subr.bf16.mxu0 0
    %5733 = vmatpush1.bf16.msra.mxu0 %v5730
    %5734 = vmatprep.subr.bf16.mxu0 0
    %5735 = vmatpush1.bf16.msra.mxu0 0
    %5736 = vmatprep.subr.bf16.mxu0 0
    %5737 = vmatpush1.bf16.msra.mxu0 0
    %5738 = vmatprep.subr.bf16.mxu0 0
    %5739 = vmatpush1.bf16.msra.mxu0 0
    %5740 = vmatprep.subr.bf16.mxu0 0
    %5741 = vmatpush1.bf16.msra.mxu0 0
    %5742 = vmatprep.subr.bf16.mxu0 0
    %5743 = vmatpush1.bf16.msra.mxu0 0
    %5744 = vmatprep.subr.bf16.mxu0 0
    %5745 = vmatpush1.bf16.msra.mxu0 0
    %5746 = vmatprep.subr.bf16.mxu0 0
    %5747 = vmatpush1.bf16.msra.mxu0 0
    %5748 = vmatprep.subr.bf16.mxu0 0
    %5749 = vmatpush1.bf16.msra.mxu0 0
    %5750 = vmatprep.subr.bf16.mxu0 0
    %5751 = vmatpush1.bf16.msra.mxu0 0
    %5752 = vmatprep.subr.bf16.mxu0 0
    %5753 = vmatpush1.bf16.msra.mxu0 0
    %5754 = vmatprep.subr.bf16.mxu0 0
    %5755 = vmatpush1.bf16.msra.mxu0 0
    %5756 = vmatprep.subr.bf16.mxu0 0
    %5757 = vmatpush1.bf16.msra.mxu0 0
    %5758 = vmatprep.subr.bf16.mxu0 0
    %5759 = vmatpush1.bf16.msra.mxu0 0
    %5760 = vmatprep.subr.bf16.mxu0 0
    %5761 = vmatpush1.bf16.msra.mxu0 0
    %5762 = vmatprep.subr.bf16.mxu0 0
    %5763 = vmatpush1.bf16.msra.mxu0 0
    %5764 = vmatprep.mubr.bf16.mxu0 0
    %5765 = vmatmul.mubr.bf16.gmra.mrb[0].mxu0 %v5724
    %v5766 = vpop.f32.mrb[0].mxu0
    %v5767 = vadd.f32 %v5709, %v5766
    %v5768 = vpop.f32.mrb[0].mxu0
    %v5769 = vpop.f32.mrb[0].mxu0
    %v5770 = vadd.f32 %v5712, %v5769
    %v5771 = vpop.f32.mrb[0].mxu0
    %5772 = vmatprep.mubr.bf16.mxu0 0
    %5773 = vmatmul.mubr.bf16.gmra.mrb[0].mxu0 %v5727
    %v5774 = vpop.f32.mrb[0].mxu0
    %v5775 = vadd.f32 %v5717, %v5774
    %v5776 = vpop.f32.mrb[0].mxu0
    %v5777 = vpop.f32.mrb[0].mxu0
    %v5778 = vadd.f32 %v5720, %v5777
    %v5779 = vpop.f32.mrb[0].mxu0
    %5780 = vdwg.mxu0
    %v5781 = vpack.c.bf16 %v5630, %v5627
    %v5782 = vpack.c.bf16 %v5638, %v5635
    %s5783 = scalar_lea.vmem [#allocation10], 2
    %v5784 = vld [vmem:[%s5783] sm:$0x1]
    %v5786 = vsel %vm5280, %v5781, 0
    %v5789 = vsel %vm5280, %v5782, 0
    %v5792 = vsel %vm5670, %v5784, 0
    %5794 = vmatprep.subr.bf16.mxu0 0
    %5795 = vmatpush1.bf16.msra.mxu0 %v5792
    %5796 = vmatprep.subr.bf16.mxu0 0
    %5797 = vmatpush1.bf16.msra.mxu0 0
    %5798 = vmatprep.subr.bf16.mxu0 0
    %5799 = vmatpush1.bf16.msra.mxu0 0
    %5800 = vmatprep.subr.bf16.mxu0 0
    %5801 = vmatpush1.bf16.msra.mxu0 0
    %5802 = vmatprep.subr.bf16.mxu0 0
    %5803 = vmatpush1.bf16.msra.mxu0 0
    %5804 = vmatprep.subr.bf16.mxu0 0
    %5805 = vmatpush1.bf16.msra.mxu0 0
    %5806 = vmatprep.subr.bf16.mxu0 0
    %5807 = vmatpush1.bf16.msra.mxu0 0
    %5808 = vmatprep.subr.bf16.mxu0 0
    %5809 = vmatpush1.bf16.msra.mxu0 0
    %5810 = vmatprep.subr.bf16.mxu0 0
    %5811 = vmatpush1.bf16.msra.mxu0 0
    %5812 = vmatprep.subr.bf16.mxu0 0
    %5813 = vmatpush1.bf16.msra.mxu0 0
    %5814 = vmatprep.subr.bf16.mxu0 0
    %5815 = vmatpush1.bf16.msra.mxu0 0
    %5816 = vmatprep.subr.bf16.mxu0 0
    %5817 = vmatpush1.bf16.msra.mxu0 0
    %5818 = vmatprep.subr.bf16.mxu0 0
    %5819 = vmatpush1.bf16.msra.mxu0 0
    %5820 = vmatprep.subr.bf16.mxu0 0
    %5821 = vmatpush1.bf16.msra.mxu0 0
    %5822 = vmatprep.subr.bf16.mxu0 0
    %5823 = vmatpush1.bf16.msra.mxu0 0
    %5824 = vmatprep.subr.bf16.mxu0 0
    %5825 = vmatpush1.bf16.msra.mxu0 0
    %5826 = vmatprep.mubr.bf16.mxu0 0
    %5827 = vmatmul.mubr.bf16.gmra.mrb[0].mxu0 %v5786
    %v5828 = vpop.f32.mrb[0].mxu0
    %v5829 = vadd.f32 0.0, %v5828
    %v5830 = vpop.f32.mrb[0].mxu0
    %v5831 = vpop.f32.mrb[0].mxu0
    %v5832 = vadd.f32 0.0, %v5831
    %v5833 = vpop.f32.mrb[0].mxu0
    %5834 = vmatprep.mubr.bf16.mxu0 0
    %5835 = vmatmul.mubr.bf16.gmra.mrb[0].mxu0 %v5789
    %v5836 = vpop.f32.mrb[0].mxu0
    %v5837 = vadd.f32 0.0, %v5836
    %v5838 = vpop.f32.mrb[0].mxu0
    %v5839 = vpop.f32.mrb[0].mxu0
    %v5840 = vadd.f32 0.0, %v5839
    %v5841 = vpop.f32.mrb[0].mxu0
    %5842 = vdwg.mxu0
    %v5843 = vadd.f32 %v5767, %v5829
    %v5844 = vadd.f32 %v5770, %v5832
    %v5845 = vadd.f32 %v5775, %v5837
    %v5846 = vadd.f32 %v5778, %v5840
    %v5847 = vpack.c.bf16 %v5646, %v5643
    %v5848 = vpack.c.bf16 %v5654, %v5651
    %s5849 = scalar_lea.vmem [#allocation10], 3
    %v5850 = vld [vmem:[%s5849] sm:$0x1]
    %v5852 = vsel %vm5280, %v5847, 0
    %v5855 = vsel %vm5280, %v5848, 0
    %v5858 = vsel %vm5670, %v5850, 0
    %5860 = vmatprep.subr.bf16.mxu0 0
    %5861 = vmatpush1.bf16.msra.mxu0 %v5858
    %5862 = vmatprep.subr.bf16.mxu0 0
    %5863 = vmatpush1.bf16.msra.mxu0 0
    %5864 = vmatprep.subr.bf16.mxu0 0
    %5865 = vmatpush1.bf16.msra.mxu0 0
    %5866 = vmatprep.subr.bf16.mxu0 0
    %5867 = vmatpush1.bf16.msra.mxu0 0
    %5868 = vmatprep.subr.bf16.mxu0 0
    %5869 = vmatpush1.bf16.msra.mxu0 0
    %5870 = vmatprep.subr.bf16.mxu0 0
    %5871 = vmatpush1.bf16.msra.mxu0 0
    %5872 = vmatprep.subr.bf16.mxu0 0
    %5873 = vmatpush1.bf16.msra.mxu0 0
    %5874 = vmatprep.subr.bf16.mxu0 0
    %5875 = vmatpush1.bf16.msra.mxu0 0
    %5876 = vmatprep.subr.bf16.mxu0 0
    %5877 = vmatpush1.bf16.msra.mxu0 0
    %5878 = vmatprep.subr.bf16.mxu0 0
    %5879 = vmatpush1.bf16.msra.mxu0 0
    %5880 = vmatprep.subr.bf16.mxu0 0
    %5881 = vmatpush1.bf16.msra.mxu0 0
    %5882 = vmatprep.subr.bf16.mxu0 0
    %5883 = vmatpush1.bf16.msra.mxu0 0
    %5884 = vmatprep.subr.bf16.mxu0 0
    %5885 = vmatpush1.bf16.msra.mxu0 0
    %5886 = vmatprep.subr.bf16.mxu0 0
    %5887 = vmatpush1.bf16.msra.mxu0 0
    %5888 = vmatprep.subr.bf16.mxu0 0
    %5889 = vmatpush1.bf16.msra.mxu0 0
    %5890 = vmatprep.subr.bf16.mxu0 0
    %5891 = vmatpush1.bf16.msra.mxu0 0
    %5892 = vmatprep.mubr.bf16.mxu0 0
    %5893 = vmatmul.mubr.bf16.gmra.mrb[0].mxu0 %v5852
    %v5894 = vpop.f32.mrb[0].mxu0
    %v5895 = vadd.f32 0.0, %v5894
    %v5896 = vpop.f32.mrb[0].mxu0
    %v5897 = vpop.f32.mrb[0].mxu0
    %v5898 = vadd.f32 0.0, %v5897
    %v5899 = vpop.f32.mrb[0].mxu0
    %5900 = vmatprep.mubr.bf16.mxu0 0
    %5901 = vmatmul.mubr.bf16.gmra.mrb[0].mxu0 %v5855
    %v5902 = vpop.f32.mrb[0].mxu0
    %v5903 = vadd.f32 0.0, %v5902
    %v5904 = vpop.f32.mrb[0].mxu0
    %v5905 = vpop.f32.mrb[0].mxu0
    %v5906 = vadd.f32 0.0, %v5905
    %v5907 = vpop.f32.mrb[0].mxu0
    %5908 = vdwg.mxu0
    %v5909 = vadd.f32 %v5843, %v5895
    %v5910 = vadd.f32 %v5844, %v5898
    %v5911 = vadd.f32 %v5845, %v5903
    %v5912 = vadd.f32 %v5846, %v5906
    %v5913 = vld [vmem:[%s45] sm:$0xff]
    %v5914 = vld [vmem:[%s45 + $0x8] sm:$0xff]
    %v5915 = vld [vmem:[%s45 + $0x10] sm:$0xff]
    %v5916 = vld [vmem:[%s45 + $0x18] sm:$0xff]
    %5918 = vset.pattern.permute.xlu0 0
    %5919 = vperm.xlu0 %5918, %v5913
    %v5920 = vpop.permute.xlu0 %5919
    %5923 = vset.pattern.permute.xlu0 0
    %5924 = vperm.xlu0 %5923, %v5914
    %v5925 = vpop.permute.xlu0 %5924
    %5928 = vset.pattern.permute.xlu0 0
    %5929 = vperm.xlu0 %5928, %v5915
    %v5930 = vpop.permute.xlu0 %5929
    %5933 = vset.pattern.permute.xlu0 0
    %5934 = vperm.xlu0 %5933, %v5916
    %v5935 = vpop.permute.xlu0 %5934
    %v5937 = vadd.f32 %v5909, %v5920
    %v5938 = vadd.f32 %v5910, %v5925
    %v5939 = vadd.f32 %v5911, %v5930
    %v5940 = vadd.f32 %v5912, %v5935
    %v5941 = vmax.f32 %v5937, 0.0
    %v5942 = vmax.f32 %v5938, 0.0
    %v5943 = vmax.f32 %v5939, 0.0
    %v5944 = vmax.f32 %v5940, 0.0
    %v5945 = vpack.c.bf16 %v5942, %v5941
    %v5946 = vpack.c.bf16 %v5944, %v5943
    %v5947 = vld [vmem:[%s47] sm:$0xf]
    %v5948 = vld [vmem:[%s47 + $0x4] sm:$0xf]
    %v5949 = vld [vmem:[%s47 + $0x8] sm:$0xf]
    %v5950 = vld [vmem:[%s47 + $0xc] sm:$0xf]
    %v5951 = vld [vmem:[%s47 + $0x10] sm:$0xf]
    %v5952 = vld [vmem:[%s47 + $0x14] sm:$0xf]
    %v5953 = vld [vmem:[%s47 + $0x18] sm:$0xf]
    %v5954 = vld [vmem:[%s47 + $0x1c] sm:$0xf]
    %v5955 = vld [vmem:[%s47 + $0x20] sm:$0xf]
    %v5956 = vld [vmem:[%s47 + $0x24] sm:$0xf]
    %v5957 = vld [vmem:[%s47 + $0x28] sm:$0xf]
    %v5958 = vld [vmem:[%s47 + $0x2c] sm:$0xf]
    %v5959 = vld [vmem:[%s47 + $0x30] sm:$0xf]
    %v5960 = vld [vmem:[%s47 + $0x34] sm:$0xf]
    %v5961 = vld [vmem:[%s47 + $0x38] sm:$0xf]
    %v5962 = vld [vmem:[%s47 + $0x3c] sm:$0xf]
    %v5963 = vld [vmem:[%s47 + $0x40] sm:$0xf]
    %v5964 = vld [vmem:[%s47 + $0x44] sm:$0xf]
    %v5983 = vunpack.c.l.b16 %v5947
    %v5984 = vunpack.c.l.b16 %v5948
    %v5985 = vunpack.c.l.b16 %v5949
    %v5986 = vunpack.c.l.b16 %v5950
    %v5987 = vunpack.c.l.b16 %v5951
    %v5988 = vunpack.c.l.b16 %v5952
    %v5989 = vunpack.c.l.b16 %v5953
    %v5990 = vunpack.c.l.b16 %v5954
    %v5991 = vunpack.c.l.b16 %v5955
    %v5992 = vunpack.c.l.b16 %v5956
    %v5993 = vunpack.c.l.b16 %v5957
    %v5994 = vunpack.c.l.b16 %v5958
    %v5995 = vunpack.c.l.b16 %v5959
    %v5996 = vunpack.c.l.b16 %v5960
    %v5997 = vunpack.c.l.b16 %v5961
    %v5998 = vunpack.c.l.b16 %v5962
    %v5999 = vunpack.c.l.b16 %v5963
    %v6000 = vunpack.c.l.b16 %v5964
    %v6001 = vpack.c.b16 %v5984, %v5983
    %v6002 = vpack.c.b16 %v5986, %v5985
    %v6003 = vpack.c.b16 %v5988, %v5987
    %v6004 = vpack.c.b16 %v5990, %v5989
    %v6005 = vpack.c.b16 %v5992, %v5991
    %v6006 = vpack.c.b16 %v5994, %v5993
    %v6007 = vpack.c.b16 %v5996, %v5995
    %v6008 = vpack.c.b16 %v5998, %v5997
    %v6009 = vpack.c.b16 %v6000, %v5999
    %v6011 = vsel %vm3742, %v6001, 0
    %v6014 = vsel %vm3742, %v6002, 0
    %v6017 = vsel %vm3742, %v6003, 0
    %v6020 = vsel %vm3742, %v6004, 0
    %v6023 = vsel %vm3742, %v6005, 0
    %v6026 = vsel %vm3742, %v6006, 0
    %v6029 = vsel %vm3742, %v6007, 0
    %v6032 = vsel %vm3742, %v6008, 0
    %v6035 = vsel %vm3742, %v6009, 0
    %6037 = vmatprep.subr.bf16.mxu0 0
    %6038 = vmatpush1.bf16.msra.mxu0 %v5945
    %6039 = vmatprep.subr.bf16.mxu0 0
    %6040 = vmatpush1.bf16.msra.mxu0 %v5946
    %6041 = vmatprep.subr.bf16.mxu0 0
    %6042 = vmatpush1.bf16.msra.mxu0 0
    %6043 = vmatprep.subr.bf16.mxu0 0
    %6044 = vmatpush1.bf16.msra.mxu0 0
    %6045 = vmatprep.subr.bf16.mxu0 0
    %6046 = vmatpush1.bf16.msra.mxu0 0
    %6047 = vmatprep.subr.bf16.mxu0 0
    %6048 = vmatpush1.bf16.msra.mxu0 0
    %6049 = vmatprep.subr.bf16.mxu0 0
    %6050 = vmatpush1.bf16.msra.mxu0 0
    %6051 = vmatprep.subr.bf16.mxu0 0
    %6052 = vmatpush1.bf16.msra.mxu0 0
    %6053 = vmatprep.subr.bf16.mxu0 0
    %6054 = vmatpush1.bf16.msra.mxu0 0
    %6055 = vmatprep.subr.bf16.mxu0 0
    %6056 = vmatpush1.bf16.msra.mxu0 0
    %6057 = vmatprep.subr.bf16.mxu0 0
    %6058 = vmatpush1.bf16.msra.mxu0 0
    %6059 = vmatprep.subr.bf16.mxu0 0
    %6060 = vmatpush1.bf16.msra.mxu0 0
    %6061 = vmatprep.subr.bf16.mxu0 0
    %6062 = vmatpush1.bf16.msra.mxu0 0
    %6063 = vmatprep.subr.bf16.mxu0 0
    %6064 = vmatpush1.bf16.msra.mxu0 0
    %6065 = vmatprep.subr.bf16.mxu0 0
    %6066 = vmatpush1.bf16.msra.mxu0 0
    %6067 = vmatprep.subr.bf16.mxu0 0
    %6068 = vmatpush1.bf16.msra.mxu0 0
    %6069 = vmatprep.mubr.bf16.mxu0 0
    %6070 = vmatmul.mubr.bf16.gmra.mrb[0].mxu0 %v6011
    %v6071 = vpop.f32.mrb[0].mxu0
    %v6072 = vadd.f32 0.0, %v6071
    %v6073 = vpop.f32.mrb[0].mxu0
    %v6074 = vpop.f32.mrb[0].mxu0
    %v6075 = vadd.f32 0.0, %v6074
    %v6076 = vpop.f32.mrb[0].mxu0
    %6077 = vmatprep.mubr.bf16.mxu0 0
    %6078 = vmatmul.mubr.bf16.gmra.mrb[0].mxu0 %v6014
    %v6079 = vpop.f32.mrb[0].mxu0
    %v6080 = vadd.f32 0.0, %v6079
    %v6081 = vpop.f32.mrb[0].mxu0
    %v6082 = vpop.f32.mrb[0].mxu0
    %v6083 = vadd.f32 0.0, %v6082
    %v6084 = vpop.f32.mrb[0].mxu0
    %6085 = vmatprep.mubr.bf16.mxu0 0
    %6086 = vmatmul.mubr.bf16.gmra.mrb[0].mxu0 %v6017
    %v6087 = vpop.f32.mrb[0].mxu0
    %v6088 = vadd.f32 0.0, %v6087
    %v6089 = vpop.f32.mrb[0].mxu0
    %v6090 = vpop.f32.mrb[0].mxu0
    %v6091 = vadd.f32 0.0, %v6090
    %v6092 = vpop.f32.mrb[0].mxu0
    %6093 = vmatprep.mubr.bf16.mxu0 0
    %6094 = vmatmul.mubr.bf16.gmra.mrb[0].mxu0 %v6020
    %v6095 = vpop.f32.mrb[0].mxu0
    %v6096 = vadd.f32 0.0, %v6095
    %v6097 = vpop.f32.mrb[0].mxu0
    %v6098 = vpop.f32.mrb[0].mxu0
    %v6099 = vadd.f32 0.0, %v6098
    %v6100 = vpop.f32.mrb[0].mxu0
    %6101 = vmatprep.mubr.bf16.mxu0 0
    %6102 = vmatmul.mubr.bf16.gmra.mrb[0].mxu0 %v6023
    %v6103 = vpop.f32.mrb[0].mxu0
    %v6104 = vadd.f32 0.0, %v6103
    %v6105 = vpop.f32.mrb[0].mxu0
    %v6106 = vpop.f32.mrb[0].mxu0
    %v6107 = vadd.f32 0.0, %v6106
    %v6108 = vpop.f32.mrb[0].mxu0
    %6109 = vmatprep.mubr.bf16.mxu0 0
    %6110 = vmatmul.mubr.bf16.gmra.mrb[0].mxu0 %v6026
    %v6111 = vpop.f32.mrb[0].mxu0
    %v6112 = vadd.f32 0.0, %v6111
    %v6113 = vpop.f32.mrb[0].mxu0
    %v6114 = vpop.f32.mrb[0].mxu0
    %v6115 = vadd.f32 0.0, %v6114
    %v6116 = vpop.f32.mrb[0].mxu0
    %6117 = vmatprep.mubr.bf16.mxu0 0
    %6118 = vmatmul.mubr.bf16.gmra.mrb[0].mxu0 %v6029
    %v6119 = vpop.f32.mrb[0].mxu0
    %v6120 = vadd.f32 0.0, %v6119
    %v6121 = vpop.f32.mrb[0].mxu0
    %v6122 = vpop.f32.mrb[0].mxu0
    %v6123 = vadd.f32 0.0, %v6122
    %v6124 = vpop.f32.mrb[0].mxu0
    %6125 = vmatprep.mubr.bf16.mxu0 0
    %6126 = vmatmul.mubr.bf16.gmra.mrb[0].mxu0 %v6032
    %v6127 = vpop.f32.mrb[0].mxu0
    %v6128 = vadd.f32 0.0, %v6127
    %v6129 = vpop.f32.mrb[0].mxu0
    %v6130 = vpop.f32.mrb[0].mxu0
    %v6131 = vadd.f32 0.0, %v6130
    %v6132 = vpop.f32.mrb[0].mxu0
    %6133 = vmatprep.mubr.bf16.mxu0 0
    %6134 = vmatmul.mubr.bf16.gmra.mrb[0].mxu0 %v6035
    %v6135 = vpop.f32.mrb[0].mxu0
    %v6136 = vadd.f32 0.0, %v6135
    %v6137 = vpop.f32.mrb[0].mxu0
    %v6138 = vpop.f32.mrb[0].mxu0
    %v6139 = vadd.f32 0.0, %v6138
    %v6140 = vpop.f32.mrb[0].mxu0
    %6141 = vdwg.mxu0
    %v6142 = vpack.c.bf16 %v6075, %v6072
    %v6143 = vld [vmem:[#allocation12] sm:$0xf]
    %v6144 = vpack.c.bf16 %v6083, %v6080
    %s6145 = scalar_lea.vmem [#allocation12], 4
    %v6146 = vld [vmem:[%s6145] sm:$0xf]
    %v6148 = vsel %vm3196, %v6144, 0
    %v6151 = vsel %vm3200, %v6146, 0
    %6153 = vmatprep.subr.bf16.mxu0 0
    %6154 = vmatpush1.bf16.msra.mxu0 %v6151
    %6155 = vmatprep.subr.bf16.mxu0 0
    %6156 = vmatpush1.bf16.msra.mxu0 0
    %6157 = vmatprep.subr.bf16.mxu0 0
    %6158 = vmatpush1.bf16.msra.mxu0 0
    %6159 = vmatprep.subr.bf16.mxu0 0
    %6160 = vmatpush1.bf16.msra.mxu0 0
    %6161 = vmatprep.subr.bf16.mxu0 0
    %6162 = vmatpush1.bf16.msra.mxu0 0
    %6163 = vmatprep.subr.bf16.mxu0 0
    %6164 = vmatpush1.bf16.msra.mxu0 0
    %6165 = vmatprep.subr.bf16.mxu0 0
    %6166 = vmatpush1.bf16.msra.mxu0 0
    %6167 = vmatprep.subr.bf16.mxu0 0
    %6168 = vmatpush1.bf16.msra.mxu0 0
    %6169 = vmatprep.subr.bf16.mxu0 0
    %6170 = vmatpush1.bf16.msra.mxu0 0
    %6171 = vmatprep.subr.bf16.mxu0 0
    %6172 = vmatpush1.bf16.msra.mxu0 0
    %6173 = vmatprep.subr.bf16.mxu0 0
    %6174 = vmatpush1.bf16.msra.mxu0 0
    %6175 = vmatprep.subr.bf16.mxu0 0
    %6176 = vmatpush1.bf16.msra.mxu0 0
    %6177 = vmatprep.subr.bf16.mxu0 0
    %6178 = vmatpush1.bf16.msra.mxu0 0
    %6179 = vmatprep.subr.bf16.mxu0 0
    %6180 = vmatpush1.bf16.msra.mxu0 0
    %6181 = vmatprep.subr.bf16.mxu0 0
    %6182 = vmatpush1.bf16.msra.mxu0 0
    %6183 = vmatprep.subr.bf16.mxu0 0
    %6184 = vmatpush1.bf16.msra.mxu0 0
    %6185 = vmatprep.mubr.bf16.mxu0 0
    %6186 = vmatmul.mubr.bf16.gmra.mrb[0].mxu0 %v6148
    %v6187 = vpop.f32.mrb[0].mxu0
    %v6188 = vadd.f32 0.0, %v6187
    %v6189 = vpop.f32.mrb[0].mxu0
    %v6190 = vpop.f32.mrb[0].mxu0
    %v6191 = vadd.f32 0.0, %v6190
    %v6192 = vpop.f32.mrb[0].mxu0
    %6193 = vdwg.mxu0
    %v6195 = vsel %vm3196, %v6142, 0
    %v6198 = vsel %vm3200, %v6143, 0
    %6200 = vmatprep.subr.bf16.mxu0 0
    %6201 = vmatpush1.bf16.msra.mxu0 %v6198
    %6202 = vmatprep.subr.bf16.mxu0 0
    %6203 = vmatpush1.bf16.msra.mxu0 0
    %6204 = vmatprep.subr.bf16.mxu0 0
    %6205 = vmatpush1.bf16.msra.mxu0 0
    %6206 = vmatprep.subr.bf16.mxu0 0
    %6207 = vmatpush1.bf16.msra.mxu0 0
    %6208 = vmatprep.subr.bf16.mxu0 0
    %6209 = vmatpush1.bf16.msra.mxu0 0
    %6210 = vmatprep.subr.bf16.mxu0 0
    %6211 = vmatpush1.bf16.msra.mxu0 0
    %6212 = vmatprep.subr.bf16.mxu0 0
    %6213 = vmatpush1.bf16.msra.mxu0 0
    %6214 = vmatprep.subr.bf16.mxu0 0
    %6215 = vmatpush1.bf16.msra.mxu0 0
    %6216 = vmatprep.subr.bf16.mxu0 0
    %6217 = vmatpush1.bf16.msra.mxu0 0
    %6218 = vmatprep.subr.bf16.mxu0 0
    %6219 = vmatpush1.bf16.msra.mxu0 0
    %6220 = vmatprep.subr.bf16.mxu0 0
    %6221 = vmatpush1.bf16.msra.mxu0 0
    %6222 = vmatprep.subr.bf16.mxu0 0
    %6223 = vmatpush1.bf16.msra.mxu0 0
    %6224 = vmatprep.subr.bf16.mxu0 0
    %6225 = vmatpush1.bf16.msra.mxu0 0
    %6226 = vmatprep.subr.bf16.mxu0 0
    %6227 = vmatpush1.bf16.msra.mxu0 0
    %6228 = vmatprep.subr.bf16.mxu0 0
    %6229 = vmatpush1.bf16.msra.mxu0 0
    %6230 = vmatprep.subr.bf16.mxu0 0
    %6231 = vmatpush1.bf16.msra.mxu0 0
    %6232 = vmatprep.mubr.bf16.mxu0 0
    %6233 = vmatmul.mubr.bf16.gmra.mrb[0].mxu0 %v6195
    %v6234 = vpop.f32.mrb[0].mxu0
    %v6235 = vadd.f32 %v6188, %v6234
    %v6236 = vpop.f32.mrb[0].mxu0
    %v6237 = vpop.f32.mrb[0].mxu0
    %v6238 = vadd.f32 %v6191, %v6237
    %v6239 = vpop.f32.mrb[0].mxu0
    %6240 = vdwg.mxu0
    %v6241 = vpack.c.bf16 %v6091, %v6088
    %s6242 = scalar_lea.vmem [#allocation12], 8
    %v6243 = vld [vmem:[%s6242] sm:$0xf]
    %v6245 = vsel %vm3196, %v6241, 0
    %v6248 = vsel %vm3200, %v6243, 0
    %6250 = vmatprep.subr.bf16.mxu0 0
    %6251 = vmatpush1.bf16.msra.mxu0 %v6248
    %6252 = vmatprep.subr.bf16.mxu0 0
    %6253 = vmatpush1.bf16.msra.mxu0 0
    %6254 = vmatprep.subr.bf16.mxu0 0
    %6255 = vmatpush1.bf16.msra.mxu0 0
    %6256 = vmatprep.subr.bf16.mxu0 0
    %6257 = vmatpush1.bf16.msra.mxu0 0
    %6258 = vmatprep.subr.bf16.mxu0 0
    %6259 = vmatpush1.bf16.msra.mxu0 0
    %6260 = vmatprep.subr.bf16.mxu0 0
    %6261 = vmatpush1.bf16.msra.mxu0 0
    %6262 = vmatprep.subr.bf16.mxu0 0
    %6263 = vmatpush1.bf16.msra.mxu0 0
    %6264 = vmatprep.subr.bf16.mxu0 0
    %6265 = vmatpush1.bf16.msra.mxu0 0
    %6266 = vmatprep.subr.bf16.mxu0 0
    %6267 = vmatpush1.bf16.msra.mxu0 0
    %6268 = vmatprep.subr.bf16.mxu0 0
    %6269 = vmatpush1.bf16.msra.mxu0 0
    %6270 = vmatprep.subr.bf16.mxu0 0
    %6271 = vmatpush1.bf16.msra.mxu0 0
    %6272 = vmatprep.subr.bf16.mxu0 0
    %6273 = vmatpush1.bf16.msra.mxu0 0
    %6274 = vmatprep.subr.bf16.mxu0 0
    %6275 = vmatpush1.bf16.msra.mxu0 0
    %6276 = vmatprep.subr.bf16.mxu0 0
    %6277 = vmatpush1.bf16.msra.mxu0 0
    %6278 = vmatprep.subr.bf16.mxu0 0
    %6279 = vmatpush1.bf16.msra.mxu0 0
    %6280 = vmatprep.subr.bf16.mxu0 0
    %6281 = vmatpush1.bf16.msra.mxu0 0
    %6282 = vmatprep.mubr.bf16.mxu0 0
    %6283 = vmatmul.mubr.bf16.gmra.mrb[0].mxu0 %v6245
    %v6284 = vpop.f32.mrb[0].mxu0
    %v6285 = vadd.f32 0.0, %v6284
    %v6286 = vpop.f32.mrb[0].mxu0
    %v6287 = vpop.f32.mrb[0].mxu0
    %v6288 = vadd.f32 0.0, %v6287
    %v6289 = vpop.f32.mrb[0].mxu0
    %6290 = vdwg.mxu0
    %v6291 = vadd.f32 %v6235, %v6285
    %v6292 = vadd.f32 %v6238, %v6288
    %v6293 = vpack.c.bf16 %v6099, %v6096
    %s6294 = scalar_lea.vmem [#allocation12], 12
    %v6295 = vld [vmem:[%s6294] sm:$0xf]
    %v6297 = vsel %vm3196, %v6293, 0
    %v6300 = vsel %vm3200, %v6295, 0
    %6302 = vmatprep.subr.bf16.mxu0 0
    %6303 = vmatpush1.bf16.msra.mxu0 %v6300
    %6304 = vmatprep.subr.bf16.mxu0 0
    %6305 = vmatpush1.bf16.msra.mxu0 0
    %6306 = vmatprep.subr.bf16.mxu0 0
    %6307 = vmatpush1.bf16.msra.mxu0 0
    %6308 = vmatprep.subr.bf16.mxu0 0
    %6309 = vmatpush1.bf16.msra.mxu0 0
    %6310 = vmatprep.subr.bf16.mxu0 0
    %6311 = vmatpush1.bf16.msra.mxu0 0
    %6312 = vmatprep.subr.bf16.mxu0 0
    %6313 = vmatpush1.bf16.msra.mxu0 0
    %6314 = vmatprep.subr.bf16.mxu0 0
    %6315 = vmatpush1.bf16.msra.mxu0 0
    %6316 = vmatprep.subr.bf16.mxu0 0
    %6317 = vmatpush1.bf16.msra.mxu0 0
    %6318 = vmatprep.subr.bf16.mxu0 0
    %6319 = vmatpush1.bf16.msra.mxu0 0
    %6320 = vmatprep.subr.bf16.mxu0 0
    %6321 = vmatpush1.bf16.msra.mxu0 0
    %6322 = vmatprep.subr.bf16.mxu0 0
    %6323 = vmatpush1.bf16.msra.mxu0 0
    %6324 = vmatprep.subr.bf16.mxu0 0
    %6325 = vmatpush1.bf16.msra.mxu0 0
    %6326 = vmatprep.subr.bf16.mxu0 0
    %6327 = vmatpush1.bf16.msra.mxu0 0
    %6328 = vmatprep.subr.bf16.mxu0 0
    %6329 = vmatpush1.bf16.msra.mxu0 0
    %6330 = vmatprep.subr.bf16.mxu0 0
    %6331 = vmatpush1.bf16.msra.mxu0 0
    %6332 = vmatprep.subr.bf16.mxu0 0
    %6333 = vmatpush1.bf16.msra.mxu0 0
    %6334 = vmatprep.mubr.bf16.mxu0 0
    %6335 = vmatmul.mubr.bf16.gmra.mrb[0].mxu0 %v6297
    %v6336 = vpop.f32.mrb[0].mxu0
    %v6337 = vadd.f32 0.0, %v6336
    %v6338 = vpop.f32.mrb[0].mxu0
    %v6339 = vpop.f32.mrb[0].mxu0
    %v6340 = vadd.f32 0.0, %v6339
    %v6341 = vpop.f32.mrb[0].mxu0
    %6342 = vdwg.mxu0
    %v6343 = vadd.f32 %v6291, %v6337
    %v6344 = vadd.f32 %v6292, %v6340
    %v6345 = vpack.c.bf16 %v6107, %v6104
    %s6346 = scalar_lea.vmem [#allocation12], 16
    %v6347 = vld [vmem:[%s6346] sm:$0xf]
    %v6349 = vsel %vm3196, %v6345, 0
    %v6352 = vsel %vm3200, %v6347, 0
    %6354 = vmatprep.subr.bf16.mxu0 0
    %6355 = vmatpush1.bf16.msra.mxu0 %v6352
    %6356 = vmatprep.subr.bf16.mxu0 0
    %6357 = vmatpush1.bf16.msra.mxu0 0
    %6358 = vmatprep.subr.bf16.mxu0 0
    %6359 = vmatpush1.bf16.msra.mxu0 0
    %6360 = vmatprep.subr.bf16.mxu0 0
    %6361 = vmatpush1.bf16.msra.mxu0 0
    %6362 = vmatprep.subr.bf16.mxu0 0
    %6363 = vmatpush1.bf16.msra.mxu0 0
    %6364 = vmatprep.subr.bf16.mxu0 0
    %6365 = vmatpush1.bf16.msra.mxu0 0
    %6366 = vmatprep.subr.bf16.mxu0 0
    %6367 = vmatpush1.bf16.msra.mxu0 0
    %6368 = vmatprep.subr.bf16.mxu0 0
    %6369 = vmatpush1.bf16.msra.mxu0 0
    %6370 = vmatprep.subr.bf16.mxu0 0
    %6371 = vmatpush1.bf16.msra.mxu0 0
    %6372 = vmatprep.subr.bf16.mxu0 0
    %6373 = vmatpush1.bf16.msra.mxu0 0
    %6374 = vmatprep.subr.bf16.mxu0 0
    %6375 = vmatpush1.bf16.msra.mxu0 0
    %6376 = vmatprep.subr.bf16.mxu0 0
    %6377 = vmatpush1.bf16.msra.mxu0 0
    %6378 = vmatprep.subr.bf16.mxu0 0
    %6379 = vmatpush1.bf16.msra.mxu0 0
    %6380 = vmatprep.subr.bf16.mxu0 0
    %6381 = vmatpush1.bf16.msra.mxu0 0
    %6382 = vmatprep.subr.bf16.mxu0 0
    %6383 = vmatpush1.bf16.msra.mxu0 0
    %6384 = vmatprep.subr.bf16.mxu0 0
    %6385 = vmatpush1.bf16.msra.mxu0 0
    %6386 = vmatprep.mubr.bf16.mxu0 0
    %6387 = vmatmul.mubr.bf16.gmra.mrb[0].mxu0 %v6349
    %v6388 = vpop.f32.mrb[0].mxu0
    %v6389 = vadd.f32 0.0, %v6388
    %v6390 = vpop.f32.mrb[0].mxu0
    %v6391 = vpop.f32.mrb[0].mxu0
    %v6392 = vadd.f32 0.0, %v6391
    %v6393 = vpop.f32.mrb[0].mxu0
    %6394 = vdwg.mxu0
    %v6395 = vadd.f32 %v6343, %v6389
    %v6396 = vadd.f32 %v6344, %v6392
    %v6397 = vpack.c.bf16 %v6115, %v6112
    %s6398 = scalar_lea.vmem [#allocation12], 20
    %v6399 = vld [vmem:[%s6398] sm:$0xf]
    %v6401 = vsel %vm3196, %v6397, 0
    %v6404 = vsel %vm3200, %v6399, 0
    %6406 = vmatprep.subr.bf16.mxu0 0
    %6407 = vmatpush1.bf16.msra.mxu0 %v6404
    %6408 = vmatprep.subr.bf16.mxu0 0
    %6409 = vmatpush1.bf16.msra.mxu0 0
    %6410 = vmatprep.subr.bf16.mxu0 0
    %6411 = vmatpush1.bf16.msra.mxu0 0
    %6412 = vmatprep.subr.bf16.mxu0 0
    %6413 = vmatpush1.bf16.msra.mxu0 0
    %6414 = vmatprep.subr.bf16.mxu0 0
    %6415 = vmatpush1.bf16.msra.mxu0 0
    %6416 = vmatprep.subr.bf16.mxu0 0
    %6417 = vmatpush1.bf16.msra.mxu0 0
    %6418 = vmatprep.subr.bf16.mxu0 0
    %6419 = vmatpush1.bf16.msra.mxu0 0
    %6420 = vmatprep.subr.bf16.mxu0 0
    %6421 = vmatpush1.bf16.msra.mxu0 0
    %6422 = vmatprep.subr.bf16.mxu0 0
    %6423 = vmatpush1.bf16.msra.mxu0 0
    %6424 = vmatprep.subr.bf16.mxu0 0
    %6425 = vmatpush1.bf16.msra.mxu0 0
    %6426 = vmatprep.subr.bf16.mxu0 0
    %6427 = vmatpush1.bf16.msra.mxu0 0
    %6428 = vmatprep.subr.bf16.mxu0 0
    %6429 = vmatpush1.bf16.msra.mxu0 0
    %6430 = vmatprep.subr.bf16.mxu0 0
    %6431 = vmatpush1.bf16.msra.mxu0 0
    %6432 = vmatprep.subr.bf16.mxu0 0
    %6433 = vmatpush1.bf16.msra.mxu0 0
    %6434 = vmatprep.subr.bf16.mxu0 0
    %6435 = vmatpush1.bf16.msra.mxu0 0
    %6436 = vmatprep.subr.bf16.mxu0 0
    %6437 = vmatpush1.bf16.msra.mxu0 0
    %6438 = vmatprep.mubr.bf16.mxu0 0
    %6439 = vmatmul.mubr.bf16.gmra.mrb[0].mxu0 %v6401
    %v6440 = vpop.f32.mrb[0].mxu0
    %v6441 = vadd.f32 0.0, %v6440
    %v6442 = vpop.f32.mrb[0].mxu0
    %v6443 = vpop.f32.mrb[0].mxu0
    %v6444 = vadd.f32 0.0, %v6443
    %v6445 = vpop.f32.mrb[0].mxu0
    %6446 = vdwg.mxu0
    %v6447 = vadd.f32 %v6395, %v6441
    %v6448 = vadd.f32 %v6396, %v6444
    %v6449 = vpack.c.bf16 %v6123, %v6120
    %s6450 = scalar_lea.vmem [#allocation12], 24
    %v6451 = vld [vmem:[%s6450] sm:$0xf]
    %v6453 = vsel %vm3196, %v6449, 0
    %v6456 = vsel %vm3200, %v6451, 0
    %6458 = vmatprep.subr.bf16.mxu0 0
    %6459 = vmatpush1.bf16.msra.mxu0 %v6456
    %6460 = vmatprep.subr.bf16.mxu0 0
    %6461 = vmatpush1.bf16.msra.mxu0 0
    %6462 = vmatprep.subr.bf16.mxu0 0
    %6463 = vmatpush1.bf16.msra.mxu0 0
    %6464 = vmatprep.subr.bf16.mxu0 0
    %6465 = vmatpush1.bf16.msra.mxu0 0
    %6466 = vmatprep.subr.bf16.mxu0 0
    %6467 = vmatpush1.bf16.msra.mxu0 0
    %6468 = vmatprep.subr.bf16.mxu0 0
    %6469 = vmatpush1.bf16.msra.mxu0 0
    %6470 = vmatprep.subr.bf16.mxu0 0
    %6471 = vmatpush1.bf16.msra.mxu0 0
    %6472 = vmatprep.subr.bf16.mxu0 0
    %6473 = vmatpush1.bf16.msra.mxu0 0
    %6474 = vmatprep.subr.bf16.mxu0 0
    %6475 = vmatpush1.bf16.msra.mxu0 0
    %6476 = vmatprep.subr.bf16.mxu0 0
    %6477 = vmatpush1.bf16.msra.mxu0 0
    %6478 = vmatprep.subr.bf16.mxu0 0
    %6479 = vmatpush1.bf16.msra.mxu0 0
    %6480 = vmatprep.subr.bf16.mxu0 0
    %6481 = vmatpush1.bf16.msra.mxu0 0
    %6482 = vmatprep.subr.bf16.mxu0 0
    %6483 = vmatpush1.bf16.msra.mxu0 0
    %6484 = vmatprep.subr.bf16.mxu0 0
    %6485 = vmatpush1.bf16.msra.mxu0 0
    %6486 = vmatprep.subr.bf16.mxu0 0
    %6487 = vmatpush1.bf16.msra.mxu0 0
    %6488 = vmatprep.subr.bf16.mxu0 0
    %6489 = vmatpush1.bf16.msra.mxu0 0
    %6490 = vmatprep.mubr.bf16.mxu0 0
    %6491 = vmatmul.mubr.bf16.gmra.mrb[0].mxu0 %v6453
    %v6492 = vpop.f32.mrb[0].mxu0
    %v6493 = vadd.f32 0.0, %v6492
    %v6494 = vpop.f32.mrb[0].mxu0
    %v6495 = vpop.f32.mrb[0].mxu0
    %v6496 = vadd.f32 0.0, %v6495
    %v6497 = vpop.f32.mrb[0].mxu0
    %6498 = vdwg.mxu0
    %v6499 = vadd.f32 %v6447, %v6493
    %v6500 = vadd.f32 %v6448, %v6496
    %v6501 = vpack.c.bf16 %v6131, %v6128
    %s6502 = scalar_lea.vmem [#allocation12], 28
    %v6503 = vld [vmem:[%s6502] sm:$0xf]
    %v6505 = vsel %vm3196, %v6501, 0
    %v6508 = vsel %vm3200, %v6503, 0
    %6510 = vmatprep.subr.bf16.mxu0 0
    %6511 = vmatpush1.bf16.msra.mxu0 %v6508
    %6512 = vmatprep.subr.bf16.mxu0 0
    %6513 = vmatpush1.bf16.msra.mxu0 0
    %6514 = vmatprep.subr.bf16.mxu0 0
    %6515 = vmatpush1.bf16.msra.mxu0 0
    %6516 = vmatprep.subr.bf16.mxu0 0
    %6517 = vmatpush1.bf16.msra.mxu0 0
    %6518 = vmatprep.subr.bf16.mxu0 0
    %6519 = vmatpush1.bf16.msra.mxu0 0
    %6520 = vmatprep.subr.bf16.mxu0 0
    %6521 = vmatpush1.bf16.msra.mxu0 0
    %6522 = vmatprep.subr.bf16.mxu0 0
    %6523 = vmatpush1.bf16.msra.mxu0 0
    %6524 = vmatprep.subr.bf16.mxu0 0
    %6525 = vmatpush1.bf16.msra.mxu0 0
    %6526 = vmatprep.subr.bf16.mxu0 0
    %6527 = vmatpush1.bf16.msra.mxu0 0
    %6528 = vmatprep.subr.bf16.mxu0 0
    %6529 = vmatpush1.bf16.msra.mxu0 0
    %6530 = vmatprep.subr.bf16.mxu0 0
    %6531 = vmatpush1.bf16.msra.mxu0 0
    %6532 = vmatprep.subr.bf16.mxu0 0
    %6533 = vmatpush1.bf16.msra.mxu0 0
    %6534 = vmatprep.subr.bf16.mxu0 0
    %6535 = vmatpush1.bf16.msra.mxu0 0
    %6536 = vmatprep.subr.bf16.mxu0 0
    %6537 = vmatpush1.bf16.msra.mxu0 0
    %6538 = vmatprep.subr.bf16.mxu0 0
    %6539 = vmatpush1.bf16.msra.mxu0 0
    %6540 = vmatprep.subr.bf16.mxu0 0
    %6541 = vmatpush1.bf16.msra.mxu0 0
    %6542 = vmatprep.mubr.bf16.mxu0 0
    %6543 = vmatmul.mubr.bf16.gmra.mrb[0].mxu0 %v6505
    %v6544 = vpop.f32.mrb[0].mxu0
    %v6545 = vadd.f32 0.0, %v6544
    %v6546 = vpop.f32.mrb[0].mxu0
    %v6547 = vpop.f32.mrb[0].mxu0
    %v6548 = vadd.f32 0.0, %v6547
    %v6549 = vpop.f32.mrb[0].mxu0
    %6550 = vdwg.mxu0
    %v6551 = vadd.f32 %v6499, %v6545
    %v6552 = vadd.f32 %v6500, %v6548
    %v6553 = vpack.c.bf16 %v6139, %v6136
    %s6554 = scalar_lea.vmem [#allocation12], 32
    %v6555 = vld [vmem:[%s6554] sm:$0xf]
    %v6557 = vsel %vm3196, %v6553, 0
    %v6560 = vsel %vm3200, %v6555, 0
    %6562 = vmatprep.subr.bf16.mxu0 0
    %6563 = vmatpush1.bf16.msra.mxu0 %v6560
    %6564 = vmatprep.subr.bf16.mxu0 0
    %6565 = vmatpush1.bf16.msra.mxu0 0
    %6566 = vmatprep.subr.bf16.mxu0 0
    %6567 = vmatpush1.bf16.msra.mxu0 0
    %6568 = vmatprep.subr.bf16.mxu0 0
    %6569 = vmatpush1.bf16.msra.mxu0 0
    %6570 = vmatprep.subr.bf16.mxu0 0
    %6571 = vmatpush1.bf16.msra.mxu0 0
    %6572 = vmatprep.subr.bf16.mxu0 0
    %6573 = vmatpush1.bf16.msra.mxu0 0
    %6574 = vmatprep.subr.bf16.mxu0 0
    %6575 = vmatpush1.bf16.msra.mxu0 0
    %6576 = vmatprep.subr.bf16.mxu0 0
    %6577 = vmatpush1.bf16.msra.mxu0 0
    %6578 = vmatprep.subr.bf16.mxu0 0
    %6579 = vmatpush1.bf16.msra.mxu0 0
    %6580 = vmatprep.subr.bf16.mxu0 0
    %6581 = vmatpush1.bf16.msra.mxu0 0
    %6582 = vmatprep.subr.bf16.mxu0 0
    %6583 = vmatpush1.bf16.msra.mxu0 0
    %6584 = vmatprep.subr.bf16.mxu0 0
    %6585 = vmatpush1.bf16.msra.mxu0 0
    %6586 = vmatprep.subr.bf16.mxu0 0
    %6587 = vmatpush1.bf16.msra.mxu0 0
    %6588 = vmatprep.subr.bf16.mxu0 0
    %6589 = vmatpush1.bf16.msra.mxu0 0
    %6590 = vmatprep.subr.bf16.mxu0 0
    %6591 = vmatpush1.bf16.msra.mxu0 0
    %6592 = vmatprep.subr.bf16.mxu0 0
    %6593 = vmatpush1.bf16.msra.mxu0 0
    %6594 = vmatprep.mubr.bf16.mxu0 0
    %6595 = vmatmul.mubr.bf16.gmra.mrb[0].mxu0 %v6557
    %v6596 = vpop.f32.mrb[0].mxu0
    %v6597 = vadd.f32 0.0, %v6596
    %v6598 = vpop.f32.mrb[0].mxu0
    %v6599 = vpop.f32.mrb[0].mxu0
    %v6600 = vadd.f32 0.0, %v6599
    %v6601 = vpop.f32.mrb[0].mxu0
    %6602 = vdwg.mxu0
    %v6603 = vadd.f32 %v6551, %v6597
    %v6604 = vadd.f32 %v6552, %v6600
    %v6605 = vld [vmem:[%s51] sm:$0xff]
    %v6606 = vld [vmem:[%s51 + $0x8] sm:$0xff]
    %6608 = vset.pattern.permute.xlu0 0
    %6609 = vperm.xlu0 %6608, %v6605
    %v6610 = vpop.permute.xlu0 %6609
    %6613 = vset.pattern.permute.xlu0 0
    %6614 = vperm.xlu0 %6613, %v6606
    %v6615 = vpop.permute.xlu0 %6614
    %v6617 = vadd.f32 %v6603, %v6610
    %v6618 = vadd.f32 %v6604, %v6615
    %v6619 = vmax.f32 %v6617, 0.0
    %v6620 = vmax.f32 %v6618, 0.0
    %v6621 = vpack.c.bf16 %v6620, %v6619
    %v6622 = vld [vmem:[%s53] sm:$0xf]
    %v6623 = vld [vmem:[%s53 + $0x4] sm:$0xf]
    %v6624 = vld [vmem:[%s53 + $0x8] sm:$0xf]
    %v6625 = vld [vmem:[%s53 + $0xc] sm:$0xf]
    %v6626 = vld [vmem:[%s53 + $0x10] sm:$0xf]
    %v6627 = vld [vmem:[%s53 + $0x14] sm:$0xf]
    %v6628 = vld [vmem:[%s53 + $0x18] sm:$0xf]
    %v6629 = vld [vmem:[%s53 + $0x1c] sm:$0xf]
    %v6630 = vld [vmem:[%s53 + $0x20] sm:$0xf]
    %v6640 = vunpack.c.l.b16 %v6622
    %v6641 = vunpack.c.l.b16 %v6623
    %v6642 = vunpack.c.l.b16 %v6624
    %v6643 = vunpack.c.l.b16 %v6625
    %v6644 = vunpack.c.l.b16 %v6626
    %v6645 = vunpack.c.l.b16 %v6627
    %v6646 = vunpack.c.l.b16 %v6628
    %v6647 = vunpack.c.l.b16 %v6629
    %v6648 = vunpack.c.l.b16 %v6630
    %v6649 = vpack.c.b16 %v6641, %v6640
    %v6650 = vpack.c.b16 %v6643, %v6642
    %v6651 = vpack.c.b16 %v6645, %v6644
    %v6652 = vpack.c.b16 %v6647, %v6646
    %v6653 = vpack.c.b16 %v6648, %v6648
    %v6655 = vsel %vm3811, %v6649, 0
    %v6658 = vsel %vm3811, %v6650, 0
    %v6661 = vsel %vm3811, %v6651, 0
    %v6664 = vsel %vm3811, %v6652, 0
    %v6667 = vsel %vm3811, %v6653, 0
    %6669 = vmatprep.subr.bf16.mxu0 0
    %6670 = vmatpush1.bf16.msra.mxu0 %v6621
    %6671 = vmatprep.subr.bf16.mxu0 0
    %6672 = vmatpush1.bf16.msra.mxu0 0
    %6673 = vmatprep.subr.bf16.mxu0 0
    %6674 = vmatpush1.bf16.msra.mxu0 0
    %6675 = vmatprep.subr.bf16.mxu0 0
    %6676 = vmatpush1.bf16.msra.mxu0 0
    %6677 = vmatprep.subr.bf16.mxu0 0
    %6678 = vmatpush1.bf16.msra.mxu0 0
    %6679 = vmatprep.subr.bf16.mxu0 0
    %6680 = vmatpush1.bf16.msra.mxu0 0
    %6681 = vmatprep.subr.bf16.mxu0 0
    %6682 = vmatpush1.bf16.msra.mxu0 0
    %6683 = vmatprep.subr.bf16.mxu0 0
    %6684 = vmatpush1.bf16.msra.mxu0 0
    %6685 = vmatprep.subr.bf16.mxu0 0
    %6686 = vmatpush1.bf16.msra.mxu0 0
    %6687 = vmatprep.subr.bf16.mxu0 0
    %6688 = vmatpush1.bf16.msra.mxu0 0
    %6689 = vmatprep.subr.bf16.mxu0 0
    %6690 = vmatpush1.bf16.msra.mxu0 0
    %6691 = vmatprep.subr.bf16.mxu0 0
    %6692 = vmatpush1.bf16.msra.mxu0 0
    %6693 = vmatprep.subr.bf16.mxu0 0
    %6694 = vmatpush1.bf16.msra.mxu0 0
    %6695 = vmatprep.subr.bf16.mxu0 0
    %6696 = vmatpush1.bf16.msra.mxu0 0
    %6697 = vmatprep.subr.bf16.mxu0 0
    %6698 = vmatpush1.bf16.msra.mxu0 0
    %6699 = vmatprep.subr.bf16.mxu0 0
    %6700 = vmatpush1.bf16.msra.mxu0 0
    %6701 = vmatprep.mubr.bf16.mxu0 0
    %6702 = vmatmul.mubr.bf16.gmra.mrb[0].mxu0 %v6655
    %v6703 = vpop.f32.mrb[0].mxu0
    %v6704 = vadd.f32 0.0, %v6703
    %v6705 = vpop.f32.mrb[0].mxu0
    %v6706 = vpop.f32.mrb[0].mxu0
    %v6707 = vadd.f32 0.0, %v6706
    %v6708 = vpop.f32.mrb[0].mxu0
    %6709 = vmatprep.mubr.bf16.mxu0 0
    %6710 = vmatmul.mubr.bf16.gmra.mrb[0].mxu0 %v6658
    %v6711 = vpop.f32.mrb[0].mxu0
    %v6712 = vadd.f32 0.0, %v6711
    %v6713 = vpop.f32.mrb[0].mxu0
    %v6714 = vpop.f32.mrb[0].mxu0
    %v6715 = vadd.f32 0.0, %v6714
    %v6716 = vpop.f32.mrb[0].mxu0
    %6717 = vmatprep.mubr.bf16.mxu0 0
    %6718 = vmatmul.mubr.bf16.gmra.mrb[0].mxu0 %v6661
    %v6719 = vpop.f32.mrb[0].mxu0
    %v6720 = vadd.f32 0.0, %v6719
    %v6721 = vpop.f32.mrb[0].mxu0
    %v6722 = vpop.f32.mrb[0].mxu0
    %v6723 = vadd.f32 0.0, %v6722
    %v6724 = vpop.f32.mrb[0].mxu0
    %6725 = vmatprep.mubr.bf16.mxu0 0
    %6726 = vmatmul.mubr.bf16.gmra.mrb[0].mxu0 %v6664
    %v6727 = vpop.f32.mrb[0].mxu0
    %v6728 = vadd.f32 0.0, %v6727
    %v6729 = vpop.f32.mrb[0].mxu0
    %v6730 = vpop.f32.mrb[0].mxu0
    %v6731 = vadd.f32 0.0, %v6730
    %v6732 = vpop.f32.mrb[0].mxu0
    %6733 = vmatprep.mubr.bf16.mxu0 0
    %6734 = vmatmul.mubr.bf16.gmra.mrb[0].mxu0 %v6667
    %v6735 = vpop.f32.mrb[0].mxu0
    %v6736 = vadd.f32 0.0, %v6735
    %v6737 = vpop.f32.mrb[0].mxu0
    %v6738 = vpop.f32.mrb[0].mxu0
    %v6739 = vpop.f32.mrb[0].mxu0
    %6740 = vdwg.mxu0
    %v6741 = vpack.c.bf16 %v6704, %v6704
    %v6742 = vld [vmem:[#allocation13] sm:$0xf]
    %v6743 = vld [vmem:[#allocation13 + $0x4] sm:$0xf]
    %v6744 = vld [vmem:[#allocation13 + $0x8] sm:$0xf]
    %v6745 = vld [vmem:[#allocation13 + $0xc] sm:$0xf]
    %v6746 = vpack.c.bf16 %v6707, %v6707
    %s6747 = scalar_lea.vmem [#allocation13], 16
    %v6748 = vld [vmem:[%s6747] sm:$0xf]
    %v6749 = vld [vmem:[%s6747 + $0x4] sm:$0xf]
    %v6750 = vld [vmem:[%s6747 + $0x8] sm:$0xf]
    %v6751 = vld [vmem:[%s6747 + $0xc] sm:$0xf]
    %v6756 = vunpack.c.l.b16 %v6748
    %v6757 = vunpack.c.l.b16 %v6749
    %v6758 = vunpack.c.l.b16 %v6750
    %v6759 = vunpack.c.l.b16 %v6751
    %v6760 = vpack.c.b16 %v6757, %v6756
    %v6761 = vpack.c.b16 %v6759, %v6758
    %v6765 = vsel %vm3742, %v6746, 0
    %6767 = vmatprep.subr.bf16.mxu0 0
    %6768 = vmatpush1.bf16.msra.mxu0 %v6760
    %6769 = vmatprep.subr.bf16.mxu0 0
    %6770 = vmatpush1.bf16.msra.mxu0 %v6761
    %6771 = vmatprep.subr.bf16.mxu0 0
    %6772 = vmatpush1.bf16.msra.mxu0 0
    %6773 = vmatprep.subr.bf16.mxu0 0
    %6774 = vmatpush1.bf16.msra.mxu0 0
    %6775 = vmatprep.subr.bf16.mxu0 0
    %6776 = vmatpush1.bf16.msra.mxu0 0
    %6777 = vmatprep.subr.bf16.mxu0 0
    %6778 = vmatpush1.bf16.msra.mxu0 0
    %6779 = vmatprep.subr.bf16.mxu0 0
    %6780 = vmatpush1.bf16.msra.mxu0 0
    %6781 = vmatprep.subr.bf16.mxu0 0
    %6782 = vmatpush1.bf16.msra.mxu0 0
    %6783 = vmatprep.subr.bf16.mxu0 0
    %6784 = vmatpush1.bf16.msra.mxu0 0
    %6785 = vmatprep.subr.bf16.mxu0 0
    %6786 = vmatpush1.bf16.msra.mxu0 0
    %6787 = vmatprep.subr.bf16.mxu0 0
    %6788 = vmatpush1.bf16.msra.mxu0 0
    %6789 = vmatprep.subr.bf16.mxu0 0
    %6790 = vmatpush1.bf16.msra.mxu0 0
    %6791 = vmatprep.subr.bf16.mxu0 0
    %6792 = vmatpush1.bf16.msra.mxu0 0
    %6793 = vmatprep.subr.bf16.mxu0 0
    %6794 = vmatpush1.bf16.msra.mxu0 0
    %6795 = vmatprep.subr.bf16.mxu0 0
    %6796 = vmatpush1.bf16.msra.mxu0 0
    %6797 = vmatprep.subr.bf16.mxu0 0
    %6798 = vmatpush1.bf16.msra.mxu0 0
    %6799 = vmatprep.mubr.bf16.mxu0 0
    %6800 = vmatmul.mubr.bf16.gmra.mrb[0].mxu0 %v6765
    %v6801 = vpop.f32.mrb[0].mxu0
    %v6802 = vadd.f32 0.0, %v6801
    %v6803 = vpop.f32.mrb[0].mxu0
    %v6804 = vpop.f32.mrb[0].mxu0
    %v6805 = vpop.f32.mrb[0].mxu0
    %6806 = vdwg.mxu0
    %v6811 = vunpack.c.l.b16 %v6742
    %v6812 = vunpack.c.l.b16 %v6743
    %v6813 = vunpack.c.l.b16 %v6744
    %v6814 = vunpack.c.l.b16 %v6745
    %v6815 = vpack.c.b16 %v6812, %v6811
    %v6816 = vpack.c.b16 %v6814, %v6813
    %v6820 = vsel %vm3742, %v6741, 0
    %6822 = vmatprep.subr.bf16.mxu0 0
    %6823 = vmatpush1.bf16.msra.mxu0 %v6815
    %6824 = vmatprep.subr.bf16.mxu0 0
    %6825 = vmatpush1.bf16.msra.mxu0 %v6816
    %6826 = vmatprep.subr.bf16.mxu0 0
    %6827 = vmatpush1.bf16.msra.mxu0 0
    %6828 = vmatprep.subr.bf16.mxu0 0
    %6829 = vmatpush1.bf16.msra.mxu0 0
    %6830 = vmatprep.subr.bf16.mxu0 0
    %6831 = vmatpush1.bf16.msra.mxu0 0
    %6832 = vmatprep.subr.bf16.mxu0 0
    %6833 = vmatpush1.bf16.msra.mxu0 0
    %6834 = vmatprep.subr.bf16.mxu0 0
    %6835 = vmatpush1.bf16.msra.mxu0 0
    %6836 = vmatprep.subr.bf16.mxu0 0
    %6837 = vmatpush1.bf16.msra.mxu0 0
    %6838 = vmatprep.subr.bf16.mxu0 0
    %6839 = vmatpush1.bf16.msra.mxu0 0
    %6840 = vmatprep.subr.bf16.mxu0 0
    %6841 = vmatpush1.bf16.msra.mxu0 0
    %6842 = vmatprep.subr.bf16.mxu0 0
    %6843 = vmatpush1.bf16.msra.mxu0 0
    %6844 = vmatprep.subr.bf16.mxu0 0
    %6845 = vmatpush1.bf16.msra.mxu0 0
    %6846 = vmatprep.subr.bf16.mxu0 0
    %6847 = vmatpush1.bf16.msra.mxu0 0
    %6848 = vmatprep.subr.bf16.mxu0 0
    %6849 = vmatpush1.bf16.msra.mxu0 0
    %6850 = vmatprep.subr.bf16.mxu0 0
    %6851 = vmatpush1.bf16.msra.mxu0 0
    %6852 = vmatprep.subr.bf16.mxu0 0
    %6853 = vmatpush1.bf16.msra.mxu0 0
    %6854 = vmatprep.mubr.bf16.mxu0 0
    %6855 = vmatmul.mubr.bf16.gmra.mrb[0].mxu0 %v6820
    %v6856 = vpop.f32.mrb[0].mxu0
    %v6857 = vadd.f32 %v6802, %v6856
    %v6858 = vpop.f32.mrb[0].mxu0
    %v6859 = vpop.f32.mrb[0].mxu0
    %v6860 = vpop.f32.mrb[0].mxu0
    %6861 = vdwg.mxu0
    %v6862 = vpack.c.bf16 %v6712, %v6712
    %s6863 = scalar_lea.vmem [#allocation13], 32
    %v6864 = vld [vmem:[%s6863] sm:$0xf]
    %v6865 = vld [vmem:[%s6863 + $0x4] sm:$0xf]
    %v6866 = vld [vmem:[%s6863 + $0x8] sm:$0xf]
    %v6867 = vld [vmem:[%s6863 + $0xc] sm:$0xf]
    %v6872 = vunpack.c.l.b16 %v6864
    %v6873 = vunpack.c.l.b16 %v6865
    %v6874 = vunpack.c.l.b16 %v6866
    %v6875 = vunpack.c.l.b16 %v6867
    %v6876 = vpack.c.b16 %v6873, %v6872
    %v6877 = vpack.c.b16 %v6875, %v6874
    %v6881 = vsel %vm3742, %v6862, 0
    %6883 = vmatprep.subr.bf16.mxu0 0
    %6884 = vmatpush1.bf16.msra.mxu0 %v6876
    %6885 = vmatprep.subr.bf16.mxu0 0
    %6886 = vmatpush1.bf16.msra.mxu0 %v6877
    %6887 = vmatprep.subr.bf16.mxu0 0
    %6888 = vmatpush1.bf16.msra.mxu0 0
    %6889 = vmatprep.subr.bf16.mxu0 0
    %6890 = vmatpush1.bf16.msra.mxu0 0
    %6891 = vmatprep.subr.bf16.mxu0 0
    %6892 = vmatpush1.bf16.msra.mxu0 0
    %6893 = vmatprep.subr.bf16.mxu0 0
    %6894 = vmatpush1.bf16.msra.mxu0 0
    %6895 = vmatprep.subr.bf16.mxu0 0
    %6896 = vmatpush1.bf16.msra.mxu0 0
    %6897 = vmatprep.subr.bf16.mxu0 0
    %6898 = vmatpush1.bf16.msra.mxu0 0
    %6899 = vmatprep.subr.bf16.mxu0 0
    %6900 = vmatpush1.bf16.msra.mxu0 0
    %6901 = vmatprep.subr.bf16.mxu0 0
    %6902 = vmatpush1.bf16.msra.mxu0 0
    %6903 = vmatprep.subr.bf16.mxu0 0
    %6904 = vmatpush1.bf16.msra.mxu0 0
    %6905 = vmatprep.subr.bf16.mxu0 0
    %6906 = vmatpush1.bf16.msra.mxu0 0
    %6907 = vmatprep.subr.bf16.mxu0 0
    %6908 = vmatpush1.bf16.msra.mxu0 0
    %6909 = vmatprep.subr.bf16.mxu0 0
    %6910 = vmatpush1.bf16.msra.mxu0 0
    %6911 = vmatprep.subr.bf16.mxu0 0
    %6912 = vmatpush1.bf16.msra.mxu0 0
    %6913 = vmatprep.subr.bf16.mxu0 0
    %6914 = vmatpush1.bf16.msra.mxu0 0
    %6915 = vmatprep.mubr.bf16.mxu0 0
    %6916 = vmatmul.mubr.bf16.gmra.mrb[0].mxu0 %v6881
    %v6917 = vpop.f32.mrb[0].mxu0
    %v6918 = vadd.f32 0.0, %v6917
    %v6919 = vpop.f32.mrb[0].mxu0
    %v6920 = vpop.f32.mrb[0].mxu0
    %v6921 = vpop.f32.mrb[0].mxu0
    %6922 = vdwg.mxu0
    %v6923 = vadd.f32 %v6857, %v6918
    %v6924 = vpack.c.bf16 %v6715, %v6715
    %s6925 = scalar_lea.vmem [#allocation13], 48
    %v6926 = vld [vmem:[%s6925] sm:$0xf]
    %v6927 = vld [vmem:[%s6925 + $0x4] sm:$0xf]
    %v6928 = vld [vmem:[%s6925 + $0x8] sm:$0xf]
    %v6929 = vld [vmem:[%s6925 + $0xc] sm:$0xf]
    %v6934 = vunpack.c.l.b16 %v6926
    %v6935 = vunpack.c.l.b16 %v6927
    %v6936 = vunpack.c.l.b16 %v6928
    %v6937 = vunpack.c.l.b16 %v6929
    %v6938 = vpack.c.b16 %v6935, %v6934
    %v6939 = vpack.c.b16 %v6937, %v6936
    %v6943 = vsel %vm3742, %v6924, 0
    %6945 = vmatprep.subr.bf16.mxu0 0
    %6946 = vmatpush1.bf16.msra.mxu0 %v6938
    %6947 = vmatprep.subr.bf16.mxu0 0
    %6948 = vmatpush1.bf16.msra.mxu0 %v6939
    %6949 = vmatprep.subr.bf16.mxu0 0
    %6950 = vmatpush1.bf16.msra.mxu0 0
    %6951 = vmatprep.subr.bf16.mxu0 0
    %6952 = vmatpush1.bf16.msra.mxu0 0
    %6953 = vmatprep.subr.bf16.mxu0 0
    %6954 = vmatpush1.bf16.msra.mxu0 0
    %6955 = vmatprep.subr.bf16.mxu0 0
    %6956 = vmatpush1.bf16.msra.mxu0 0
    %6957 = vmatprep.subr.bf16.mxu0 0
    %6958 = vmatpush1.bf16.msra.mxu0 0
    %6959 = vmatprep.subr.bf16.mxu0 0
    %6960 = vmatpush1.bf16.msra.mxu0 0
    %6961 = vmatprep.subr.bf16.mxu0 0
    %6962 = vmatpush1.bf16.msra.mxu0 0
    %6963 = vmatprep.subr.bf16.mxu0 0
    %6964 = vmatpush1.bf16.msra.mxu0 0
    %6965 = vmatprep.subr.bf16.mxu0 0
    %6966 = vmatpush1.bf16.msra.mxu0 0
    %6967 = vmatprep.subr.bf16.mxu0 0
    %6968 = vmatpush1.bf16.msra.mxu0 0
    %6969 = vmatprep.subr.bf16.mxu0 0
    %6970 = vmatpush1.bf16.msra.mxu0 0
    %6971 = vmatprep.subr.bf16.mxu0 0
    %6972 = vmatpush1.bf16.msra.mxu0 0
    %6973 = vmatprep.subr.bf16.mxu0 0
    %6974 = vmatpush1.bf16.msra.mxu0 0
    %6975 = vmatprep.subr.bf16.mxu0 0
    %6976 = vmatpush1.bf16.msra.mxu0 0
    %6977 = vmatprep.mubr.bf16.mxu0 0
    %6978 = vmatmul.mubr.bf16.gmra.mrb[0].mxu0 %v6943
    %v6979 = vpop.f32.mrb[0].mxu0
    %v6980 = vadd.f32 0.0, %v6979
    %v6981 = vpop.f32.mrb[0].mxu0
    %v6982 = vpop.f32.mrb[0].mxu0
    %v6983 = vpop.f32.mrb[0].mxu0
    %6984 = vdwg.mxu0
    %v6985 = vadd.f32 %v6923, %v6980
    %v6986 = vpack.c.bf16 %v6720, %v6720
    %s6987 = scalar_lea.vmem [#allocation13], 64
    %v6988 = vld [vmem:[%s6987] sm:$0xf]
    %v6989 = vld [vmem:[%s6987 + $0x4] sm:$0xf]
    %v6990 = vld [vmem:[%s6987 + $0x8] sm:$0xf]
    %v6991 = vld [vmem:[%s6987 + $0xc] sm:$0xf]
    %v6996 = vunpack.c.l.b16 %v6988
    %v6997 = vunpack.c.l.b16 %v6989
    %v6998 = vunpack.c.l.b16 %v6990
    %v6999 = vunpack.c.l.b16 %v6991
    %v7000 = vpack.c.b16 %v6997, %v6996
    %v7001 = vpack.c.b16 %v6999, %v6998
    %v7005 = vsel %vm3742, %v6986, 0
    %7007 = vmatprep.subr.bf16.mxu0 0
    %7008 = vmatpush1.bf16.msra.mxu0 %v7000
    %7009 = vmatprep.subr.bf16.mxu0 0
    %7010 = vmatpush1.bf16.msra.mxu0 %v7001
    %7011 = vmatprep.subr.bf16.mxu0 0
    %7012 = vmatpush1.bf16.msra.mxu0 0
    %7013 = vmatprep.subr.bf16.mxu0 0
    %7014 = vmatpush1.bf16.msra.mxu0 0
    %7015 = vmatprep.subr.bf16.mxu0 0
    %7016 = vmatpush1.bf16.msra.mxu0 0
    %7017 = vmatprep.subr.bf16.mxu0 0
    %7018 = vmatpush1.bf16.msra.mxu0 0
    %7019 = vmatprep.subr.bf16.mxu0 0
    %7020 = vmatpush1.bf16.msra.mxu0 0
    %7021 = vmatprep.subr.bf16.mxu0 0
    %7022 = vmatpush1.bf16.msra.mxu0 0
    %7023 = vmatprep.subr.bf16.mxu0 0
    %7024 = vmatpush1.bf16.msra.mxu0 0
    %7025 = vmatprep.subr.bf16.mxu0 0
    %7026 = vmatpush1.bf16.msra.mxu0 0
    %7027 = vmatprep.subr.bf16.mxu0 0
    %7028 = vmatpush1.bf16.msra.mxu0 0
    %7029 = vmatprep.subr.bf16.mxu0 0
    %7030 = vmatpush1.bf16.msra.mxu0 0
    %7031 = vmatprep.subr.bf16.mxu0 0
    %7032 = vmatpush1.bf16.msra.mxu0 0
    %7033 = vmatprep.subr.bf16.mxu0 0
    %7034 = vmatpush1.bf16.msra.mxu0 0
    %7035 = vmatprep.subr.bf16.mxu0 0
    %7036 = vmatpush1.bf16.msra.mxu0 0
    %7037 = vmatprep.subr.bf16.mxu0 0
    %7038 = vmatpush1.bf16.msra.mxu0 0
    %7039 = vmatprep.mubr.bf16.mxu0 0
    %7040 = vmatmul.mubr.bf16.gmra.mrb[0].mxu0 %v7005
    %v7041 = vpop.f32.mrb[0].mxu0
    %v7042 = vadd.f32 0.0, %v7041
    %v7043 = vpop.f32.mrb[0].mxu0
    %v7044 = vpop.f32.mrb[0].mxu0
    %v7045 = vpop.f32.mrb[0].mxu0
    %7046 = vdwg.mxu0
    %v7047 = vadd.f32 %v6985, %v7042
    %v7048 = vpack.c.bf16 %v6723, %v6723
    %s7049 = scalar_lea.vmem [#allocation13], 80
    %v7050 = vld [vmem:[%s7049] sm:$0xf]
    %v7051 = vld [vmem:[%s7049 + $0x4] sm:$0xf]
    %v7052 = vld [vmem:[%s7049 + $0x8] sm:$0xf]
    %v7053 = vld [vmem:[%s7049 + $0xc] sm:$0xf]
    %v7058 = vunpack.c.l.b16 %v7050
    %v7059 = vunpack.c.l.b16 %v7051
    %v7060 = vunpack.c.l.b16 %v7052
    %v7061 = vunpack.c.l.b16 %v7053
    %v7062 = vpack.c.b16 %v7059, %v7058
    %v7063 = vpack.c.b16 %v7061, %v7060
    %v7067 = vsel %vm3742, %v7048, 0
    %7069 = vmatprep.subr.bf16.mxu0 0
    %7070 = vmatpush1.bf16.msra.mxu0 %v7062
    %7071 = vmatprep.subr.bf16.mxu0 0
    %7072 = vmatpush1.bf16.msra.mxu0 %v7063
    %7073 = vmatprep.subr.bf16.mxu0 0
    %7074 = vmatpush1.bf16.msra.mxu0 0
    %7075 = vmatprep.subr.bf16.mxu0 0
    %7076 = vmatpush1.bf16.msra.mxu0 0
    %7077 = vmatprep.subr.bf16.mxu0 0
    %7078 = vmatpush1.bf16.msra.mxu0 0
    %7079 = vmatprep.subr.bf16.mxu0 0
    %7080 = vmatpush1.bf16.msra.mxu0 0
    %7081 = vmatprep.subr.bf16.mxu0 0
    %7082 = vmatpush1.bf16.msra.mxu0 0
    %7083 = vmatprep.subr.bf16.mxu0 0
    %7084 = vmatpush1.bf16.msra.mxu0 0
    %7085 = vmatprep.subr.bf16.mxu0 0
    %7086 = vmatpush1.bf16.msra.mxu0 0
    %7087 = vmatprep.subr.bf16.mxu0 0
    %7088 = vmatpush1.bf16.msra.mxu0 0
    %7089 = vmatprep.subr.bf16.mxu0 0
    %7090 = vmatpush1.bf16.msra.mxu0 0
    %7091 = vmatprep.subr.bf16.mxu0 0
    %7092 = vmatpush1.bf16.msra.mxu0 0
    %7093 = vmatprep.subr.bf16.mxu0 0
    %7094 = vmatpush1.bf16.msra.mxu0 0
    %7095 = vmatprep.subr.bf16.mxu0 0
    %7096 = vmatpush1.bf16.msra.mxu0 0
    %7097 = vmatprep.subr.bf16.mxu0 0
    %7098 = vmatpush1.bf16.msra.mxu0 0
    %7099 = vmatprep.subr.bf16.mxu0 0
    %7100 = vmatpush1.bf16.msra.mxu0 0
    %7101 = vmatprep.mubr.bf16.mxu0 0
    %7102 = vmatmul.mubr.bf16.gmra.mrb[0].mxu0 %v7067
    %v7103 = vpop.f32.mrb[0].mxu0
    %v7104 = vadd.f32 0.0, %v7103
    %v7105 = vpop.f32.mrb[0].mxu0
    %v7106 = vpop.f32.mrb[0].mxu0
    %v7107 = vpop.f32.mrb[0].mxu0
    %7108 = vdwg.mxu0
    %v7109 = vadd.f32 %v7047, %v7104
    %v7110 = vpack.c.bf16 %v6728, %v6728
    %s7111 = scalar_lea.vmem [#allocation13], 96
    %v7112 = vld [vmem:[%s7111] sm:$0xf]
    %v7113 = vld [vmem:[%s7111 + $0x4] sm:$0xf]
    %v7114 = vld [vmem:[%s7111 + $0x8] sm:$0xf]
    %v7115 = vld [vmem:[%s7111 + $0xc] sm:$0xf]
    %v7120 = vunpack.c.l.b16 %v7112
    %v7121 = vunpack.c.l.b16 %v7113
    %v7122 = vunpack.c.l.b16 %v7114
    %v7123 = vunpack.c.l.b16 %v7115
    %v7124 = vpack.c.b16 %v7121, %v7120
    %v7125 = vpack.c.b16 %v7123, %v7122
    %v7129 = vsel %vm3742, %v7110, 0
    %7131 = vmatprep.subr.bf16.mxu0 0
    %7132 = vmatpush1.bf16.msra.mxu0 %v7124
    %7133 = vmatprep.subr.bf16.mxu0 0
    %7134 = vmatpush1.bf16.msra.mxu0 %v7125
    %7135 = vmatprep.subr.bf16.mxu0 0
    %7136 = vmatpush1.bf16.msra.mxu0 0
    %7137 = vmatprep.subr.bf16.mxu0 0
    %7138 = vmatpush1.bf16.msra.mxu0 0
    %7139 = vmatprep.subr.bf16.mxu0 0
    %7140 = vmatpush1.bf16.msra.mxu0 0
    %7141 = vmatprep.subr.bf16.mxu0 0
    %7142 = vmatpush1.bf16.msra.mxu0 0
    %7143 = vmatprep.subr.bf16.mxu0 0
    %7144 = vmatpush1.bf16.msra.mxu0 0
    %7145 = vmatprep.subr.bf16.mxu0 0
    %7146 = vmatpush1.bf16.msra.mxu0 0
    %7147 = vmatprep.subr.bf16.mxu0 0
    %7148 = vmatpush1.bf16.msra.mxu0 0
    %7149 = vmatprep.subr.bf16.mxu0 0
    %7150 = vmatpush1.bf16.msra.mxu0 0
    %7151 = vmatprep.subr.bf16.mxu0 0
    %7152 = vmatpush1.bf16.msra.mxu0 0
    %7153 = vmatprep.subr.bf16.mxu0 0
    %7154 = vmatpush1.bf16.msra.mxu0 0
    %7155 = vmatprep.subr.bf16.mxu0 0
    %7156 = vmatpush1.bf16.msra.mxu0 0
    %7157 = vmatprep.subr.bf16.mxu0 0
    %7158 = vmatpush1.bf16.msra.mxu0 0
    %7159 = vmatprep.subr.bf16.mxu0 0
    %7160 = vmatpush1.bf16.msra.mxu0 0
    %7161 = vmatprep.subr.bf16.mxu0 0
    %7162 = vmatpush1.bf16.msra.mxu0 0
    %7163 = vmatprep.mubr.bf16.mxu0 0
    %7164 = vmatmul.mubr.bf16.gmra.mrb[0].mxu0 %v7129
    %v7165 = vpop.f32.mrb[0].mxu0
    %v7166 = vadd.f32 0.0, %v7165
    %v7167 = vpop.f32.mrb[0].mxu0
    %v7168 = vpop.f32.mrb[0].mxu0
    %v7169 = vpop.f32.mrb[0].mxu0
    %7170 = vdwg.mxu0
    %v7171 = vadd.f32 %v7109, %v7166
    %v7172 = vpack.c.bf16 %v6731, %v6731
    %s7173 = scalar_lea.vmem [#allocation13], 112
    %v7174 = vld [vmem:[%s7173] sm:$0xf]
    %v7175 = vld [vmem:[%s7173 + $0x4] sm:$0xf]
    %v7176 = vld [vmem:[%s7173 + $0x8] sm:$0xf]
    %v7177 = vld [vmem:[%s7173 + $0xc] sm:$0xf]
    %v7182 = vunpack.c.l.b16 %v7174
    %v7183 = vunpack.c.l.b16 %v7175
    %v7184 = vunpack.c.l.b16 %v7176
    %v7185 = vunpack.c.l.b16 %v7177
    %v7186 = vpack.c.b16 %v7183, %v7182
    %v7187 = vpack.c.b16 %v7185, %v7184
    %v7191 = vsel %vm3742, %v7172, 0
    %7193 = vmatprep.subr.bf16.mxu0 0
    %7194 = vmatpush1.bf16.msra.mxu0 %v7186
    %7195 = vmatprep.subr.bf16.mxu0 0
    %7196 = vmatpush1.bf16.msra.mxu0 %v7187
    %7197 = vmatprep.subr.bf16.mxu0 0
    %7198 = vmatpush1.bf16.msra.mxu0 0
    %7199 = vmatprep.subr.bf16.mxu0 0
    %7200 = vmatpush1.bf16.msra.mxu0 0
    %7201 = vmatprep.subr.bf16.mxu0 0
    %7202 = vmatpush1.bf16.msra.mxu0 0
    %7203 = vmatprep.subr.bf16.mxu0 0
    %7204 = vmatpush1.bf16.msra.mxu0 0
    %7205 = vmatprep.subr.bf16.mxu0 0
    %7206 = vmatpush1.bf16.msra.mxu0 0
    %7207 = vmatprep.subr.bf16.mxu0 0
    %7208 = vmatpush1.bf16.msra.mxu0 0
    %7209 = vmatprep.subr.bf16.mxu0 0
    %7210 = vmatpush1.bf16.msra.mxu0 0
    %7211 = vmatprep.subr.bf16.mxu0 0
    %7212 = vmatpush1.bf16.msra.mxu0 0
    %7213 = vmatprep.subr.bf16.mxu0 0
    %7214 = vmatpush1.bf16.msra.mxu0 0
    %7215 = vmatprep.subr.bf16.mxu0 0
    %7216 = vmatpush1.bf16.msra.mxu0 0
    %7217 = vmatprep.subr.bf16.mxu0 0
    %7218 = vmatpush1.bf16.msra.mxu0 0
    %7219 = vmatprep.subr.bf16.mxu0 0
    %7220 = vmatpush1.bf16.msra.mxu0 0
    %7221 = vmatprep.subr.bf16.mxu0 0
    %7222 = vmatpush1.bf16.msra.mxu0 0
    %7223 = vmatprep.subr.bf16.mxu0 0
    %7224 = vmatpush1.bf16.msra.mxu0 0
    %7225 = vmatprep.mubr.bf16.mxu0 0
    %7226 = vmatmul.mubr.bf16.gmra.mrb[0].mxu0 %v7191
    %v7227 = vpop.f32.mrb[0].mxu0
    %v7228 = vadd.f32 0.0, %v7227
    %v7229 = vpop.f32.mrb[0].mxu0
    %v7230 = vpop.f32.mrb[0].mxu0
    %v7231 = vpop.f32.mrb[0].mxu0
    %7232 = vdwg.mxu0
    %v7233 = vadd.f32 %v7171, %v7228
    %v7234 = vpack.c.bf16 %v6736, %v6736
    %s7235 = scalar_lea.vmem [#allocation13], 128
    %v7236 = vld [vmem:[%s7235] sm:$0xf]
    %v7237 = vld [vmem:[%s7235 + $0x4] sm:$0xf]
    %v7238 = vld [vmem:[%s7235 + $0x8] sm:$0xf]
    %v7239 = vld [vmem:[%s7235 + $0xc] sm:$0xf]
    %v7244 = vunpack.c.l.b16 %v7236
    %v7245 = vunpack.c.l.b16 %v7237
    %v7246 = vunpack.c.l.b16 %v7238
    %v7247 = vunpack.c.l.b16 %v7239
    %v7248 = vpack.c.b16 %v7245, %v7244
    %v7249 = vpack.c.b16 %v7247, %v7246
    %v7253 = vsel %vm3742, %v7234, 0
    %7255 = vmatprep.subr.bf16.mxu0 0
    %7256 = vmatpush1.bf16.msra.mxu0 %v7248
    %7257 = vmatprep.subr.bf16.mxu0 0
    %7258 = vmatpush1.bf16.msra.mxu0 %v7249
    %7259 = vmatprep.subr.bf16.mxu0 0
    %7260 = vmatpush1.bf16.msra.mxu0 0
    %7261 = vmatprep.subr.bf16.mxu0 0
    %7262 = vmatpush1.bf16.msra.mxu0 0
    %7263 = vmatprep.subr.bf16.mxu0 0
    %7264 = vmatpush1.bf16.msra.mxu0 0
    %7265 = vmatprep.subr.bf16.mxu0 0
    %7266 = vmatpush1.bf16.msra.mxu0 0
    %7267 = vmatprep.subr.bf16.mxu0 0
    %7268 = vmatpush1.bf16.msra.mxu0 0
    %7269 = vmatprep.subr.bf16.mxu0 0
    %7270 = vmatpush1.bf16.msra.mxu0 0
    %7271 = vmatprep.subr.bf16.mxu0 0
    %7272 = vmatpush1.bf16.msra.mxu0 0
    %7273 = vmatprep.subr.bf16.mxu0 0
    %7274 = vmatpush1.bf16.msra.mxu0 0
    %7275 = vmatprep.subr.bf16.mxu0 0
    %7276 = vmatpush1.bf16.msra.mxu0 0
    %7277 = vmatprep.subr.bf16.mxu0 0
    %7278 = vmatpush1.bf16.msra.mxu0 0
    %7279 = vmatprep.subr.bf16.mxu0 0
    %7280 = vmatpush1.bf16.msra.mxu0 0
    %7281 = vmatprep.subr.bf16.mxu0 0
    %7282 = vmatpush1.bf16.msra.mxu0 0
    %7283 = vmatprep.subr.bf16.mxu0 0
    %7284 = vmatpush1.bf16.msra.mxu0 0
    %7285 = vmatprep.subr.bf16.mxu0 0
    %7286 = vmatpush1.bf16.msra.mxu0 0
    %7287 = vmatprep.mubr.bf16.mxu0 0
    %7288 = vmatmul.mubr.bf16.gmra.mrb[0].mxu0 %v7253
    %v7289 = vpop.f32.mrb[0].mxu0
    %v7290 = vadd.f32 0.0, %v7289
    %v7291 = vpop.f32.mrb[0].mxu0
    %v7292 = vpop.f32.mrb[0].mxu0
    %v7293 = vpop.f32.mrb[0].mxu0
    %7294 = vdwg.mxu0
    %v7295 = vadd.f32 %v7233, %v7290
    %v7296 = vld [vmem:[%s57] sm:$0xff]
    %7298 = vset.pattern.permute.xlu0 0
    %7299 = vperm.xlu0 %7298, %v7296
    %v7300 = vpop.permute.xlu0 %7299
    %v7302 = vadd.f32 %v7295, %v7300
    %v7303 = vmax.f32 %v7302, 0.0
    %v7304 = vpack.c.bf16 %v7303, %v7303
    %v7305 = vld [vmem:[%s59] sm:$0xf]
    %v7306 = vld [vmem:[%s59 + $0x4] sm:$0xf]
    %v7307 = vld [vmem:[%s59 + $0x8] sm:$0xf]
    %v7308 = vld [vmem:[%s59 + $0xc] sm:$0xf]
    %v7309 = vld [vmem:[%s59 + $0x10] sm:$0x3]
    %v7315 = vunpack.c.l.b16 %v7305
    %v7316 = vunpack.c.l.b16 %v7306
    %v7317 = vunpack.c.l.b16 %v7307
    %v7318 = vunpack.c.l.b16 %v7308
    %v7319 = vunpack.c.l.b16 %v7309
    %v7320 = vpack.c.b16 %v7316, %v7315
    %v7321 = vpack.c.b16 %v7318, %v7317
    %v7322 = vpack.c.b16 %v7319, %v7319
    %v7324 = vsel %vm3196, %v7320, 0
    %v7327 = vsel %vm3196, %v7321, 0
    %v7330 = vsel %vm3196, %v7322, 0
    %v7333 = vsel %vm3200, %v7304, 0
    %7335 = vmatprep.subr.bf16.mxu0 0
    %7336 = vmatpush1.bf16.msra.mxu0 %v7333
    %7337 = vmatprep.subr.bf16.mxu0 0
    %7338 = vmatpush1.bf16.msra.mxu0 0
    %7339 = vmatprep.subr.bf16.mxu0 0
    %7340 = vmatpush1.bf16.msra.mxu0 0
    %7341 = vmatprep.subr.bf16.mxu0 0
    %7342 = vmatpush1.bf16.msra.mxu0 0
    %7343 = vmatprep.subr.bf16.mxu0 0
    %7344 = vmatpush1.bf16.msra.mxu0 0
    %7345 = vmatprep.subr.bf16.mxu0 0
    %7346 = vmatpush1.bf16.msra.mxu0 0
    %7347 = vmatprep.subr.bf16.mxu0 0
    %7348 = vmatpush1.bf16.msra.mxu0 0
    %7349 = vmatprep.subr.bf16.mxu0 0
    %7350 = vmatpush1.bf16.msra.mxu0 0
    %7351 = vmatprep.subr.bf16.mxu0 0
    %7352 = vmatpush1.bf16.msra.mxu0 0
    %7353 = vmatprep.subr.bf16.mxu0 0
    %7354 = vmatpush1.bf16.msra.mxu0 0
    %7355 = vmatprep.subr.bf16.mxu0 0
    %7356 = vmatpush1.bf16.msra.mxu0 0
    %7357 = vmatprep.subr.bf16.mxu0 0
    %7358 = vmatpush1.bf16.msra.mxu0 0
    %7359 = vmatprep.subr.bf16.mxu0 0
    %7360 = vmatpush1.bf16.msra.mxu0 0
    %7361 = vmatprep.subr.bf16.mxu0 0
    %7362 = vmatpush1.bf16.msra.mxu0 0
    %7363 = vmatprep.subr.bf16.mxu0 0
    %7364 = vmatpush1.bf16.msra.mxu0 0
    %7365 = vmatprep.subr.bf16.mxu0 0
    %7366 = vmatpush1.bf16.msra.mxu0 0
    %7367 = vmatprep.mubr.bf16.mxu0 0
    %7368 = vmatmul.mubr.bf16.gmra.mrb[0].mxu0 %v7324
    %v7369 = vpop.f32.mrb[0].mxu0
    %v7370 = vadd.f32 0.0, %v7369
    %v7371 = vpop.f32.mrb[0].mxu0
    %v7372 = vpop.f32.mrb[0].mxu0
    %v7373 = vadd.f32 0.0, %v7372
    %v7374 = vpop.f32.mrb[0].mxu0
    %7375 = vmatprep.mubr.bf16.mxu0 0
    %7376 = vmatmul.mubr.bf16.gmra.mrb[0].mxu0 %v7327
    %v7377 = vpop.f32.mrb[0].mxu0
    %v7378 = vadd.f32 0.0, %v7377
    %v7379 = vpop.f32.mrb[0].mxu0
    %v7380 = vpop.f32.mrb[0].mxu0
    %v7381 = vadd.f32 0.0, %v7380
    %v7382 = vpop.f32.mrb[0].mxu0
    %7383 = vmatprep.mubr.bf16.mxu0 0
    %7384 = vmatmul.mubr.bf16.gmra.mrb[0].mxu0 %v7330
    %v7385 = vpop.f32.mrb[0].mxu0
    %v7386 = vadd.f32 0.0, %v7385
    %v7387 = vpop.f32.mrb[0].mxu0
    %v7388 = vpop.f32.mrb[0].mxu0
    %v7389 = vpop.f32.mrb[0].mxu0
    %7390 = vdwg.mxu0
    %v7391 = vpack.c.bf16 %v7370, %v7370
    %v7392 = vld [vmem:[#allocation15] sm:$0xff]
    %v7393 = vld [vmem:[#allocation15 + $0x8] sm:$0xff]
    %v7394 = vld [vmem:[#allocation15 + $0x10] sm:$0xff]
    %v7395 = vld [vmem:[#allocation15 + $0x18] sm:$0xff]
    %v7396 = vld [vmem:[#allocation15 + $0x20] sm:$0xff]
    %v7397 = vld [vmem:[#allocation15 + $0x28] sm:$0xff]
    %v7398 = vld [vmem:[#allocation15 + $0x30] sm:$0xff]
    %v7399 = vld [vmem:[#allocation15 + $0x38] sm:$0xff]
    %v7400 = vld [vmem:[#allocation15 + $0x40] sm:$0xff]
    %v7401 = vld [vmem:[#allocation15 + $0x48] sm:$0xff]
    %v7402 = vld [vmem:[#allocation15 + $0x50] sm:$0xff]
    %v7403 = vld [vmem:[#allocation15 + $0x58] sm:$0xff]
    %v7404 = vld [vmem:[#allocation15 + $0x60] sm:$0xff]
    %v7405 = vld [vmem:[#allocation15 + $0x68] sm:$0xff]
    %v7406 = vld [vmem:[#allocation15 + $0x70] sm:$0xff]
    %v7407 = vld [vmem:[#allocation15 + $0x78] sm:$0xff]
    %v7408 = vld [vmem:[#allocation15 + $0x80] sm:$0xff]
    %v7409 = vld [vmem:[#allocation15 + $0x88] sm:$0xff]
    %v7410 = vld [vmem:[#allocation15 + $0x90] sm:$0xff]
    %v7411 = vld [vmem:[#allocation15 + $0x98] sm:$0xff]
    %v7412 = vld [vmem:[#allocation15 + $0xa0] sm:$0xff]
    %v7413 = vld [vmem:[#allocation15 + $0xa8] sm:$0xff]
    %v7414 = vld [vmem:[#allocation15 + $0xb0] sm:$0xff]
    %v7415 = vld [vmem:[#allocation15 + $0xb8] sm:$0xff]
    %v7416 = vld [vmem:[#allocation15 + $0xc0] sm:$0xff]
    %v7417 = vld [vmem:[#allocation15 + $0xc8] sm:$0xff]
    %v7418 = vld [vmem:[#allocation15 + $0xd0] sm:$0xff]
    %v7419 = vld [vmem:[#allocation15 + $0xd8] sm:$0xff]
    %v7420 = vld [vmem:[#allocation15 + $0xe0] sm:$0xff]
    %v7421 = vld [vmem:[#allocation15 + $0xe8] sm:$0xff]
    %v7422 = vld [vmem:[#allocation15 + $0xf0] sm:$0xff]
    %v7423 = vld [vmem:[#allocation15 + $0xf8] sm:$0xff]
    %s7424 = scalar_lea.vmem [#allocation15], 256
    %v7425 = vld [vmem:[%s7424] sm:$0xff]
    %v7426 = vld [vmem:[%s7424 + $0x8] sm:$0xff]
    %v7427 = vld [vmem:[%s7424 + $0x10] sm:$0xff]
    %v7428 = vld [vmem:[%s7424 + $0x18] sm:$0xff]
    %v7429 = vld [vmem:[%s7424 + $0x20] sm:$0xff]
    %v7430 = vld [vmem:[%s7424 + $0x28] sm:$0xff]
    %v7431 = vld [vmem:[%s7424 + $0x30] sm:$0xff]
    %v7432 = vld [vmem:[%s7424 + $0x38] sm:$0xff]
    %v7433 = vld [vmem:[%s7424 + $0x40] sm:$0xff]
    %v7434 = vld [vmem:[%s7424 + $0x48] sm:$0xff]
    %v7435 = vld [vmem:[%s7424 + $0x50] sm:$0xff]
    %v7436 = vld [vmem:[%s7424 + $0x58] sm:$0xff]
    %v7437 = vld [vmem:[%s7424 + $0x60] sm:$0xff]
    %v7438 = vld [vmem:[%s7424 + $0x68] sm:$0xff]
    %v7439 = vld [vmem:[%s7424 + $0x70] sm:$0xff]
    %v7440 = vld [vmem:[%s7424 + $0x78] sm:$0xff]
    %v7441 = vld [vmem:[%s7424 + $0x80] sm:$0xff]
    %v7442 = vld [vmem:[%s7424 + $0x88] sm:$0xff]
    %v7443 = vld [vmem:[%s7424 + $0x90] sm:$0xff]
    %v7444 = vld [vmem:[%s7424 + $0x98] sm:$0xff]
    %v7445 = vld [vmem:[%s7424 + $0xa0] sm:$0xff]
    %v7446 = vld [vmem:[%s7424 + $0xa8] sm:$0xff]
    %v7447 = vld [vmem:[%s7424 + $0xb0] sm:$0xff]
    %v7448 = vld [vmem:[%s7424 + $0xb8] sm:$0xff]
    %v7449 = vld [vmem:[%s7424 + $0xc0] sm:$0xff]
    %v7450 = vld [vmem:[%s7424 + $0xc8] sm:$0xff]
    %v7451 = vld [vmem:[%s7424 + $0xd0] sm:$0xff]
    %v7452 = vld [vmem:[%s7424 + $0xd8] sm:$0xff]
    %v7453 = vld [vmem:[%s7424 + $0xe0] sm:$0xff]
    %v7454 = vld [vmem:[%s7424 + $0xe8] sm:$0xff]
    %v7455 = vld [vmem:[%s7424 + $0xf0] sm:$0xff]
    %v7456 = vld [vmem:[%s7424 + $0xf8] sm:$0xff]
    %v7458 = vrot.slane %v7391, 2
    %v7492 = vunpack.c.l.b16 %v7425
    %v7493 = vunpack.c.h.b16 %v7425
    %v7494 = vunpack.c.l.b16 %v7426
    %v7495 = vunpack.c.h.b16 %v7426
    %v7496 = vunpack.c.l.b16 %v7427
    %v7497 = vunpack.c.h.b16 %v7427
    %v7498 = vunpack.c.l.b16 %v7428
    %v7499 = vunpack.c.h.b16 %v7428
    %v7500 = vunpack.c.l.b16 %v7429
    %v7501 = vunpack.c.h.b16 %v7429
    %v7502 = vunpack.c.l.b16 %v7430
    %v7503 = vunpack.c.h.b16 %v7430
    %v7504 = vunpack.c.l.b16 %v7431
    %v7505 = vunpack.c.h.b16 %v7431
    %v7506 = vunpack.c.l.b16 %v7432
    %v7507 = vunpack.c.h.b16 %v7432
    %v7508 = vunpack.c.l.b16 %v7433
    %v7509 = vunpack.c.h.b16 %v7433
    %v7510 = vunpack.c.l.b16 %v7434
    %v7511 = vunpack.c.h.b16 %v7434
    %v7512 = vunpack.c.l.b16 %v7435
    %v7513 = vunpack.c.h.b16 %v7435
    %v7514 = vunpack.c.l.b16 %v7436
    %v7515 = vunpack.c.h.b16 %v7436
    %v7516 = vunpack.c.l.b16 %v7437
    %v7517 = vunpack.c.h.b16 %v7437
    %v7518 = vunpack.c.l.b16 %v7438
    %v7519 = vunpack.c.h.b16 %v7438
    %v7520 = vunpack.c.l.b16 %v7439
    %v7521 = vunpack.c.h.b16 %v7439
    %v7522 = vunpack.c.l.b16 %v7440
    %v7523 = vunpack.c.h.b16 %v7440
    %v7524 = vunpack.c.l.b16 %v7441
    %v7525 = vunpack.c.h.b16 %v7441
    %v7526 = vunpack.c.l.b16 %v7442
    %v7527 = vunpack.c.h.b16 %v7442
    %v7528 = vunpack.c.l.b16 %v7443
    %v7529 = vunpack.c.h.b16 %v7443
    %v7530 = vunpack.c.l.b16 %v7444
    %v7531 = vunpack.c.h.b16 %v7444
    %v7532 = vunpack.c.l.b16 %v7445
    %v7533 = vunpack.c.h.b16 %v7445
    %v7534 = vunpack.c.l.b16 %v7446
    %v7535 = vunpack.c.h.b16 %v7446
    %v7536 = vunpack.c.l.b16 %v7447
    %v7537 = vunpack.c.h.b16 %v7447
    %v7538 = vunpack.c.l.b16 %v7448
    %v7539 = vunpack.c.h.b16 %v7448
    %v7540 = vunpack.c.l.b16 %v7449
    %v7541 = vunpack.c.h.b16 %v7449
    %v7542 = vunpack.c.l.b16 %v7450
    %v7543 = vunpack.c.h.b16 %v7450
    %v7544 = vunpack.c.l.b16 %v7451
    %v7545 = vunpack.c.h.b16 %v7451
    %v7546 = vunpack.c.l.b16 %v7452
    %v7547 = vunpack.c.h.b16 %v7452
    %v7548 = vunpack.c.l.b16 %v7453
    %v7549 = vunpack.c.h.b16 %v7453
    %v7550 = vunpack.c.l.b16 %v7454
    %v7551 = vunpack.c.h.b16 %v7454
    %v7552 = vunpack.c.l.b16 %v7455
    %v7553 = vunpack.c.h.b16 %v7455
    %v7554 = vunpack.c.l.b16 %v7456
    %v7555 = vunpack.c.h.b16 %v7456
    %v7556 = vpack.c.b16 %v7496, %v7492
    %v7557 = vpack.c.b16 %v7497, %v7493
    %v7558 = vpack.c.b16 %v7498, %v7494
    %v7559 = vpack.c.b16 %v7499, %v7495
    %v7560 = vpack.c.b16 %v7504, %v7500
    %v7561 = vpack.c.b16 %v7505, %v7501
    %v7562 = vpack.c.b16 %v7506, %v7502
    %v7563 = vpack.c.b16 %v7507, %v7503
    %v7564 = vpack.c.b16 %v7512, %v7508
    %v7565 = vpack.c.b16 %v7513, %v7509
    %v7566 = vpack.c.b16 %v7514, %v7510
    %v7567 = vpack.c.b16 %v7515, %v7511
    %v7568 = vpack.c.b16 %v7520, %v7516
    %v7569 = vpack.c.b16 %v7521, %v7517
    %v7570 = vpack.c.b16 %v7522, %v7518
    %v7571 = vpack.c.b16 %v7523, %v7519
    %v7572 = vpack.c.b16 %v7528, %v7524
    %v7573 = vpack.c.b16 %v7529, %v7525
    %v7574 = vpack.c.b16 %v7530, %v7526
    %v7575 = vpack.c.b16 %v7531, %v7527
    %v7576 = vpack.c.b16 %v7536, %v7532
    %v7577 = vpack.c.b16 %v7537, %v7533
    %v7578 = vpack.c.b16 %v7538, %v7534
    %v7579 = vpack.c.b16 %v7539, %v7535
    %v7580 = vpack.c.b16 %v7544, %v7540
    %v7581 = vpack.c.b16 %v7545, %v7541
    %v7582 = vpack.c.b16 %v7546, %v7542
    %v7583 = vpack.c.b16 %v7547, %v7543
    %v7584 = vpack.c.b16 %v7552, %v7548
    %v7585 = vpack.c.b16 %v7553, %v7549
    %v7586 = vpack.c.b16 %v7554, %v7550
    %v7587 = vpack.c.b16 %v7555, %v7551
    %7620 = vmatprep.subr.bf16.mxu0 %v7557
    %7621 = vmatpush1.bf16.msra.mxu0 %v7556
    %7622 = vmatprep.subr.bf16.mxu0 %v7561
    %7623 = vmatpush1.bf16.msra.mxu0 %v7560
    %7624 = vmatprep.subr.bf16.mxu0 %v7565
    %7625 = vmatpush1.bf16.msra.mxu0 %v7564
    %7626 = vmatprep.subr.bf16.mxu0 %v7569
    %7627 = vmatpush1.bf16.msra.mxu0 %v7568
    %7628 = vmatprep.subr.bf16.mxu0 %v7573
    %7629 = vmatpush1.bf16.msra.mxu0 %v7572
    %7630 = vmatprep.subr.bf16.mxu0 %v7577
    %7631 = vmatpush1.bf16.msra.mxu0 %v7576
    %7632 = vmatprep.subr.bf16.mxu0 %v7581
    %7633 = vmatpush1.bf16.msra.mxu0 %v7580
    %7634 = vmatprep.subr.bf16.mxu0 %v7585
    %7635 = vmatpush1.bf16.msra.mxu0 %v7584
    %7636 = vmatprep.subr.bf16.mxu0 0
    %7637 = vmatpush1.bf16.msra.mxu0 0
    %7638 = vmatprep.subr.bf16.mxu0 0
    %7639 = vmatpush1.bf16.msra.mxu0 0
    %7640 = vmatprep.subr.bf16.mxu0 0
    %7641 = vmatpush1.bf16.msra.mxu0 0
    %7642 = vmatprep.subr.bf16.mxu0 0
    %7643 = vmatpush1.bf16.msra.mxu0 0
    %7644 = vmatprep.subr.bf16.mxu0 0
    %7645 = vmatpush1.bf16.msra.mxu0 0
    %7646 = vmatprep.subr.bf16.mxu0 0
    %7647 = vmatpush1.bf16.msra.mxu0 0
    %7648 = vmatprep.subr.bf16.mxu0 0
    %7649 = vmatpush1.bf16.msra.mxu0 0
    %7650 = vmatprep.subr.bf16.mxu0 0
    %7651 = vmatpush1.bf16.msra.mxu0 0
    %7652 = vmatprep.mubr.bf16.mxu0 0
    %7653 = vmatmul.mubr.bf16.gmra.mrb[0].mxu0 %v7458
    %v7654 = vpop.f32.mrb[0].mxu0
    %v7655 = vadd.f32 0.0, %v7654
    %v7656 = vpop.f32.mrb[0].mxu0
    %v7657 = vadd.f32 0.0, %v7656
    %v7658 = vpop.f32.mrb[0].mxu0
    %v7659 = vpop.f32.mrb[0].mxu0
    %7660 = vdwg.mxu0
    %7661 = vmatprep.subr.bf16.mxu0 %v7559
    %7662 = vmatpush1.bf16.msra.mxu0 %v7558
    %7663 = vmatprep.subr.bf16.mxu0 %v7563
    %7664 = vmatpush1.bf16.msra.mxu0 %v7562
    %7665 = vmatprep.subr.bf16.mxu0 %v7567
    %7666 = vmatpush1.bf16.msra.mxu0 %v7566
    %7667 = vmatprep.subr.bf16.mxu0 %v7571
    %7668 = vmatpush1.bf16.msra.mxu0 %v7570
    %7669 = vmatprep.subr.bf16.mxu0 %v7575
    %7670 = vmatpush1.bf16.msra.mxu0 %v7574
    %7671 = vmatprep.subr.bf16.mxu0 %v7579
    %7672 = vmatpush1.bf16.msra.mxu0 %v7578
    %7673 = vmatprep.subr.bf16.mxu0 %v7583
    %7674 = vmatpush1.bf16.msra.mxu0 %v7582
    %7675 = vmatprep.subr.bf16.mxu0 %v7587
    %7676 = vmatpush1.bf16.msra.mxu0 %v7586
    %7677 = vmatprep.subr.bf16.mxu0 0
    %7678 = vmatpush1.bf16.msra.mxu0 0
    %7679 = vmatprep.subr.bf16.mxu0 0
    %7680 = vmatpush1.bf16.msra.mxu0 0
    %7681 = vmatprep.subr.bf16.mxu0 0
    %7682 = vmatpush1.bf16.msra.mxu0 0
    %7683 = vmatprep.subr.bf16.mxu0 0
    %7684 = vmatpush1.bf16.msra.mxu0 0
    %7685 = vmatprep.subr.bf16.mxu0 0
    %7686 = vmatpush1.bf16.msra.mxu0 0
    %7687 = vmatprep.subr.bf16.mxu0 0
    %7688 = vmatpush1.bf16.msra.mxu0 0
    %7689 = vmatprep.subr.bf16.mxu0 0
    %7690 = vmatpush1.bf16.msra.mxu0 0
    %7691 = vmatprep.subr.bf16.mxu0 0
    %7692 = vmatpush1.bf16.msra.mxu0 0
    %7693 = vmatprep.mubr.bf16.mxu0 0
    %7694 = vmatmul.mubr.bf16.gmra.mrb[0].mxu0 %v7458
    %v7695 = vpop.f32.mrb[0].mxu0
    %v7696 = vadd.f32 0.0, %v7695
    %v7697 = vpop.f32.mrb[0].mxu0
    %v7698 = vadd.f32 0.0, %v7697
    %v7699 = vpop.f32.mrb[0].mxu0
    %v7700 = vpop.f32.mrb[0].mxu0
    %7701 = vdwg.mxu0
    %v7734 = vunpack.c.l.b16 %v7392
    %v7735 = vunpack.c.h.b16 %v7392
    %v7736 = vunpack.c.l.b16 %v7393
    %v7737 = vunpack.c.h.b16 %v7393
    %v7738 = vunpack.c.l.b16 %v7394
    %v7739 = vunpack.c.h.b16 %v7394
    %v7740 = vunpack.c.l.b16 %v7395
    %v7741 = vunpack.c.h.b16 %v7395
    %v7742 = vunpack.c.l.b16 %v7396
    %v7743 = vunpack.c.h.b16 %v7396
    %v7744 = vunpack.c.l.b16 %v7397
    %v7745 = vunpack.c.h.b16 %v7397
    %v7746 = vunpack.c.l.b16 %v7398
    %v7747 = vunpack.c.h.b16 %v7398
    %v7748 = vunpack.c.l.b16 %v7399
    %v7749 = vunpack.c.h.b16 %v7399
    %v7750 = vunpack.c.l.b16 %v7400
    %v7751 = vunpack.c.h.b16 %v7400
    %v7752 = vunpack.c.l.b16 %v7401
    %v7753 = vunpack.c.h.b16 %v7401
    %v7754 = vunpack.c.l.b16 %v7402
    %v7755 = vunpack.c.h.b16 %v7402
    %v7756 = vunpack.c.l.b16 %v7403
    %v7757 = vunpack.c.h.b16 %v7403
    %v7758 = vunpack.c.l.b16 %v7404
    %v7759 = vunpack.c.h.b16 %v7404
    %v7760 = vunpack.c.l.b16 %v7405
    %v7761 = vunpack.c.h.b16 %v7405
    %v7762 = vunpack.c.l.b16 %v7406
    %v7763 = vunpack.c.h.b16 %v7406
    %v7764 = vunpack.c.l.b16 %v7407
    %v7765 = vunpack.c.h.b16 %v7407
    %v7766 = vunpack.c.l.b16 %v7408
    %v7767 = vunpack.c.h.b16 %v7408
    %v7768 = vunpack.c.l.b16 %v7409
    %v7769 = vunpack.c.h.b16 %v7409
    %v7770 = vunpack.c.l.b16 %v7410
    %v7771 = vunpack.c.h.b16 %v7410
    %v7772 = vunpack.c.l.b16 %v7411
    %v7773 = vunpack.c.h.b16 %v7411
    %v7774 = vunpack.c.l.b16 %v7412
    %v7775 = vunpack.c.h.b16 %v7412
    %v7776 = vunpack.c.l.b16 %v7413
    %v7777 = vunpack.c.h.b16 %v7413
    %v7778 = vunpack.c.l.b16 %v7414
    %v7779 = vunpack.c.h.b16 %v7414
    %v7780 = vunpack.c.l.b16 %v7415
    %v7781 = vunpack.c.h.b16 %v7415
    %v7782 = vunpack.c.l.b16 %v7416
    %v7783 = vunpack.c.h.b16 %v7416
    %v7784 = vunpack.c.l.b16 %v7417
    %v7785 = vunpack.c.h.b16 %v7417
    %v7786 = vunpack.c.l.b16 %v7418
    %v7787 = vunpack.c.h.b16 %v7418
    %v7788 = vunpack.c.l.b16 %v7419
    %v7789 = vunpack.c.h.b16 %v7419
    %v7790 = vunpack.c.l.b16 %v7420
    %v7791 = vunpack.c.h.b16 %v7420
    %v7792 = vunpack.c.l.b16 %v7421
    %v7793 = vunpack.c.h.b16 %v7421
    %v7794 = vunpack.c.l.b16 %v7422
    %v7795 = vunpack.c.h.b16 %v7422
    %v7796 = vunpack.c.l.b16 %v7423
    %v7797 = vunpack.c.h.b16 %v7423
    %v7798 = vpack.c.b16 %v7738, %v7734
    %v7799 = vpack.c.b16 %v7739, %v7735
    %v7800 = vpack.c.b16 %v7740, %v7736
    %v7801 = vpack.c.b16 %v7741, %v7737
    %v7802 = vpack.c.b16 %v7746, %v7742
    %v7803 = vpack.c.b16 %v7747, %v7743
    %v7804 = vpack.c.b16 %v7748, %v7744
    %v7805 = vpack.c.b16 %v7749, %v7745
    %v7806 = vpack.c.b16 %v7754, %v7750
    %v7807 = vpack.c.b16 %v7755, %v7751
    %v7808 = vpack.c.b16 %v7756, %v7752
    %v7809 = vpack.c.b16 %v7757, %v7753
    %v7810 = vpack.c.b16 %v7762, %v7758
    %v7811 = vpack.c.b16 %v7763, %v7759
    %v7812 = vpack.c.b16 %v7764, %v7760
    %v7813 = vpack.c.b16 %v7765, %v7761
    %v7814 = vpack.c.b16 %v7770, %v7766
    %v7815 = vpack.c.b16 %v7771, %v7767
    %v7816 = vpack.c.b16 %v7772, %v7768
    %v7817 = vpack.c.b16 %v7773, %v7769
    %v7818 = vpack.c.b16 %v7778, %v7774
    %v7819 = vpack.c.b16 %v7779, %v7775
    %v7820 = vpack.c.b16 %v7780, %v7776
    %v7821 = vpack.c.b16 %v7781, %v7777
    %v7822 = vpack.c.b16 %v7786, %v7782
    %v7823 = vpack.c.b16 %v7787, %v7783
    %v7824 = vpack.c.b16 %v7788, %v7784
    %v7825 = vpack.c.b16 %v7789, %v7785
    %v7826 = vpack.c.b16 %v7794, %v7790
    %v7827 = vpack.c.b16 %v7795, %v7791
    %v7828 = vpack.c.b16 %v7796, %v7792
    %v7829 = vpack.c.b16 %v7797, %v7793
    %7862 = vmatprep.subr.bf16.mxu0 %v7799
    %7863 = vmatpush1.bf16.msra.mxu0 %v7798
    %7864 = vmatprep.subr.bf16.mxu0 %v7803
    %7865 = vmatpush1.bf16.msra.mxu0 %v7802
    %7866 = vmatprep.subr.bf16.mxu0 %v7807
    %7867 = vmatpush1.bf16.msra.mxu0 %v7806
    %7868 = vmatprep.subr.bf16.mxu0 %v7811
    %7869 = vmatpush1.bf16.msra.mxu0 %v7810
    %7870 = vmatprep.subr.bf16.mxu0 %v7815
    %7871 = vmatpush1.bf16.msra.mxu0 %v7814
    %7872 = vmatprep.subr.bf16.mxu0 %v7819
    %7873 = vmatpush1.bf16.msra.mxu0 %v7818
    %7874 = vmatprep.subr.bf16.mxu0 %v7823
    %7875 = vmatpush1.bf16.msra.mxu0 %v7822
    %7876 = vmatprep.subr.bf16.mxu0 %v7827
    %7877 = vmatpush1.bf16.msra.mxu0 %v7826
    %7878 = vmatprep.subr.bf16.mxu0 0
    %7879 = vmatpush1.bf16.msra.mxu0 0
    %7880 = vmatprep.subr.bf16.mxu0 0
    %7881 = vmatpush1.bf16.msra.mxu0 0
    %7882 = vmatprep.subr.bf16.mxu0 0
    %7883 = vmatpush1.bf16.msra.mxu0 0
    %7884 = vmatprep.subr.bf16.mxu0 0
    %7885 = vmatpush1.bf16.msra.mxu0 0
    %7886 = vmatprep.subr.bf16.mxu0 0
    %7887 = vmatpush1.bf16.msra.mxu0 0
    %7888 = vmatprep.subr.bf16.mxu0 0
    %7889 = vmatpush1.bf16.msra.mxu0 0
    %7890 = vmatprep.subr.bf16.mxu0 0
    %7891 = vmatpush1.bf16.msra.mxu0 0
    %7892 = vmatprep.subr.bf16.mxu0 0
    %7893 = vmatpush1.bf16.msra.mxu0 0
    %7894 = vmatprep.mubr.bf16.mxu0 0
    %7895 = vmatmul.mubr.bf16.gmra.mrb[0].mxu0 %v7391
    %v7896 = vpop.f32.mrb[0].mxu0
    %v7897 = vadd.f32 %v7655, %v7896
    %v7898 = vpop.f32.mrb[0].mxu0
    %v7899 = vadd.f32 %v7657, %v7898
    %v7900 = vpop.f32.mrb[0].mxu0
    %v7901 = vpop.f32.mrb[0].mxu0
    %7902 = vdwg.mxu0
    %7903 = vmatprep.subr.bf16.mxu0 %v7801
    %7904 = vmatpush1.bf16.msra.mxu0 %v7800
    %7905 = vmatprep.subr.bf16.mxu0 %v7805
    %7906 = vmatpush1.bf16.msra.mxu0 %v7804
    %7907 = vmatprep.subr.bf16.mxu0 %v7809
    %7908 = vmatpush1.bf16.msra.mxu0 %v7808
    %7909 = vmatprep.subr.bf16.mxu0 %v7813
    %7910 = vmatpush1.bf16.msra.mxu0 %v7812
    %7911 = vmatprep.subr.bf16.mxu0 %v7817
    %7912 = vmatpush1.bf16.msra.mxu0 %v7816
    %7913 = vmatprep.subr.bf16.mxu0 %v7821
    %7914 = vmatpush1.bf16.msra.mxu0 %v7820
    %7915 = vmatprep.subr.bf16.mxu0 %v7825
    %7916 = vmatpush1.bf16.msra.mxu0 %v7824
    %7917 = vmatprep.subr.bf16.mxu0 %v7829
    %7918 = vmatpush1.bf16.msra.mxu0 %v7828
    %7919 = vmatprep.subr.bf16.mxu0 0
    %7920 = vmatpush1.bf16.msra.mxu0 0
    %7921 = vmatprep.subr.bf16.mxu0 0
    %7922 = vmatpush1.bf16.msra.mxu0 0
    %7923 = vmatprep.subr.bf16.mxu0 0
    %7924 = vmatpush1.bf16.msra.mxu0 0
    %7925 = vmatprep.subr.bf16.mxu0 0
    %7926 = vmatpush1.bf16.msra.mxu0 0
    %7927 = vmatprep.subr.bf16.mxu0 0
    %7928 = vmatpush1.bf16.msra.mxu0 0
    %7929 = vmatprep.subr.bf16.mxu0 0
    %7930 = vmatpush1.bf16.msra.mxu0 0
    %7931 = vmatprep.subr.bf16.mxu0 0
    %7932 = vmatpush1.bf16.msra.mxu0 0
    %7933 = vmatprep.subr.bf16.mxu0 0
    %7934 = vmatpush1.bf16.msra.mxu0 0
    %7935 = vmatprep.mubr.bf16.mxu0 0
    %7936 = vmatmul.mubr.bf16.gmra.mrb[0].mxu0 %v7391
    %v7937 = vpop.f32.mrb[0].mxu0
    %v7938 = vadd.f32 %v7696, %v7937
    %v7939 = vpop.f32.mrb[0].mxu0
    %v7940 = vadd.f32 %v7698, %v7939
    %v7941 = vpop.f32.mrb[0].mxu0
    %v7942 = vpop.f32.mrb[0].mxu0
    %7943 = vdwg.mxu0
    %v7944 = vpack.c.bf16 %v7373, %v7373
    %s7945 = scalar_lea.vmem [#allocation15], 512
    %v7946 = vld [vmem:[%s7945] sm:$0xff]
    %v7947 = vld [vmem:[%s7945 + $0x8] sm:$0xff]
    %v7948 = vld [vmem:[%s7945 + $0x10] sm:$0xff]
    %v7949 = vld [vmem:[%s7945 + $0x18] sm:$0xff]
    %v7950 = vld [vmem:[%s7945 + $0x20] sm:$0xff]
    %v7951 = vld [vmem:[%s7945 + $0x28] sm:$0xff]
    %v7952 = vld [vmem:[%s7945 + $0x30] sm:$0xff]
    %v7953 = vld [vmem:[%s7945 + $0x38] sm:$0xff]
    %v7954 = vld [vmem:[%s7945 + $0x40] sm:$0xff]
    %v7955 = vld [vmem:[%s7945 + $0x48] sm:$0xff]
    %v7956 = vld [vmem:[%s7945 + $0x50] sm:$0xff]
    %v7957 = vld [vmem:[%s7945 + $0x58] sm:$0xff]
    %v7958 = vld [vmem:[%s7945 + $0x60] sm:$0xff]
    %v7959 = vld [vmem:[%s7945 + $0x68] sm:$0xff]
    %v7960 = vld [vmem:[%s7945 + $0x70] sm:$0xff]
    %v7961 = vld [vmem:[%s7945 + $0x78] sm:$0xff]
    %v7962 = vld [vmem:[%s7945 + $0x80] sm:$0xff]
    %v7963 = vld [vmem:[%s7945 + $0x88] sm:$0xff]
    %v7964 = vld [vmem:[%s7945 + $0x90] sm:$0xff]
    %v7965 = vld [vmem:[%s7945 + $0x98] sm:$0xff]
    %v7966 = vld [vmem:[%s7945 + $0xa0] sm:$0xff]
    %v7967 = vld [vmem:[%s7945 + $0xa8] sm:$0xff]
    %v7968 = vld [vmem:[%s7945 + $0xb0] sm:$0xff]
    %v7969 = vld [vmem:[%s7945 + $0xb8] sm:$0xff]
    %v7970 = vld [vmem:[%s7945 + $0xc0] sm:$0xff]
    %v7971 = vld [vmem:[%s7945 + $0xc8] sm:$0xff]
    %v7972 = vld [vmem:[%s7945 + $0xd0] sm:$0xff]
    %v7973 = vld [vmem:[%s7945 + $0xd8] sm:$0xff]
    %v7974 = vld [vmem:[%s7945 + $0xe0] sm:$0xff]
    %v7975 = vld [vmem:[%s7945 + $0xe8] sm:$0xff]
    %v7976 = vld [vmem:[%s7945 + $0xf0] sm:$0xff]
    %v7977 = vld [vmem:[%s7945 + $0xf8] sm:$0xff]
    %v8010 = vunpack.c.l.b16 %v7946
    %v8011 = vunpack.c.h.b16 %v7946
    %v8012 = vunpack.c.l.b16 %v7947
    %v8013 = vunpack.c.h.b16 %v7947
    %v8014 = vunpack.c.l.b16 %v7948
    %v8015 = vunpack.c.h.b16 %v7948
    %v8016 = vunpack.c.l.b16 %v7949
    %v8017 = vunpack.c.h.b16 %v7949
    %v8018 = vunpack.c.l.b16 %v7950
    %v8019 = vunpack.c.h.b16 %v7950
    %v8020 = vunpack.c.l.b16 %v7951
    %v8021 = vunpack.c.h.b16 %v7951
    %v8022 = vunpack.c.l.b16 %v7952
    %v8023 = vunpack.c.h.b16 %v7952
    %v8024 = vunpack.c.l.b16 %v7953
    %v8025 = vunpack.c.h.b16 %v7953
    %v8026 = vunpack.c.l.b16 %v7954
    %v8027 = vunpack.c.h.b16 %v7954
    %v8028 = vunpack.c.l.b16 %v7955
    %v8029 = vunpack.c.h.b16 %v7955
    %v8030 = vunpack.c.l.b16 %v7956
    %v8031 = vunpack.c.h.b16 %v7956
    %v8032 = vunpack.c.l.b16 %v7957
    %v8033 = vunpack.c.h.b16 %v7957
    %v8034 = vunpack.c.l.b16 %v7958
    %v8035 = vunpack.c.h.b16 %v7958
    %v8036 = vunpack.c.l.b16 %v7959
    %v8037 = vunpack.c.h.b16 %v7959
    %v8038 = vunpack.c.l.b16 %v7960
    %v8039 = vunpack.c.h.b16 %v7960
    %v8040 = vunpack.c.l.b16 %v7961
    %v8041 = vunpack.c.h.b16 %v7961
    %v8042 = vunpack.c.l.b16 %v7962
    %v8043 = vunpack.c.h.b16 %v7962
    %v8044 = vunpack.c.l.b16 %v7963
    %v8045 = vunpack.c.h.b16 %v7963
    %v8046 = vunpack.c.l.b16 %v7964
    %v8047 = vunpack.c.h.b16 %v7964
    %v8048 = vunpack.c.l.b16 %v7965
    %v8049 = vunpack.c.h.b16 %v7965
    %v8050 = vunpack.c.l.b16 %v7966
    %v8051 = vunpack.c.h.b16 %v7966
    %v8052 = vunpack.c.l.b16 %v7967
    %v8053 = vunpack.c.h.b16 %v7967
    %v8054 = vunpack.c.l.b16 %v7968
    %v8055 = vunpack.c.h.b16 %v7968
    %v8056 = vunpack.c.l.b16 %v7969
    %v8057 = vunpack.c.h.b16 %v7969
    %v8058 = vunpack.c.l.b16 %v7970
    %v8059 = vunpack.c.h.b16 %v7970
    %v8060 = vunpack.c.l.b16 %v7971
    %v8061 = vunpack.c.h.b16 %v7971
    %v8062 = vunpack.c.l.b16 %v7972
    %v8063 = vunpack.c.h.b16 %v7972
    %v8064 = vunpack.c.l.b16 %v7973
    %v8065 = vunpack.c.h.b16 %v7973
    %v8066 = vunpack.c.l.b16 %v7974
    %v8067 = vunpack.c.h.b16 %v7974
    %v8068 = vunpack.c.l.b16 %v7975
    %v8069 = vunpack.c.h.b16 %v7975
    %v8070 = vunpack.c.l.b16 %v7976
    %v8071 = vunpack.c.h.b16 %v7976
    %v8072 = vunpack.c.l.b16 %v7977
    %v8073 = vunpack.c.h.b16 %v7977
    %v8074 = vpack.c.b16 %v8014, %v8010
    %v8075 = vpack.c.b16 %v8015, %v8011
    %v8076 = vpack.c.b16 %v8016, %v8012
    %v8077 = vpack.c.b16 %v8017, %v8013
    %v8078 = vpack.c.b16 %v8022, %v8018
    %v8079 = vpack.c.b16 %v8023, %v8019
    %v8080 = vpack.c.b16 %v8024, %v8020
    %v8081 = vpack.c.b16 %v8025, %v8021
    %v8082 = vpack.c.b16 %v8030, %v8026
    %v8083 = vpack.c.b16 %v8031, %v8027
    %v8084 = vpack.c.b16 %v8032, %v8028
    %v8085 = vpack.c.b16 %v8033, %v8029
    %v8086 = vpack.c.b16 %v8038, %v8034
    %v8087 = vpack.c.b16 %v8039, %v8035
    %v8088 = vpack.c.b16 %v8040, %v8036
    %v8089 = vpack.c.b16 %v8041, %v8037
    %v8090 = vpack.c.b16 %v8046, %v8042
    %v8091 = vpack.c.b16 %v8047, %v8043
    %v8092 = vpack.c.b16 %v8048, %v8044
    %v8093 = vpack.c.b16 %v8049, %v8045
    %v8094 = vpack.c.b16 %v8054, %v8050
    %v8095 = vpack.c.b16 %v8055, %v8051
    %v8096 = vpack.c.b16 %v8056, %v8052
    %v8097 = vpack.c.b16 %v8057, %v8053
    %v8098 = vpack.c.b16 %v8062, %v8058
    %v8099 = vpack.c.b16 %v8063, %v8059
    %v8100 = vpack.c.b16 %v8064, %v8060
    %v8101 = vpack.c.b16 %v8065, %v8061
    %v8102 = vpack.c.b16 %v8070, %v8066
    %v8103 = vpack.c.b16 %v8071, %v8067
    %v8104 = vpack.c.b16 %v8072, %v8068
    %v8105 = vpack.c.b16 %v8073, %v8069
    %8138 = vmatprep.subr.bf16.mxu0 %v8075
    %8139 = vmatpush1.bf16.msra.mxu0 %v8074
    %8140 = vmatprep.subr.bf16.mxu0 %v8079
    %8141 = vmatpush1.bf16.msra.mxu0 %v8078
    %8142 = vmatprep.subr.bf16.mxu0 %v8083
    %8143 = vmatpush1.bf16.msra.mxu0 %v8082
    %8144 = vmatprep.subr.bf16.mxu0 %v8087
    %8145 = vmatpush1.bf16.msra.mxu0 %v8086
    %8146 = vmatprep.subr.bf16.mxu0 %v8091
    %8147 = vmatpush1.bf16.msra.mxu0 %v8090
    %8148 = vmatprep.subr.bf16.mxu0 %v8095
    %8149 = vmatpush1.bf16.msra.mxu0 %v8094
    %8150 = vmatprep.subr.bf16.mxu0 %v8099
    %8151 = vmatpush1.bf16.msra.mxu0 %v8098
    %8152 = vmatprep.subr.bf16.mxu0 %v8103
    %8153 = vmatpush1.bf16.msra.mxu0 %v8102
    %8154 = vmatprep.subr.bf16.mxu0 0
    %8155 = vmatpush1.bf16.msra.mxu0 0
    %8156 = vmatprep.subr.bf16.mxu0 0
    %8157 = vmatpush1.bf16.msra.mxu0 0
    %8158 = vmatprep.subr.bf16.mxu0 0
    %8159 = vmatpush1.bf16.msra.mxu0 0
    %8160 = vmatprep.subr.bf16.mxu0 0
    %8161 = vmatpush1.bf16.msra.mxu0 0
    %8162 = vmatprep.subr.bf16.mxu0 0
    %8163 = vmatpush1.bf16.msra.mxu0 0
    %8164 = vmatprep.subr.bf16.mxu0 0
    %8165 = vmatpush1.bf16.msra.mxu0 0
    %8166 = vmatprep.subr.bf16.mxu0 0
    %8167 = vmatpush1.bf16.msra.mxu0 0
    %8168 = vmatprep.subr.bf16.mxu0 0
    %8169 = vmatpush1.bf16.msra.mxu0 0
    %8170 = vmatprep.mubr.bf16.mxu0 0
    %8171 = vmatmul.mubr.bf16.gmra.mrb[0].mxu0 %v7944
    %v8172 = vpop.f32.mrb[0].mxu0
    %v8173 = vadd.f32 0.0, %v8172
    %v8174 = vpop.f32.mrb[0].mxu0
    %v8175 = vadd.f32 0.0, %v8174
    %v8176 = vpop.f32.mrb[0].mxu0
    %v8177 = vpop.f32.mrb[0].mxu0
    %8178 = vdwg.mxu0
    %8179 = vmatprep.subr.bf16.mxu0 %v8077
    %8180 = vmatpush1.bf16.msra.mxu0 %v8076
    %8181 = vmatprep.subr.bf16.mxu0 %v8081
    %8182 = vmatpush1.bf16.msra.mxu0 %v8080
    %8183 = vmatprep.subr.bf16.mxu0 %v8085
    %8184 = vmatpush1.bf16.msra.mxu0 %v8084
    %8185 = vmatprep.subr.bf16.mxu0 %v8089
    %8186 = vmatpush1.bf16.msra.mxu0 %v8088
    %8187 = vmatprep.subr.bf16.mxu0 %v8093
    %8188 = vmatpush1.bf16.msra.mxu0 %v8092
    %8189 = vmatprep.subr.bf16.mxu0 %v8097
    %8190 = vmatpush1.bf16.msra.mxu0 %v8096
    %8191 = vmatprep.subr.bf16.mxu0 %v8101
    %8192 = vmatpush1.bf16.msra.mxu0 %v8100
    %8193 = vmatprep.subr.bf16.mxu0 %v8105
    %8194 = vmatpush1.bf16.msra.mxu0 %v8104
    %8195 = vmatprep.subr.bf16.mxu0 0
    %8196 = vmatpush1.bf16.msra.mxu0 0
    %8197 = vmatprep.subr.bf16.mxu0 0
    %8198 = vmatpush1.bf16.msra.mxu0 0
    %8199 = vmatprep.subr.bf16.mxu0 0
    %8200 = vmatpush1.bf16.msra.mxu0 0
    %8201 = vmatprep.subr.bf16.mxu0 0
    %8202 = vmatpush1.bf16.msra.mxu0 0
    %8203 = vmatprep.subr.bf16.mxu0 0
    %8204 = vmatpush1.bf16.msra.mxu0 0
    %8205 = vmatprep.subr.bf16.mxu0 0
    %8206 = vmatpush1.bf16.msra.mxu0 0
    %8207 = vmatprep.subr.bf16.mxu0 0
    %8208 = vmatpush1.bf16.msra.mxu0 0
    %8209 = vmatprep.subr.bf16.mxu0 0
    %8210 = vmatpush1.bf16.msra.mxu0 0
    %8211 = vmatprep.mubr.bf16.mxu0 0
    %8212 = vmatmul.mubr.bf16.gmra.mrb[0].mxu0 %v7944
    %v8213 = vpop.f32.mrb[0].mxu0
    %v8214 = vadd.f32 0.0, %v8213
    %v8215 = vpop.f32.mrb[0].mxu0
    %v8216 = vadd.f32 0.0, %v8215
    %v8217 = vpop.f32.mrb[0].mxu0
    %v8218 = vpop.f32.mrb[0].mxu0
    %8219 = vdwg.mxu0
    %v8220 = vadd.f32 %v7897, %v8173
    %v8221 = vadd.f32 %v7899, %v8175
    %v8222 = vadd.f32 %v7938, %v8214
    %v8223 = vadd.f32 %v7940, %v8216
    %s8224 = scalar_lea.vmem [#allocation15], 768
    %v8225 = vld [vmem:[%s8224] sm:$0xff]
    %v8226 = vld [vmem:[%s8224 + $0x8] sm:$0xff]
    %v8227 = vld [vmem:[%s8224 + $0x10] sm:$0xff]
    %v8228 = vld [vmem:[%s8224 + $0x18] sm:$0xff]
    %v8229 = vld [vmem:[%s8224 + $0x20] sm:$0xff]
    %v8230 = vld [vmem:[%s8224 + $0x28] sm:$0xff]
    %v8231 = vld [vmem:[%s8224 + $0x30] sm:$0xff]
    %v8232 = vld [vmem:[%s8224 + $0x38] sm:$0xff]
    %v8233 = vld [vmem:[%s8224 + $0x40] sm:$0xff]
    %v8234 = vld [vmem:[%s8224 + $0x48] sm:$0xff]
    %v8235 = vld [vmem:[%s8224 + $0x50] sm:$0xff]
    %v8236 = vld [vmem:[%s8224 + $0x58] sm:$0xff]
    %v8237 = vld [vmem:[%s8224 + $0x60] sm:$0xff]
    %v8238 = vld [vmem:[%s8224 + $0x68] sm:$0xff]
    %v8239 = vld [vmem:[%s8224 + $0x70] sm:$0xff]
    %v8240 = vld [vmem:[%s8224 + $0x78] sm:$0xff]
    %v8241 = vld [vmem:[%s8224 + $0x80] sm:$0xff]
    %v8242 = vld [vmem:[%s8224 + $0x88] sm:$0xff]
    %v8243 = vld [vmem:[%s8224 + $0x90] sm:$0xff]
    %v8244 = vld [vmem:[%s8224 + $0x98] sm:$0xff]
    %v8245 = vld [vmem:[%s8224 + $0xa0] sm:$0xff]
    %v8246 = vld [vmem:[%s8224 + $0xa8] sm:$0xff]
    %v8247 = vld [vmem:[%s8224 + $0xb0] sm:$0xff]
    %v8248 = vld [vmem:[%s8224 + $0xb8] sm:$0xff]
    %v8249 = vld [vmem:[%s8224 + $0xc0] sm:$0xff]
    %v8250 = vld [vmem:[%s8224 + $0xc8] sm:$0xff]
    %v8251 = vld [vmem:[%s8224 + $0xd0] sm:$0xff]
    %v8252 = vld [vmem:[%s8224 + $0xd8] sm:$0xff]
    %v8253 = vld [vmem:[%s8224 + $0xe0] sm:$0xff]
    %v8254 = vld [vmem:[%s8224 + $0xe8] sm:$0xff]
    %v8255 = vld [vmem:[%s8224 + $0xf0] sm:$0xff]
    %v8256 = vld [vmem:[%s8224 + $0xf8] sm:$0xff]
    %v8258 = vrot.slane %v7944, 2
    %v8292 = vunpack.c.l.b16 %v8225
    %v8293 = vunpack.c.h.b16 %v8225
    %v8294 = vunpack.c.l.b16 %v8226
    %v8295 = vunpack.c.h.b16 %v8226
    %v8296 = vunpack.c.l.b16 %v8227
    %v8297 = vunpack.c.h.b16 %v8227
    %v8298 = vunpack.c.l.b16 %v8228
    %v8299 = vunpack.c.h.b16 %v8228
    %v8300 = vunpack.c.l.b16 %v8229
    %v8301 = vunpack.c.h.b16 %v8229
    %v8302 = vunpack.c.l.b16 %v8230
    %v8303 = vunpack.c.h.b16 %v8230
    %v8304 = vunpack.c.l.b16 %v8231
    %v8305 = vunpack.c.h.b16 %v8231
    %v8306 = vunpack.c.l.b16 %v8232
    %v8307 = vunpack.c.h.b16 %v8232
    %v8308 = vunpack.c.l.b16 %v8233
    %v8309 = vunpack.c.h.b16 %v8233
    %v8310 = vunpack.c.l.b16 %v8234
    %v8311 = vunpack.c.h.b16 %v8234
    %v8312 = vunpack.c.l.b16 %v8235
    %v8313 = vunpack.c.h.b16 %v8235
    %v8314 = vunpack.c.l.b16 %v8236
    %v8315 = vunpack.c.h.b16 %v8236
    %v8316 = vunpack.c.l.b16 %v8237
    %v8317 = vunpack.c.h.b16 %v8237
    %v8318 = vunpack.c.l.b16 %v8238
    %v8319 = vunpack.c.h.b16 %v8238
    %v8320 = vunpack.c.l.b16 %v8239
    %v8321 = vunpack.c.h.b16 %v8239
    %v8322 = vunpack.c.l.b16 %v8240
    %v8323 = vunpack.c.h.b16 %v8240
    %v8324 = vunpack.c.l.b16 %v8241
    %v8325 = vunpack.c.h.b16 %v8241
    %v8326 = vunpack.c.l.b16 %v8242
    %v8327 = vunpack.c.h.b16 %v8242
    %v8328 = vunpack.c.l.b16 %v8243
    %v8329 = vunpack.c.h.b16 %v8243
    %v8330 = vunpack.c.l.b16 %v8244
    %v8331 = vunpack.c.h.b16 %v8244
    %v8332 = vunpack.c.l.b16 %v8245
    %v8333 = vunpack.c.h.b16 %v8245
    %v8334 = vunpack.c.l.b16 %v8246
    %v8335 = vunpack.c.h.b16 %v8246
    %v8336 = vunpack.c.l.b16 %v8247
    %v8337 = vunpack.c.h.b16 %v8247
    %v8338 = vunpack.c.l.b16 %v8248
    %v8339 = vunpack.c.h.b16 %v8248
    %v8340 = vunpack.c.l.b16 %v8249
    %v8341 = vunpack.c.h.b16 %v8249
    %v8342 = vunpack.c.l.b16 %v8250
    %v8343 = vunpack.c.h.b16 %v8250
    %v8344 = vunpack.c.l.b16 %v8251
    %v8345 = vunpack.c.h.b16 %v8251
    %v8346 = vunpack.c.l.b16 %v8252
    %v8347 = vunpack.c.h.b16 %v8252
    %v8348 = vunpack.c.l.b16 %v8253
    %v8349 = vunpack.c.h.b16 %v8253
    %v8350 = vunpack.c.l.b16 %v8254
    %v8351 = vunpack.c.h.b16 %v8254
    %v8352 = vunpack.c.l.b16 %v8255
    %v8353 = vunpack.c.h.b16 %v8255
    %v8354 = vunpack.c.l.b16 %v8256
    %v8355 = vunpack.c.h.b16 %v8256
    %v8356 = vpack.c.b16 %v8296, %v8292
    %v8357 = vpack.c.b16 %v8297, %v8293
    %v8358 = vpack.c.b16 %v8298, %v8294
    %v8359 = vpack.c.b16 %v8299, %v8295
    %v8360 = vpack.c.b16 %v8304, %v8300
    %v8361 = vpack.c.b16 %v8305, %v8301
    %v8362 = vpack.c.b16 %v8306, %v8302
    %v8363 = vpack.c.b16 %v8307, %v8303
    %v8364 = vpack.c.b16 %v8312, %v8308
    %v8365 = vpack.c.b16 %v8313, %v8309
    %v8366 = vpack.c.b16 %v8314, %v8310
    %v8367 = vpack.c.b16 %v8315, %v8311
    %v8368 = vpack.c.b16 %v8320, %v8316
    %v8369 = vpack.c.b16 %v8321, %v8317
    %v8370 = vpack.c.b16 %v8322, %v8318
    %v8371 = vpack.c.b16 %v8323, %v8319
    %v8372 = vpack.c.b16 %v8328, %v8324
    %v8373 = vpack.c.b16 %v8329, %v8325
    %v8374 = vpack.c.b16 %v8330, %v8326
    %v8375 = vpack.c.b16 %v8331, %v8327
    %v8376 = vpack.c.b16 %v8336, %v8332
    %v8377 = vpack.c.b16 %v8337, %v8333
    %v8378 = vpack.c.b16 %v8338, %v8334
    %v8379 = vpack.c.b16 %v8339, %v8335
    %v8380 = vpack.c.b16 %v8344, %v8340
    %v8381 = vpack.c.b16 %v8345, %v8341
    %v8382 = vpack.c.b16 %v8346, %v8342
    %v8383 = vpack.c.b16 %v8347, %v8343
    %v8384 = vpack.c.b16 %v8352, %v8348
    %v8385 = vpack.c.b16 %v8353, %v8349
    %v8386 = vpack.c.b16 %v8354, %v8350
    %v8387 = vpack.c.b16 %v8355, %v8351
    %8420 = vmatprep.subr.bf16.mxu0 %v8357
    %8421 = vmatpush1.bf16.msra.mxu0 %v8356
    %8422 = vmatprep.subr.bf16.mxu0 %v8361
    %8423 = vmatpush1.bf16.msra.mxu0 %v8360
    %8424 = vmatprep.subr.bf16.mxu0 %v8365
    %8425 = vmatpush1.bf16.msra.mxu0 %v8364
    %8426 = vmatprep.subr.bf16.mxu0 %v8369
    %8427 = vmatpush1.bf16.msra.mxu0 %v8368
    %8428 = vmatprep.subr.bf16.mxu0 %v8373
    %8429 = vmatpush1.bf16.msra.mxu0 %v8372
    %8430 = vmatprep.subr.bf16.mxu0 %v8377
    %8431 = vmatpush1.bf16.msra.mxu0 %v8376
    %8432 = vmatprep.subr.bf16.mxu0 %v8381
    %8433 = vmatpush1.bf16.msra.mxu0 %v8380
    %8434 = vmatprep.subr.bf16.mxu0 %v8385
    %8435 = vmatpush1.bf16.msra.mxu0 %v8384
    %8436 = vmatprep.subr.bf16.mxu0 0
    %8437 = vmatpush1.bf16.msra.mxu0 0
    %8438 = vmatprep.subr.bf16.mxu0 0
    %8439 = vmatpush1.bf16.msra.mxu0 0
    %8440 = vmatprep.subr.bf16.mxu0 0
    %8441 = vmatpush1.bf16.msra.mxu0 0
    %8442 = vmatprep.subr.bf16.mxu0 0
    %8443 = vmatpush1.bf16.msra.mxu0 0
    %8444 = vmatprep.subr.bf16.mxu0 0
    %8445 = vmatpush1.bf16.msra.mxu0 0
    %8446 = vmatprep.subr.bf16.mxu0 0
    %8447 = vmatpush1.bf16.msra.mxu0 0
    %8448 = vmatprep.subr.bf16.mxu0 0
    %8449 = vmatpush1.bf16.msra.mxu0 0
    %8450 = vmatprep.subr.bf16.mxu0 0
    %8451 = vmatpush1.bf16.msra.mxu0 0
    %8452 = vmatprep.mubr.bf16.mxu0 0
    %8453 = vmatmul.mubr.bf16.gmra.mrb[0].mxu0 %v8258
    %v8454 = vpop.f32.mrb[0].mxu0
    %v8455 = vadd.f32 0.0, %v8454
    %v8456 = vpop.f32.mrb[0].mxu0
    %v8457 = vadd.f32 0.0, %v8456
    %v8458 = vpop.f32.mrb[0].mxu0
    %v8459 = vpop.f32.mrb[0].mxu0
    %8460 = vdwg.mxu0
    %8461 = vmatprep.subr.bf16.mxu0 %v8359
    %8462 = vmatpush1.bf16.msra.mxu0 %v8358
    %8463 = vmatprep.subr.bf16.mxu0 %v8363
    %8464 = vmatpush1.bf16.msra.mxu0 %v8362
    %8465 = vmatprep.subr.bf16.mxu0 %v8367
    %8466 = vmatpush1.bf16.msra.mxu0 %v8366
    %8467 = vmatprep.subr.bf16.mxu0 %v8371
    %8468 = vmatpush1.bf16.msra.mxu0 %v8370
    %8469 = vmatprep.subr.bf16.mxu0 %v8375
    %8470 = vmatpush1.bf16.msra.mxu0 %v8374
    %8471 = vmatprep.subr.bf16.mxu0 %v8379
    %8472 = vmatpush1.bf16.msra.mxu0 %v8378
    %8473 = vmatprep.subr.bf16.mxu0 %v8383
    %8474 = vmatpush1.bf16.msra.mxu0 %v8382
    %8475 = vmatprep.subr.bf16.mxu0 %v8387
    %8476 = vmatpush1.bf16.msra.mxu0 %v8386
    %8477 = vmatprep.subr.bf16.mxu0 0
    %8478 = vmatpush1.bf16.msra.mxu0 0
    %8479 = vmatprep.subr.bf16.mxu0 0
    %8480 = vmatpush1.bf16.msra.mxu0 0
    %8481 = vmatprep.subr.bf16.mxu0 0
    %8482 = vmatpush1.bf16.msra.mxu0 0
    %8483 = vmatprep.subr.bf16.mxu0 0
    %8484 = vmatpush1.bf16.msra.mxu0 0
    %8485 = vmatprep.subr.bf16.mxu0 0
    %8486 = vmatpush1.bf16.msra.mxu0 0
    %8487 = vmatprep.subr.bf16.mxu0 0
    %8488 = vmatpush1.bf16.msra.mxu0 0
    %8489 = vmatprep.subr.bf16.mxu0 0
    %8490 = vmatpush1.bf16.msra.mxu0 0
    %8491 = vmatprep.subr.bf16.mxu0 0
    %8492 = vmatpush1.bf16.msra.mxu0 0
    %8493 = vmatprep.mubr.bf16.mxu0 0
    %8494 = vmatmul.mubr.bf16.gmra.mrb[0].mxu0 %v8258
    %v8495 = vpop.f32.mrb[0].mxu0
    %v8496 = vadd.f32 0.0, %v8495
    %v8497 = vpop.f32.mrb[0].mxu0
    %v8498 = vadd.f32 0.0, %v8497
    %v8499 = vpop.f32.mrb[0].mxu0
    %v8500 = vpop.f32.mrb[0].mxu0
    %8501 = vdwg.mxu0
    %v8502 = vadd.f32 %v8220, %v8455
    %v8503 = vadd.f32 %v8221, %v8457
    %v8504 = vadd.f32 %v8222, %v8496
    %v8505 = vadd.f32 %v8223, %v8498
    %v8506 = vpack.c.bf16 %v7378, %v7378
    %s8507 = scalar_lea.vmem [#allocation15], 1024
    %v8508 = vld [vmem:[%s8507] sm:$0xff]
    %v8509 = vld [vmem:[%s8507 + $0x8] sm:$0xff]
    %v8510 = vld [vmem:[%s8507 + $0x10] sm:$0xff]
    %v8511 = vld [vmem:[%s8507 + $0x18] sm:$0xff]
    %v8512 = vld [vmem:[%s8507 + $0x20] sm:$0xff]
    %v8513 = vld [vmem:[%s8507 + $0x28] sm:$0xff]
    %v8514 = vld [vmem:[%s8507 + $0x30] sm:$0xff]
    %v8515 = vld [vmem:[%s8507 + $0x38] sm:$0xff]
    %v8516 = vld [vmem:[%s8507 + $0x40] sm:$0xff]
    %v8517 = vld [vmem:[%s8507 + $0x48] sm:$0xff]
    %v8518 = vld [vmem:[%s8507 + $0x50] sm:$0xff]
    %v8519 = vld [vmem:[%s8507 + $0x58] sm:$0xff]
    %v8520 = vld [vmem:[%s8507 + $0x60] sm:$0xff]
    %v8521 = vld [vmem:[%s8507 + $0x68] sm:$0xff]
    %v8522 = vld [vmem:[%s8507 + $0x70] sm:$0xff]
    %v8523 = vld [vmem:[%s8507 + $0x78] sm:$0xff]
    %v8524 = vld [vmem:[%s8507 + $0x80] sm:$0xff]
    %v8525 = vld [vmem:[%s8507 + $0x88] sm:$0xff]
    %v8526 = vld [vmem:[%s8507 + $0x90] sm:$0xff]
    %v8527 = vld [vmem:[%s8507 + $0x98] sm:$0xff]
    %v8528 = vld [vmem:[%s8507 + $0xa0] sm:$0xff]
    %v8529 = vld [vmem:[%s8507 + $0xa8] sm:$0xff]
    %v8530 = vld [vmem:[%s8507 + $0xb0] sm:$0xff]
    %v8531 = vld [vmem:[%s8507 + $0xb8] sm:$0xff]
    %v8532 = vld [vmem:[%s8507 + $0xc0] sm:$0xff]
    %v8533 = vld [vmem:[%s8507 + $0xc8] sm:$0xff]
    %v8534 = vld [vmem:[%s8507 + $0xd0] sm:$0xff]
    %v8535 = vld [vmem:[%s8507 + $0xd8] sm:$0xff]
    %v8536 = vld [vmem:[%s8507 + $0xe0] sm:$0xff]
    %v8537 = vld [vmem:[%s8507 + $0xe8] sm:$0xff]
    %v8538 = vld [vmem:[%s8507 + $0xf0] sm:$0xff]
    %v8539 = vld [vmem:[%s8507 + $0xf8] sm:$0xff]
    %v8572 = vunpack.c.l.b16 %v8508
    %v8573 = vunpack.c.h.b16 %v8508
    %v8574 = vunpack.c.l.b16 %v8509
    %v8575 = vunpack.c.h.b16 %v8509
    %v8576 = vunpack.c.l.b16 %v8510
    %v8577 = vunpack.c.h.b16 %v8510
    %v8578 = vunpack.c.l.b16 %v8511
    %v8579 = vunpack.c.h.b16 %v8511
    %v8580 = vunpack.c.l.b16 %v8512
    %v8581 = vunpack.c.h.b16 %v8512
    %v8582 = vunpack.c.l.b16 %v8513
    %v8583 = vunpack.c.h.b16 %v8513
    %v8584 = vunpack.c.l.b16 %v8514
    %v8585 = vunpack.c.h.b16 %v8514
    %v8586 = vunpack.c.l.b16 %v8515
    %v8587 = vunpack.c.h.b16 %v8515
    %v8588 = vunpack.c.l.b16 %v8516
    %v8589 = vunpack.c.h.b16 %v8516
    %v8590 = vunpack.c.l.b16 %v8517
    %v8591 = vunpack.c.h.b16 %v8517
    %v8592 = vunpack.c.l.b16 %v8518
    %v8593 = vunpack.c.h.b16 %v8518
    %v8594 = vunpack.c.l.b16 %v8519
    %v8595 = vunpack.c.h.b16 %v8519
    %v8596 = vunpack.c.l.b16 %v8520
    %v8597 = vunpack.c.h.b16 %v8520
    %v8598 = vunpack.c.l.b16 %v8521
    %v8599 = vunpack.c.h.b16 %v8521
    %v8600 = vunpack.c.l.b16 %v8522
    %v8601 = vunpack.c.h.b16 %v8522
    %v8602 = vunpack.c.l.b16 %v8523
    %v8603 = vunpack.c.h.b16 %v8523
    %v8604 = vunpack.c.l.b16 %v8524
    %v8605 = vunpack.c.h.b16 %v8524
    %v8606 = vunpack.c.l.b16 %v8525
    %v8607 = vunpack.c.h.b16 %v8525
    %v8608 = vunpack.c.l.b16 %v8526
    %v8609 = vunpack.c.h.b16 %v8526
    %v8610 = vunpack.c.l.b16 %v8527
    %v8611 = vunpack.c.h.b16 %v8527
    %v8612 = vunpack.c.l.b16 %v8528
    %v8613 = vunpack.c.h.b16 %v8528
    %v8614 = vunpack.c.l.b16 %v8529
    %v8615 = vunpack.c.h.b16 %v8529
    %v8616 = vunpack.c.l.b16 %v8530
    %v8617 = vunpack.c.h.b16 %v8530
    %v8618 = vunpack.c.l.b16 %v8531
    %v8619 = vunpack.c.h.b16 %v8531
    %v8620 = vunpack.c.l.b16 %v8532
    %v8621 = vunpack.c.h.b16 %v8532
    %v8622 = vunpack.c.l.b16 %v8533
    %v8623 = vunpack.c.h.b16 %v8533
    %v8624 = vunpack.c.l.b16 %v8534
    %v8625 = vunpack.c.h.b16 %v8534
    %v8626 = vunpack.c.l.b16 %v8535
    %v8627 = vunpack.c.h.b16 %v8535
    %v8628 = vunpack.c.l.b16 %v8536
    %v8629 = vunpack.c.h.b16 %v8536
    %v8630 = vunpack.c.l.b16 %v8537
    %v8631 = vunpack.c.h.b16 %v8537
    %v8632 = vunpack.c.l.b16 %v8538
    %v8633 = vunpack.c.h.b16 %v8538
    %v8634 = vunpack.c.l.b16 %v8539
    %v8635 = vunpack.c.h.b16 %v8539
    %v8636 = vpack.c.b16 %v8576, %v8572
    %v8637 = vpack.c.b16 %v8577, %v8573
    %v8638 = vpack.c.b16 %v8578, %v8574
    %v8639 = vpack.c.b16 %v8579, %v8575
    %v8640 = vpack.c.b16 %v8584, %v8580
    %v8641 = vpack.c.b16 %v8585, %v8581
    %v8642 = vpack.c.b16 %v8586, %v8582
    %v8643 = vpack.c.b16 %v8587, %v8583
    %v8644 = vpack.c.b16 %v8592, %v8588
    %v8645 = vpack.c.b16 %v8593, %v8589
    %v8646 = vpack.c.b16 %v8594, %v8590
    %v8647 = vpack.c.b16 %v8595, %v8591
    %v8648 = vpack.c.b16 %v8600, %v8596
    %v8649 = vpack.c.b16 %v8601, %v8597
    %v8650 = vpack.c.b16 %v8602, %v8598
    %v8651 = vpack.c.b16 %v8603, %v8599
    %v8652 = vpack.c.b16 %v8608, %v8604
    %v8653 = vpack.c.b16 %v8609, %v8605
    %v8654 = vpack.c.b16 %v8610, %v8606
    %v8655 = vpack.c.b16 %v8611, %v8607
    %v8656 = vpack.c.b16 %v8616, %v8612
    %v8657 = vpack.c.b16 %v8617, %v8613
    %v8658 = vpack.c.b16 %v8618, %v8614
    %v8659 = vpack.c.b16 %v8619, %v8615
    %v8660 = vpack.c.b16 %v8624, %v8620
    %v8661 = vpack.c.b16 %v8625, %v8621
    %v8662 = vpack.c.b16 %v8626, %v8622
    %v8663 = vpack.c.b16 %v8627, %v8623
    %v8664 = vpack.c.b16 %v8632, %v8628
    %v8665 = vpack.c.b16 %v8633, %v8629
    %v8666 = vpack.c.b16 %v8634, %v8630
    %v8667 = vpack.c.b16 %v8635, %v8631
    %8700 = vmatprep.subr.bf16.mxu0 %v8637
    %8701 = vmatpush1.bf16.msra.mxu0 %v8636
    %8702 = vmatprep.subr.bf16.mxu0 %v8641
    %8703 = vmatpush1.bf16.msra.mxu0 %v8640
    %8704 = vmatprep.subr.bf16.mxu0 %v8645
    %8705 = vmatpush1.bf16.msra.mxu0 %v8644
    %8706 = vmatprep.subr.bf16.mxu0 %v8649
    %8707 = vmatpush1.bf16.msra.mxu0 %v8648
    %8708 = vmatprep.subr.bf16.mxu0 %v8653
    %8709 = vmatpush1.bf16.msra.mxu0 %v8652
    %8710 = vmatprep.subr.bf16.mxu0 %v8657
    %8711 = vmatpush1.bf16.msra.mxu0 %v8656
    %8712 = vmatprep.subr.bf16.mxu0 %v8661
    %8713 = vmatpush1.bf16.msra.mxu0 %v8660
    %8714 = vmatprep.subr.bf16.mxu0 %v8665
    %8715 = vmatpush1.bf16.msra.mxu0 %v8664
    %8716 = vmatprep.subr.bf16.mxu0 0
    %8717 = vmatpush1.bf16.msra.mxu0 0
    %8718 = vmatprep.subr.bf16.mxu0 0
    %8719 = vmatpush1.bf16.msra.mxu0 0
    %8720 = vmatprep.subr.bf16.mxu0 0
    %8721 = vmatpush1.bf16.msra.mxu0 0
    %8722 = vmatprep.subr.bf16.mxu0 0
    %8723 = vmatpush1.bf16.msra.mxu0 0
    %8724 = vmatprep.subr.bf16.mxu0 0
    %8725 = vmatpush1.bf16.msra.mxu0 0
    %8726 = vmatprep.subr.bf16.mxu0 0
    %8727 = vmatpush1.bf16.msra.mxu0 0
    %8728 = vmatprep.subr.bf16.mxu0 0
    %8729 = vmatpush1.bf16.msra.mxu0 0
    %8730 = vmatprep.subr.bf16.mxu0 0
    %8731 = vmatpush1.bf16.msra.mxu0 0
    %8732 = vmatprep.mubr.bf16.mxu0 0
    %8733 = vmatmul.mubr.bf16.gmra.mrb[0].mxu0 %v8506
    %v8734 = vpop.f32.mrb[0].mxu0
    %v8735 = vadd.f32 0.0, %v8734
    %v8736 = vpop.f32.mrb[0].mxu0
    %v8737 = vadd.f32 0.0, %v8736
    %v8738 = vpop.f32.mrb[0].mxu0
    %v8739 = vpop.f32.mrb[0].mxu0
    %8740 = vdwg.mxu0
    %8741 = vmatprep.subr.bf16.mxu0 %v8639
    %8742 = vmatpush1.bf16.msra.mxu0 %v8638
    %8743 = vmatprep.subr.bf16.mxu0 %v8643
    %8744 = vmatpush1.bf16.msra.mxu0 %v8642
    %8745 = vmatprep.subr.bf16.mxu0 %v8647
    %8746 = vmatpush1.bf16.msra.mxu0 %v8646
    %8747 = vmatprep.subr.bf16.mxu0 %v8651
    %8748 = vmatpush1.bf16.msra.mxu0 %v8650
    %8749 = vmatprep.subr.bf16.mxu0 %v8655
    %8750 = vmatpush1.bf16.msra.mxu0 %v8654
    %8751 = vmatprep.subr.bf16.mxu0 %v8659
    %8752 = vmatpush1.bf16.msra.mxu0 %v8658
    %8753 = vmatprep.subr.bf16.mxu0 %v8663
    %8754 = vmatpush1.bf16.msra.mxu0 %v8662
    %8755 = vmatprep.subr.bf16.mxu0 %v8667
    %8756 = vmatpush1.bf16.msra.mxu0 %v8666
    %8757 = vmatprep.subr.bf16.mxu0 0
    %8758 = vmatpush1.bf16.msra.mxu0 0
    %8759 = vmatprep.subr.bf16.mxu0 0
    %8760 = vmatpush1.bf16.msra.mxu0 0
    %8761 = vmatprep.subr.bf16.mxu0 0
    %8762 = vmatpush1.bf16.msra.mxu0 0
    %8763 = vmatprep.subr.bf16.mxu0 0
    %8764 = vmatpush1.bf16.msra.mxu0 0
    %8765 = vmatprep.subr.bf16.mxu0 0
    %8766 = vmatpush1.bf16.msra.mxu0 0
    %8767 = vmatprep.subr.bf16.mxu0 0
    %8768 = vmatpush1.bf16.msra.mxu0 0
    %8769 = vmatprep.subr.bf16.mxu0 0
    %8770 = vmatpush1.bf16.msra.mxu0 0
    %8771 = vmatprep.subr.bf16.mxu0 0
    %8772 = vmatpush1.bf16.msra.mxu0 0
    %8773 = vmatprep.mubr.bf16.mxu0 0
    %8774 = vmatmul.mubr.bf16.gmra.mrb[0].mxu0 %v8506
    %v8775 = vpop.f32.mrb[0].mxu0
    %v8776 = vadd.f32 0.0, %v8775
    %v8777 = vpop.f32.mrb[0].mxu0
    %v8778 = vadd.f32 0.0, %v8777
    %v8779 = vpop.f32.mrb[0].mxu0
    %v8780 = vpop.f32.mrb[0].mxu0
    %8781 = vdwg.mxu0
    %v8782 = vadd.f32 %v8502, %v8735
    %v8783 = vadd.f32 %v8503, %v8737
    %v8784 = vadd.f32 %v8504, %v8776
    %v8785 = vadd.f32 %v8505, %v8778
    %s8786 = scalar_lea.vmem [#allocation15], 1280
    %v8787 = vld [vmem:[%s8786] sm:$0xff]
    %v8788 = vld [vmem:[%s8786 + $0x8] sm:$0xff]
    %v8789 = vld [vmem:[%s8786 + $0x10] sm:$0xff]
    %v8790 = vld [vmem:[%s8786 + $0x18] sm:$0xff]
    %v8791 = vld [vmem:[%s8786 + $0x20] sm:$0xff]
    %v8792 = vld [vmem:[%s8786 + $0x28] sm:$0xff]
    %v8793 = vld [vmem:[%s8786 + $0x30] sm:$0xff]
    %v8794 = vld [vmem:[%s8786 + $0x38] sm:$0xff]
    %v8795 = vld [vmem:[%s8786 + $0x40] sm:$0xff]
    %v8796 = vld [vmem:[%s8786 + $0x48] sm:$0xff]
    %v8797 = vld [vmem:[%s8786 + $0x50] sm:$0xff]
    %v8798 = vld [vmem:[%s8786 + $0x58] sm:$0xff]
    %v8799 = vld [vmem:[%s8786 + $0x60] sm:$0xff]
    %v8800 = vld [vmem:[%s8786 + $0x68] sm:$0xff]
    %v8801 = vld [vmem:[%s8786 + $0x70] sm:$0xff]
    %v8802 = vld [vmem:[%s8786 + $0x78] sm:$0xff]
    %v8803 = vld [vmem:[%s8786 + $0x80] sm:$0xff]
    %v8804 = vld [vmem:[%s8786 + $0x88] sm:$0xff]
    %v8805 = vld [vmem:[%s8786 + $0x90] sm:$0xff]
    %v8806 = vld [vmem:[%s8786 + $0x98] sm:$0xff]
    %v8807 = vld [vmem:[%s8786 + $0xa0] sm:$0xff]
    %v8808 = vld [vmem:[%s8786 + $0xa8] sm:$0xff]
    %v8809 = vld [vmem:[%s8786 + $0xb0] sm:$0xff]
    %v8810 = vld [vmem:[%s8786 + $0xb8] sm:$0xff]
    %v8811 = vld [vmem:[%s8786 + $0xc0] sm:$0xff]
    %v8812 = vld [vmem:[%s8786 + $0xc8] sm:$0xff]
    %v8813 = vld [vmem:[%s8786 + $0xd0] sm:$0xff]
    %v8814 = vld [vmem:[%s8786 + $0xd8] sm:$0xff]
    %v8815 = vld [vmem:[%s8786 + $0xe0] sm:$0xff]
    %v8816 = vld [vmem:[%s8786 + $0xe8] sm:$0xff]
    %v8817 = vld [vmem:[%s8786 + $0xf0] sm:$0xff]
    %v8818 = vld [vmem:[%s8786 + $0xf8] sm:$0xff]
    %v8820 = vrot.slane %v8506, 2
    %v8854 = vunpack.c.l.b16 %v8787
    %v8855 = vunpack.c.h.b16 %v8787
    %v8856 = vunpack.c.l.b16 %v8788
    %v8857 = vunpack.c.h.b16 %v8788
    %v8858 = vunpack.c.l.b16 %v8789
    %v8859 = vunpack.c.h.b16 %v8789
    %v8860 = vunpack.c.l.b16 %v8790
    %v8861 = vunpack.c.h.b16 %v8790
    %v8862 = vunpack.c.l.b16 %v8791
    %v8863 = vunpack.c.h.b16 %v8791
    %v8864 = vunpack.c.l.b16 %v8792
    %v8865 = vunpack.c.h.b16 %v8792
    %v8866 = vunpack.c.l.b16 %v8793
    %v8867 = vunpack.c.h.b16 %v8793
    %v8868 = vunpack.c.l.b16 %v8794
    %v8869 = vunpack.c.h.b16 %v8794
    %v8870 = vunpack.c.l.b16 %v8795
    %v8871 = vunpack.c.h.b16 %v8795
    %v8872 = vunpack.c.l.b16 %v8796
    %v8873 = vunpack.c.h.b16 %v8796
    %v8874 = vunpack.c.l.b16 %v8797
    %v8875 = vunpack.c.h.b16 %v8797
    %v8876 = vunpack.c.l.b16 %v8798
    %v8877 = vunpack.c.h.b16 %v8798
    %v8878 = vunpack.c.l.b16 %v8799
    %v8879 = vunpack.c.h.b16 %v8799
    %v8880 = vunpack.c.l.b16 %v8800
    %v8881 = vunpack.c.h.b16 %v8800
    %v8882 = vunpack.c.l.b16 %v8801
    %v8883 = vunpack.c.h.b16 %v8801
    %v8884 = vunpack.c.l.b16 %v8802
    %v8885 = vunpack.c.h.b16 %v8802
    %v8886 = vunpack.c.l.b16 %v8803
    %v8887 = vunpack.c.h.b16 %v8803
    %v8888 = vunpack.c.l.b16 %v8804
    %v8889 = vunpack.c.h.b16 %v8804
    %v8890 = vunpack.c.l.b16 %v8805
    %v8891 = vunpack.c.h.b16 %v8805
    %v8892 = vunpack.c.l.b16 %v8806
    %v8893 = vunpack.c.h.b16 %v8806
    %v8894 = vunpack.c.l.b16 %v8807
    %v8895 = vunpack.c.h.b16 %v8807
    %v8896 = vunpack.c.l.b16 %v8808
    %v8897 = vunpack.c.h.b16 %v8808
    %v8898 = vunpack.c.l.b16 %v8809
    %v8899 = vunpack.c.h.b16 %v8809
    %v8900 = vunpack.c.l.b16 %v8810
    %v8901 = vunpack.c.h.b16 %v8810
    %v8902 = vunpack.c.l.b16 %v8811
    %v8903 = vunpack.c.h.b16 %v8811
    %v8904 = vunpack.c.l.b16 %v8812
    %v8905 = vunpack.c.h.b16 %v8812
    %v8906 = vunpack.c.l.b16 %v8813
    %v8907 = vunpack.c.h.b16 %v8813
    %v8908 = vunpack.c.l.b16 %v8814
    %v8909 = vunpack.c.h.b16 %v8814
    %v8910 = vunpack.c.l.b16 %v8815
    %v8911 = vunpack.c.h.b16 %v8815
    %v8912 = vunpack.c.l.b16 %v8816
    %v8913 = vunpack.c.h.b16 %v8816
    %v8914 = vunpack.c.l.b16 %v8817
    %v8915 = vunpack.c.h.b16 %v8817
    %v8916 = vunpack.c.l.b16 %v8818
    %v8917 = vunpack.c.h.b16 %v8818
    %v8918 = vpack.c.b16 %v8858, %v8854
    %v8919 = vpack.c.b16 %v8859, %v8855
    %v8920 = vpack.c.b16 %v8860, %v8856
    %v8921 = vpack.c.b16 %v8861, %v8857
    %v8922 = vpack.c.b16 %v8866, %v8862
    %v8923 = vpack.c.b16 %v8867, %v8863
    %v8924 = vpack.c.b16 %v8868, %v8864
    %v8925 = vpack.c.b16 %v8869, %v8865
    %v8926 = vpack.c.b16 %v8874, %v8870
    %v8927 = vpack.c.b16 %v8875, %v8871
    %v8928 = vpack.c.b16 %v8876, %v8872
    %v8929 = vpack.c.b16 %v8877, %v8873
    %v8930 = vpack.c.b16 %v8882, %v8878
    %v8931 = vpack.c.b16 %v8883, %v8879
    %v8932 = vpack.c.b16 %v8884, %v8880
    %v8933 = vpack.c.b16 %v8885, %v8881
    %v8934 = vpack.c.b16 %v8890, %v8886
    %v8935 = vpack.c.b16 %v8891, %v8887
    %v8936 = vpack.c.b16 %v8892, %v8888
    %v8937 = vpack.c.b16 %v8893, %v8889
    %v8938 = vpack.c.b16 %v8898, %v8894
    %v8939 = vpack.c.b16 %v8899, %v8895
    %v8940 = vpack.c.b16 %v8900, %v8896
    %v8941 = vpack.c.b16 %v8901, %v8897
    %v8942 = vpack.c.b16 %v8906, %v8902
    %v8943 = vpack.c.b16 %v8907, %v8903
    %v8944 = vpack.c.b16 %v8908, %v8904
    %v8945 = vpack.c.b16 %v8909, %v8905
    %v8946 = vpack.c.b16 %v8914, %v8910
    %v8947 = vpack.c.b16 %v8915, %v8911
    %v8948 = vpack.c.b16 %v8916, %v8912
    %v8949 = vpack.c.b16 %v8917, %v8913
    %8982 = vmatprep.subr.bf16.mxu0 %v8919
    %8983 = vmatpush1.bf16.msra.mxu0 %v8918
    %8984 = vmatprep.subr.bf16.mxu0 %v8923
    %8985 = vmatpush1.bf16.msra.mxu0 %v8922
    %8986 = vmatprep.subr.bf16.mxu0 %v8927
    %8987 = vmatpush1.bf16.msra.mxu0 %v8926
    %8988 = vmatprep.subr.bf16.mxu0 %v8931
    %8989 = vmatpush1.bf16.msra.mxu0 %v8930
    %8990 = vmatprep.subr.bf16.mxu0 %v8935
    %8991 = vmatpush1.bf16.msra.mxu0 %v8934
    %8992 = vmatprep.subr.bf16.mxu0 %v8939
    %8993 = vmatpush1.bf16.msra.mxu0 %v8938
    %8994 = vmatprep.subr.bf16.mxu0 %v8943
    %8995 = vmatpush1.bf16.msra.mxu0 %v8942
    %8996 = vmatprep.subr.bf16.mxu0 %v8947
    %8997 = vmatpush1.bf16.msra.mxu0 %v8946
    %8998 = vmatprep.subr.bf16.mxu0 0
    %8999 = vmatpush1.bf16.msra.mxu0 0
    %9000 = vmatprep.subr.bf16.mxu0 0
    %9001 = vmatpush1.bf16.msra.mxu0 0
    %9002 = vmatprep.subr.bf16.mxu0 0
    %9003 = vmatpush1.bf16.msra.mxu0 0
    %9004 = vmatprep.subr.bf16.mxu0 0
    %9005 = vmatpush1.bf16.msra.mxu0 0
    %9006 = vmatprep.subr.bf16.mxu0 0
    %9007 = vmatpush1.bf16.msra.mxu0 0
    %9008 = vmatprep.subr.bf16.mxu0 0
    %9009 = vmatpush1.bf16.msra.mxu0 0
    %9010 = vmatprep.subr.bf16.mxu0 0
    %9011 = vmatpush1.bf16.msra.mxu0 0
    %9012 = vmatprep.subr.bf16.mxu0 0
    %9013 = vmatpush1.bf16.msra.mxu0 0
    %9014 = vmatprep.mubr.bf16.mxu0 0
    %9015 = vmatmul.mubr.bf16.gmra.mrb[0].mxu0 %v8820
    %v9016 = vpop.f32.mrb[0].mxu0
    %v9017 = vadd.f32 0.0, %v9016
    %v9018 = vpop.f32.mrb[0].mxu0
    %v9019 = vadd.f32 0.0, %v9018
    %v9020 = vpop.f32.mrb[0].mxu0
    %v9021 = vpop.f32.mrb[0].mxu0
    %9022 = vdwg.mxu0
    %9023 = vmatprep.subr.bf16.mxu0 %v8921
    %9024 = vmatpush1.bf16.msra.mxu0 %v8920
    %9025 = vmatprep.subr.bf16.mxu0 %v8925
    %9026 = vmatpush1.bf16.msra.mxu0 %v8924
    %9027 = vmatprep.subr.bf16.mxu0 %v8929
    %9028 = vmatpush1.bf16.msra.mxu0 %v8928
    %9029 = vmatprep.subr.bf16.mxu0 %v8933
    %9030 = vmatpush1.bf16.msra.mxu0 %v8932
    %9031 = vmatprep.subr.bf16.mxu0 %v8937
    %9032 = vmatpush1.bf16.msra.mxu0 %v8936
    %9033 = vmatprep.subr.bf16.mxu0 %v8941
    %9034 = vmatpush1.bf16.msra.mxu0 %v8940
    %9035 = vmatprep.subr.bf16.mxu0 %v8945
    %9036 = vmatpush1.bf16.msra.mxu0 %v8944
    %9037 = vmatprep.subr.bf16.mxu0 %v8949
    %9038 = vmatpush1.bf16.msra.mxu0 %v8948
    %9039 = vmatprep.subr.bf16.mxu0 0
    %9040 = vmatpush1.bf16.msra.mxu0 0
    %9041 = vmatprep.subr.bf16.mxu0 0
    %9042 = vmatpush1.bf16.msra.mxu0 0
    %9043 = vmatprep.subr.bf16.mxu0 0
    %9044 = vmatpush1.bf16.msra.mxu0 0
    %9045 = vmatprep.subr.bf16.mxu0 0
    %9046 = vmatpush1.bf16.msra.mxu0 0
    %9047 = vmatprep.subr.bf16.mxu0 0
    %9048 = vmatpush1.bf16.msra.mxu0 0
    %9049 = vmatprep.subr.bf16.mxu0 0
    %9050 = vmatpush1.bf16.msra.mxu0 0
    %9051 = vmatprep.subr.bf16.mxu0 0
    %9052 = vmatpush1.bf16.msra.mxu0 0
    %9053 = vmatprep.subr.bf16.mxu0 0
    %9054 = vmatpush1.bf16.msra.mxu0 0
    %9055 = vmatprep.mubr.bf16.mxu0 0
    %9056 = vmatmul.mubr.bf16.gmra.mrb[0].mxu0 %v8820
    %v9057 = vpop.f32.mrb[0].mxu0
    %v9058 = vadd.f32 0.0, %v9057
    %v9059 = vpop.f32.mrb[0].mxu0
    %v9060 = vadd.f32 0.0, %v9059
    %v9061 = vpop.f32.mrb[0].mxu0
    %v9062 = vpop.f32.mrb[0].mxu0
    %9063 = vdwg.mxu0
    %v9064 = vadd.f32 %v8782, %v9017
    %v9065 = vadd.f32 %v8783, %v9019
    %v9066 = vadd.f32 %v8784, %v9058
    %v9067 = vadd.f32 %v8785, %v9060
    %v9068 = vpack.c.bf16 %v7381, %v7381
    %s9069 = scalar_lea.vmem [#allocation15], 1536
    %v9070 = vld [vmem:[%s9069] sm:$0xff]
    %v9071 = vld [vmem:[%s9069 + $0x8] sm:$0xff]
    %v9072 = vld [vmem:[%s9069 + $0x10] sm:$0xff]
    %v9073 = vld [vmem:[%s9069 + $0x18] sm:$0xff]
    %v9074 = vld [vmem:[%s9069 + $0x20] sm:$0xff]
    %v9075 = vld [vmem:[%s9069 + $0x28] sm:$0xff]
    %v9076 = vld [vmem:[%s9069 + $0x30] sm:$0xff]
    %v9077 = vld [vmem:[%s9069 + $0x38] sm:$0xff]
    %v9078 = vld [vmem:[%s9069 + $0x40] sm:$0xff]
    %v9079 = vld [vmem:[%s9069 + $0x48] sm:$0xff]
    %v9080 = vld [vmem:[%s9069 + $0x50] sm:$0xff]
    %v9081 = vld [vmem:[%s9069 + $0x58] sm:$0xff]
    %v9082 = vld [vmem:[%s9069 + $0x60] sm:$0xff]
    %v9083 = vld [vmem:[%s9069 + $0x68] sm:$0xff]
    %v9084 = vld [vmem:[%s9069 + $0x70] sm:$0xff]
    %v9085 = vld [vmem:[%s9069 + $0x78] sm:$0xff]
    %v9086 = vld [vmem:[%s9069 + $0x80] sm:$0xff]
    %v9087 = vld [vmem:[%s9069 + $0x88] sm:$0xff]
    %v9088 = vld [vmem:[%s9069 + $0x90] sm:$0xff]
    %v9089 = vld [vmem:[%s9069 + $0x98] sm:$0xff]
    %v9090 = vld [vmem:[%s9069 + $0xa0] sm:$0xff]
    %v9091 = vld [vmem:[%s9069 + $0xa8] sm:$0xff]
    %v9092 = vld [vmem:[%s9069 + $0xb0] sm:$0xff]
    %v9093 = vld [vmem:[%s9069 + $0xb8] sm:$0xff]
    %v9094 = vld [vmem:[%s9069 + $0xc0] sm:$0xff]
    %v9095 = vld [vmem:[%s9069 + $0xc8] sm:$0xff]
    %v9096 = vld [vmem:[%s9069 + $0xd0] sm:$0xff]
    %v9097 = vld [vmem:[%s9069 + $0xd8] sm:$0xff]
    %v9098 = vld [vmem:[%s9069 + $0xe0] sm:$0xff]
    %v9099 = vld [vmem:[%s9069 + $0xe8] sm:$0xff]
    %v9100 = vld [vmem:[%s9069 + $0xf0] sm:$0xff]
    %v9101 = vld [vmem:[%s9069 + $0xf8] sm:$0xff]
    %v9134 = vunpack.c.l.b16 %v9070
    %v9135 = vunpack.c.h.b16 %v9070
    %v9136 = vunpack.c.l.b16 %v9071
    %v9137 = vunpack.c.h.b16 %v9071
    %v9138 = vunpack.c.l.b16 %v9072
    %v9139 = vunpack.c.h.b16 %v9072
    %v9140 = vunpack.c.l.b16 %v9073
    %v9141 = vunpack.c.h.b16 %v9073
    %v9142 = vunpack.c.l.b16 %v9074
    %v9143 = vunpack.c.h.b16 %v9074
    %v9144 = vunpack.c.l.b16 %v9075
    %v9145 = vunpack.c.h.b16 %v9075
    %v9146 = vunpack.c.l.b16 %v9076
    %v9147 = vunpack.c.h.b16 %v9076
    %v9148 = vunpack.c.l.b16 %v9077
    %v9149 = vunpack.c.h.b16 %v9077
    %v9150 = vunpack.c.l.b16 %v9078
    %v9151 = vunpack.c.h.b16 %v9078
    %v9152 = vunpack.c.l.b16 %v9079
    %v9153 = vunpack.c.h.b16 %v9079
    %v9154 = vunpack.c.l.b16 %v9080
    %v9155 = vunpack.c.h.b16 %v9080
    %v9156 = vunpack.c.l.b16 %v9081
    %v9157 = vunpack.c.h.b16 %v9081
    %v9158 = vunpack.c.l.b16 %v9082
    %v9159 = vunpack.c.h.b16 %v9082
    %v9160 = vunpack.c.l.b16 %v9083
    %v9161 = vunpack.c.h.b16 %v9083
    %v9162 = vunpack.c.l.b16 %v9084
    %v9163 = vunpack.c.h.b16 %v9084
    %v9164 = vunpack.c.l.b16 %v9085
    %v9165 = vunpack.c.h.b16 %v9085
    %v9166 = vunpack.c.l.b16 %v9086
    %v9167 = vunpack.c.h.b16 %v9086
    %v9168 = vunpack.c.l.b16 %v9087
    %v9169 = vunpack.c.h.b16 %v9087
    %v9170 = vunpack.c.l.b16 %v9088
    %v9171 = vunpack.c.h.b16 %v9088
    %v9172 = vunpack.c.l.b16 %v9089
    %v9173 = vunpack.c.h.b16 %v9089
    %v9174 = vunpack.c.l.b16 %v9090
    %v9175 = vunpack.c.h.b16 %v9090
    %v9176 = vunpack.c.l.b16 %v9091
    %v9177 = vunpack.c.h.b16 %v9091
    %v9178 = vunpack.c.l.b16 %v9092
    %v9179 = vunpack.c.h.b16 %v9092
    %v9180 = vunpack.c.l.b16 %v9093
    %v9181 = vunpack.c.h.b16 %v9093
    %v9182 = vunpack.c.l.b16 %v9094
    %v9183 = vunpack.c.h.b16 %v9094
    %v9184 = vunpack.c.l.b16 %v9095
    %v9185 = vunpack.c.h.b16 %v9095
    %v9186 = vunpack.c.l.b16 %v9096
    %v9187 = vunpack.c.h.b16 %v9096
    %v9188 = vunpack.c.l.b16 %v9097
    %v9189 = vunpack.c.h.b16 %v9097
    %v9190 = vunpack.c.l.b16 %v9098
    %v9191 = vunpack.c.h.b16 %v9098
    %v9192 = vunpack.c.l.b16 %v9099
    %v9193 = vunpack.c.h.b16 %v9099
    %v9194 = vunpack.c.l.b16 %v9100
    %v9195 = vunpack.c.h.b16 %v9100
    %v9196 = vunpack.c.l.b16 %v9101
    %v9197 = vunpack.c.h.b16 %v9101
    %v9198 = vpack.c.b16 %v9138, %v9134
    %v9199 = vpack.c.b16 %v9139, %v9135
    %v9200 = vpack.c.b16 %v9140, %v9136
    %v9201 = vpack.c.b16 %v9141, %v9137
    %v9202 = vpack.c.b16 %v9146, %v9142
    %v9203 = vpack.c.b16 %v9147, %v9143
    %v9204 = vpack.c.b16 %v9148, %v9144
    %v9205 = vpack.c.b16 %v9149, %v9145
    %v9206 = vpack.c.b16 %v9154, %v9150
    %v9207 = vpack.c.b16 %v9155, %v9151
    %v9208 = vpack.c.b16 %v9156, %v9152
    %v9209 = vpack.c.b16 %v9157, %v9153
    %v9210 = vpack.c.b16 %v9162, %v9158
    %v9211 = vpack.c.b16 %v9163, %v9159
    %v9212 = vpack.c.b16 %v9164, %v9160
    %v9213 = vpack.c.b16 %v9165, %v9161
    %v9214 = vpack.c.b16 %v9170, %v9166
    %v9215 = vpack.c.b16 %v9171, %v9167
    %v9216 = vpack.c.b16 %v9172, %v9168
    %v9217 = vpack.c.b16 %v9173, %v9169
    %v9218 = vpack.c.b16 %v9178, %v9174
    %v9219 = vpack.c.b16 %v9179, %v9175
    %v9220 = vpack.c.b16 %v9180, %v9176
    %v9221 = vpack.c.b16 %v9181, %v9177
    %v9222 = vpack.c.b16 %v9186, %v9182
    %v9223 = vpack.c.b16 %v9187, %v9183
    %v9224 = vpack.c.b16 %v9188, %v9184
    %v9225 = vpack.c.b16 %v9189, %v9185
    %v9226 = vpack.c.b16 %v9194, %v9190
    %v9227 = vpack.c.b16 %v9195, %v9191
    %v9228 = vpack.c.b16 %v9196, %v9192
    %v9229 = vpack.c.b16 %v9197, %v9193
    %9262 = vmatprep.subr.bf16.mxu0 %v9199
    %9263 = vmatpush1.bf16.msra.mxu0 %v9198
    %9264 = vmatprep.subr.bf16.mxu0 %v9203
    %9265 = vmatpush1.bf16.msra.mxu0 %v9202
    %9266 = vmatprep.subr.bf16.mxu0 %v9207
    %9267 = vmatpush1.bf16.msra.mxu0 %v9206
    %9268 = vmatprep.subr.bf16.mxu0 %v9211
    %9269 = vmatpush1.bf16.msra.mxu0 %v9210
    %9270 = vmatprep.subr.bf16.mxu0 %v9215
    %9271 = vmatpush1.bf16.msra.mxu0 %v9214
    %9272 = vmatprep.subr.bf16.mxu0 %v9219
    %9273 = vmatpush1.bf16.msra.mxu0 %v9218
    %9274 = vmatprep.subr.bf16.mxu0 %v9223
    %9275 = vmatpush1.bf16.msra.mxu0 %v9222
    %9276 = vmatprep.subr.bf16.mxu0 %v9227
    %9277 = vmatpush1.bf16.msra.mxu0 %v9226
    %9278 = vmatprep.subr.bf16.mxu0 0
    %9279 = vmatpush1.bf16.msra.mxu0 0
    %9280 = vmatprep.subr.bf16.mxu0 0
    %9281 = vmatpush1.bf16.msra.mxu0 0
    %9282 = vmatprep.subr.bf16.mxu0 0
    %9283 = vmatpush1.bf16.msra.mxu0 0
    %9284 = vmatprep.subr.bf16.mxu0 0
    %9285 = vmatpush1.bf16.msra.mxu0 0
    %9286 = vmatprep.subr.bf16.mxu0 0
    %9287 = vmatpush1.bf16.msra.mxu0 0
    %9288 = vmatprep.subr.bf16.mxu0 0
    %9289 = vmatpush1.bf16.msra.mxu0 0
    %9290 = vmatprep.subr.bf16.mxu0 0
    %9291 = vmatpush1.bf16.msra.mxu0 0
    %9292 = vmatprep.subr.bf16.mxu0 0
    %9293 = vmatpush1.bf16.msra.mxu0 0
    %9294 = vmatprep.mubr.bf16.mxu0 0
    %9295 = vmatmul.mubr.bf16.gmra.mrb[0].mxu0 %v9068
    %v9296 = vpop.f32.mrb[0].mxu0
    %v9297 = vadd.f32 0.0, %v9296
    %v9298 = vpop.f32.mrb[0].mxu0
    %v9299 = vadd.f32 0.0, %v9298
    %v9300 = vpop.f32.mrb[0].mxu0
    %v9301 = vpop.f32.mrb[0].mxu0
    %9302 = vdwg.mxu0
    %9303 = vmatprep.subr.bf16.mxu0 %v9201
    %9304 = vmatpush1.bf16.msra.mxu0 %v9200
    %9305 = vmatprep.subr.bf16.mxu0 %v9205
    %9306 = vmatpush1.bf16.msra.mxu0 %v9204
    %9307 = vmatprep.subr.bf16.mxu0 %v9209
    %9308 = vmatpush1.bf16.msra.mxu0 %v9208
    %9309 = vmatprep.subr.bf16.mxu0 %v9213
    %9310 = vmatpush1.bf16.msra.mxu0 %v9212
    %9311 = vmatprep.subr.bf16.mxu0 %v9217
    %9312 = vmatpush1.bf16.msra.mxu0 %v9216
    %9313 = vmatprep.subr.bf16.mxu0 %v9221
    %9314 = vmatpush1.bf16.msra.mxu0 %v9220
    %9315 = vmatprep.subr.bf16.mxu0 %v9225
    %9316 = vmatpush1.bf16.msra.mxu0 %v9224
    %9317 = vmatprep.subr.bf16.mxu0 %v9229
    %9318 = vmatpush1.bf16.msra.mxu0 %v9228
    %9319 = vmatprep.subr.bf16.mxu0 0
    %9320 = vmatpush1.bf16.msra.mxu0 0
    %9321 = vmatprep.subr.bf16.mxu0 0
    %9322 = vmatpush1.bf16.msra.mxu0 0
    %9323 = vmatprep.subr.bf16.mxu0 0
    %9324 = vmatpush1.bf16.msra.mxu0 0
    %9325 = vmatprep.subr.bf16.mxu0 0
    %9326 = vmatpush1.bf16.msra.mxu0 0
    %9327 = vmatprep.subr.bf16.mxu0 0
    %9328 = vmatpush1.bf16.msra.mxu0 0
    %9329 = vmatprep.subr.bf16.mxu0 0
    %9330 = vmatpush1.bf16.msra.mxu0 0
    %9331 = vmatprep.subr.bf16.mxu0 0
    %9332 = vmatpush1.bf16.msra.mxu0 0
    %9333 = vmatprep.subr.bf16.mxu0 0
    %9334 = vmatpush1.bf16.msra.mxu0 0
    %9335 = vmatprep.mubr.bf16.mxu0 0
    %9336 = vmatmul.mubr.bf16.gmra.mrb[0].mxu0 %v9068
    %v9337 = vpop.f32.mrb[0].mxu0
    %v9338 = vadd.f32 0.0, %v9337
    %v9339 = vpop.f32.mrb[0].mxu0
    %v9340 = vadd.f32 0.0, %v9339
    %v9341 = vpop.f32.mrb[0].mxu0
    %v9342 = vpop.f32.mrb[0].mxu0
    %9343 = vdwg.mxu0
    %v9344 = vadd.f32 %v9064, %v9297
    %v9345 = vadd.f32 %v9065, %v9299
    %v9346 = vadd.f32 %v9066, %v9338
    %v9347 = vadd.f32 %v9067, %v9340
    %s9348 = scalar_lea.vmem [#allocation15], 1792
    %v9349 = vld [vmem:[%s9348] sm:$0xff]
    %v9350 = vld [vmem:[%s9348 + $0x8] sm:$0xff]
    %v9351 = vld [vmem:[%s9348 + $0x10] sm:$0xff]
    %v9352 = vld [vmem:[%s9348 + $0x18] sm:$0xff]
    %v9353 = vld [vmem:[%s9348 + $0x20] sm:$0xff]
    %v9354 = vld [vmem:[%s9348 + $0x28] sm:$0xff]
    %v9355 = vld [vmem:[%s9348 + $0x30] sm:$0xff]
    %v9356 = vld [vmem:[%s9348 + $0x38] sm:$0xff]
    %v9357 = vld [vmem:[%s9348 + $0x40] sm:$0xff]
    %v9358 = vld [vmem:[%s9348 + $0x48] sm:$0xff]
    %v9359 = vld [vmem:[%s9348 + $0x50] sm:$0xff]
    %v9360 = vld [vmem:[%s9348 + $0x58] sm:$0xff]
    %v9361 = vld [vmem:[%s9348 + $0x60] sm:$0xff]
    %v9362 = vld [vmem:[%s9348 + $0x68] sm:$0xff]
    %v9363 = vld [vmem:[%s9348 + $0x70] sm:$0xff]
    %v9364 = vld [vmem:[%s9348 + $0x78] sm:$0xff]
    %v9365 = vld [vmem:[%s9348 + $0x80] sm:$0xff]
    %v9366 = vld [vmem:[%s9348 + $0x88] sm:$0xff]
    %v9367 = vld [vmem:[%s9348 + $0x90] sm:$0xff]
    %v9368 = vld [vmem:[%s9348 + $0x98] sm:$0xff]
    %v9369 = vld [vmem:[%s9348 + $0xa0] sm:$0xff]
    %v9370 = vld [vmem:[%s9348 + $0xa8] sm:$0xff]
    %v9371 = vld [vmem:[%s9348 + $0xb0] sm:$0xff]
    %v9372 = vld [vmem:[%s9348 + $0xb8] sm:$0xff]
    %v9373 = vld [vmem:[%s9348 + $0xc0] sm:$0xff]
    %v9374 = vld [vmem:[%s9348 + $0xc8] sm:$0xff]
    %v9375 = vld [vmem:[%s9348 + $0xd0] sm:$0xff]
    %v9376 = vld [vmem:[%s9348 + $0xd8] sm:$0xff]
    %v9377 = vld [vmem:[%s9348 + $0xe0] sm:$0xff]
    %v9378 = vld [vmem:[%s9348 + $0xe8] sm:$0xff]
    %v9379 = vld [vmem:[%s9348 + $0xf0] sm:$0xff]
    %v9380 = vld [vmem:[%s9348 + $0xf8] sm:$0xff]
    %v9382 = vrot.slane %v9068, 2
    %v9416 = vunpack.c.l.b16 %v9349
    %v9417 = vunpack.c.h.b16 %v9349
    %v9418 = vunpack.c.l.b16 %v9350
    %v9419 = vunpack.c.h.b16 %v9350
    %v9420 = vunpack.c.l.b16 %v9351
    %v9421 = vunpack.c.h.b16 %v9351
    %v9422 = vunpack.c.l.b16 %v9352
    %v9423 = vunpack.c.h.b16 %v9352
    %v9424 = vunpack.c.l.b16 %v9353
    %v9425 = vunpack.c.h.b16 %v9353
    %v9426 = vunpack.c.l.b16 %v9354
    %v9427 = vunpack.c.h.b16 %v9354
    %v9428 = vunpack.c.l.b16 %v9355
    %v9429 = vunpack.c.h.b16 %v9355
    %v9430 = vunpack.c.l.b16 %v9356
    %v9431 = vunpack.c.h.b16 %v9356
    %v9432 = vunpack.c.l.b16 %v9357
    %v9433 = vunpack.c.h.b16 %v9357
    %v9434 = vunpack.c.l.b16 %v9358
    %v9435 = vunpack.c.h.b16 %v9358
    %v9436 = vunpack.c.l.b16 %v9359
    %v9437 = vunpack.c.h.b16 %v9359
    %v9438 = vunpack.c.l.b16 %v9360
    %v9439 = vunpack.c.h.b16 %v9360
    %v9440 = vunpack.c.l.b16 %v9361
    %v9441 = vunpack.c.h.b16 %v9361
    %v9442 = vunpack.c.l.b16 %v9362
    %v9443 = vunpack.c.h.b16 %v9362
    %v9444 = vunpack.c.l.b16 %v9363
    %v9445 = vunpack.c.h.b16 %v9363
    %v9446 = vunpack.c.l.b16 %v9364
    %v9447 = vunpack.c.h.b16 %v9364
    %v9448 = vunpack.c.l.b16 %v9365
    %v9449 = vunpack.c.h.b16 %v9365
    %v9450 = vunpack.c.l.b16 %v9366
    %v9451 = vunpack.c.h.b16 %v9366
    %v9452 = vunpack.c.l.b16 %v9367
    %v9453 = vunpack.c.h.b16 %v9367
    %v9454 = vunpack.c.l.b16 %v9368
    %v9455 = vunpack.c.h.b16 %v9368
    %v9456 = vunpack.c.l.b16 %v9369
    %v9457 = vunpack.c.h.b16 %v9369
    %v9458 = vunpack.c.l.b16 %v9370
    %v9459 = vunpack.c.h.b16 %v9370
    %v9460 = vunpack.c.l.b16 %v9371
    %v9461 = vunpack.c.h.b16 %v9371
    %v9462 = vunpack.c.l.b16 %v9372
    %v9463 = vunpack.c.h.b16 %v9372
    %v9464 = vunpack.c.l.b16 %v9373
    %v9465 = vunpack.c.h.b16 %v9373
    %v9466 = vunpack.c.l.b16 %v9374
    %v9467 = vunpack.c.h.b16 %v9374
    %v9468 = vunpack.c.l.b16 %v9375
    %v9469 = vunpack.c.h.b16 %v9375
    %v9470 = vunpack.c.l.b16 %v9376
    %v9471 = vunpack.c.h.b16 %v9376
    %v9472 = vunpack.c.l.b16 %v9377
    %v9473 = vunpack.c.h.b16 %v9377
    %v9474 = vunpack.c.l.b16 %v9378
    %v9475 = vunpack.c.h.b16 %v9378
    %v9476 = vunpack.c.l.b16 %v9379
    %v9477 = vunpack.c.h.b16 %v9379
    %v9478 = vunpack.c.l.b16 %v9380
    %v9479 = vunpack.c.h.b16 %v9380
    %v9480 = vpack.c.b16 %v9420, %v9416
    %v9481 = vpack.c.b16 %v9421, %v9417
    %v9482 = vpack.c.b16 %v9422, %v9418
    %v9483 = vpack.c.b16 %v9423, %v9419
    %v9484 = vpack.c.b16 %v9428, %v9424
    %v9485 = vpack.c.b16 %v9429, %v9425
    %v9486 = vpack.c.b16 %v9430, %v9426
    %v9487 = vpack.c.b16 %v9431, %v9427
    %v9488 = vpack.c.b16 %v9436, %v9432
    %v9489 = vpack.c.b16 %v9437, %v9433
    %v9490 = vpack.c.b16 %v9438, %v9434
    %v9491 = vpack.c.b16 %v9439, %v9435
    %v9492 = vpack.c.b16 %v9444, %v9440
    %v9493 = vpack.c.b16 %v9445, %v9441
    %v9494 = vpack.c.b16 %v9446, %v9442
    %v9495 = vpack.c.b16 %v9447, %v9443
    %v9496 = vpack.c.b16 %v9452, %v9448
    %v9497 = vpack.c.b16 %v9453, %v9449
    %v9498 = vpack.c.b16 %v9454, %v9450
    %v9499 = vpack.c.b16 %v9455, %v9451
    %v9500 = vpack.c.b16 %v9460, %v9456
    %v9501 = vpack.c.b16 %v9461, %v9457
    %v9502 = vpack.c.b16 %v9462, %v9458
    %v9503 = vpack.c.b16 %v9463, %v9459
    %v9504 = vpack.c.b16 %v9468, %v9464
    %v9505 = vpack.c.b16 %v9469, %v9465
    %v9506 = vpack.c.b16 %v9470, %v9466
    %v9507 = vpack.c.b16 %v9471, %v9467
    %v9508 = vpack.c.b16 %v9476, %v9472
    %v9509 = vpack.c.b16 %v9477, %v9473
    %v9510 = vpack.c.b16 %v9478, %v9474
    %v9511 = vpack.c.b16 %v9479, %v9475
    %9544 = vmatprep.subr.bf16.mxu0 %v9481
    %9545 = vmatpush1.bf16.msra.mxu0 %v9480
    %9546 = vmatprep.subr.bf16.mxu0 %v9485
    %9547 = vmatpush1.bf16.msra.mxu0 %v9484
    %9548 = vmatprep.subr.bf16.mxu0 %v9489
    %9549 = vmatpush1.bf16.msra.mxu0 %v9488
    %9550 = vmatprep.subr.bf16.mxu0 %v9493
    %9551 = vmatpush1.bf16.msra.mxu0 %v9492
    %9552 = vmatprep.subr.bf16.mxu0 %v9497
    %9553 = vmatpush1.bf16.msra.mxu0 %v9496
    %9554 = vmatprep.subr.bf16.mxu0 %v9501
    %9555 = vmatpush1.bf16.msra.mxu0 %v9500
    %9556 = vmatprep.subr.bf16.mxu0 %v9505
    %9557 = vmatpush1.bf16.msra.mxu0 %v9504
    %9558 = vmatprep.subr.bf16.mxu0 %v9509
    %9559 = vmatpush1.bf16.msra.mxu0 %v9508
    %9560 = vmatprep.subr.bf16.mxu0 0
    %9561 = vmatpush1.bf16.msra.mxu0 0
    %9562 = vmatprep.subr.bf16.mxu0 0
    %9563 = vmatpush1.bf16.msra.mxu0 0
    %9564 = vmatprep.subr.bf16.mxu0 0
    %9565 = vmatpush1.bf16.msra.mxu0 0
    %9566 = vmatprep.subr.bf16.mxu0 0
    %9567 = vmatpush1.bf16.msra.mxu0 0
    %9568 = vmatprep.subr.bf16.mxu0 0
    %9569 = vmatpush1.bf16.msra.mxu0 0
    %9570 = vmatprep.subr.bf16.mxu0 0
    %9571 = vmatpush1.bf16.msra.mxu0 0
    %9572 = vmatprep.subr.bf16.mxu0 0
    %9573 = vmatpush1.bf16.msra.mxu0 0
    %9574 = vmatprep.subr.bf16.mxu0 0
    %9575 = vmatpush1.bf16.msra.mxu0 0
    %9576 = vmatprep.mubr.bf16.mxu0 0
    %9577 = vmatmul.mubr.bf16.gmra.mrb[0].mxu0 %v9382
    %v9578 = vpop.f32.mrb[0].mxu0
    %v9579 = vadd.f32 0.0, %v9578
    %v9580 = vpop.f32.mrb[0].mxu0
    %v9581 = vadd.f32 0.0, %v9580
    %v9582 = vpop.f32.mrb[0].mxu0
    %v9583 = vpop.f32.mrb[0].mxu0
    %9584 = vdwg.mxu0
    %9585 = vmatprep.subr.bf16.mxu0 %v9483
    %9586 = vmatpush1.bf16.msra.mxu0 %v9482
    %9587 = vmatprep.subr.bf16.mxu0 %v9487
    %9588 = vmatpush1.bf16.msra.mxu0 %v9486
    %9589 = vmatprep.subr.bf16.mxu0 %v9491
    %9590 = vmatpush1.bf16.msra.mxu0 %v9490
    %9591 = vmatprep.subr.bf16.mxu0 %v9495
    %9592 = vmatpush1.bf16.msra.mxu0 %v9494
    %9593 = vmatprep.subr.bf16.mxu0 %v9499
    %9594 = vmatpush1.bf16.msra.mxu0 %v9498
    %9595 = vmatprep.subr.bf16.mxu0 %v9503
    %9596 = vmatpush1.bf16.msra.mxu0 %v9502
    %9597 = vmatprep.subr.bf16.mxu0 %v9507
    %9598 = vmatpush1.bf16.msra.mxu0 %v9506
    %9599 = vmatprep.subr.bf16.mxu0 %v9511
    %9600 = vmatpush1.bf16.msra.mxu0 %v9510
    %9601 = vmatprep.subr.bf16.mxu0 0
    %9602 = vmatpush1.bf16.msra.mxu0 0
    %9603 = vmatprep.subr.bf16.mxu0 0
    %9604 = vmatpush1.bf16.msra.mxu0 0
    %9605 = vmatprep.subr.bf16.mxu0 0
    %9606 = vmatpush1.bf16.msra.mxu0 0
    %9607 = vmatprep.subr.bf16.mxu0 0
    %9608 = vmatpush1.bf16.msra.mxu0 0
    %9609 = vmatprep.subr.bf16.mxu0 0
    %9610 = vmatpush1.bf16.msra.mxu0 0
    %9611 = vmatprep.subr.bf16.mxu0 0
    %9612 = vmatpush1.bf16.msra.mxu0 0
    %9613 = vmatprep.subr.bf16.mxu0 0
    %9614 = vmatpush1.bf16.msra.mxu0 0
    %9615 = vmatprep.subr.bf16.mxu0 0
    %9616 = vmatpush1.bf16.msra.mxu0 0
    %9617 = vmatprep.mubr.bf16.mxu0 0
    %9618 = vmatmul.mubr.bf16.gmra.mrb[0].mxu0 %v9382
    %v9619 = vpop.f32.mrb[0].mxu0
    %v9620 = vadd.f32 0.0, %v9619
    %v9621 = vpop.f32.mrb[0].mxu0
    %v9622 = vadd.f32 0.0, %v9621
    %v9623 = vpop.f32.mrb[0].mxu0
    %v9624 = vpop.f32.mrb[0].mxu0
    %9625 = vdwg.mxu0
    %v9626 = vadd.f32 %v9344, %v9579
    %v9627 = vadd.f32 %v9345, %v9581
    %v9628 = vadd.f32 %v9346, %v9620
    %v9629 = vadd.f32 %v9347, %v9622
    %v9630 = vpack.c.bf16 %v7386, %v7386
    %s9631 = scalar_lea.vmem [#allocation15], 2048
    %v9632 = vld [vmem:[%s9631] sm:$0xff]
    %v9633 = vld [vmem:[%s9631 + $0x8] sm:$0xff]
    %v9634 = vld [vmem:[%s9631 + $0x10] sm:$0xff]
    %v9635 = vld [vmem:[%s9631 + $0x18] sm:$0xff]
    %v9636 = vld [vmem:[%s9631 + $0x20] sm:$0xff]
    %v9637 = vld [vmem:[%s9631 + $0x28] sm:$0xff]
    %v9638 = vld [vmem:[%s9631 + $0x30] sm:$0xff]
    %v9639 = vld [vmem:[%s9631 + $0x38] sm:$0xff]
    %v9640 = vld [vmem:[%s9631 + $0x40] sm:$0xff]
    %v9641 = vld [vmem:[%s9631 + $0x48] sm:$0xff]
    %v9642 = vld [vmem:[%s9631 + $0x50] sm:$0xff]
    %v9643 = vld [vmem:[%s9631 + $0x58] sm:$0xff]
    %v9644 = vld [vmem:[%s9631 + $0x60] sm:$0xff]
    %v9645 = vld [vmem:[%s9631 + $0x68] sm:$0xff]
    %v9646 = vld [vmem:[%s9631 + $0x70] sm:$0xff]
    %v9647 = vld [vmem:[%s9631 + $0x78] sm:$0xff]
    %v9648 = vld [vmem:[%s9631 + $0x80] sm:$0xff]
    %v9649 = vld [vmem:[%s9631 + $0x88] sm:$0xff]
    %v9650 = vld [vmem:[%s9631 + $0x90] sm:$0xff]
    %v9651 = vld [vmem:[%s9631 + $0x98] sm:$0xff]
    %v9652 = vld [vmem:[%s9631 + $0xa0] sm:$0xff]
    %v9653 = vld [vmem:[%s9631 + $0xa8] sm:$0xff]
    %v9654 = vld [vmem:[%s9631 + $0xb0] sm:$0xff]
    %v9655 = vld [vmem:[%s9631 + $0xb8] sm:$0xff]
    %v9656 = vld [vmem:[%s9631 + $0xc0] sm:$0xff]
    %v9657 = vld [vmem:[%s9631 + $0xc8] sm:$0xff]
    %v9658 = vld [vmem:[%s9631 + $0xd0] sm:$0xff]
    %v9659 = vld [vmem:[%s9631 + $0xd8] sm:$0xff]
    %v9660 = vld [vmem:[%s9631 + $0xe0] sm:$0xff]
    %v9661 = vld [vmem:[%s9631 + $0xe8] sm:$0xff]
    %v9662 = vld [vmem:[%s9631 + $0xf0] sm:$0xff]
    %v9663 = vld [vmem:[%s9631 + $0xf8] sm:$0xff]
    %v9696 = vunpack.c.l.b16 %v9632
    %v9697 = vunpack.c.h.b16 %v9632
    %v9698 = vunpack.c.l.b16 %v9633
    %v9699 = vunpack.c.h.b16 %v9633
    %v9700 = vunpack.c.l.b16 %v9634
    %v9701 = vunpack.c.h.b16 %v9634
    %v9702 = vunpack.c.l.b16 %v9635
    %v9703 = vunpack.c.h.b16 %v9635
    %v9704 = vunpack.c.l.b16 %v9636
    %v9705 = vunpack.c.h.b16 %v9636
    %v9706 = vunpack.c.l.b16 %v9637
    %v9707 = vunpack.c.h.b16 %v9637
    %v9708 = vunpack.c.l.b16 %v9638
    %v9709 = vunpack.c.h.b16 %v9638
    %v9710 = vunpack.c.l.b16 %v9639
    %v9711 = vunpack.c.h.b16 %v9639
    %v9712 = vunpack.c.l.b16 %v9640
    %v9713 = vunpack.c.h.b16 %v9640
    %v9714 = vunpack.c.l.b16 %v9641
    %v9715 = vunpack.c.h.b16 %v9641
    %v9716 = vunpack.c.l.b16 %v9642
    %v9717 = vunpack.c.h.b16 %v9642
    %v9718 = vunpack.c.l.b16 %v9643
    %v9719 = vunpack.c.h.b16 %v9643
    %v9720 = vunpack.c.l.b16 %v9644
    %v9721 = vunpack.c.h.b16 %v9644
    %v9722 = vunpack.c.l.b16 %v9645
    %v9723 = vunpack.c.h.b16 %v9645
    %v9724 = vunpack.c.l.b16 %v9646
    %v9725 = vunpack.c.h.b16 %v9646
    %v9726 = vunpack.c.l.b16 %v9647
    %v9727 = vunpack.c.h.b16 %v9647
    %v9728 = vunpack.c.l.b16 %v9648
    %v9729 = vunpack.c.h.b16 %v9648
    %v9730 = vunpack.c.l.b16 %v9649
    %v9731 = vunpack.c.h.b16 %v9649
    %v9732 = vunpack.c.l.b16 %v9650
    %v9733 = vunpack.c.h.b16 %v9650
    %v9734 = vunpack.c.l.b16 %v9651
    %v9735 = vunpack.c.h.b16 %v9651
    %v9736 = vunpack.c.l.b16 %v9652
    %v9737 = vunpack.c.h.b16 %v9652
    %v9738 = vunpack.c.l.b16 %v9653
    %v9739 = vunpack.c.h.b16 %v9653
    %v9740 = vunpack.c.l.b16 %v9654
    %v9741 = vunpack.c.h.b16 %v9654
    %v9742 = vunpack.c.l.b16 %v9655
    %v9743 = vunpack.c.h.b16 %v9655
    %v9744 = vunpack.c.l.b16 %v9656
    %v9745 = vunpack.c.h.b16 %v9656
    %v9746 = vunpack.c.l.b16 %v9657
    %v9747 = vunpack.c.h.b16 %v9657
    %v9748 = vunpack.c.l.b16 %v9658
    %v9749 = vunpack.c.h.b16 %v9658
    %v9750 = vunpack.c.l.b16 %v9659
    %v9751 = vunpack.c.h.b16 %v9659
    %v9752 = vunpack.c.l.b16 %v9660
    %v9753 = vunpack.c.h.b16 %v9660
    %v9754 = vunpack.c.l.b16 %v9661
    %v9755 = vunpack.c.h.b16 %v9661
    %v9756 = vunpack.c.l.b16 %v9662
    %v9757 = vunpack.c.h.b16 %v9662
    %v9758 = vunpack.c.l.b16 %v9663
    %v9759 = vunpack.c.h.b16 %v9663
    %v9760 = vpack.c.b16 %v9700, %v9696
    %v9761 = vpack.c.b16 %v9701, %v9697
    %v9762 = vpack.c.b16 %v9702, %v9698
    %v9763 = vpack.c.b16 %v9703, %v9699
    %v9764 = vpack.c.b16 %v9708, %v9704
    %v9765 = vpack.c.b16 %v9709, %v9705
    %v9766 = vpack.c.b16 %v9710, %v9706
    %v9767 = vpack.c.b16 %v9711, %v9707
    %v9768 = vpack.c.b16 %v9716, %v9712
    %v9769 = vpack.c.b16 %v9717, %v9713
    %v9770 = vpack.c.b16 %v9718, %v9714
    %v9771 = vpack.c.b16 %v9719, %v9715
    %v9772 = vpack.c.b16 %v9724, %v9720
    %v9773 = vpack.c.b16 %v9725, %v9721
    %v9774 = vpack.c.b16 %v9726, %v9722
    %v9775 = vpack.c.b16 %v9727, %v9723
    %v9776 = vpack.c.b16 %v9732, %v9728
    %v9777 = vpack.c.b16 %v9733, %v9729
    %v9778 = vpack.c.b16 %v9734, %v9730
    %v9779 = vpack.c.b16 %v9735, %v9731
    %v9780 = vpack.c.b16 %v9740, %v9736
    %v9781 = vpack.c.b16 %v9741, %v9737
    %v9782 = vpack.c.b16 %v9742, %v9738
    %v9783 = vpack.c.b16 %v9743, %v9739
    %v9784 = vpack.c.b16 %v9748, %v9744
    %v9785 = vpack.c.b16 %v9749, %v9745
    %v9786 = vpack.c.b16 %v9750, %v9746
    %v9787 = vpack.c.b16 %v9751, %v9747
    %v9788 = vpack.c.b16 %v9756, %v9752
    %v9789 = vpack.c.b16 %v9757, %v9753
    %v9790 = vpack.c.b16 %v9758, %v9754
    %v9791 = vpack.c.b16 %v9759, %v9755
    %9824 = vmatprep.subr.bf16.mxu0 %v9761
    %9825 = vmatpush1.bf16.msra.mxu0 %v9760
    %9826 = vmatprep.subr.bf16.mxu0 %v9765
    %9827 = vmatpush1.bf16.msra.mxu0 %v9764
    %9828 = vmatprep.subr.bf16.mxu0 %v9769
    %9829 = vmatpush1.bf16.msra.mxu0 %v9768
    %9830 = vmatprep.subr.bf16.mxu0 %v9773
    %9831 = vmatpush1.bf16.msra.mxu0 %v9772
    %9832 = vmatprep.subr.bf16.mxu0 %v9777
    %9833 = vmatpush1.bf16.msra.mxu0 %v9776
    %9834 = vmatprep.subr.bf16.mxu0 %v9781
    %9835 = vmatpush1.bf16.msra.mxu0 %v9780
    %9836 = vmatprep.subr.bf16.mxu0 %v9785
    %9837 = vmatpush1.bf16.msra.mxu0 %v9784
    %9838 = vmatprep.subr.bf16.mxu0 %v9789
    %9839 = vmatpush1.bf16.msra.mxu0 %v9788
    %9840 = vmatprep.subr.bf16.mxu0 0
    %9841 = vmatpush1.bf16.msra.mxu0 0
    %9842 = vmatprep.subr.bf16.mxu0 0
    %9843 = vmatpush1.bf16.msra.mxu0 0
    %9844 = vmatprep.subr.bf16.mxu0 0
    %9845 = vmatpush1.bf16.msra.mxu0 0
    %9846 = vmatprep.subr.bf16.mxu0 0
    %9847 = vmatpush1.bf16.msra.mxu0 0
    %9848 = vmatprep.subr.bf16.mxu0 0
    %9849 = vmatpush1.bf16.msra.mxu0 0
    %9850 = vmatprep.subr.bf16.mxu0 0
    %9851 = vmatpush1.bf16.msra.mxu0 0
    %9852 = vmatprep.subr.bf16.mxu0 0
    %9853 = vmatpush1.bf16.msra.mxu0 0
    %9854 = vmatprep.subr.bf16.mxu0 0
    %9855 = vmatpush1.bf16.msra.mxu0 0
    %9856 = vmatprep.mubr.bf16.mxu0 0
    %9857 = vmatmul.mubr.bf16.gmra.mrb[0].mxu0 %v9630
    %v9858 = vpop.f32.mrb[0].mxu0
    %v9859 = vadd.f32 0.0, %v9858
    %v9860 = vpop.f32.mrb[0].mxu0
    %v9861 = vadd.f32 0.0, %v9860
    %v9862 = vpop.f32.mrb[0].mxu0
    %v9863 = vpop.f32.mrb[0].mxu0
    %9864 = vdwg.mxu0
    %9865 = vmatprep.subr.bf16.mxu0 %v9763
    %9866 = vmatpush1.bf16.msra.mxu0 %v9762
    %9867 = vmatprep.subr.bf16.mxu0 %v9767
    %9868 = vmatpush1.bf16.msra.mxu0 %v9766
    %9869 = vmatprep.subr.bf16.mxu0 %v9771
    %9870 = vmatpush1.bf16.msra.mxu0 %v9770
    %9871 = vmatprep.subr.bf16.mxu0 %v9775
    %9872 = vmatpush1.bf16.msra.mxu0 %v9774
    %9873 = vmatprep.subr.bf16.mxu0 %v9779
    %9874 = vmatpush1.bf16.msra.mxu0 %v9778
    %9875 = vmatprep.subr.bf16.mxu0 %v9783
    %9876 = vmatpush1.bf16.msra.mxu0 %v9782
    %9877 = vmatprep.subr.bf16.mxu0 %v9787
    %9878 = vmatpush1.bf16.msra.mxu0 %v9786
    %9879 = vmatprep.subr.bf16.mxu0 %v9791
    %9880 = vmatpush1.bf16.msra.mxu0 %v9790
    %9881 = vmatprep.subr.bf16.mxu0 0
    %9882 = vmatpush1.bf16.msra.mxu0 0
    %9883 = vmatprep.subr.bf16.mxu0 0
    %9884 = vmatpush1.bf16.msra.mxu0 0
    %9885 = vmatprep.subr.bf16.mxu0 0
    %9886 = vmatpush1.bf16.msra.mxu0 0
    %9887 = vmatprep.subr.bf16.mxu0 0
    %9888 = vmatpush1.bf16.msra.mxu0 0
    %9889 = vmatprep.subr.bf16.mxu0 0
    %9890 = vmatpush1.bf16.msra.mxu0 0
    %9891 = vmatprep.subr.bf16.mxu0 0
    %9892 = vmatpush1.bf16.msra.mxu0 0
    %9893 = vmatprep.subr.bf16.mxu0 0
    %9894 = vmatpush1.bf16.msra.mxu0 0
    %9895 = vmatprep.subr.bf16.mxu0 0
    %9896 = vmatpush1.bf16.msra.mxu0 0
    %9897 = vmatprep.mubr.bf16.mxu0 0
    %9898 = vmatmul.mubr.bf16.gmra.mrb[0].mxu0 %v9630
    %v9899 = vpop.f32.mrb[0].mxu0
    %v9900 = vadd.f32 0.0, %v9899
    %v9901 = vpop.f32.mrb[0].mxu0
    %v9902 = vadd.f32 0.0, %v9901
    %v9903 = vpop.f32.mrb[0].mxu0
    %v9904 = vpop.f32.mrb[0].mxu0
    %9905 = vdwg.mxu0
    %v9906 = vadd.f32 %v9626, %v9859
    %v9907 = vadd.f32 %v9627, %v9861
    %v9908 = vadd.f32 %v9628, %v9900
    %v9909 = vadd.f32 %v9629, %v9902
    %v9910 = vld [vmem:[%s63] sm:$0xf]
    %9912 = vset.pattern.permute.xlu0 0
    %9913 = vperm.xlu0 %9912, %v9910
    %v9914 = vpop.permute.xlu0 %9913
    %v9916 = vadd.f32 %v9906, %v9914
    %v9917 = vadd.f32 %v9907, %v9914
    %v9918 = vadd.f32 %v9908, %v9914
    %v9919 = vadd.f32 %v9909, %v9914
    %v9920 = vxor.u32 %v9916, 2147483648
    %v9921 = vxor.u32 %v9917, 2147483648
    %v9922 = vxor.u32 %v9918, 2147483648
    %v9923 = vxor.u32 %v9919, 2147483648
    %v9924 = vmul.f32 %v9920, 1.442695
    %v9925 = vpow.pop %v9924
    %v9926 = vmul.f32 %v9921, 1.442695
    %v9927 = vpow.pop %v9926
    %v9928 = vmul.f32 %v9922, 1.442695
    %v9929 = vpow.pop %v9928
    %v9930 = vmul.f32 %v9923, 1.442695
    %v9931 = vpow.pop %v9930
    %v9932 = vadd.f32 %v9925, 1.0
    %v9933 = vadd.f32 %v9927, 1.0
    %v9934 = vadd.f32 %v9929, 1.0
    %v9935 = vadd.f32 %v9931, 1.0
    %v9936 = vrcp.pop %v9932
    %v9937 = vmul.f32 1.0, %v9936
    %v9938 = vrcp.pop %v9933
    %v9939 = vmul.f32 1.0, %v9938
    %v9940 = vrcp.pop %v9934
    %v9941 = vmul.f32 1.0, %v9940
    %v9942 = vrcp.pop %v9935
    %v9943 = vmul.f32 1.0, %v9942
    %v9948 = vcombine.low %v9937, %v9939
    %v9949 = vcombine.low %v9941, %v9943
    %9952 = vst [vmem:[%s65] sm:$0xff] %v9948
    %9953 = vst [vmem:[%s65 + $0x8] sm:$0xff] %v9949
    // Predicated region
    $region166: #{vae_forward.1} parent=1 // pred_check
      _
    $region167: #{vae_forward.1} parent=1 // pred_check_branch
      %9955 = sbr.rel (0) target = $region169
    $region168: #{vae_forward.1} parent=1 // pred_region
      _
    $region169: #{vae_forward.1} parent=1 // pred_fallthru
      _
    // Predicated region
    $region170: #{vae_forward.1} parent=1 // pred_check
      _
    $region171: #{vae_forward.1} parent=1 // pred_check_branch
      %9957 = sbr.rel (0) target = $region173
    $region172: #{vae_forward.1} parent=1 // pred_region
      _
    $region173: #{vae_forward.1} parent=1 // pred_fallthru
      _
    // Predicated region
    $region174: #{vae_forward.1} parent=1 // pred_check
      _
    $region175: #{vae_forward.1} parent=1 // pred_check_branch
      %9959 = sbr.rel (0) target = $region177
    $region176: #{vae_forward.1} parent=1 // pred_region
      _
    $region177: #{vae_forward.1} parent=1 // pred_fallthru
      _
    // Predicated region
    $region178: #{vae_forward.1} parent=1 // pred_check
      _
    $region179: #{vae_forward.1} parent=1 // pred_check_branch
      %9961 = sbr.rel (0) target = $region181
    $region180: #{vae_forward.1} parent=1 // pred_region
      _
    $region181: #{vae_forward.1} parent=1 // pred_fallthru
      _
    // Predicated region
    $region182: #{vae_forward.1} parent=1 // pred_check
      _
    $region183: #{vae_forward.1} parent=1 // pred_check_branch
      %9963 = sbr.rel (0) target = $region185
    $region184: #{vae_forward.1} parent=1 // pred_region
      _
    $region185: #{vae_forward.1} parent=1 // pred_fallthru
      _
    // Predicated region
    $region186: #{vae_forward.1} parent=1 // pred_check
      _
    $region187: #{vae_forward.1} parent=1 // pred_check_branch
      %9965 = sbr.rel (0) target = $region189
    $region188: #{vae_forward.1} parent=1 // pred_region
      _
    $region189: #{vae_forward.1} parent=1 // pred_fallthru
      _
    %9966 = vsyncpa [#allocation3], 1
    %9967 = vsyncpa [#allocation5], 1
    %9968 = vsyncpa [#allocation8], 1
    %9969 = vsyncpa [#allocation11], 1
    %9970 = vsyncpa [#allocation14], 1

</llo_original>
